<compile_context>
chip_gen: v7x
topology: tpu7x:2x2x1
jax: 0.10.0
libtpu: 0.0.40
codegen_flags: <defaults>
</compile_context>

<pallas_src>
import functools
import math

import jax
import jax.numpy as jnp
import numpy as np
from jax.experimental import pallas as pl
from jax.experimental.pallas import tpu as pltpu


# ------------------------------------------------------------------ fused encoder kernel
def _fused_encoder_kernel(
    x_ref, pos_ref,
    inw_ref, inb_ref, outw_ref, outb_ref,
    l1w_ref, l1b_ref, l2w_ref, l2b_ref,
    ln1g_ref, ln1b_ref, ln2g_ref, ln2b_ref,
    o_ref, tok_ref, attn_ref,
    *, L, nhead, eps,
):
    layer = pl.program_id(1)
    E, M = tok_ref.shape                 # feature-major token slab: (E, L*tn), f32
    tn = M // L
    hd = E // nhead

    # ---- first layer of this spatial chunk: build the token slab in VMEM ------------
    # Fuses nn.Flatten(2) + pos-add + permute(0,2,1): tok[:, l*tn + n] = x[l, :, n] + pos[:, n]
    @pl.when(layer == 0)
    def _():
        pos = pos_ref[0]                                  # (E, tn)
        for l in range(L):
            tok_ref[:, l * tn:(l + 1) * tn] = x_ref[l] + pos

    tok = tok_ref[...]                                    # (E, M) f32

    # ---- self-attention block (post-norm, batch_first=False semantics) --------------
    # bf16 operands on the MXU, f32 accumulation.  Q is pre-scaled (folded into in_proj).
    qkv = (jnp.dot(inw_ref[...], tok.astype(jnp.bfloat16),
                   preferred_element_type=jnp.float32)
           + inb_ref[...])                                # (3E, M) f32
    q = qkv[0:E, :].reshape(nhead, hd, M)                 # heads on leading dim (sublane groups)
    k = qkv[E:2 * E, :].reshape(nhead, hd, M)
    v = qkv[2 * E:3 * E, :].reshape(nhead, hd, M)

    for lq in range(L):                                   # L = image batch B: tiny, static
        ql = q[:, :, lq * tn:(lq + 1) * tn]               # (nhead, hd, tn), already scaled
        # scores over the seq axis: sublane reduction, all heads & tn lanes at once
        scores = [
            jnp.sum(ql * k[:, :, lk * tn:(lk + 1) * tn], axis=1, keepdims=True)
            for lk in range(L)
        ]                                                 # L x (nhead, 1, tn)
        m = scores[0]
        for lk in range(1, L):
            m = jnp.maximum(m, scores[lk])
        p = jnp.exp(scores[0] - m)
        den = p
        num = p * v[:, :, 0:tn]
        for lk in range(1, L):
            p = jnp.exp(scores[lk] - m)
            den = den + p
            num = num + p * v[:, :, lk * tn:(lk + 1) * tn]
        inv = 1.0 / den
        # tn-aligned, unmasked lane store into the attention slab (no concat copy).
        attn_ref[:, lq * tn:(lq + 1) * tn] = (
            (num * inv).reshape(E, tn).astype(jnp.bfloat16))

    sa = (jnp.dot(outw_ref[...], attn_ref[...],
                  preferred_element_type=jnp.float32)
          + outb_ref[...])                                # (E, M) f32

    # residual + LayerNorm over the feature (sublane) axis — fused mean / E[x^2] stats
    y = tok + sa
    mu = jnp.mean(y, axis=0, keepdims=True)
    var = jnp.maximum(jnp.mean(y * y, axis=0, keepdims=True) - mu * mu, 0.0)
    x1 = (y - mu) * jax.lax.rsqrt(var + eps) * ln1g_ref[...] + ln1b_ref[...]

    # ---- feed-forward block ----------------------------------------------------------
    h = (jnp.dot(l1w_ref[...], x1.astype(jnp.bfloat16),
                 preferred_element_type=jnp.float32)
         + l1b_ref[...])                                  # (FF, M) f32
    h = 0.5 * h * (1.0 + jax.lax.erf(h * (1.0 / math.sqrt(2.0))))   # exact GELU (PyTorch)
    h = (jnp.dot(l2w_ref[...], h.astype(jnp.bfloat16),
                 preferred_element_type=jnp.float32)
         + l2b_ref[...])                                  # (E, M) f32

    y2 = x1 + h
    mu2 = jnp.mean(y2, axis=0, keepdims=True)
    var2 = jnp.maximum(jnp.mean(y2 * y2, axis=0, keepdims=True) - mu2 * mu2, 0.0)
    out_tok = (y2 - mu2) * jax.lax.rsqrt(var2 + eps) * ln2g_ref[...] + ln2b_ref[...]

    tok_ref[...] = out_tok                                # carry to the next layer (VMEM only)

    # ---- last layer: write back in the original (B, C, HW) layout --------------------
    @pl.when(layer == pl.num_programs(1) - 1)
    def _():
        for l in range(L):
            o_ref[l] = out_tok[:, l * tn:(l + 1) * tn].astype(o_ref.dtype)


# ------------------------------------------------------------------ VMEM / chunking model
def _vmem_capacity_bytes():
    try:
        return int(pltpu.get_tpu_info().vmem_capacity_bytes)
    except Exception:
        return 64 << 20          # conservative (v7x per-TC)


def _num_tensorcores():
    try:
        kind = jax.devices()[0].device_kind.lower()
        if "v7" in kind:
            return 2
    except Exception:
        pass
    return 1


def _vmem_estimate_bytes(E, FF, B, tn):
    """Rough per-grid-step VMEM footprint for the fused kernel."""
    M = B * tn
    f32, bf16 = 4, 2
    tok = E * M * f32                                # resident token slab
    attn = E * M * bf16                              # attention result slab
    qkv = 3 * E * M * f32                            # qkv activation
    h = FF * M * f32                                 # feed-forward hidden
    io = 2 * (B * E * tn * f32) * 2 + (E * tn * f32) * 2   # x + out (2-buf) + pos (2-buf)
    wmat = (3 * E * E + E * E + 2 * FF * E) * bf16
    wvec = (3 * E + E + FF + E + 4 * E) * f32
    weights = 2 * (wmat + wvec)                      # double-buffered over the layer axis
    temps = qkv + h                                  # temporaries / relayout headroom
    return tok + attn + qkv + h + io + weights + temps


def _choose_tn(HW, E, FF, B, cap, want_chunks):
    budget = 0.7 * cap
    cands = sorted([d for d in range(128, HW + 1, 128) if HW % d == 0], reverse=True)
    if not cands:
        return HW                                    # masked-store fallback (non-128 spatial)
    for tn in cands:
        if HW // tn >= want_chunks and _vmem_estimate_bytes(E, FF, B, tn) <= budget:
            return tn
    for tn in cands:
        if _vmem_estimate_bytes(E, FF, B, tn) <= budget:
            return tn
    return cands[-1]


# ------------------------------------------------------------------ host wrapper
def transformer_bottleneck_forward(x, kparams, nhead):
    B, C, H, W = x.shape
    HW = H * W
    assert kparams["pos"].shape[-1] == HW, "pos_embedding is hard-coded to 32*32 positions"
    assert C % nhead == 0
    hd = C // nhead
    assert hd % 8 == 0, "head_dim must be a multiple of the f32 sublane packing (8)"
    num_layers = kparams["in_proj_w"].shape[0]
    FF = kparams["lin1_w"].shape[1]

    cap = _vmem_capacity_bytes()
    tn = _choose_tn(HW, C, FF, B, cap, _num_tensorcores())
    n_chunks = HW // tn if HW % tn == 0 else 1

    vmem_limit = int(min(cap, max(32 << 20,
                                  1.3 * _vmem_estimate_bytes(C, FF, B, tn) + (4 << 20))))

    x_flat = x.reshape(B, C, HW)
    kernel = functools.partial(_fused_encoder_kernel, L=B, nhead=nhead, eps=1e-5)

    def wspec(shape):
        nd = len(shape)
        return pl.BlockSpec((None,) + tuple(shape), lambda n, l, _nd=nd: (l,) + (0,) * _nd)

    out = pl.pallas_call(
        kernel,
        out_shape=jax.ShapeDtypeStruct((B, C, HW), x.dtype),
        grid=(n_chunks, num_layers),
        in_specs=[
            pl.BlockSpec((B, C, tn), lambda n, l: (0, 0, n)),   # x (read once per chunk)
            pl.BlockSpec((1, C, tn), lambda n, l: (0, 0, n)),   # pos_embedding
            wspec(kparams["in_proj_w"].shape[1:]),
            wspec(kparams["in_proj_b"].shape[1:]),
            wspec(kparams["out_proj_w"].shape[1:]),
            wspec(kparams["out_proj_b"].shape[1:]),
            wspec(kparams["lin1_w"].shape[1:]),
            wspec(kparams["lin1_b"].shape[1:]),
            wspec(kparams["lin2_w"].shape[1:]),
            wspec(kparams["lin2_b"].shape[1:]),
            wspec(kparams["ln1_w"].shape[1:]),
            wspec(kparams["ln1_b"].shape[1:]),
            wspec(kparams["ln2_w"].shape[1:]),
            wspec(kparams["ln2_b"].shape[1:]),
        ],
        out_specs=pl.BlockSpec((B, C, tn), lambda n, l: (0, 0, n)),
        scratch_shapes=[
            pltpu.VMEM((C, B * tn), jnp.float32),     # layer-resident token slab
            pltpu.VMEM((C, B * tn), jnp.bfloat16),    # attention output slab (out-proj input)
        ],
        compiler_params=pltpu.CompilerParams(
            dimension_semantics=("parallel", "arbitrary"),
            vmem_limit_bytes=vmem_limit,
        ),
    )(
        x_flat, kparams["pos"],
        kparams["in_proj_w"], kparams["in_proj_b"],
        kparams["out_proj_w"], kparams["out_proj_b"],
        kparams["lin1_w"], kparams["lin1_b"],
        kparams["lin2_w"], kparams["lin2_b"],
        kparams["ln1_w"], kparams["ln1_b"],
        kparams["ln2_w"], kparams["ln2_b"],
    )
    return out.reshape(B, C, H, W)


# ------------------------------------------------------------------ deterministic parameter init
# Master (f32, PyTorch (out_features, in_features) layout) weights, stacked over layers.
def init_params(key, embed_dim, num_heads, num_layers, dim_feedforward):
    del num_heads  # shapes do not depend on head count
    E, FF = embed_dim, dim_feedforward
    keys = jax.random.split(key, 1 + num_layers)
    pos = 0.02 * jax.random.truncated_normal(
        keys[0], -2.0, 2.0, (1, E, 32 * 32), jnp.float32)
    s = 0.02

    def w(i, j, shape):
        return s * jax.random.normal(jax.random.fold_in(keys[1 + i], j), shape, jnp.float32)

    def stack(fn):
        return jnp.stack([fn(i) for i in range(num_layers)], axis=0)

    return dict(
        pos=pos,
        in_proj_w=stack(lambda i: w(i, 0, (3 * E, E))),
        in_proj_b=stack(lambda i: w(i, 10, (3 * E, 1))),
        out_proj_w=stack(lambda i: w(i, 1, (E, E))),
        out_proj_b=stack(lambda i: w(i, 11, (E, 1))),
        lin1_w=stack(lambda i: w(i, 2, (FF, E))),
        lin1_b=stack(lambda i: w(i, 12, (FF, 1))),
        lin2_w=stack(lambda i: w(i, 3, (E, FF))),
        lin2_b=stack(lambda i: w(i, 13, (E, 1))),
        ln1_w=jnp.ones((num_layers, E, 1), jnp.float32),
        ln1_b=jnp.zeros((num_layers, E, 1), jnp.float32),
        ln2_w=jnp.ones((num_layers, E, 1), jnp.float32),
        ln2_b=jnp.zeros((num_layers, E, 1), jnp.float32),
    )


# One-time static parameter prep for the kernel:
#   * fold 1/sqrt(hd) into the Q rows of in_proj (weight AND bias),
#   * cast the weight matrices to bf16 (halves weight DMA + VMEM; MXU native rate),
#   * keep biases / LN params / pos in f32 (added to f32 accumulators).
def prepare_kernel_params(params, nhead):
    E = params["in_proj_w"].shape[-1]
    hd = E // nhead
    scale = 1.0 / math.sqrt(hd)
    row_scale = jnp.concatenate(
        [jnp.full((E, 1), scale, jnp.float32), jnp.ones((2 * E, 1), jnp.float32)], axis=0)
    in_w = params["in_proj_w"] * row_scale[None]
    in_b = params["in_proj_b"] * row_scale[None]
    return dict(
        pos=params["pos"],
        in_proj_w=in_w.astype(jnp.bfloat16),
        in_proj_b=in_b,
        out_proj_w=params["out_proj_w"].astype(jnp.bfloat16),
        out_proj_b=params["out_proj_b"],
        lin1_w=params["lin1_w"].astype(jnp.bfloat16),
        lin1_b=params["lin1_b"],
        lin2_w=params["lin2_w"].astype(jnp.bfloat16),
        lin2_b=params["lin2_b"],
        ln1_w=params["ln1_w"], ln1_b=params["ln1_b"],
        ln2_w=params["ln2_w"], ln2_b=params["ln2_b"],
    )


# ------------------------------------------------------------------ pure-JAX reference (f32)
def _layer_norm_ref(y, g, b, eps=1e-5):
    mu = jnp.mean(y, axis=-1, keepdims=True)
    c = y - mu
    var = jnp.mean(c * c, axis=-1, keepdims=True)
    return c * jax.lax.rsqrt(var + eps) * g + b


def reference_forward(x, params, nhead):
    B, C, H, W = x.shape
    HW = H * W
    E = C
    hd = E // nhead
    t = x.reshape(B, C, HW) + params["pos"]
    t = jnp.transpose(t, (0, 2, 1))            # (seq=B, batch=HW, embed=E)  [batch_first=False]
    L, N, _ = t.shape
    for i in range(params["in_proj_w"].shape[0]):
        qkv = jnp.einsum("lne,fe->lnf", t, params["in_proj_w"][i]) + params["in_proj_b"][i, :, 0]
        q, k, v = qkv[..., :E], qkv[..., E:2 * E], qkv[..., 2 * E:]
        qh = q.reshape(L, N, nhead, hd)
        kh = k.reshape(L, N, nhead, hd)
        vh = v.reshape(L, N, nhead, hd)
        s = jnp.einsum("lnhd,mnhd->nhlm", qh, kh) / math.sqrt(hd)
        p = jax.nn.softmax(s, axis=-1)
        o = jnp.einsum("nhlm,mnhd->lnhd", p, vh).reshape(L, N, E)
        o = jnp.einsum("lne,fe->lnf", o, params["out_proj_w"][i]) + params["out_proj_b"][i, :, 0]
        t = _layer_norm_ref(t + o, params["ln1_w"][i, :, 0], params["ln1_b"][i, :, 0])
        h1 = jnp.einsum("lne,fe->lnf", t, params["lin1_w"][i]) + params["lin1_b"][i, :, 0]
        h1 = 0.5 * h1 * (1.0 + jax.lax.erf(h1 * (1.0 / math.sqrt(2.0))))
        h2 = jnp.einsum("lnf,ef->lne", h1, params["lin2_w"][i]) + params["lin2_b"][i, :, 0]
        t = _layer_norm_ref(t + h2, params["ln2_w"][i, :, 0], params["ln2_b"][i, :, 0])
    return jnp.transpose(t, (0, 2, 1)).reshape(B, C, H, W)


if __name__ == "__main__":
    # Small config consistent with the module: C == embed_dim, spatial must be 32x32
    # (the pos_embedding is hard-coded to 32*32 positions).
    embed_dim = 32
    num_heads = 4
    num_layers = 2
    dim_feedforward = 64
    B, H, W = 2, 32, 32

    key = jax.random.PRNGKey(0)
    pkey, xkey = jax.random.split(key)
    params = init_params(pkey, embed_dim, num_heads, num_layers, dim_feedforward)
    kparams = prepare_kernel_params(params, num_heads)
    x = jax.random.normal(xkey, (B, embed_dim, H, W), jnp.float32)

    fwd = jax.jit(functools.partial(transformer_bottleneck_forward, nhead=num_heads))
    out = fwd(x, kparams)
    jax.block_until_ready(out)
    assert out.shape == (B, embed_dim, H, W)
    assert out.dtype == jnp.float32

    ref = reference_forward(x, params, num_heads)
    np.testing.assert_allclose(np.asarray(out), np.asarray(ref), rtol=2e-2, atol=2e-2)

    print("KERNEL_OK")
</pallas_src>

<mosaic_0001>
module attributes {stable_mosaic.version = 11 : i64} {
  func.func @_fused_encoder_kernel(%arg0: i32, %arg1: i32, %arg2: memref<2x32x1024xf32, #tpu.memory_space<vmem>>, %arg3: memref<1x32x1024xf32, #tpu.memory_space<vmem>>, %arg4: memref<1x96x32xbf16, #tpu.memory_space<vmem>>, %arg5: memref<1x96x1xf32, #tpu.memory_space<vmem>>, %arg6: memref<1x32x32xbf16, #tpu.memory_space<vmem>>, %arg7: memref<1x32x1xf32, #tpu.memory_space<vmem>>, %arg8: memref<1x64x32xbf16, #tpu.memory_space<vmem>>, %arg9: memref<1x64x1xf32, #tpu.memory_space<vmem>>, %arg10: memref<1x32x64xbf16, #tpu.memory_space<vmem>>, %arg11: memref<1x32x1xf32, #tpu.memory_space<vmem>>, %arg12: memref<1x32x1xf32, #tpu.memory_space<vmem>>, %arg13: memref<1x32x1xf32, #tpu.memory_space<vmem>>, %arg14: memref<1x32x1xf32, #tpu.memory_space<vmem>>, %arg15: memref<1x32x1xf32, #tpu.memory_space<vmem>>, %arg16: memref<2x32x1024xf32, #tpu.memory_space<vmem>>, %arg17: memref<32x2048xf32, #tpu.memory_space<vmem>>, %arg18: memref<32x2048xbf16, #tpu.memory_space<vmem>>) attributes {dimension_semantics = [#tpu.dimension_semantics<parallel>, #tpu.dimension_semantics<arbitrary>], iteration_bounds = array<i64: 1, 2>, scalar_prefetch = 0 : i64, scratch_operands = 2 : i64, tpu.core_type = #tpu.core_type<tc>, window_params = [{transform_indices = @transform_0, window_bounds = array<i64: 2, 32, 1024>}, {transform_indices = @transform_1, window_bounds = array<i64: 1, 32, 1024>}, {transform_indices = @transform_2, window_bounds = array<i64: 1, 96, 32>}, {transform_indices = @transform_3, window_bounds = array<i64: 1, 96, 1>}, {transform_indices = @transform_4, window_bounds = array<i64: 1, 32, 32>}, {transform_indices = @transform_5, window_bounds = array<i64: 1, 32, 1>}, {transform_indices = @transform_6, window_bounds = array<i64: 1, 64, 32>}, {transform_indices = @transform_7, window_bounds = array<i64: 1, 64, 1>}, {transform_indices = @transform_8, window_bounds = array<i64: 1, 32, 64>}, {transform_indices = @transform_9, window_bounds = array<i64: 1, 32, 1>}, {transform_indices = @transform_10, window_bounds = array<i64: 1, 32, 1>}, {transform_indices = @transform_11, window_bounds = array<i64: 1, 32, 1>}, {transform_indices = @transform_12, window_bounds = array<i64: 1, 32, 1>}, {transform_indices = @transform_13, window_bounds = array<i64: 1, 32, 1>}, {transform_indices = @transform_14, window_bounds = array<i64: 2, 32, 1024>}]} {
    %c0_i32 = arith.constant 0 : i32
    %0 = arith.cmpi eq, %arg1, %c0_i32 : i32
    %1 = arith.extui %0 : i1 to i32
    %c0_i32_0 = arith.constant 0 : i32
    %2 = arith.cmpi ne, %1, %c0_i32_0 : i32
    scf.if %2 {
      %c0_70 = arith.constant 0 : index
      %c0_71 = arith.constant 0 : index
      %c0_72 = arith.constant 0 : index
      %170 = vector.load %arg3[%c0_70, %c0_71, %c0_72] : memref<1x32x1024xf32, #tpu.memory_space<vmem>>, vector<1x32x1024xf32>
      %171 = vector.shape_cast %170 : vector<1x32x1024xf32> to vector<32x1024xf32>
      %c0_73 = arith.constant 0 : index
      %c0_74 = arith.constant 0 : index
      %c0_75 = arith.constant 0 : index
      %172 = vector.load %arg2[%c0_73, %c0_74, %c0_75] : memref<2x32x1024xf32, #tpu.memory_space<vmem>>, vector<1x32x1024xf32>
      %173 = vector.shape_cast %172 : vector<1x32x1024xf32> to vector<32x1024xf32>
      %174 = arith.addf %173, %171 : vector<32x1024xf32>
      %c0_76 = arith.constant 0 : index
      %c0_77 = arith.constant 0 : index
      %175 = vector.load %arg17[%c0_76, %c0_77] : memref<32x2048xf32, #tpu.memory_space<vmem>>, vector<32x1024xf32>
      tpu.vector_store %arg17[%c0_76, %c0_77], %174 {strides = array<i32>} : memref<32x2048xf32, #tpu.memory_space<vmem>>, vector<32x1024xf32>,
      %c1 = arith.constant 1 : index
      %c0_78 = arith.constant 0 : index
      %c0_79 = arith.constant 0 : index
      %176 = vector.load %arg2[%c1, %c0_78, %c0_79] : memref<2x32x1024xf32, #tpu.memory_space<vmem>>, vector<1x32x1024xf32>
      %177 = vector.shape_cast %176 : vector<1x32x1024xf32> to vector<32x1024xf32>
      %178 = arith.addf %177, %171 : vector<32x1024xf32>
      %c0_80 = arith.constant 0 : index
      %c1024_81 = arith.constant 1024 : index
      %179 = vector.load %arg17[%c0_80, %c1024_81] : memref<32x2048xf32, #tpu.memory_space<vmem>>, vector<32x1024xf32>
      tpu.vector_store %arg17[%c0_80, %c1024_81], %178 {strides = array<i32>} : memref<32x2048xf32, #tpu.memory_space<vmem>>, vector<32x1024xf32>,
    } else {
    }
    %c0 = arith.constant 0 : index
    %c0_1 = arith.constant 0 : index
    %3 = vector.load %arg17[%c0, %c0_1] : memref<32x2048xf32, #tpu.memory_space<vmem>>, vector<32x2048xf32>
    %c0_2 = arith.constant 0 : index
    %c0_3 = arith.constant 0 : index
    %c0_4 = arith.constant 0 : index
    %4 = vector.load %arg4[%c0_2, %c0_3, %c0_4] : memref<1x96x32xbf16, #tpu.memory_space<vmem>>, vector<1x96x32xbf16>
    %5 = vector.shape_cast %4 : vector<1x96x32xbf16> to vector<96x32xbf16>
    %6 = arith.truncf %3 : vector<32x2048xf32> to vector<32x2048xbf16>
    %cst = arith.constant dense<0.000000e+00> : vector<96x2048xf32>
    %7 = tpu.matmul %5, %6, %cst {dimension_numbers = #tpu.dot_dimension_numbers<[1], [0], [0], [1], [0, 0, 1, 1], [], []>} : vector<96x32xbf16>, vector<32x2048xbf16>, vector<96x2048xf32> -> vector<96x2048xf32>
    %c0_5 = arith.constant 0 : index
    %c0_6 = arith.constant 0 : index
    %c0_7 = arith.constant 0 : index
    %8 = vector.load %arg5[%c0_5, %c0_6, %c0_7] : memref<1x96x1xf32, #tpu.memory_space<vmem>>, vector<1x96x1xf32>
    %9 = vector.shape_cast %8 : vector<1x96x1xf32> to vector<96x1xf32>
    %10 = vector.broadcast %9 : vector<96x1xf32> to vector<96x2048xf32>
    %11 = arith.addf %7, %10 : vector<96x2048xf32>
    %12 = vector.extract_strided_slice %11 {offsets = [0, 0], sizes = [32, 2048], strides = [1, 1]} : vector<96x2048xf32> to vector<32x2048xf32>
    %13 = vector.shape_cast %12 : vector<32x2048xf32> to vector<4x8x2048xf32>
    %14 = vector.extract_strided_slice %11 {offsets = [32, 0], sizes = [32, 2048], strides = [1, 1]} : vector<96x2048xf32> to vector<32x2048xf32>
    %15 = vector.shape_cast %14 : vector<32x2048xf32> to vector<4x8x2048xf32>
    %16 = vector.extract_strided_slice %11 {offsets = [64, 0], sizes = [32, 2048], strides = [1, 1]} : vector<96x2048xf32> to vector<32x2048xf32>
    %17 = vector.shape_cast %16 : vector<32x2048xf32> to vector<4x8x2048xf32>
    %18 = vector.extract_strided_slice %13 {offsets = [0, 0, 0], sizes = [4, 8, 1024], strides = [1, 1, 1]} : vector<4x8x2048xf32> to vector<4x8x1024xf32>
    %19 = vector.extract_strided_slice %15 {offsets = [0, 0, 0], sizes = [4, 8, 1024], strides = [1, 1, 1]} : vector<4x8x2048xf32> to vector<4x8x1024xf32>
    %20 = arith.mulf %18, %19 : vector<4x8x1024xf32>
    %cst_8 = arith.constant dense<0.000000e+00> : vector<4x1024xf32>
    %21 = vector.multi_reduction <add>, %20, %cst_8 [1] : vector<4x8x1024xf32> to vector<4x1024xf32>
    %22 = vector.shape_cast %21 : vector<4x1024xf32> to vector<4x1x1024xf32>
    %23 = vector.extract_strided_slice %15 {offsets = [0, 0, 1024], sizes = [4, 8, 1024], strides = [1, 1, 1]} : vector<4x8x2048xf32> to vector<4x8x1024xf32>
    %24 = arith.mulf %18, %23 : vector<4x8x1024xf32>
    %cst_9 = arith.constant dense<0.000000e+00> : vector<4x1024xf32>
    %25 = vector.multi_reduction <add>, %24, %cst_9 [1] : vector<4x8x1024xf32> to vector<4x1024xf32>
    %26 = vector.shape_cast %25 : vector<4x1024xf32> to vector<4x1x1024xf32>
    %27 = arith.maximumf %22, %26 : vector<4x1x1024xf32>
    %28 = arith.subf %22, %27 : vector<4x1x1024xf32>
    %29 = math.exp %28 : vector<4x1x1024xf32>
    %30 = vector.extract_strided_slice %17 {offsets = [0, 0, 0], sizes = [4, 8, 1024], strides = [1, 1, 1]} : vector<4x8x2048xf32> to vector<4x8x1024xf32>
    %31 = vector.broadcast %29 : vector<4x1x1024xf32> to vector<4x8x1024xf32>
    %32 = arith.mulf %31, %30 : vector<4x8x1024xf32>
    %33 = arith.subf %26, %27 : vector<4x1x1024xf32>
    %34 = math.exp %33 : vector<4x1x1024xf32>
    %35 = arith.addf %29, %34 : vector<4x1x1024xf32>
    %36 = vector.extract_strided_slice %17 {offsets = [0, 0, 1024], sizes = [4, 8, 1024], strides = [1, 1, 1]} : vector<4x8x2048xf32> to vector<4x8x1024xf32>
    %37 = vector.broadcast %34 : vector<4x1x1024xf32> to vector<4x8x1024xf32>
    %38 = arith.mulf %37, %36 : vector<4x8x1024xf32>
    %39 = arith.addf %32, %38 : vector<4x8x1024xf32>
    %cst_10 = arith.constant 1.000000e+00 : f32
    %40 = vector.broadcast %cst_10 : f32 to vector<4x1x1024xf32>
    %41 = arith.divf %40, %35 : vector<4x1x1024xf32>
    %42 = vector.broadcast %41 : vector<4x1x1024xf32> to vector<4x8x1024xf32>
    %43 = arith.mulf %39, %42 : vector<4x8x1024xf32>
    %44 = vector.shape_cast %43 : vector<4x8x1024xf32> to vector<32x1024xf32>
    %45 = arith.truncf %44 : vector<32x1024xf32> to vector<32x1024xbf16>
    %c0_11 = arith.constant 0 : index
    %c0_12 = arith.constant 0 : index
    %46 = vector.load %arg18[%c0_11, %c0_12] : memref<32x2048xbf16, #tpu.memory_space<vmem>>, vector<32x1024xbf16>
    tpu.vector_store %arg18[%c0_11, %c0_12], %45 {strides = array<i32>} : memref<32x2048xbf16, #tpu.memory_space<vmem>>, vector<32x1024xbf16>,
    %47 = vector.extract_strided_slice %13 {offsets = [0, 0, 1024], sizes = [4, 8, 1024], strides = [1, 1, 1]} : vector<4x8x2048xf32> to vector<4x8x1024xf32>
    %48 = vector.extract_strided_slice %15 {offsets = [0, 0, 0], sizes = [4, 8, 1024], strides = [1, 1, 1]} : vector<4x8x2048xf32> to vector<4x8x1024xf32>
    %49 = arith.mulf %47, %48 : vector<4x8x1024xf32>
    %cst_13 = arith.constant dense<0.000000e+00> : vector<4x1024xf32>
    %50 = vector.multi_reduction <add>, %49, %cst_13 [1] : vector<4x8x1024xf32> to vector<4x1024xf32>
    %51 = vector.shape_cast %50 : vector<4x1024xf32> to vector<4x1x1024xf32>
    %52 = vector.extract_strided_slice %15 {offsets = [0, 0, 1024], sizes = [4, 8, 1024], strides = [1, 1, 1]} : vector<4x8x2048xf32> to vector<4x8x1024xf32>
    %53 = arith.mulf %47, %52 : vector<4x8x1024xf32>
    %cst_14 = arith.constant dense<0.000000e+00> : vector<4x1024xf32>
    %54 = vector.multi_reduction <add>, %53, %cst_14 [1] : vector<4x8x1024xf32> to vector<4x1024xf32>
    %55 = vector.shape_cast %54 : vector<4x1024xf32> to vector<4x1x1024xf32>
    %56 = arith.maximumf %51, %55 : vector<4x1x1024xf32>
    %57 = arith.subf %51, %56 : vector<4x1x1024xf32>
    %58 = math.exp %57 : vector<4x1x1024xf32>
    %59 = vector.extract_strided_slice %17 {offsets = [0, 0, 0], sizes = [4, 8, 1024], strides = [1, 1, 1]} : vector<4x8x2048xf32> to vector<4x8x1024xf32>
    %60 = vector.broadcast %58 : vector<4x1x1024xf32> to vector<4x8x1024xf32>
    %61 = arith.mulf %60, %59 : vector<4x8x1024xf32>
    %62 = arith.subf %55, %56 : vector<4x1x1024xf32>
    %63 = math.exp %62 : vector<4x1x1024xf32>
    %64 = arith.addf %58, %63 : vector<4x1x1024xf32>
    %65 = vector.extract_strided_slice %17 {offsets = [0, 0, 1024], sizes = [4, 8, 1024], strides = [1, 1, 1]} : vector<4x8x2048xf32> to vector<4x8x1024xf32>
    %66 = vector.broadcast %63 : vector<4x1x1024xf32> to vector<4x8x1024xf32>
    %67 = arith.mulf %66, %65 : vector<4x8x1024xf32>
    %68 = arith.addf %61, %67 : vector<4x8x1024xf32>
    %cst_15 = arith.constant 1.000000e+00 : f32
    %69 = vector.broadcast %cst_15 : f32 to vector<4x1x1024xf32>
    %70 = arith.divf %69, %64 : vector<4x1x1024xf32>
    %71 = vector.broadcast %70 : vector<4x1x1024xf32> to vector<4x8x1024xf32>
    %72 = arith.mulf %68, %71 : vector<4x8x1024xf32>
    %73 = vector.shape_cast %72 : vector<4x8x1024xf32> to vector<32x1024xf32>
    %74 = arith.truncf %73 : vector<32x1024xf32> to vector<32x1024xbf16>
    %c0_16 = arith.constant 0 : index
    %c1024 = arith.constant 1024 : index
    %75 = vector.load %arg18[%c0_16, %c1024] : memref<32x2048xbf16, #tpu.memory_space<vmem>>, vector<32x1024xbf16>
    tpu.vector_store %arg18[%c0_16, %c1024], %74 {strides = array<i32>} : memref<32x2048xbf16, #tpu.memory_space<vmem>>, vector<32x1024xbf16>,
    %c0_17 = arith.constant 0 : index
    %c0_18 = arith.constant 0 : index
    %c0_19 = arith.constant 0 : index
    %76 = vector.load %arg6[%c0_17, %c0_18, %c0_19] : memref<1x32x32xbf16, #tpu.memory_space<vmem>>, vector<1x32x32xbf16>
    %77 = vector.shape_cast %76 : vector<1x32x32xbf16> to vector<32x32xbf16>
    %c0_20 = arith.constant 0 : index
    %c0_21 = arith.constant 0 : index
    %78 = vector.load %arg18[%c0_20, %c0_21] : memref<32x2048xbf16, #tpu.memory_space<vmem>>, vector<32x2048xbf16>
    %cst_22 = arith.constant dense<0.000000e+00> : vector<32x2048xf32>
    %79 = tpu.matmul %77, %78, %cst_22 {dimension_numbers = #tpu.dot_dimension_numbers<[1], [0], [0], [1], [0, 0, 1, 1], [], []>} : vector<32x32xbf16>, vector<32x2048xbf16>, vector<32x2048xf32> -> vector<32x2048xf32>
    %c0_23 = arith.constant 0 : index
    %c0_24 = arith.constant 0 : index
    %c0_25 = arith.constant 0 : index
    %80 = vector.load %arg7[%c0_23, %c0_24, %c0_25] : memref<1x32x1xf32, #tpu.memory_space<vmem>>, vector<1x32x1xf32>
    %81 = vector.shape_cast %80 : vector<1x32x1xf32> to vector<32x1xf32>
    %82 = vector.broadcast %81 : vector<32x1xf32> to vector<32x2048xf32>
    %83 = arith.addf %79, %82 : vector<32x2048xf32>
    %84 = arith.addf %3, %83 : vector<32x2048xf32>
    %cst_26 = arith.constant dense<0.000000e+00> : vector<2048xf32>
    %85 = vector.multi_reduction <add>, %84, %cst_26 [0] : vector<32x2048xf32> to vector<2048xf32>
    %86 = vector.shape_cast %85 : vector<2048xf32> to vector<1x2048xf32>
    %cst_27 = arith.constant 3.200000e+01 : f32
    %87 = vector.broadcast %cst_27 : f32 to vector<1x2048xf32>
    %88 = arith.divf %86, %87 : vector<1x2048xf32>
    %89 = arith.mulf %84, %84 : vector<32x2048xf32>
    %cst_28 = arith.constant dense<0.000000e+00> : vector<2048xf32>
    %90 = vector.multi_reduction <add>, %89, %cst_28 [0] : vector<32x2048xf32> to vector<2048xf32>
    %91 = vector.shape_cast %90 : vector<2048xf32> to vector<1x2048xf32>
    %cst_29 = arith.constant 3.200000e+01 : f32
    %92 = vector.broadcast %cst_29 : f32 to vector<1x2048xf32>
    %93 = arith.divf %91, %92 : vector<1x2048xf32>
    %94 = arith.mulf %88, %88 : vector<1x2048xf32>
    %95 = arith.subf %93, %94 : vector<1x2048xf32>
    %cst_30 = arith.constant 0.000000e+00 : f32
    %96 = vector.broadcast %cst_30 : f32 to vector<1x2048xf32>
    %97 = arith.maximumf %95, %96 : vector<1x2048xf32>
    %98 = vector.broadcast %88 : vector<1x2048xf32> to vector<32x2048xf32>
    %99 = arith.subf %84, %98 : vector<32x2048xf32>
    %cst_31 = arith.constant 9.99999974E-6 : f32
    %100 = vector.broadcast %cst_31 : f32 to vector<1x2048xf32>
    %101 = arith.addf %97, %100 : vector<1x2048xf32>
    %102 = math.rsqrt %101 : vector<1x2048xf32>
    %103 = vector.broadcast %102 : vector<1x2048xf32> to vector<32x2048xf32>
    %104 = arith.mulf %99, %103 : vector<32x2048xf32>
    %c0_32 = arith.constant 0 : index
    %c0_33 = arith.constant 0 : index
    %c0_34 = arith.constant 0 : index
    %105 = vector.load %arg12[%c0_32, %c0_33, %c0_34] : memref<1x32x1xf32, #tpu.memory_space<vmem>>, vector<1x32x1xf32>
    %106 = vector.shape_cast %105 : vector<1x32x1xf32> to vector<32x1xf32>
    %107 = vector.broadcast %106 : vector<32x1xf32> to vector<32x2048xf32>
    %108 = arith.mulf %104, %107 : vector<32x2048xf32>
    %c0_35 = arith.constant 0 : index
    %c0_36 = arith.constant 0 : index
    %c0_37 = arith.constant 0 : index
    %109 = vector.load %arg13[%c0_35, %c0_36, %c0_37] : memref<1x32x1xf32, #tpu.memory_space<vmem>>, vector<1x32x1xf32>
    %110 = vector.shape_cast %109 : vector<1x32x1xf32> to vector<32x1xf32>
    %111 = vector.broadcast %110 : vector<32x1xf32> to vector<32x2048xf32>
    %112 = arith.addf %108, %111 : vector<32x2048xf32>
    %c0_38 = arith.constant 0 : index
    %c0_39 = arith.constant 0 : index
    %c0_40 = arith.constant 0 : index
    %113 = vector.load %arg8[%c0_38, %c0_39, %c0_40] : memref<1x64x32xbf16, #tpu.memory_space<vmem>>, vector<1x64x32xbf16>
    %114 = vector.shape_cast %113 : vector<1x64x32xbf16> to vector<64x32xbf16>
    %115 = arith.truncf %112 : vector<32x2048xf32> to vector<32x2048xbf16>
    %cst_41 = arith.constant dense<0.000000e+00> : vector<64x2048xf32>
    %116 = tpu.matmul %114, %115, %cst_41 {dimension_numbers = #tpu.dot_dimension_numbers<[1], [0], [0], [1], [0, 0, 1, 1], [], []>} : vector<64x32xbf16>, vector<32x2048xbf16>, vector<64x2048xf32> -> vector<64x2048xf32>
    %c0_42 = arith.constant 0 : index
    %c0_43 = arith.constant 0 : index
    %c0_44 = arith.constant 0 : index
    %117 = vector.load %arg9[%c0_42, %c0_43, %c0_44] : memref<1x64x1xf32, #tpu.memory_space<vmem>>, vector<1x64x1xf32>
    %118 = vector.shape_cast %117 : vector<1x64x1xf32> to vector<64x1xf32>
    %119 = vector.broadcast %118 : vector<64x1xf32> to vector<64x2048xf32>
    %120 = arith.addf %116, %119 : vector<64x2048xf32>
    %cst_45 = arith.constant 5.000000e-01 : f32
    %121 = vector.broadcast %cst_45 : f32 to vector<64x2048xf32>
    %122 = arith.mulf %121, %120 : vector<64x2048xf32>
    %cst_46 = arith.constant 0.707106769 : f32
    %123 = vector.broadcast %cst_46 : f32 to vector<64x2048xf32>
    %124 = arith.mulf %120, %123 : vector<64x2048xf32>
    %125 = math.erf %124 : vector<64x2048xf32>
    %cst_47 = arith.constant 1.000000e+00 : f32
    %126 = vector.broadcast %cst_47 : f32 to vector<64x2048xf32>
    %127 = arith.addf %126, %125 : vector<64x2048xf32>
    %128 = arith.mulf %122, %127 : vector<64x2048xf32>
    %c0_48 = arith.constant 0 : index
    %c0_49 = arith.constant 0 : index
    %c0_50 = arith.constant 0 : index
    %129 = vector.load %arg10[%c0_48, %c0_49, %c0_50] : memref<1x32x64xbf16, #tpu.memory_space<vmem>>, vector<1x32x64xbf16>
    %130 = vector.shape_cast %129 : vector<1x32x64xbf16> to vector<32x64xbf16>
    %131 = arith.truncf %128 : vector<64x2048xf32> to vector<64x2048xbf16>
    %cst_51 = arith.constant dense<0.000000e+00> : vector<32x2048xf32>
    %132 = tpu.matmul %130, %131, %cst_51 {dimension_numbers = #tpu.dot_dimension_numbers<[1], [0], [0], [1], [0, 0, 1, 1], [], []>} : vector<32x64xbf16>, vector<64x2048xbf16>, vector<32x2048xf32> -> vector<32x2048xf32>
    %c0_52 = arith.constant 0 : index
    %c0_53 = arith.constant 0 : index
    %c0_54 = arith.constant 0 : index
    %133 = vector.load %arg11[%c0_52, %c0_53, %c0_54] : memref<1x32x1xf32, #tpu.memory_space<vmem>>, vector<1x32x1xf32>
    %134 = vector.shape_cast %133 : vector<1x32x1xf32> to vector<32x1xf32>
    %135 = vector.broadcast %134 : vector<32x1xf32> to vector<32x2048xf32>
    %136 = arith.addf %132, %135 : vector<32x2048xf32>
    %137 = arith.addf %112, %136 : vector<32x2048xf32>
    %cst_55 = arith.constant dense<0.000000e+00> : vector<2048xf32>
    %138 = vector.multi_reduction <add>, %137, %cst_55 [0] : vector<32x2048xf32> to vector<2048xf32>
    %139 = vector.shape_cast %138 : vector<2048xf32> to vector<1x2048xf32>
    %cst_56 = arith.constant 3.200000e+01 : f32
    %140 = vector.broadcast %cst_56 : f32 to vector<1x2048xf32>
    %141 = arith.divf %139, %140 : vector<1x2048xf32>
    %142 = arith.mulf %137, %137 : vector<32x2048xf32>
    %cst_57 = arith.constant dense<0.000000e+00> : vector<2048xf32>
    %143 = vector.multi_reduction <add>, %142, %cst_57 [0] : vector<32x2048xf32> to vector<2048xf32>
    %144 = vector.shape_cast %143 : vector<2048xf32> to vector<1x2048xf32>
    %cst_58 = arith.constant 3.200000e+01 : f32
    %145 = vector.broadcast %cst_58 : f32 to vector<1x2048xf32>
    %146 = arith.divf %144, %145 : vector<1x2048xf32>
    %147 = arith.mulf %141, %141 : vector<1x2048xf32>
    %148 = arith.subf %146, %147 : vector<1x2048xf32>
    %cst_59 = arith.constant 0.000000e+00 : f32
    %149 = vector.broadcast %cst_59 : f32 to vector<1x2048xf32>
    %150 = arith.maximumf %148, %149 : vector<1x2048xf32>
    %151 = vector.broadcast %141 : vector<1x2048xf32> to vector<32x2048xf32>
    %152 = arith.subf %137, %151 : vector<32x2048xf32>
    %cst_60 = arith.constant 9.99999974E-6 : f32
    %153 = vector.broadcast %cst_60 : f32 to vector<1x2048xf32>
    %154 = arith.addf %150, %153 : vector<1x2048xf32>
    %155 = math.rsqrt %154 : vector<1x2048xf32>
    %156 = vector.broadcast %155 : vector<1x2048xf32> to vector<32x2048xf32>
    %157 = arith.mulf %152, %156 : vector<32x2048xf32>
    %c0_61 = arith.constant 0 : index
    %c0_62 = arith.constant 0 : index
    %c0_63 = arith.constant 0 : index
    %158 = vector.load %arg14[%c0_61, %c0_62, %c0_63] : memref<1x32x1xf32, #tpu.memory_space<vmem>>, vector<1x32x1xf32>
    %159 = vector.shape_cast %158 : vector<1x32x1xf32> to vector<32x1xf32>
    %160 = vector.broadcast %159 : vector<32x1xf32> to vector<32x2048xf32>
    %161 = arith.mulf %157, %160 : vector<32x2048xf32>
    %c0_64 = arith.constant 0 : index
    %c0_65 = arith.constant 0 : index
    %c0_66 = arith.constant 0 : index
    %162 = vector.load %arg15[%c0_64, %c0_65, %c0_66] : memref<1x32x1xf32, #tpu.memory_space<vmem>>, vector<1x32x1xf32>
    %163 = vector.shape_cast %162 : vector<1x32x1xf32> to vector<32x1xf32>
    %164 = vector.broadcast %163 : vector<32x1xf32> to vector<32x2048xf32>
    %165 = arith.addf %161, %164 : vector<32x2048xf32>
    %c0_67 = arith.constant 0 : index
    %c0_68 = arith.constant 0 : index
    %166 = vector.load %arg17[%c0_67, %c0_68] : memref<32x2048xf32, #tpu.memory_space<vmem>>, vector<32x2048xf32>
    tpu.vector_store %arg17[%c0_67, %c0_68], %165 {strides = array<i32>} : memref<32x2048xf32, #tpu.memory_space<vmem>>, vector<32x2048xf32>,
    %c1_i32 = arith.constant 1 : i32
    %167 = arith.cmpi eq, %arg1, %c1_i32 : i32
    %168 = arith.extui %167 : i1 to i32
    %c0_i32_69 = arith.constant 0 : i32
    %169 = arith.cmpi ne, %168, %c0_i32_69 : i32
    scf.if %169 {
      %170 = vector.extract_strided_slice %165 {offsets = [0, 0], sizes = [32, 1024], strides = [1, 1]} : vector<32x2048xf32> to vector<32x1024xf32>
      %c0_70 = arith.constant 0 : index
      %c0_71 = arith.constant 0 : index
      %c0_72 = arith.constant 0 : index
      %171 = vector.load %arg16[%c0_70, %c0_71, %c0_72] : memref<2x32x1024xf32, #tpu.memory_space<vmem>>, vector<1x32x1024xf32>
      %172 = vector.shape_cast %171 : vector<1x32x1024xf32> to vector<32x1024xf32>
      %173 = vector.shape_cast %170 : vector<32x1024xf32> to vector<1x32x1024xf32>
      tpu.vector_store %arg16[%c0_70, %c0_71, %c0_72], %173 {strides = array<i32>} : memref<2x32x1024xf32, #tpu.memory_space<vmem>>, vector<1x32x1024xf32>,
      %174 = vector.extract_strided_slice %165 {offsets = [0, 1024], sizes = [32, 1024], strides = [1, 1]} : vector<32x2048xf32> to vector<32x1024xf32>
      %c1 = arith.constant 1 : index
      %c0_73 = arith.constant 0 : index
      %c0_74 = arith.constant 0 : index
      %175 = vector.load %arg16[%c1, %c0_73, %c0_74] : memref<2x32x1024xf32, #tpu.memory_space<vmem>>, vector<1x32x1024xf32>
      %176 = vector.shape_cast %175 : vector<1x32x1024xf32> to vector<32x1024xf32>
      %177 = vector.shape_cast %174 : vector<32x1024xf32> to vector<1x32x1024xf32>
      tpu.vector_store %arg16[%c1, %c0_73, %c0_74], %177 {strides = array<i32>} : memref<2x32x1024xf32, #tpu.memory_space<vmem>>, vector<1x32x1024xf32>,
    } else {
    }
    return
  }
  func.func @transform_0(%arg0: i32, %arg1: i32) -> (i32, i32, i32) {
    %c0_i32 = arith.constant 0 : i32
    %c0_i32_0 = arith.constant 0 : i32
    %c0_i32_1 = arith.constant 0 : i32
    return %c0_i32, %c0_i32_0, %arg0 : i32, i32, i32
  }
  func.func @transform_1(%arg0: i32, %arg1: i32) -> (i32, i32, i32) {
    %c0_i32 = arith.constant 0 : i32
    %c0_i32_0 = arith.constant 0 : i32
    %c0_i32_1 = arith.constant 0 : i32
    return %c0_i32, %c0_i32_0, %arg0 : i32, i32, i32
  }
  func.func @transform_2(%arg0: i32, %arg1: i32) -> (i32, i32, i32) {
    %c0_i32 = arith.constant 0 : i32
    %c0_i32_0 = arith.constant 0 : i32
    %c0_i32_1 = arith.constant 0 : i32
    return %arg1, %c0_i32, %c0_i32_0 : i32, i32, i32
  }
  func.func @transform_3(%arg0: i32, %arg1: i32) -> (i32, i32, i32) {
    %c0_i32 = arith.constant 0 : i32
    %c0_i32_0 = arith.constant 0 : i32
    %c0_i32_1 = arith.constant 0 : i32
    return %arg1, %c0_i32, %c0_i32_0 : i32, i32, i32
  }
  func.func @transform_4(%arg0: i32, %arg1: i32) -> (i32, i32, i32) {
    %c0_i32 = arith.constant 0 : i32
    %c0_i32_0 = arith.constant 0 : i32
    %c0_i32_1 = arith.constant 0 : i32
    return %arg1, %c0_i32, %c0_i32_0 : i32, i32, i32
  }
  func.func @transform_5(%arg0: i32, %arg1: i32) -> (i32, i32, i32) {
    %c0_i32 = arith.constant 0 : i32
    %c0_i32_0 = arith.constant 0 : i32
    %c0_i32_1 = arith.constant 0 : i32
    return %arg1, %c0_i32, %c0_i32_0 : i32, i32, i32
  }
  func.func @transform_6(%arg0: i32, %arg1: i32) -> (i32, i32, i32) {
    %c0_i32 = arith.constant 0 : i32
    %c0_i32_0 = arith.constant 0 : i32
    %c0_i32_1 = arith.constant 0 : i32
    return %arg1, %c0_i32, %c0_i32_0 : i32, i32, i32
  }
  func.func @transform_7(%arg0: i32, %arg1: i32) -> (i32, i32, i32) {
    %c0_i32 = arith.constant 0 : i32
    %c0_i32_0 = arith.constant 0 : i32
    %c0_i32_1 = arith.constant 0 : i32
    return %arg1, %c0_i32, %c0_i32_0 : i32, i32, i32
  }
  func.func @transform_8(%arg0: i32, %arg1: i32) -> (i32, i32, i32) {
    %c0_i32 = arith.constant 0 : i32
    %c0_i32_0 = arith.constant 0 : i32
    %c0_i32_1 = arith.constant 0 : i32
    return %arg1, %c0_i32, %c0_i32_0 : i32, i32, i32
  }
  func.func @transform_9(%arg0: i32, %arg1: i32) -> (i32, i32, i32) {
    %c0_i32 = arith.constant 0 : i32
    %c0_i32_0 = arith.constant 0 : i32
    %c0_i32_1 = arith.constant 0 : i32
    return %arg1, %c0_i32, %c0_i32_0 : i32, i32, i32
  }
  func.func @transform_10(%arg0: i32, %arg1: i32) -> (i32, i32, i32) {
    %c0_i32 = arith.constant 0 : i32
    %c0_i32_0 = arith.constant 0 : i32
    %c0_i32_1 = arith.constant 0 : i32
    return %arg1, %c0_i32, %c0_i32_0 : i32, i32, i32
  }
  func.func @transform_11(%arg0: i32, %arg1: i32) -> (i32, i32, i32) {
    %c0_i32 = arith.constant 0 : i32
    %c0_i32_0 = arith.constant 0 : i32
    %c0_i32_1 = arith.constant 0 : i32
    return %arg1, %c0_i32, %c0_i32_0 : i32, i32, i32
  }
  func.func @transform_12(%arg0: i32, %arg1: i32) -> (i32, i32, i32) {
    %c0_i32 = arith.constant 0 : i32
    %c0_i32_0 = arith.constant 0 : i32
    %c0_i32_1 = arith.constant 0 : i32
    return %arg1, %c0_i32, %c0_i32_0 : i32, i32, i32
  }
  func.func @transform_13(%arg0: i32, %arg1: i32) -> (i32, i32, i32) {
    %c0_i32 = arith.constant 0 : i32
    %c0_i32_0 = arith.constant 0 : i32
    %c0_i32_1 = arith.constant 0 : i32
    return %arg1, %c0_i32, %c0_i32_0 : i32, i32, i32
  }
  func.func @transform_14(%arg0: i32, %arg1: i32) -> (i32, i32, i32) {
    %c0_i32 = arith.constant 0 : i32
    %c0_i32_0 = arith.constant 0 : i32
    %c0_i32_1 = arith.constant 0 : i32
    return %c0_i32, %c0_i32_0, %arg0 : i32, i32, i32
  }
}

</mosaic_0001>

<llo_original>
// kernel: transformer_bottleneck_forward.1
$region0: #{transformer_bottleneck_forward.1}
  #allocation0 [shape = 'u32[]', space=smem, size = 0x4, offset = 0x4, fixed_abs, tag = 'smem constant byte address 0x4 - core index']
  #allocation1 [shape = 'u32[144,128]{1,0:T(1,128)}', space=vmem, size = 0x12000, scoped, tag = 'internal scratch']
  #allocation2 [shape = 'f32[32,2048]{1,0:T(8,128)}', space=vmem, size = 0x40000, scoped, tag = 'scratch operand']
  #allocation3 [shape = 'bf16[32,2048]{1,0:T(16,128)(2,1)}', space=vmem, size = 0x20000, scoped, tag = 'scratch operand']
  %s0 = inlined_call_operand.vmem [shape: f32[2,32,1024], index: 0, kind: input, shape index: {}]
  %s1 = inlined_call_operand.vmem [shape: f32[1,32,1024], index: 1, kind: input, shape index: {}]
  %s2 = inlined_call_operand.vmem [shape: bf16[2,96,32], index: 2, kind: input, shape index: {}]
  %s3 = inlined_call_operand.vmem [shape: f32[2,96,1], index: 3, kind: input, shape index: {}]
  %s4 = inlined_call_operand.vmem [shape: bf16[2,32,32], index: 4, kind: input, shape index: {}]
  %s5 = inlined_call_operand.vmem [shape: f32[2,32,1], index: 5, kind: input, shape index: {}]
  %s6 = inlined_call_operand.vmem [shape: bf16[2,64,32], index: 6, kind: input, shape index: {}]
  %s7 = inlined_call_operand.vmem [shape: f32[2,64,1], index: 7, kind: input, shape index: {}]
  %s8 = inlined_call_operand.vmem [shape: bf16[2,32,64], index: 8, kind: input, shape index: {}]
  %s9 = inlined_call_operand.vmem [shape: f32[2,32,1], index: 9, kind: input, shape index: {}]
  %s10 = inlined_call_operand.vmem [shape: f32[2,32,1], index: 10, kind: input, shape index: {}]
  %s11 = inlined_call_operand.vmem [shape: f32[2,32,1], index: 11, kind: input, shape index: {}]
  %s12 = inlined_call_operand.vmem [shape: f32[2,32,1], index: 12, kind: input, shape index: {}]
  %s13 = inlined_call_operand.vmem [shape: f32[2,32,1], index: 13, kind: input, shape index: {}]
  %s14 = inlined_call_operand.vmem [shape: f32[2,32,1024], index: 14, kind: output, shape index: {}]
  %s15 = sld [smem:[#allocation0]]
  $region97: #{transformer_bottleneck_forward.1} parent=0
    _
  %s17 = ssub.s32 1, %s15
  %s18 = scalar_select 0, %s17, %s15
  loop: start=0, step=1, limit=4
  $region2: #{transformer_bottleneck_forward.1} parent=0 // loop_pre_header
    _
  $region3: #{transformer_bottleneck_forward.1} parent=0 // loop_header
    %s20 = sphi 0, %s24
    %p21 = scmp.ge.s32.totalorder %s20, 4
    %s27 = sphi 0, %s39
    %s28 = sphi 0, %s35
    %s29 = sphi 0, %s27
    %s30 = sphi 0, %s28
    %s31 = sphi 0, %s29
    %s32 = sphi 0, %s30
    %s42 = sphi 0, %s44
    %s45 = sphi 0, %s42
    %s46 = sphi 0, %s45
    %s62 = sphi 0, %s46
    %s68 = sphi 0, %s70
    %s71 = sphi 0, %s68
    %s72 = sphi 0, %s71
    %s88 = sphi 0, %s72
    %s94 = sphi 0, %s96
    %s97 = sphi 0, %s94
    %s98 = sphi 0, %s97
    %s114 = sphi 0, %s98
    %s120 = sphi 0, %s122
    %s123 = sphi 0, %s120
    %s124 = sphi 0, %s123
    %s140 = sphi 0, %s124
    %s146 = sphi 0, %s148
    %s149 = sphi 0, %s146
    %s150 = sphi 0, %s149
    %s166 = sphi 0, %s150
    %s172 = sphi 0, %s174
    %s175 = sphi 0, %s172
    %s176 = sphi 0, %s175
    %s192 = sphi 0, %s176
    %s198 = sphi 0, %s200
    %s201 = sphi 0, %s198
    %s202 = sphi 0, %s201
    %s218 = sphi 0, %s202
    %s224 = sphi 0, %s226
    %s227 = sphi 0, %s224
    %s228 = sphi 0, %s227
    %s244 = sphi 0, %s228
    %s250 = sphi 0, %s252
    %s253 = sphi 0, %s250
    %s254 = sphi 0, %s253
    %s270 = sphi 0, %s254
    %s276 = sphi 0, %s278
    %s279 = sphi 0, %s276
    %s280 = sphi 0, %s279
    %s296 = sphi 0, %s280
    %s302 = sphi 0, %s304
    %s305 = sphi 0, %s302
    %s306 = sphi 0, %s305
    %s322 = sphi 0, %s306
    %s328 = sphi 0, %s330
    %s331 = sphi 0, %s328
    %s332 = sphi 0, %s331
    %s348 = sphi 0, %s332
    %s354 = sphi 0, %s356
    %s357 = sphi 0, %s354
    %s358 = sphi 0, %s357
    %s374 = sphi 0, %s358
    %s380 = sphi 0, %s382
    %s383 = sphi 0, %s380
    %s384 = sphi 0, %s383
    %s400 = sphi 0, %s384
    %s406 = sphi 0, %s408
    %s409 = sphi 0, %s406
    %s410 = sphi 0, %s409
    %s426 = sphi 0, %s410
  $region4: #{transformer_bottleneck_forward.1} parent=0 // loop_header_branch
    %23 = sbr.rel (%p21) target = $region8
  $region5: #{transformer_bottleneck_forward.1} parent=0 // loop_body
    %s25 = ssub.s32 %s20, 1
    %s26 = ssub.s32 %s20, 2
    %s33 = sadd.s32 1, %s28
    %p34 = scmp.ge.s32.totalorder %s33, 2
    %s35 = scalar_select %p34, 0, %s33
    %s36 = sadd.s32 1, %s27
    %s37 = scalar_select %p34, %s36, %s27
    %p38 = scmp.ge.s32.totalorder %s37, 1
    %s39 = scalar_select %p38, 0, %s37
    %s40 = ssub.s32 %s27, %s39
    %p41 = scmp.eq.s32.totalorder %s40, 0
    %s43 = sadd.s32 %s42, 1
    %s44 = scalar_select %p41, %s42, %s43
    %p47 = pneg %p41
    %p48 = scmp.eq.s32.totalorder %s20, 1
    %p49 = por %p47, %p48
    %p50 = scmp.ne.s32.totalorder %s42, %s45
    %p51 = scmp.eq.s32.totalorder %s20, 0
    %p52 = por %p50, %p51
    %p53 = scmp.ne.s32.totalorder %s42, %s45
    %p54 = scmp.eq.s32.totalorder %s25, 1
    %p55 = por %p53, %p54
    %p56 = scmp.ne.s32.totalorder %s45, %s46
    %p57 = scmp.eq.s32.totalorder %s25, 0
    %p58 = por %p56, %p57
    %p59 = scmp.ne.s32.totalorder %s45, %s46
    %p60 = scmp.eq.s32.totalorder %s26, 1
    %p61 = por %p59, %p60
    %p63 = scmp.ne.s32.totalorder %s46, %s62
    %p64 = scmp.eq.s32.totalorder %s26, 0
    %p65 = por %p63, %p64
    %s66 = ssub.s32 %s27, %s39
    %p67 = scmp.eq.s32.totalorder %s66, 0
    %s69 = sadd.s32 %s68, 1
    %s70 = scalar_select %p67, %s68, %s69
    %p73 = pneg %p67
    %p74 = scmp.eq.s32.totalorder %s20, 1
    %p75 = por %p73, %p74
    %p76 = scmp.ne.s32.totalorder %s68, %s71
    %p77 = scmp.eq.s32.totalorder %s20, 0
    %p78 = por %p76, %p77
    %p79 = scmp.ne.s32.totalorder %s68, %s71
    %p80 = scmp.eq.s32.totalorder %s25, 1
    %p81 = por %p79, %p80
    %p82 = scmp.ne.s32.totalorder %s71, %s72
    %p83 = scmp.eq.s32.totalorder %s25, 0
    %p84 = por %p82, %p83
    %p85 = scmp.ne.s32.totalorder %s71, %s72
    %p86 = scmp.eq.s32.totalorder %s26, 1
    %p87 = por %p85, %p86
    %p89 = scmp.ne.s32.totalorder %s72, %s88
    %p90 = scmp.eq.s32.totalorder %s26, 0
    %p91 = por %p89, %p90
    %s92 = ssub.s32 %s28, %s35
    %p93 = scmp.eq.s32.totalorder %s92, 0
    %s95 = sadd.s32 %s94, 1
    %s96 = scalar_select %p93, %s94, %s95
    %p99 = pneg %p93
    %p100 = scmp.eq.s32.totalorder %s20, 1
    %p101 = por %p99, %p100
    %p102 = scmp.ne.s32.totalorder %s94, %s97
    %p103 = scmp.eq.s32.totalorder %s20, 0
    %p104 = por %p102, %p103
    %p105 = scmp.ne.s32.totalorder %s94, %s97
    %p106 = scmp.eq.s32.totalorder %s25, 1
    %p107 = por %p105, %p106
    %p108 = scmp.ne.s32.totalorder %s97, %s98
    %p109 = scmp.eq.s32.totalorder %s25, 0
    %p110 = por %p108, %p109
    %p111 = scmp.ne.s32.totalorder %s97, %s98
    %p112 = scmp.eq.s32.totalorder %s26, 1
    %p113 = por %p111, %p112
    %p115 = scmp.ne.s32.totalorder %s98, %s114
    %p116 = scmp.eq.s32.totalorder %s26, 0
    %p117 = por %p115, %p116
    %s118 = ssub.s32 %s28, %s35
    %p119 = scmp.eq.s32.totalorder %s118, 0
    %s121 = sadd.s32 %s120, 1
    %s122 = scalar_select %p119, %s120, %s121
    %p125 = pneg %p119
    %p126 = scmp.eq.s32.totalorder %s20, 1
    %p127 = por %p125, %p126
    %p128 = scmp.ne.s32.totalorder %s120, %s123
    %p129 = scmp.eq.s32.totalorder %s20, 0
    %p130 = por %p128, %p129
    %p131 = scmp.ne.s32.totalorder %s120, %s123
    %p132 = scmp.eq.s32.totalorder %s25, 1
    %p133 = por %p131, %p132
    %p134 = scmp.ne.s32.totalorder %s123, %s124
    %p135 = scmp.eq.s32.totalorder %s25, 0
    %p136 = por %p134, %p135
    %p137 = scmp.ne.s32.totalorder %s123, %s124
    %p138 = scmp.eq.s32.totalorder %s26, 1
    %p139 = por %p137, %p138
    %p141 = scmp.ne.s32.totalorder %s124, %s140
    %p142 = scmp.eq.s32.totalorder %s26, 0
    %p143 = por %p141, %p142
    %s144 = ssub.s32 %s28, %s35
    %p145 = scmp.eq.s32.totalorder %s144, 0
    %s147 = sadd.s32 %s146, 1
    %s148 = scalar_select %p145, %s146, %s147
    %p151 = pneg %p145
    %p152 = scmp.eq.s32.totalorder %s20, 1
    %p153 = por %p151, %p152
    %p154 = scmp.ne.s32.totalorder %s146, %s149
    %p155 = scmp.eq.s32.totalorder %s20, 0
    %p156 = por %p154, %p155
    %p157 = scmp.ne.s32.totalorder %s146, %s149
    %p158 = scmp.eq.s32.totalorder %s25, 1
    %p159 = por %p157, %p158
    %p160 = scmp.ne.s32.totalorder %s149, %s150
    %p161 = scmp.eq.s32.totalorder %s25, 0
    %p162 = por %p160, %p161
    %p163 = scmp.ne.s32.totalorder %s149, %s150
    %p164 = scmp.eq.s32.totalorder %s26, 1
    %p165 = por %p163, %p164
    %p167 = scmp.ne.s32.totalorder %s150, %s166
    %p168 = scmp.eq.s32.totalorder %s26, 0
    %p169 = por %p167, %p168
    %s170 = ssub.s32 %s28, %s35
    %p171 = scmp.eq.s32.totalorder %s170, 0
    %s173 = sadd.s32 %s172, 1
    %s174 = scalar_select %p171, %s172, %s173
    %p177 = pneg %p171
    %p178 = scmp.eq.s32.totalorder %s20, 1
    %p179 = por %p177, %p178
    %p180 = scmp.ne.s32.totalorder %s172, %s175
    %p181 = scmp.eq.s32.totalorder %s20, 0
    %p182 = por %p180, %p181
    %p183 = scmp.ne.s32.totalorder %s172, %s175
    %p184 = scmp.eq.s32.totalorder %s25, 1
    %p185 = por %p183, %p184
    %p186 = scmp.ne.s32.totalorder %s175, %s176
    %p187 = scmp.eq.s32.totalorder %s25, 0
    %p188 = por %p186, %p187
    %p189 = scmp.ne.s32.totalorder %s175, %s176
    %p190 = scmp.eq.s32.totalorder %s26, 1
    %p191 = por %p189, %p190
    %p193 = scmp.ne.s32.totalorder %s176, %s192
    %p194 = scmp.eq.s32.totalorder %s26, 0
    %p195 = por %p193, %p194
    %s196 = ssub.s32 %s28, %s35
    %p197 = scmp.eq.s32.totalorder %s196, 0
    %s199 = sadd.s32 %s198, 1
    %s200 = scalar_select %p197, %s198, %s199
    %p203 = pneg %p197
    %p204 = scmp.eq.s32.totalorder %s20, 1
    %p205 = por %p203, %p204
    %p206 = scmp.ne.s32.totalorder %s198, %s201
    %p207 = scmp.eq.s32.totalorder %s20, 0
    %p208 = por %p206, %p207
    %p209 = scmp.ne.s32.totalorder %s198, %s201
    %p210 = scmp.eq.s32.totalorder %s25, 1
    %p211 = por %p209, %p210
    %p212 = scmp.ne.s32.totalorder %s201, %s202
    %p213 = scmp.eq.s32.totalorder %s25, 0
    %p214 = por %p212, %p213
    %p215 = scmp.ne.s32.totalorder %s201, %s202
    %p216 = scmp.eq.s32.totalorder %s26, 1
    %p217 = por %p215, %p216
    %p219 = scmp.ne.s32.totalorder %s202, %s218
    %p220 = scmp.eq.s32.totalorder %s26, 0
    %p221 = por %p219, %p220
    %s222 = ssub.s32 %s28, %s35
    %p223 = scmp.eq.s32.totalorder %s222, 0
    %s225 = sadd.s32 %s224, 1
    %s226 = scalar_select %p223, %s224, %s225
    %p229 = pneg %p223
    %p230 = scmp.eq.s32.totalorder %s20, 1
    %p231 = por %p229, %p230
    %p232 = scmp.ne.s32.totalorder %s224, %s227
    %p233 = scmp.eq.s32.totalorder %s20, 0
    %p234 = por %p232, %p233
    %p235 = scmp.ne.s32.totalorder %s224, %s227
    %p236 = scmp.eq.s32.totalorder %s25, 1
    %p237 = por %p235, %p236
    %p238 = scmp.ne.s32.totalorder %s227, %s228
    %p239 = scmp.eq.s32.totalorder %s25, 0
    %p240 = por %p238, %p239
    %p241 = scmp.ne.s32.totalorder %s227, %s228
    %p242 = scmp.eq.s32.totalorder %s26, 1
    %p243 = por %p241, %p242
    %p245 = scmp.ne.s32.totalorder %s228, %s244
    %p246 = scmp.eq.s32.totalorder %s26, 0
    %p247 = por %p245, %p246
    %s248 = ssub.s32 %s28, %s35
    %p249 = scmp.eq.s32.totalorder %s248, 0
    %s251 = sadd.s32 %s250, 1
    %s252 = scalar_select %p249, %s250, %s251
    %p255 = pneg %p249
    %p256 = scmp.eq.s32.totalorder %s20, 1
    %p257 = por %p255, %p256
    %p258 = scmp.ne.s32.totalorder %s250, %s253
    %p259 = scmp.eq.s32.totalorder %s20, 0
    %p260 = por %p258, %p259
    %p261 = scmp.ne.s32.totalorder %s250, %s253
    %p262 = scmp.eq.s32.totalorder %s25, 1
    %p263 = por %p261, %p262
    %p264 = scmp.ne.s32.totalorder %s253, %s254
    %p265 = scmp.eq.s32.totalorder %s25, 0
    %p266 = por %p264, %p265
    %p267 = scmp.ne.s32.totalorder %s253, %s254
    %p268 = scmp.eq.s32.totalorder %s26, 1
    %p269 = por %p267, %p268
    %p271 = scmp.ne.s32.totalorder %s254, %s270
    %p272 = scmp.eq.s32.totalorder %s26, 0
    %p273 = por %p271, %p272
    %s274 = ssub.s32 %s28, %s35
    %p275 = scmp.eq.s32.totalorder %s274, 0
    %s277 = sadd.s32 %s276, 1
    %s278 = scalar_select %p275, %s276, %s277
    %p281 = pneg %p275
    %p282 = scmp.eq.s32.totalorder %s20, 1
    %p283 = por %p281, %p282
    %p284 = scmp.ne.s32.totalorder %s276, %s279
    %p285 = scmp.eq.s32.totalorder %s20, 0
    %p286 = por %p284, %p285
    %p287 = scmp.ne.s32.totalorder %s276, %s279
    %p288 = scmp.eq.s32.totalorder %s25, 1
    %p289 = por %p287, %p288
    %p290 = scmp.ne.s32.totalorder %s279, %s280
    %p291 = scmp.eq.s32.totalorder %s25, 0
    %p292 = por %p290, %p291
    %p293 = scmp.ne.s32.totalorder %s279, %s280
    %p294 = scmp.eq.s32.totalorder %s26, 1
    %p295 = por %p293, %p294
    %p297 = scmp.ne.s32.totalorder %s280, %s296
    %p298 = scmp.eq.s32.totalorder %s26, 0
    %p299 = por %p297, %p298
    %s300 = ssub.s32 %s28, %s35
    %p301 = scmp.eq.s32.totalorder %s300, 0
    %s303 = sadd.s32 %s302, 1
    %s304 = scalar_select %p301, %s302, %s303
    %p307 = pneg %p301
    %p308 = scmp.eq.s32.totalorder %s20, 1
    %p309 = por %p307, %p308
    %p310 = scmp.ne.s32.totalorder %s302, %s305
    %p311 = scmp.eq.s32.totalorder %s20, 0
    %p312 = por %p310, %p311
    %p313 = scmp.ne.s32.totalorder %s302, %s305
    %p314 = scmp.eq.s32.totalorder %s25, 1
    %p315 = por %p313, %p314
    %p316 = scmp.ne.s32.totalorder %s305, %s306
    %p317 = scmp.eq.s32.totalorder %s25, 0
    %p318 = por %p316, %p317
    %p319 = scmp.ne.s32.totalorder %s305, %s306
    %p320 = scmp.eq.s32.totalorder %s26, 1
    %p321 = por %p319, %p320
    %p323 = scmp.ne.s32.totalorder %s306, %s322
    %p324 = scmp.eq.s32.totalorder %s26, 0
    %p325 = por %p323, %p324
    %s326 = ssub.s32 %s28, %s35
    %p327 = scmp.eq.s32.totalorder %s326, 0
    %s329 = sadd.s32 %s328, 1
    %s330 = scalar_select %p327, %s328, %s329
    %p333 = pneg %p327
    %p334 = scmp.eq.s32.totalorder %s20, 1
    %p335 = por %p333, %p334
    %p336 = scmp.ne.s32.totalorder %s328, %s331
    %p337 = scmp.eq.s32.totalorder %s20, 0
    %p338 = por %p336, %p337
    %p339 = scmp.ne.s32.totalorder %s328, %s331
    %p340 = scmp.eq.s32.totalorder %s25, 1
    %p341 = por %p339, %p340
    %p342 = scmp.ne.s32.totalorder %s331, %s332
    %p343 = scmp.eq.s32.totalorder %s25, 0
    %p344 = por %p342, %p343
    %p345 = scmp.ne.s32.totalorder %s331, %s332
    %p346 = scmp.eq.s32.totalorder %s26, 1
    %p347 = por %p345, %p346
    %p349 = scmp.ne.s32.totalorder %s332, %s348
    %p350 = scmp.eq.s32.totalorder %s26, 0
    %p351 = por %p349, %p350
    %s352 = ssub.s32 %s28, %s35
    %p353 = scmp.eq.s32.totalorder %s352, 0
    %s355 = sadd.s32 %s354, 1
    %s356 = scalar_select %p353, %s354, %s355
    %p359 = pneg %p353
    %p360 = scmp.eq.s32.totalorder %s20, 1
    %p361 = por %p359, %p360
    %p362 = scmp.ne.s32.totalorder %s354, %s357
    %p363 = scmp.eq.s32.totalorder %s20, 0
    %p364 = por %p362, %p363
    %p365 = scmp.ne.s32.totalorder %s354, %s357
    %p366 = scmp.eq.s32.totalorder %s25, 1
    %p367 = por %p365, %p366
    %p368 = scmp.ne.s32.totalorder %s357, %s358
    %p369 = scmp.eq.s32.totalorder %s25, 0
    %p370 = por %p368, %p369
    %p371 = scmp.ne.s32.totalorder %s357, %s358
    %p372 = scmp.eq.s32.totalorder %s26, 1
    %p373 = por %p371, %p372
    %p375 = scmp.ne.s32.totalorder %s358, %s374
    %p376 = scmp.eq.s32.totalorder %s26, 0
    %p377 = por %p375, %p376
    %s378 = ssub.s32 %s28, %s35
    %p379 = scmp.eq.s32.totalorder %s378, 0
    %s381 = sadd.s32 %s380, 1
    %s382 = scalar_select %p379, %s380, %s381
    %p385 = pneg %p379
    %p386 = scmp.eq.s32.totalorder %s20, 1
    %p387 = por %p385, %p386
    %p388 = scmp.ne.s32.totalorder %s380, %s383
    %p389 = scmp.eq.s32.totalorder %s20, 0
    %p390 = por %p388, %p389
    %p391 = scmp.ne.s32.totalorder %s380, %s383
    %p392 = scmp.eq.s32.totalorder %s25, 1
    %p393 = por %p391, %p392
    %p394 = scmp.ne.s32.totalorder %s383, %s384
    %p395 = scmp.eq.s32.totalorder %s25, 0
    %p396 = por %p394, %p395
    %p397 = scmp.ne.s32.totalorder %s383, %s384
    %p398 = scmp.eq.s32.totalorder %s26, 1
    %p399 = por %p397, %p398
    %p401 = scmp.ne.s32.totalorder %s384, %s400
    %p402 = scmp.eq.s32.totalorder %s26, 0
    %p403 = por %p401, %p402
    %s404 = ssub.s32 %s27, %s39
    %p405 = scmp.eq.s32.totalorder %s404, 0
    %s407 = sadd.s32 %s406, 1
    %s408 = scalar_select %p405, %s406, %s407
    %p411 = pneg %p405
    %p412 = scmp.eq.s32.totalorder %s20, 1
    %p413 = por %p411, %p412
    %p414 = scmp.ne.s32.totalorder %s406, %s409
    %p415 = scmp.eq.s32.totalorder %s20, 0
    %p416 = por %p414, %p415
    %p417 = scmp.ne.s32.totalorder %s406, %s409
    %p418 = scmp.eq.s32.totalorder %s25, 1
    %p419 = por %p417, %p418
    %p420 = scmp.ne.s32.totalorder %s409, %s410
    %p421 = scmp.eq.s32.totalorder %s25, 0
    %p422 = por %p420, %p421
    %p423 = scmp.ne.s32.totalorder %s409, %s410
    %p424 = scmp.eq.s32.totalorder %s26, 1
    %p425 = por %p423, %p424
    %p427 = scmp.ne.s32.totalorder %s410, %s426
    %p428 = scmp.eq.s32.totalorder %s26, 0
    %p429 = por %p427, %p428
    %p430 = scmp.le.s32.totalorder 1, %s20
    %p431 = scmp.lt.s32.totalorder %s20, 3
    %p432 = pnand %p430, %p431
    %p433 = pneg %p432
    // Predicated region
    $region9: #{transformer_bottleneck_forward.1} parent=5 // pred_check
      _
    $region10: #{transformer_bottleneck_forward.1} parent=5 // pred_check_branch
      %435 = sbr.rel (%p432) target = $region12
    $region11: #{transformer_bottleneck_forward.1} parent=5 // pred_region
      %s436 = ssub.s32 %s20, 1
      // Predicated region
      $region13: #{transformer_bottleneck_forward.1} parent=11 // pred_check
        %p437 = pneg %p58
      $region14: #{transformer_bottleneck_forward.1} parent=11 // pred_check_branch
        %439 = sbr.rel (%p437) target = $region16
      $region15: #{transformer_bottleneck_forward.1} parent=11 // pred_region
        %s440 = smul.u32 8, %s29
        %p441 = scmp.lt.s32.totalorder %s440, 7
        %s442 = scalar_select %p441, %s440, 7
        %s443 = smul.addr %s442, 8
        %s444 = scalar_lea.vmem %s0, %s443
        %s445 = smul.u32 8, %s29
      $region16: #{transformer_bottleneck_forward.1} parent=11 // pred_fallthru
        _
      // Predicated region
      $region17: #{transformer_bottleneck_forward.1} parent=11 // pred_check
        %p446 = pneg %p84
      $region18: #{transformer_bottleneck_forward.1} parent=11 // pred_check_branch
        %448 = sbr.rel (%p446) target = $region20
      $region19: #{transformer_bottleneck_forward.1} parent=11 // pred_region
        %s449 = smul.u32 8, %s29
        %p450 = scmp.lt.s32.totalorder %s449, 7
        %s451 = scalar_select %p450, %s449, 7
        %s452 = smul.addr %s451, 8
        %s453 = scalar_lea.vmem %s1, %s452
        %s454 = smul.u32 8, %s29
      $region20: #{transformer_bottleneck_forward.1} parent=11 // pred_fallthru
        _
    $region12: #{transformer_bottleneck_forward.1} parent=5 // pred_fallthru
      _
    %p455 = scmp.lt.s32.totalorder %s20, 2
    // Predicated region
    $region21: #{transformer_bottleneck_forward.1} parent=5 // pred_check
      %p456 = pneg %p455
    $region22: #{transformer_bottleneck_forward.1} parent=5 // pred_check_branch
      %458 = sbr.rel (%p456) target = $region24
    $region23: #{transformer_bottleneck_forward.1} parent=5 // pred_region
      // Predicated region
      $region25: #{transformer_bottleneck_forward.1} parent=23 // pred_check
        %p459 = pneg %p104
      $region26: #{transformer_bottleneck_forward.1} parent=23 // pred_check_branch
        %461 = sbr.rel (%p459) target = $region28
      $region27: #{transformer_bottleneck_forward.1} parent=23 // pred_region
        %p462 = scmp.lt.s32.totalorder %s28, 1
        %s463 = scalar_select %p462, %s28, 1
        %s464 = smul.addr %s463, 12
        %s465 = smul.addr %s464, 4
        %s466 = scalar_lea.vmem %s2, %s465
      $region28: #{transformer_bottleneck_forward.1} parent=23 // pred_fallthru
        _
      // Predicated region
      $region29: #{transformer_bottleneck_forward.1} parent=23 // pred_check
        %p467 = pneg %p130
      $region30: #{transformer_bottleneck_forward.1} parent=23 // pred_check_branch
        %469 = sbr.rel (%p467) target = $region32
      $region31: #{transformer_bottleneck_forward.1} parent=23 // pred_region
        %p470 = scmp.lt.s32.totalorder %s28, 1
        %s471 = scalar_select %p470, %s28, 1
        %s472 = smul.addr %s471, 12
        %s473 = smul.addr %s472, 8
        %s474 = scalar_lea.vmem %s3, %s473
      $region32: #{transformer_bottleneck_forward.1} parent=23 // pred_fallthru
        _
      // Predicated region
      $region33: #{transformer_bottleneck_forward.1} parent=23 // pred_check
        %p475 = pneg %p156
      $region34: #{transformer_bottleneck_forward.1} parent=23 // pred_check_branch
        %477 = sbr.rel (%p475) target = $region36
      $region35: #{transformer_bottleneck_forward.1} parent=23 // pred_region
        %p478 = scmp.lt.s32.totalorder %s28, 1
        %s479 = scalar_select %p478, %s28, 1
        %s480 = smul.addr %s479, 4
        %s481 = smul.addr %s480, 4
        %s482 = scalar_lea.vmem %s4, %s481
      $region36: #{transformer_bottleneck_forward.1} parent=23 // pred_fallthru
        _
      // Predicated region
      $region37: #{transformer_bottleneck_forward.1} parent=23 // pred_check
        %p483 = pneg %p182
      $region38: #{transformer_bottleneck_forward.1} parent=23 // pred_check_branch
        %485 = sbr.rel (%p483) target = $region40
      $region39: #{transformer_bottleneck_forward.1} parent=23 // pred_region
        %p486 = scmp.lt.s32.totalorder %s28, 1
        %s487 = scalar_select %p486, %s28, 1
        %s488 = smul.addr %s487, 4
        %s489 = smul.addr %s488, 8
        %s490 = scalar_lea.vmem %s5, %s489
      $region40: #{transformer_bottleneck_forward.1} parent=23 // pred_fallthru
        _
      // Predicated region
      $region41: #{transformer_bottleneck_forward.1} parent=23 // pred_check
        %p491 = pneg %p208
      $region42: #{transformer_bottleneck_forward.1} parent=23 // pred_check_branch
        %493 = sbr.rel (%p491) target = $region44
      $region43: #{transformer_bottleneck_forward.1} parent=23 // pred_region
        %p494 = scmp.lt.s32.totalorder %s28, 1
        %s495 = scalar_select %p494, %s28, 1
        %s496 = smul.addr %s495, 8
        %s497 = smul.addr %s496, 4
        %s498 = scalar_lea.vmem %s6, %s497
      $region44: #{transformer_bottleneck_forward.1} parent=23 // pred_fallthru
        _
      // Predicated region
      $region45: #{transformer_bottleneck_forward.1} parent=23 // pred_check
        %p499 = pneg %p234
      $region46: #{transformer_bottleneck_forward.1} parent=23 // pred_check_branch
        %501 = sbr.rel (%p499) target = $region48
      $region47: #{transformer_bottleneck_forward.1} parent=23 // pred_region
        %p502 = scmp.lt.s32.totalorder %s28, 1
        %s503 = scalar_select %p502, %s28, 1
        %s504 = smul.addr %s503, 8
        %s505 = smul.addr %s504, 8
        %s506 = scalar_lea.vmem %s7, %s505
      $region48: #{transformer_bottleneck_forward.1} parent=23 // pred_fallthru
        _
      // Predicated region
      $region49: #{transformer_bottleneck_forward.1} parent=23 // pred_check
        %p507 = pneg %p260
      $region50: #{transformer_bottleneck_forward.1} parent=23 // pred_check_branch
        %509 = sbr.rel (%p507) target = $region52
      $region51: #{transformer_bottleneck_forward.1} parent=23 // pred_region
        %p510 = scmp.lt.s32.totalorder %s28, 1
        %s511 = scalar_select %p510, %s28, 1
        %s512 = smul.addr %s511, 4
        %s513 = smul.addr %s512, 4
        %s514 = scalar_lea.vmem %s8, %s513
      $region52: #{transformer_bottleneck_forward.1} parent=23 // pred_fallthru
        _
      // Predicated region
      $region53: #{transformer_bottleneck_forward.1} parent=23 // pred_check
        %p515 = pneg %p286
      $region54: #{transformer_bottleneck_forward.1} parent=23 // pred_check_branch
        %517 = sbr.rel (%p515) target = $region56
      $region55: #{transformer_bottleneck_forward.1} parent=23 // pred_region
        %p518 = scmp.lt.s32.totalorder %s28, 1
        %s519 = scalar_select %p518, %s28, 1
        %s520 = smul.addr %s519, 4
        %s521 = smul.addr %s520, 8
        %s522 = scalar_lea.vmem %s9, %s521
      $region56: #{transformer_bottleneck_forward.1} parent=23 // pred_fallthru
        _
      // Predicated region
      $region57: #{transformer_bottleneck_forward.1} parent=23 // pred_check
        %p523 = pneg %p312
      $region58: #{transformer_bottleneck_forward.1} parent=23 // pred_check_branch
        %525 = sbr.rel (%p523) target = $region60
      $region59: #{transformer_bottleneck_forward.1} parent=23 // pred_region
        %p526 = scmp.lt.s32.totalorder %s28, 1
        %s527 = scalar_select %p526, %s28, 1
        %s528 = smul.addr %s527, 4
        %s529 = smul.addr %s528, 8
        %s530 = scalar_lea.vmem %s10, %s529
      $region60: #{transformer_bottleneck_forward.1} parent=23 // pred_fallthru
        _
      // Predicated region
      $region61: #{transformer_bottleneck_forward.1} parent=23 // pred_check
        %p531 = pneg %p338
      $region62: #{transformer_bottleneck_forward.1} parent=23 // pred_check_branch
        %533 = sbr.rel (%p531) target = $region64
      $region63: #{transformer_bottleneck_forward.1} parent=23 // pred_region
        %p534 = scmp.lt.s32.totalorder %s28, 1
        %s535 = scalar_select %p534, %s28, 1
        %s536 = smul.addr %s535, 4
        %s537 = smul.addr %s536, 8
        %s538 = scalar_lea.vmem %s11, %s537
      $region64: #{transformer_bottleneck_forward.1} parent=23 // pred_fallthru
        _
      // Predicated region
      $region65: #{transformer_bottleneck_forward.1} parent=23 // pred_check
        %p539 = pneg %p364
      $region66: #{transformer_bottleneck_forward.1} parent=23 // pred_check_branch
        %541 = sbr.rel (%p539) target = $region68
      $region67: #{transformer_bottleneck_forward.1} parent=23 // pred_region
        %p542 = scmp.lt.s32.totalorder %s28, 1
        %s543 = scalar_select %p542, %s28, 1
        %s544 = smul.addr %s543, 4
        %s545 = smul.addr %s544, 8
        %s546 = scalar_lea.vmem %s12, %s545
      $region68: #{transformer_bottleneck_forward.1} parent=23 // pred_fallthru
        _
      // Predicated region
      $region69: #{transformer_bottleneck_forward.1} parent=23 // pred_check
        %p547 = pneg %p390
      $region70: #{transformer_bottleneck_forward.1} parent=23 // pred_check_branch
        %549 = sbr.rel (%p547) target = $region72
      $region71: #{transformer_bottleneck_forward.1} parent=23 // pred_region
        %p550 = scmp.lt.s32.totalorder %s28, 1
        %s551 = scalar_select %p550, %s28, 1
        %s552 = smul.addr %s551, 4
        %s553 = smul.addr %s552, 8
        %s554 = scalar_lea.vmem %s13, %s553
      $region72: #{transformer_bottleneck_forward.1} parent=23 // pred_fallthru
        _
    $region24: #{transformer_bottleneck_forward.1} parent=5 // pred_fallthru
      _
    %p555 = scmp.le.s32.totalorder 1, %s20
    %p556 = scmp.lt.s32.totalorder %s20, 3
    %p557 = pnand %p555, %p556
    %p558 = pneg %p557
    // Predicated region
    $region73: #{transformer_bottleneck_forward.1} parent=5 // pred_check
      _
    $region74: #{transformer_bottleneck_forward.1} parent=5 // pred_check_branch
      %560 = sbr.rel (%p557) target = $region76
    $region75: #{transformer_bottleneck_forward.1} parent=5 // pred_region
      %s561 = ssub.s32 %s20, 1
      %s562 = smul.u32 8, %s29
      %p563 = scmp.lt.s32.totalorder %s562, 7
      %s564 = scalar_select %p563, %s562, 7
      %s565 = smul.addr %s564, 8
      %s566 = scalar_lea.vmem %s0, %s565
      %p567 = pneg %p58
      %p568 = pneg %p55
      %s569 = smul.u32 8, %s29
      %p570 = scmp.lt.s32.totalorder %s569, 7
      %s571 = scalar_select %p570, %s569, 7
      %s572 = smul.addr %s571, 8
      %s573 = scalar_lea.vmem %s1, %s572
      %p574 = pneg %p84
      %p575 = pneg %p81
      %p576 = scmp.lt.s32.totalorder %s30, 1
      %s577 = scalar_select %p576, %s30, 1
      %s578 = smul.addr %s577, 12
      %s579 = smul.addr %s578, 4
      %s580 = scalar_lea.vmem %s2, %s579
      %p581 = pneg %p110
      %p582 = pneg %p107
      %p583 = scmp.lt.s32.totalorder %s30, 1
      %s584 = scalar_select %p583, %s30, 1
      %s585 = smul.addr %s584, 12
      %s586 = smul.addr %s585, 8
      %s587 = scalar_lea.vmem %s3, %s586
      %p588 = pneg %p136
      %p589 = pneg %p133
      %p590 = scmp.lt.s32.totalorder %s30, 1
      %s591 = scalar_select %p590, %s30, 1
      %s592 = smul.addr %s591, 4
      %s593 = smul.addr %s592, 4
      %s594 = scalar_lea.vmem %s4, %s593
      %p595 = pneg %p162
      %p596 = pneg %p159
      %p597 = scmp.lt.s32.totalorder %s30, 1
      %s598 = scalar_select %p597, %s30, 1
      %s599 = smul.addr %s598, 4
      %s600 = smul.addr %s599, 8
      %s601 = scalar_lea.vmem %s5, %s600
      %p602 = pneg %p188
      %p603 = pneg %p185
      %p604 = scmp.lt.s32.totalorder %s30, 1
      %s605 = scalar_select %p604, %s30, 1
      %s606 = smul.addr %s605, 8
      %s607 = smul.addr %s606, 4
      %s608 = scalar_lea.vmem %s6, %s607
      %p609 = pneg %p214
      %p610 = pneg %p211
      %p611 = scmp.lt.s32.totalorder %s30, 1
      %s612 = scalar_select %p611, %s30, 1
      %s613 = smul.addr %s612, 8
      %s614 = smul.addr %s613, 8
      %s615 = scalar_lea.vmem %s7, %s614
      %p616 = pneg %p240
      %p617 = pneg %p237
      %p618 = scmp.lt.s32.totalorder %s30, 1
      %s619 = scalar_select %p618, %s30, 1
      %s620 = smul.addr %s619, 4
      %s621 = smul.addr %s620, 4
      %s622 = scalar_lea.vmem %s8, %s621
      %p623 = pneg %p266
      %p624 = pneg %p263
      %p625 = scmp.lt.s32.totalorder %s30, 1
      %s626 = scalar_select %p625, %s30, 1
      %s627 = smul.addr %s626, 4
      %s628 = smul.addr %s627, 8
      %s629 = scalar_lea.vmem %s9, %s628
      %p630 = pneg %p292
      %p631 = pneg %p289
      %p632 = scmp.lt.s32.totalorder %s30, 1
      %s633 = scalar_select %p632, %s30, 1
      %s634 = smul.addr %s633, 4
      %s635 = smul.addr %s634, 8
      %s636 = scalar_lea.vmem %s10, %s635
      %p637 = pneg %p318
      %p638 = pneg %p315
      %p639 = scmp.lt.s32.totalorder %s30, 1
      %s640 = scalar_select %p639, %s30, 1
      %s641 = smul.addr %s640, 4
      %s642 = smul.addr %s641, 8
      %s643 = scalar_lea.vmem %s11, %s642
      %p644 = pneg %p344
      %p645 = pneg %p341
      %p646 = scmp.lt.s32.totalorder %s30, 1
      %s647 = scalar_select %p646, %s30, 1
      %s648 = smul.addr %s647, 4
      %s649 = smul.addr %s648, 8
      %s650 = scalar_lea.vmem %s12, %s649
      %p651 = pneg %p370
      %p652 = pneg %p367
      %p653 = scmp.lt.s32.totalorder %s30, 1
      %s654 = scalar_select %p653, %s30, 1
      %s655 = smul.addr %s654, 4
      %s656 = smul.addr %s655, 8
      %s657 = scalar_lea.vmem %s13, %s656
      %p658 = pneg %p396
      %p659 = pneg %p393
      %p660 = pneg %p422
      %p661 = pneg %p419
      %s662 = smul.u32 8, %s29
      %p663 = scmp.lt.s32.totalorder %s662, 7
      %s664 = scalar_select %p663, %s662, 7
      %s665 = smul.addr %s664, 8
      %s666 = scalar_lea.vmem %s14, %s665
      %s667 = smul.u32 8, %s29
      %p668 = scmp.lt.s32.totalorder %s667, 7
      %s669 = scalar_select %p668, %s667, 7
      %s670 = smul.addr %s669, 8
      %s671 = scalar_lea.vmem %s0, %s670
      %s672 = smul.u32 8, %s29
      %s673 = smul.u32 8, %s29
      %p674 = scmp.lt.s32.totalorder %s673, 7
      %s675 = scalar_select %p674, %s673, 7
      %s676 = smul.addr %s675, 8
      %s677 = scalar_lea.vmem %s1, %s676
      %s678 = smul.u32 8, %s29
      %p679 = scmp.lt.s32.totalorder %s30, 1
      %s680 = scalar_select %p679, %s30, 1
      %s681 = smul.addr %s680, 12
      %s682 = smul.addr %s681, 4
      %s683 = scalar_lea.vmem %s2, %s682
      %p684 = scmp.lt.s32.totalorder %s30, 1
      %s685 = scalar_select %p684, %s30, 1
      %s686 = smul.addr %s685, 12
      %s687 = smul.addr %s686, 8
      %s688 = scalar_lea.vmem %s3, %s687
      %p689 = scmp.lt.s32.totalorder %s30, 1
      %s690 = scalar_select %p689, %s30, 1
      %s691 = smul.addr %s690, 4
      %s692 = smul.addr %s691, 4
      %s693 = scalar_lea.vmem %s4, %s692
      %p694 = scmp.lt.s32.totalorder %s30, 1
      %s695 = scalar_select %p694, %s30, 1
      %s696 = smul.addr %s695, 4
      %s697 = smul.addr %s696, 8
      %s698 = scalar_lea.vmem %s5, %s697
      %p699 = scmp.lt.s32.totalorder %s30, 1
      %s700 = scalar_select %p699, %s30, 1
      %s701 = smul.addr %s700, 8
      %s702 = smul.addr %s701, 4
      %s703 = scalar_lea.vmem %s6, %s702
      %p704 = scmp.lt.s32.totalorder %s30, 1
      %s705 = scalar_select %p704, %s30, 1
      %s706 = smul.addr %s705, 8
      %s707 = smul.addr %s706, 8
      %s708 = scalar_lea.vmem %s7, %s707
      %p709 = scmp.lt.s32.totalorder %s30, 1
      %s710 = scalar_select %p709, %s30, 1
      %s711 = smul.addr %s710, 4
      %s712 = smul.addr %s711, 4
      %s713 = scalar_lea.vmem %s8, %s712
      %p714 = scmp.lt.s32.totalorder %s30, 1
      %s715 = scalar_select %p714, %s30, 1
      %s716 = smul.addr %s715, 4
      %s717 = smul.addr %s716, 8
      %s718 = scalar_lea.vmem %s9, %s717
      %p719 = scmp.lt.s32.totalorder %s30, 1
      %s720 = scalar_select %p719, %s30, 1
      %s721 = smul.addr %s720, 4
      %s722 = smul.addr %s721, 8
      %s723 = scalar_lea.vmem %s10, %s722
      %p724 = scmp.lt.s32.totalorder %s30, 1
      %s725 = scalar_select %p724, %s30, 1
      %s726 = smul.addr %s725, 4
      %s727 = smul.addr %s726, 8
      %s728 = scalar_lea.vmem %s11, %s727
      %p729 = scmp.lt.s32.totalorder %s30, 1
      %s730 = scalar_select %p729, %s30, 1
      %s731 = smul.addr %s730, 4
      %s732 = smul.addr %s731, 8
      %s733 = scalar_lea.vmem %s12, %s732
      %p734 = scmp.lt.s32.totalorder %s30, 1
      %s735 = scalar_select %p734, %s30, 1
      %s736 = smul.addr %s735, 4
      %s737 = smul.addr %s736, 8
      %s738 = scalar_lea.vmem %s13, %s737
      %s739 = smul.u32 8, %s29
      %p740 = scmp.lt.s32.totalorder %s739, 7
      %s741 = scalar_select %p740, %s739, 7
      %s742 = smul.addr %s741, 8
      %s743 = scalar_lea.vmem %s14, %s742
      %s744 = smul.u32 8, %s29
      %p746 = scmp.eq.s32.totalorder %s30, 0
      // Predicated region
      $region77: #{transformer_bottleneck_forward.1} parent=75 // pred_check
        %p747 = pneg %p746
      $region78: #{transformer_bottleneck_forward.1} parent=75 // pred_check_branch
        %749 = sbr.rel (%p747) target = $region80
      $region79: #{transformer_bottleneck_forward.1} parent=75 // pred_region
        %v750 = vld [vmem:[%s677] sm:$0xff]
        %v751 = vld [vmem:[%s677 + $0x8] sm:$0xff]
        %v752 = vld [vmem:[%s677 + $0x10] sm:$0xff]
        %v753 = vld [vmem:[%s677 + $0x18] sm:$0xff]
        %v754 = vld [vmem:[%s677 + $0x20] sm:$0xff]
        %v755 = vld [vmem:[%s677 + $0x28] sm:$0xff]
        %v756 = vld [vmem:[%s677 + $0x30] sm:$0xff]
        %v757 = vld [vmem:[%s677 + $0x38] sm:$0xff]
        %v758 = vld [vmem:[%s677 + $0x40] sm:$0xff]
        %v759 = vld [vmem:[%s677 + $0x48] sm:$0xff]
        %v760 = vld [vmem:[%s677 + $0x50] sm:$0xff]
        %v761 = vld [vmem:[%s677 + $0x58] sm:$0xff]
        %v762 = vld [vmem:[%s677 + $0x60] sm:$0xff]
        %v763 = vld [vmem:[%s677 + $0x68] sm:$0xff]
        %v764 = vld [vmem:[%s677 + $0x70] sm:$0xff]
        %v765 = vld [vmem:[%s677 + $0x78] sm:$0xff]
        %v766 = vld [vmem:[%s677 + $0x80] sm:$0xff]
        %v767 = vld [vmem:[%s677 + $0x88] sm:$0xff]
        %v768 = vld [vmem:[%s677 + $0x90] sm:$0xff]
        %v769 = vld [vmem:[%s677 + $0x98] sm:$0xff]
        %v770 = vld [vmem:[%s677 + $0xa0] sm:$0xff]
        %v771 = vld [vmem:[%s677 + $0xa8] sm:$0xff]
        %v772 = vld [vmem:[%s677 + $0xb0] sm:$0xff]
        %v773 = vld [vmem:[%s677 + $0xb8] sm:$0xff]
        %v774 = vld [vmem:[%s677 + $0xc0] sm:$0xff]
        %v775 = vld [vmem:[%s677 + $0xc8] sm:$0xff]
        %v776 = vld [vmem:[%s677 + $0xd0] sm:$0xff]
        %v777 = vld [vmem:[%s677 + $0xd8] sm:$0xff]
        %v778 = vld [vmem:[%s677 + $0xe0] sm:$0xff]
        %v779 = vld [vmem:[%s677 + $0xe8] sm:$0xff]
        %v780 = vld [vmem:[%s677 + $0xf0] sm:$0xff]
        %v781 = vld [vmem:[%s677 + $0xf8] sm:$0xff]
        %v782 = vld [vmem:[%s671] sm:$0xff]
        %v783 = vld [vmem:[%s671 + $0x8] sm:$0xff]
        %v784 = vld [vmem:[%s671 + $0x10] sm:$0xff]
        %v785 = vld [vmem:[%s671 + $0x18] sm:$0xff]
        %v786 = vld [vmem:[%s671 + $0x20] sm:$0xff]
        %v787 = vld [vmem:[%s671 + $0x28] sm:$0xff]
        %v788 = vld [vmem:[%s671 + $0x30] sm:$0xff]
        %v789 = vld [vmem:[%s671 + $0x38] sm:$0xff]
        %v790 = vld [vmem:[%s671 + $0x40] sm:$0xff]
        %v791 = vld [vmem:[%s671 + $0x48] sm:$0xff]
        %v792 = vld [vmem:[%s671 + $0x50] sm:$0xff]
        %v793 = vld [vmem:[%s671 + $0x58] sm:$0xff]
        %v794 = vld [vmem:[%s671 + $0x60] sm:$0xff]
        %v795 = vld [vmem:[%s671 + $0x68] sm:$0xff]
        %v796 = vld [vmem:[%s671 + $0x70] sm:$0xff]
        %v797 = vld [vmem:[%s671 + $0x78] sm:$0xff]
        %v798 = vld [vmem:[%s671 + $0x80] sm:$0xff]
        %v799 = vld [vmem:[%s671 + $0x88] sm:$0xff]
        %v800 = vld [vmem:[%s671 + $0x90] sm:$0xff]
        %v801 = vld [vmem:[%s671 + $0x98] sm:$0xff]
        %v802 = vld [vmem:[%s671 + $0xa0] sm:$0xff]
        %v803 = vld [vmem:[%s671 + $0xa8] sm:$0xff]
        %v804 = vld [vmem:[%s671 + $0xb0] sm:$0xff]
        %v805 = vld [vmem:[%s671 + $0xb8] sm:$0xff]
        %v806 = vld [vmem:[%s671 + $0xc0] sm:$0xff]
        %v807 = vld [vmem:[%s671 + $0xc8] sm:$0xff]
        %v808 = vld [vmem:[%s671 + $0xd0] sm:$0xff]
        %v809 = vld [vmem:[%s671 + $0xd8] sm:$0xff]
        %v810 = vld [vmem:[%s671 + $0xe0] sm:$0xff]
        %v811 = vld [vmem:[%s671 + $0xe8] sm:$0xff]
        %v812 = vld [vmem:[%s671 + $0xf0] sm:$0xff]
        %v813 = vld [vmem:[%s671 + $0xf8] sm:$0xff]
        %v814 = vadd.f32 %v782, %v750
        %v815 = vadd.f32 %v783, %v751
        %v816 = vadd.f32 %v784, %v752
        %v817 = vadd.f32 %v785, %v753
        %v818 = vadd.f32 %v786, %v754
        %v819 = vadd.f32 %v787, %v755
        %v820 = vadd.f32 %v788, %v756
        %v821 = vadd.f32 %v789, %v757
        %v822 = vadd.f32 %v790, %v758
        %v823 = vadd.f32 %v791, %v759
        %v824 = vadd.f32 %v792, %v760
        %v825 = vadd.f32 %v793, %v761
        %v826 = vadd.f32 %v794, %v762
        %v827 = vadd.f32 %v795, %v763
        %v828 = vadd.f32 %v796, %v764
        %v829 = vadd.f32 %v797, %v765
        %v830 = vadd.f32 %v798, %v766
        %v831 = vadd.f32 %v799, %v767
        %v832 = vadd.f32 %v800, %v768
        %v833 = vadd.f32 %v801, %v769
        %v834 = vadd.f32 %v802, %v770
        %v835 = vadd.f32 %v803, %v771
        %v836 = vadd.f32 %v804, %v772
        %v837 = vadd.f32 %v805, %v773
        %v838 = vadd.f32 %v806, %v774
        %v839 = vadd.f32 %v807, %v775
        %v840 = vadd.f32 %v808, %v776
        %v841 = vadd.f32 %v809, %v777
        %v842 = vadd.f32 %v810, %v778
        %v843 = vadd.f32 %v811, %v779
        %v844 = vadd.f32 %v812, %v780
        %v845 = vadd.f32 %v813, %v781
        %846 = vst [vmem:[#allocation2] sm:$0xff] %v814
        %847 = vst [vmem:[#allocation2 + $0x8] sm:$0xff] %v815
        %848 = vst [vmem:[#allocation2 + $0x10] sm:$0xff] %v816
        %849 = vst [vmem:[#allocation2 + $0x18] sm:$0xff] %v817
        %850 = vst [vmem:[#allocation2 + $0x20] sm:$0xff] %v818
        %851 = vst [vmem:[#allocation2 + $0x28] sm:$0xff] %v819
        %852 = vst [vmem:[#allocation2 + $0x30] sm:$0xff] %v820
        %853 = vst [vmem:[#allocation2 + $0x38] sm:$0xff] %v821
        %854 = vst [vmem:[#allocation2 + $0x80] sm:$0xff] %v822
        %855 = vst [vmem:[#allocation2 + $0x88] sm:$0xff] %v823
        %856 = vst [vmem:[#allocation2 + $0x90] sm:$0xff] %v824
        %857 = vst [vmem:[#allocation2 + $0x98] sm:$0xff] %v825
        %858 = vst [vmem:[#allocation2 + $0xa0] sm:$0xff] %v826
        %859 = vst [vmem:[#allocation2 + $0xa8] sm:$0xff] %v827
        %860 = vst [vmem:[#allocation2 + $0xb0] sm:$0xff] %v828
        %861 = vst [vmem:[#allocation2 + $0xb8] sm:$0xff] %v829
        %862 = vst [vmem:[#allocation2 + $0x100] sm:$0xff] %v830
        %863 = vst [vmem:[#allocation2 + $0x108] sm:$0xff] %v831
        %864 = vst [vmem:[#allocation2 + $0x110] sm:$0xff] %v832
        %865 = vst [vmem:[#allocation2 + $0x118] sm:$0xff] %v833
        %866 = vst [vmem:[#allocation2 + $0x120] sm:$0xff] %v834
        %867 = vst [vmem:[#allocation2 + $0x128] sm:$0xff] %v835
        %868 = vst [vmem:[#allocation2 + $0x130] sm:$0xff] %v836
        %869 = vst [vmem:[#allocation2 + $0x138] sm:$0xff] %v837
        %870 = vst [vmem:[#allocation2 + $0x180] sm:$0xff] %v838
        %871 = vst [vmem:[#allocation2 + $0x188] sm:$0xff] %v839
        %872 = vst [vmem:[#allocation2 + $0x190] sm:$0xff] %v840
        %873 = vst [vmem:[#allocation2 + $0x198] sm:$0xff] %v841
        %874 = vst [vmem:[#allocation2 + $0x1a0] sm:$0xff] %v842
        %875 = vst [vmem:[#allocation2 + $0x1a8] sm:$0xff] %v843
        %876 = vst [vmem:[#allocation2 + $0x1b0] sm:$0xff] %v844
        %877 = vst [vmem:[#allocation2 + $0x1b8] sm:$0xff] %v845
        %s878 = scalar_lea.vmem %s671, 256
        %v879 = vld [vmem:[%s878] sm:$0xff]
        %v880 = vld [vmem:[%s878 + $0x8] sm:$0xff]
        %v881 = vld [vmem:[%s878 + $0x10] sm:$0xff]
        %v882 = vld [vmem:[%s878 + $0x18] sm:$0xff]
        %v883 = vld [vmem:[%s878 + $0x20] sm:$0xff]
        %v884 = vld [vmem:[%s878 + $0x28] sm:$0xff]
        %v885 = vld [vmem:[%s878 + $0x30] sm:$0xff]
        %v886 = vld [vmem:[%s878 + $0x38] sm:$0xff]
        %v887 = vld [vmem:[%s878 + $0x40] sm:$0xff]
        %v888 = vld [vmem:[%s878 + $0x48] sm:$0xff]
        %v889 = vld [vmem:[%s878 + $0x50] sm:$0xff]
        %v890 = vld [vmem:[%s878 + $0x58] sm:$0xff]
        %v891 = vld [vmem:[%s878 + $0x60] sm:$0xff]
        %v892 = vld [vmem:[%s878 + $0x68] sm:$0xff]
        %v893 = vld [vmem:[%s878 + $0x70] sm:$0xff]
        %v894 = vld [vmem:[%s878 + $0x78] sm:$0xff]
        %v895 = vld [vmem:[%s878 + $0x80] sm:$0xff]
        %v896 = vld [vmem:[%s878 + $0x88] sm:$0xff]
        %v897 = vld [vmem:[%s878 + $0x90] sm:$0xff]
        %v898 = vld [vmem:[%s878 + $0x98] sm:$0xff]
        %v899 = vld [vmem:[%s878 + $0xa0] sm:$0xff]
        %v900 = vld [vmem:[%s878 + $0xa8] sm:$0xff]
        %v901 = vld [vmem:[%s878 + $0xb0] sm:$0xff]
        %v902 = vld [vmem:[%s878 + $0xb8] sm:$0xff]
        %v903 = vld [vmem:[%s878 + $0xc0] sm:$0xff]
        %v904 = vld [vmem:[%s878 + $0xc8] sm:$0xff]
        %v905 = vld [vmem:[%s878 + $0xd0] sm:$0xff]
        %v906 = vld [vmem:[%s878 + $0xd8] sm:$0xff]
        %v907 = vld [vmem:[%s878 + $0xe0] sm:$0xff]
        %v908 = vld [vmem:[%s878 + $0xe8] sm:$0xff]
        %v909 = vld [vmem:[%s878 + $0xf0] sm:$0xff]
        %v910 = vld [vmem:[%s878 + $0xf8] sm:$0xff]
        %v911 = vadd.f32 %v879, %v750
        %v912 = vadd.f32 %v880, %v751
        %v913 = vadd.f32 %v881, %v752
        %v914 = vadd.f32 %v882, %v753
        %v915 = vadd.f32 %v883, %v754
        %v916 = vadd.f32 %v884, %v755
        %v917 = vadd.f32 %v885, %v756
        %v918 = vadd.f32 %v886, %v757
        %v919 = vadd.f32 %v887, %v758
        %v920 = vadd.f32 %v888, %v759
        %v921 = vadd.f32 %v889, %v760
        %v922 = vadd.f32 %v890, %v761
        %v923 = vadd.f32 %v891, %v762
        %v924 = vadd.f32 %v892, %v763
        %v925 = vadd.f32 %v893, %v764
        %v926 = vadd.f32 %v894, %v765
        %v927 = vadd.f32 %v895, %v766
        %v928 = vadd.f32 %v896, %v767
        %v929 = vadd.f32 %v897, %v768
        %v930 = vadd.f32 %v898, %v769
        %v931 = vadd.f32 %v899, %v770
        %v932 = vadd.f32 %v900, %v771
        %v933 = vadd.f32 %v901, %v772
        %v934 = vadd.f32 %v902, %v773
        %v935 = vadd.f32 %v903, %v774
        %v936 = vadd.f32 %v904, %v775
        %v937 = vadd.f32 %v905, %v776
        %v938 = vadd.f32 %v906, %v777
        %v939 = vadd.f32 %v907, %v778
        %v940 = vadd.f32 %v908, %v779
        %v941 = vadd.f32 %v909, %v780
        %v942 = vadd.f32 %v910, %v781
        %943 = vst [vmem:[#allocation2 + $0x40] sm:$0xff] %v911
        %944 = vst [vmem:[#allocation2 + $0x48] sm:$0xff] %v912
        %945 = vst [vmem:[#allocation2 + $0x50] sm:$0xff] %v913
        %946 = vst [vmem:[#allocation2 + $0x58] sm:$0xff] %v914
        %947 = vst [vmem:[#allocation2 + $0x60] sm:$0xff] %v915
        %948 = vst [vmem:[#allocation2 + $0x68] sm:$0xff] %v916
        %949 = vst [vmem:[#allocation2 + $0x70] sm:$0xff] %v917
        %950 = vst [vmem:[#allocation2 + $0x78] sm:$0xff] %v918
        %951 = vst [vmem:[#allocation2 + $0xc0] sm:$0xff] %v919
        %952 = vst [vmem:[#allocation2 + $0xc8] sm:$0xff] %v920
        %953 = vst [vmem:[#allocation2 + $0xd0] sm:$0xff] %v921
        %954 = vst [vmem:[#allocation2 + $0xd8] sm:$0xff] %v922
        %955 = vst [vmem:[#allocation2 + $0xe0] sm:$0xff] %v923
        %956 = vst [vmem:[#allocation2 + $0xe8] sm:$0xff] %v924
        %957 = vst [vmem:[#allocation2 + $0xf0] sm:$0xff] %v925
        %958 = vst [vmem:[#allocation2 + $0xf8] sm:$0xff] %v926
        %959 = vst [vmem:[#allocation2 + $0x140] sm:$0xff] %v927
        %960 = vst [vmem:[#allocation2 + $0x148] sm:$0xff] %v928
        %961 = vst [vmem:[#allocation2 + $0x150] sm:$0xff] %v929
        %962 = vst [vmem:[#allocation2 + $0x158] sm:$0xff] %v930
        %963 = vst [vmem:[#allocation2 + $0x160] sm:$0xff] %v931
        %964 = vst [vmem:[#allocation2 + $0x168] sm:$0xff] %v932
        %965 = vst [vmem:[#allocation2 + $0x170] sm:$0xff] %v933
        %966 = vst [vmem:[#allocation2 + $0x178] sm:$0xff] %v934
        %967 = vst [vmem:[#allocation2 + $0x1c0] sm:$0xff] %v935
        %968 = vst [vmem:[#allocation2 + $0x1c8] sm:$0xff] %v936
        %969 = vst [vmem:[#allocation2 + $0x1d0] sm:$0xff] %v937
        %970 = vst [vmem:[#allocation2 + $0x1d8] sm:$0xff] %v938
        %971 = vst [vmem:[#allocation2 + $0x1e0] sm:$0xff] %v939
        %972 = vst [vmem:[#allocation2 + $0x1e8] sm:$0xff] %v940
        %973 = vst [vmem:[#allocation2 + $0x1f0] sm:$0xff] %v941
        %974 = vst [vmem:[#allocation2 + $0x1f8] sm:$0xff] %v942
      $region80: #{transformer_bottleneck_forward.1} parent=75 // pred_fallthru
        _
      %v975 = vld [vmem:[#allocation2] sm:$0xff]
      %v976 = vld [vmem:[#allocation2 + $0x8] sm:$0xff]
      %v977 = vld [vmem:[#allocation2 + $0x10] sm:$0xff]
      %v978 = vld [vmem:[#allocation2 + $0x18] sm:$0xff]
      %v979 = vld [vmem:[#allocation2 + $0x20] sm:$0xff]
      %v980 = vld [vmem:[#allocation2 + $0x28] sm:$0xff]
      %v981 = vld [vmem:[#allocation2 + $0x30] sm:$0xff]
      %v982 = vld [vmem:[#allocation2 + $0x38] sm:$0xff]
      %v983 = vld [vmem:[#allocation2 + $0x40] sm:$0xff]
      %v984 = vld [vmem:[#allocation2 + $0x48] sm:$0xff]
      %v985 = vld [vmem:[#allocation2 + $0x50] sm:$0xff]
      %v986 = vld [vmem:[#allocation2 + $0x58] sm:$0xff]
      %v987 = vld [vmem:[#allocation2 + $0x60] sm:$0xff]
      %v988 = vld [vmem:[#allocation2 + $0x68] sm:$0xff]
      %v989 = vld [vmem:[#allocation2 + $0x70] sm:$0xff]
      %v990 = vld [vmem:[#allocation2 + $0x78] sm:$0xff]
      %v991 = vld [vmem:[#allocation2 + $0x80] sm:$0xff]
      %v992 = vld [vmem:[#allocation2 + $0x88] sm:$0xff]
      %v993 = vld [vmem:[#allocation2 + $0x90] sm:$0xff]
      %v994 = vld [vmem:[#allocation2 + $0x98] sm:$0xff]
      %v995 = vld [vmem:[#allocation2 + $0xa0] sm:$0xff]
      %v996 = vld [vmem:[#allocation2 + $0xa8] sm:$0xff]
      %v997 = vld [vmem:[#allocation2 + $0xb0] sm:$0xff]
      %v998 = vld [vmem:[#allocation2 + $0xb8] sm:$0xff]
      %v999 = vld [vmem:[#allocation2 + $0xc0] sm:$0xff]
      %v1000 = vld [vmem:[#allocation2 + $0xc8] sm:$0xff]
      %v1001 = vld [vmem:[#allocation2 + $0xd0] sm:$0xff]
      %v1002 = vld [vmem:[#allocation2 + $0xd8] sm:$0xff]
      %v1003 = vld [vmem:[#allocation2 + $0xe0] sm:$0xff]
      %v1004 = vld [vmem:[#allocation2 + $0xe8] sm:$0xff]
      %v1005 = vld [vmem:[#allocation2 + $0xf0] sm:$0xff]
      %v1006 = vld [vmem:[#allocation2 + $0xf8] sm:$0xff]
      %v1007 = vld [vmem:[#allocation2 + $0x100] sm:$0xff]
      %v1008 = vld [vmem:[#allocation2 + $0x108] sm:$0xff]
      %v1009 = vld [vmem:[#allocation2 + $0x110] sm:$0xff]
      %v1010 = vld [vmem:[#allocation2 + $0x118] sm:$0xff]
      %v1011 = vld [vmem:[#allocation2 + $0x120] sm:$0xff]
      %v1012 = vld [vmem:[#allocation2 + $0x128] sm:$0xff]
      %v1013 = vld [vmem:[#allocation2 + $0x130] sm:$0xff]
      %v1014 = vld [vmem:[#allocation2 + $0x138] sm:$0xff]
      %v1015 = vld [vmem:[#allocation2 + $0x140] sm:$0xff]
      %v1016 = vld [vmem:[#allocation2 + $0x148] sm:$0xff]
      %v1017 = vld [vmem:[#allocation2 + $0x150] sm:$0xff]
      %v1018 = vld [vmem:[#allocation2 + $0x158] sm:$0xff]
      %v1019 = vld [vmem:[#allocation2 + $0x160] sm:$0xff]
      %v1020 = vld [vmem:[#allocation2 + $0x168] sm:$0xff]
      %v1021 = vld [vmem:[#allocation2 + $0x170] sm:$0xff]
      %v1022 = vld [vmem:[#allocation2 + $0x178] sm:$0xff]
      %v1023 = vld [vmem:[#allocation2 + $0x180] sm:$0xff]
      %v1024 = vld [vmem:[#allocation2 + $0x188] sm:$0xff]
      %v1025 = vld [vmem:[#allocation2 + $0x190] sm:$0xff]
      %v1026 = vld [vmem:[#allocation2 + $0x198] sm:$0xff]
      %v1027 = vld [vmem:[#allocation2 + $0x1a0] sm:$0xff]
      %v1028 = vld [vmem:[#allocation2 + $0x1a8] sm:$0xff]
      %v1029 = vld [vmem:[#allocation2 + $0x1b0] sm:$0xff]
      %v1030 = vld [vmem:[#allocation2 + $0x1b8] sm:$0xff]
      %v1031 = vld [vmem:[#allocation2 + $0x1c0] sm:$0xff]
      %v1032 = vld [vmem:[#allocation2 + $0x1c8] sm:$0xff]
      %v1033 = vld [vmem:[#allocation2 + $0x1d0] sm:$0xff]
      %v1034 = vld [vmem:[#allocation2 + $0x1d8] sm:$0xff]
      %v1035 = vld [vmem:[#allocation2 + $0x1e0] sm:$0xff]
      %v1036 = vld [vmem:[#allocation2 + $0x1e8] sm:$0xff]
      %v1037 = vld [vmem:[#allocation2 + $0x1f0] sm:$0xff]
      %v1038 = vld [vmem:[#allocation2 + $0x1f8] sm:$0xff]
      %v1039 = vld [vmem:[%s683] sm:$0xf]
      %v1040 = vld [vmem:[%s683 + $0x4] sm:$0xf]
      %v1041 = vld [vmem:[%s683 + $0x8] sm:$0xf]
      %v1042 = vld [vmem:[%s683 + $0xc] sm:$0xf]
      %v1043 = vld [vmem:[%s683 + $0x10] sm:$0xf]
      %v1044 = vld [vmem:[%s683 + $0x14] sm:$0xf]
      %v1045 = vld [vmem:[%s683 + $0x18] sm:$0xf]
      %v1046 = vld [vmem:[%s683 + $0x1c] sm:$0xf]
      %v1047 = vld [vmem:[%s683 + $0x20] sm:$0xf]
      %v1048 = vld [vmem:[%s683 + $0x24] sm:$0xf]
      %v1049 = vld [vmem:[%s683 + $0x28] sm:$0xf]
      %v1050 = vld [vmem:[%s683 + $0x2c] sm:$0xf]
      %v1051 = vpack.c.bf16 %v991, %v975
      %v1052 = vpack.c.bf16 %v992, %v976
      %v1053 = vpack.c.bf16 %v993, %v977
      %v1054 = vpack.c.bf16 %v994, %v978
      %v1055 = vpack.c.bf16 %v995, %v979
      %v1056 = vpack.c.bf16 %v996, %v980
      %v1057 = vpack.c.bf16 %v997, %v981
      %v1058 = vpack.c.bf16 %v998, %v982
      %v1059 = vpack.c.bf16 %v999, %v983
      %v1060 = vpack.c.bf16 %v1000, %v984
      %v1061 = vpack.c.bf16 %v1001, %v985
      %v1062 = vpack.c.bf16 %v1002, %v986
      %v1063 = vpack.c.bf16 %v1003, %v987
      %v1064 = vpack.c.bf16 %v1004, %v988
      %v1065 = vpack.c.bf16 %v1005, %v989
      %v1066 = vpack.c.bf16 %v1006, %v990
      %v1067 = vpack.c.bf16 %v1023, %v1007
      %v1068 = vpack.c.bf16 %v1024, %v1008
      %v1069 = vpack.c.bf16 %v1025, %v1009
      %v1070 = vpack.c.bf16 %v1026, %v1010
      %v1071 = vpack.c.bf16 %v1027, %v1011
      %v1072 = vpack.c.bf16 %v1028, %v1012
      %v1073 = vpack.c.bf16 %v1029, %v1013
      %v1074 = vpack.c.bf16 %v1030, %v1014
      %v1075 = vpack.c.bf16 %v1031, %v1015
      %v1076 = vpack.c.bf16 %v1032, %v1016
      %v1077 = vpack.c.bf16 %v1033, %v1017
      %v1078 = vpack.c.bf16 %v1034, %v1018
      %v1079 = vpack.c.bf16 %v1035, %v1019
      %v1080 = vpack.c.bf16 %v1036, %v1020
      %v1081 = vpack.c.bf16 %v1037, %v1021
      %v1082 = vpack.c.bf16 %v1038, %v1022
      %v1083 = vld [vmem:[%s688] sm:$0xff]
      %v1084 = vld [vmem:[%s688 + $0x8] sm:$0xff]
      %v1085 = vld [vmem:[%s688 + $0x10] sm:$0xff]
      %v1086 = vld [vmem:[%s688 + $0x18] sm:$0xff]
      %v1087 = vld [vmem:[%s688 + $0x20] sm:$0xff]
      %v1088 = vld [vmem:[%s688 + $0x28] sm:$0xff]
      %v1089 = vld [vmem:[%s688 + $0x30] sm:$0xff]
      %v1090 = vld [vmem:[%s688 + $0x38] sm:$0xff]
      %v1091 = vld [vmem:[%s688 + $0x40] sm:$0xff]
      %v1092 = vld [vmem:[%s688 + $0x48] sm:$0xff]
      %v1093 = vld [vmem:[%s688 + $0x50] sm:$0xff]
      %v1094 = vld [vmem:[%s688 + $0x58] sm:$0xff]
      %1096 = vset.pattern.permute.xlu0 0
      %1097 = vperm.xlu0 %1096, %v1083
      %v1098 = vpop.permute.xlu0 %1097
      %1101 = vset.pattern.permute.xlu0 0
      %1102 = vperm.xlu0 %1101, %v1084
      %v1103 = vpop.permute.xlu0 %1102
      %1106 = vset.pattern.permute.xlu0 0
      %1107 = vperm.xlu0 %1106, %v1085
      %v1108 = vpop.permute.xlu0 %1107
      %1111 = vset.pattern.permute.xlu0 0
      %1112 = vperm.xlu0 %1111, %v1086
      %v1113 = vpop.permute.xlu0 %1112
      %1116 = vset.pattern.permute.xlu0 0
      %1117 = vperm.xlu0 %1116, %v1087
      %v1118 = vpop.permute.xlu0 %1117
      %1121 = vset.pattern.permute.xlu0 0
      %1122 = vperm.xlu0 %1121, %v1088
      %v1123 = vpop.permute.xlu0 %1122
      %1126 = vset.pattern.permute.xlu0 0
      %1127 = vperm.xlu0 %1126, %v1089
      %v1128 = vpop.permute.xlu0 %1127
      %1131 = vset.pattern.permute.xlu0 0
      %1132 = vperm.xlu0 %1131, %v1090
      %v1133 = vpop.permute.xlu0 %1132
      %1136 = vset.pattern.permute.xlu0 0
      %1137 = vperm.xlu0 %1136, %v1091
      %v1138 = vpop.permute.xlu0 %1137
      %1141 = vset.pattern.permute.xlu0 0
      %1142 = vperm.xlu0 %1141, %v1092
      %v1143 = vpop.permute.xlu0 %1142
      %1146 = vset.pattern.permute.xlu0 0
      %1147 = vperm.xlu0 %1146, %v1093
      %v1148 = vpop.permute.xlu0 %1147
      %1151 = vset.pattern.permute.xlu0 0
      %1152 = vperm.xlu0 %1151, %v1094
      %v1153 = vpop.permute.xlu0 %1152
      %v1167 = vunpack.c.l.b16 %v1039
      %v1168 = vunpack.c.l.b16 %v1040
      %v1169 = vunpack.c.l.b16 %v1041
      %v1170 = vunpack.c.l.b16 %v1042
      %v1171 = vunpack.c.l.b16 %v1043
      %v1172 = vunpack.c.l.b16 %v1044
      %v1173 = vunpack.c.l.b16 %v1045
      %v1174 = vunpack.c.l.b16 %v1046
      %v1175 = vunpack.c.l.b16 %v1047
      %v1176 = vunpack.c.l.b16 %v1048
      %v1177 = vunpack.c.l.b16 %v1049
      %v1178 = vunpack.c.l.b16 %v1050
      %v1179 = vpack.c.b16 %v1168, %v1167
      %v1180 = vpack.c.b16 %v1170, %v1169
      %v1181 = vpack.c.b16 %v1172, %v1171
      %v1182 = vpack.c.b16 %v1174, %v1173
      %v1183 = vpack.c.b16 %v1176, %v1175
      %v1184 = vpack.c.b16 %v1178, %v1177
      %vm1185 = vcmask 261120
      %v1187 = vsel %vm1185, %v1179, 0
      %v1190 = vsel %vm1185, %v1180, 0
      %v1193 = vsel %vm1185, %v1181, 0
      %v1196 = vsel %vm1185, %v1182, 0
      %v1199 = vsel %vm1185, %v1183, 0
      %v1202 = vsel %vm1185, %v1184, 0
      %1204 = vmatprep.subr.bf16.mxu0 %v1052
      %1205 = vmatpush1.bf16.msra.mxu0 %v1051
      %1206 = vmatprep.subr.bf16.mxu0 %v1068
      %1207 = vmatpush1.bf16.msra.mxu0 %v1067
      %1208 = vmatprep.subr.bf16.mxu0 0
      %1209 = vmatpush1.bf16.msra.mxu0 0
      %1210 = vmatprep.subr.bf16.mxu0 0
      %1211 = vmatpush1.bf16.msra.mxu0 0
      %1212 = vmatprep.subr.bf16.mxu0 0
      %1213 = vmatpush1.bf16.msra.mxu0 0
      %1214 = vmatprep.subr.bf16.mxu0 0
      %1215 = vmatpush1.bf16.msra.mxu0 0
      %1216 = vmatprep.subr.bf16.mxu0 0
      %1217 = vmatpush1.bf16.msra.mxu0 0
      %1218 = vmatprep.subr.bf16.mxu0 0
      %1219 = vmatpush1.bf16.msra.mxu0 0
      %1220 = vmatprep.subr.bf16.mxu0 0
      %1221 = vmatpush1.bf16.msra.mxu0 0
      %1222 = vmatprep.subr.bf16.mxu0 0
      %1223 = vmatpush1.bf16.msra.mxu0 0
      %1224 = vmatprep.subr.bf16.mxu0 0
      %1225 = vmatpush1.bf16.msra.mxu0 0
      %1226 = vmatprep.subr.bf16.mxu0 0
      %1227 = vmatpush1.bf16.msra.mxu0 0
      %1228 = vmatprep.subr.bf16.mxu0 0
      %1229 = vmatpush1.bf16.msra.mxu0 0
      %1230 = vmatprep.subr.bf16.mxu0 0
      %1231 = vmatpush1.bf16.msra.mxu0 0
      %1232 = vmatprep.subr.bf16.mxu0 0
      %1233 = vmatpush1.bf16.msra.mxu0 0
      %1234 = vmatprep.subr.bf16.mxu0 0
      %1235 = vmatpush1.bf16.msra.mxu0 0
      %1236 = vmatprep.mubr.bf16.mxu0 0
      %1237 = vmatmul.mubr.bf16.gmra.mrb[0].mxu0 %v1187
      %v1238 = vpop.f32.mrb[0].mxu0
      %v1239 = vadd.f32 %v1098, %v1238
      %v1240 = vpop.f32.mrb[0].mxu0
      %v1241 = vadd.f32 %v1098, %v1240
      %v1242 = vpop.f32.mrb[0].mxu0
      %v1243 = vadd.f32 %v1103, %v1242
      %v1244 = vpop.f32.mrb[0].mxu0
      %v1245 = vadd.f32 %v1103, %v1244
      %1246 = vmatprep.mubr.bf16.mxu0 0
      %1247 = vmatmul.mubr.bf16.gmra.mrb[0].mxu0 %v1190
      %v1248 = vpop.f32.mrb[0].mxu0
      %v1249 = vadd.f32 %v1108, %v1248
      %v1250 = vpop.f32.mrb[0].mxu0
      %v1251 = vadd.f32 %v1108, %v1250
      %v1252 = vpop.f32.mrb[0].mxu0
      %v1253 = vadd.f32 %v1113, %v1252
      %v1254 = vpop.f32.mrb[0].mxu0
      %v1255 = vadd.f32 %v1113, %v1254
      %1256 = vmatprep.mubr.bf16.mxu0 0
      %1257 = vmatmul.mubr.bf16.gmra.mrb[0].mxu0 %v1193
      %v1258 = vpop.f32.mrb[0].mxu0
      %v1259 = vadd.f32 %v1118, %v1258
      %v1260 = vpop.f32.mrb[0].mxu0
      %v1261 = vadd.f32 %v1118, %v1260
      %v1262 = vpop.f32.mrb[0].mxu0
      %v1263 = vadd.f32 %v1123, %v1262
      %v1264 = vpop.f32.mrb[0].mxu0
      %v1265 = vadd.f32 %v1123, %v1264
      %1266 = vmatprep.mubr.bf16.mxu0 0
      %1267 = vmatmul.mubr.bf16.gmra.mrb[0].mxu0 %v1196
      %v1268 = vpop.f32.mrb[0].mxu0
      %v1269 = vadd.f32 %v1128, %v1268
      %v1270 = vpop.f32.mrb[0].mxu0
      %v1271 = vadd.f32 %v1128, %v1270
      %v1272 = vpop.f32.mrb[0].mxu0
      %v1273 = vadd.f32 %v1133, %v1272
      %v1274 = vpop.f32.mrb[0].mxu0
      %v1275 = vadd.f32 %v1133, %v1274
      %1276 = vmatprep.mubr.bf16.mxu0 0
      %1277 = vmatmul.mubr.bf16.gmra.mrb[0].mxu0 %v1199
      %v1278 = vpop.f32.mrb[0].mxu0
      %v1279 = vadd.f32 %v1138, %v1278
      %v1280 = vpop.f32.mrb[0].mxu0
      %v1281 = vadd.f32 %v1138, %v1280
      %v1282 = vpop.f32.mrb[0].mxu0
      %v1283 = vadd.f32 %v1143, %v1282
      %v1284 = vpop.f32.mrb[0].mxu0
      %v1285 = vadd.f32 %v1143, %v1284
      %1286 = vmatprep.mubr.bf16.mxu0 0
      %1287 = vmatmul.mubr.bf16.gmra.mrb[0].mxu0 %v1202
      %v1288 = vpop.f32.mrb[0].mxu0
      %v1289 = vadd.f32 %v1148, %v1288
      %v1290 = vpop.f32.mrb[0].mxu0
      %v1291 = vadd.f32 %v1148, %v1290
      %v1292 = vpop.f32.mrb[0].mxu0
      %v1293 = vadd.f32 %v1153, %v1292
      %v1294 = vpop.f32.mrb[0].mxu0
      %v1295 = vadd.f32 %v1153, %v1294
      %1296 = vdwg.mxu0
      %1297 = vmatprep.subr.bf16.mxu0 %v1054
      %1298 = vmatpush1.bf16.msra.mxu0 %v1053
      %1299 = vmatprep.subr.bf16.mxu0 %v1070
      %1300 = vmatpush1.bf16.msra.mxu0 %v1069
      %1301 = vmatprep.subr.bf16.mxu0 0
      %1302 = vmatpush1.bf16.msra.mxu0 0
      %1303 = vmatprep.subr.bf16.mxu0 0
      %1304 = vmatpush1.bf16.msra.mxu0 0
      %1305 = vmatprep.subr.bf16.mxu0 0
      %1306 = vmatpush1.bf16.msra.mxu0 0
      %1307 = vmatprep.subr.bf16.mxu0 0
      %1308 = vmatpush1.bf16.msra.mxu0 0
      %1309 = vmatprep.subr.bf16.mxu0 0
      %1310 = vmatpush1.bf16.msra.mxu0 0
      %1311 = vmatprep.subr.bf16.mxu0 0
      %1312 = vmatpush1.bf16.msra.mxu0 0
      %1313 = vmatprep.subr.bf16.mxu0 0
      %1314 = vmatpush1.bf16.msra.mxu0 0
      %1315 = vmatprep.subr.bf16.mxu0 0
      %1316 = vmatpush1.bf16.msra.mxu0 0
      %1317 = vmatprep.subr.bf16.mxu0 0
      %1318 = vmatpush1.bf16.msra.mxu0 0
      %1319 = vmatprep.subr.bf16.mxu0 0
      %1320 = vmatpush1.bf16.msra.mxu0 0
      %1321 = vmatprep.subr.bf16.mxu0 0
      %1322 = vmatpush1.bf16.msra.mxu0 0
      %1323 = vmatprep.subr.bf16.mxu0 0
      %1324 = vmatpush1.bf16.msra.mxu0 0
      %1325 = vmatprep.subr.bf16.mxu0 0
      %1326 = vmatpush1.bf16.msra.mxu0 0
      %1327 = vmatprep.subr.bf16.mxu0 0
      %1328 = vmatpush1.bf16.msra.mxu0 0
      %1329 = vmatprep.mubr.bf16.mxu0 0
      %1330 = vmatmul.mubr.bf16.gmra.mrb[0].mxu0 %v1187
      %v1331 = vpop.f32.mrb[0].mxu0
      %v1332 = vadd.f32 %v1098, %v1331
      %v1333 = vpop.f32.mrb[0].mxu0
      %v1334 = vadd.f32 %v1098, %v1333
      %v1335 = vpop.f32.mrb[0].mxu0
      %v1336 = vadd.f32 %v1103, %v1335
      %v1337 = vpop.f32.mrb[0].mxu0
      %v1338 = vadd.f32 %v1103, %v1337
      %1339 = vmatprep.mubr.bf16.mxu0 0
      %1340 = vmatmul.mubr.bf16.gmra.mrb[0].mxu0 %v1190
      %v1341 = vpop.f32.mrb[0].mxu0
      %v1342 = vadd.f32 %v1108, %v1341
      %v1343 = vpop.f32.mrb[0].mxu0
      %v1344 = vadd.f32 %v1108, %v1343
      %v1345 = vpop.f32.mrb[0].mxu0
      %v1346 = vadd.f32 %v1113, %v1345
      %v1347 = vpop.f32.mrb[0].mxu0
      %v1348 = vadd.f32 %v1113, %v1347
      %1349 = vmatprep.mubr.bf16.mxu0 0
      %1350 = vmatmul.mubr.bf16.gmra.mrb[0].mxu0 %v1193
      %v1351 = vpop.f32.mrb[0].mxu0
      %v1352 = vadd.f32 %v1118, %v1351
      %v1353 = vpop.f32.mrb[0].mxu0
      %v1354 = vadd.f32 %v1118, %v1353
      %v1355 = vpop.f32.mrb[0].mxu0
      %v1356 = vadd.f32 %v1123, %v1355
      %v1357 = vpop.f32.mrb[0].mxu0
      %v1358 = vadd.f32 %v1123, %v1357
      %1359 = vmatprep.mubr.bf16.mxu0 0
      %1360 = vmatmul.mubr.bf16.gmra.mrb[0].mxu0 %v1196
      %v1361 = vpop.f32.mrb[0].mxu0
      %v1362 = vadd.f32 %v1128, %v1361
      %v1363 = vpop.f32.mrb[0].mxu0
      %v1364 = vadd.f32 %v1128, %v1363
      %v1365 = vpop.f32.mrb[0].mxu0
      %v1366 = vadd.f32 %v1133, %v1365
      %v1367 = vpop.f32.mrb[0].mxu0
      %v1368 = vadd.f32 %v1133, %v1367
      %1369 = vmatprep.mubr.bf16.mxu0 0
      %1370 = vmatmul.mubr.bf16.gmra.mrb[0].mxu0 %v1199
      %v1371 = vpop.f32.mrb[0].mxu0
      %v1372 = vadd.f32 %v1138, %v1371
      %v1373 = vpop.f32.mrb[0].mxu0
      %v1374 = vadd.f32 %v1138, %v1373
      %v1375 = vpop.f32.mrb[0].mxu0
      %v1376 = vadd.f32 %v1143, %v1375
      %v1377 = vpop.f32.mrb[0].mxu0
      %v1378 = vadd.f32 %v1143, %v1377
      %1379 = vmatprep.mubr.bf16.mxu0 0
      %1380 = vmatmul.mubr.bf16.gmra.mrb[0].mxu0 %v1202
      %v1381 = vpop.f32.mrb[0].mxu0
      %v1382 = vadd.f32 %v1148, %v1381
      %v1383 = vpop.f32.mrb[0].mxu0
      %v1384 = vadd.f32 %v1148, %v1383
      %v1385 = vpop.f32.mrb[0].mxu0
      %v1386 = vadd.f32 %v1153, %v1385
      %v1387 = vpop.f32.mrb[0].mxu0
      %v1388 = vadd.f32 %v1153, %v1387
      %1389 = vdwg.mxu0
      %1390 = vmatprep.subr.bf16.mxu0 %v1056
      %1391 = vmatpush1.bf16.msra.mxu0 %v1055
      %1392 = vmatprep.subr.bf16.mxu0 %v1072
      %1393 = vmatpush1.bf16.msra.mxu0 %v1071
      %1394 = vmatprep.subr.bf16.mxu0 0
      %1395 = vmatpush1.bf16.msra.mxu0 0
      %1396 = vmatprep.subr.bf16.mxu0 0
      %1397 = vmatpush1.bf16.msra.mxu0 0
      %1398 = vmatprep.subr.bf16.mxu0 0
      %1399 = vmatpush1.bf16.msra.mxu0 0
      %1400 = vmatprep.subr.bf16.mxu0 0
      %1401 = vmatpush1.bf16.msra.mxu0 0
      %1402 = vmatprep.subr.bf16.mxu0 0
      %1403 = vmatpush1.bf16.msra.mxu0 0
      %1404 = vmatprep.subr.bf16.mxu0 0
      %1405 = vmatpush1.bf16.msra.mxu0 0
      %1406 = vmatprep.subr.bf16.mxu0 0
      %1407 = vmatpush1.bf16.msra.mxu0 0
      %1408 = vmatprep.subr.bf16.mxu0 0
      %1409 = vmatpush1.bf16.msra.mxu0 0
      %1410 = vmatprep.subr.bf16.mxu0 0
      %1411 = vmatpush1.bf16.msra.mxu0 0
      %1412 = vmatprep.subr.bf16.mxu0 0
      %1413 = vmatpush1.bf16.msra.mxu0 0
      %1414 = vmatprep.subr.bf16.mxu0 0
      %1415 = vmatpush1.bf16.msra.mxu0 0
      %1416 = vmatprep.subr.bf16.mxu0 0
      %1417 = vmatpush1.bf16.msra.mxu0 0
      %1418 = vmatprep.subr.bf16.mxu0 0
      %1419 = vmatpush1.bf16.msra.mxu0 0
      %1420 = vmatprep.subr.bf16.mxu0 0
      %1421 = vmatpush1.bf16.msra.mxu0 0
      %1422 = vmatprep.mubr.bf16.mxu0 0
      %1423 = vmatmul.mubr.bf16.gmra.mrb[0].mxu0 %v1187
      %v1424 = vpop.f32.mrb[0].mxu0
      %v1425 = vadd.f32 %v1098, %v1424
      %v1426 = vpop.f32.mrb[0].mxu0
      %v1427 = vadd.f32 %v1098, %v1426
      %v1428 = vpop.f32.mrb[0].mxu0
      %v1429 = vadd.f32 %v1103, %v1428
      %v1430 = vpop.f32.mrb[0].mxu0
      %v1431 = vadd.f32 %v1103, %v1430
      %1432 = vmatprep.mubr.bf16.mxu0 0
      %1433 = vmatmul.mubr.bf16.gmra.mrb[0].mxu0 %v1190
      %v1434 = vpop.f32.mrb[0].mxu0
      %v1435 = vadd.f32 %v1108, %v1434
      %v1436 = vpop.f32.mrb[0].mxu0
      %v1437 = vadd.f32 %v1108, %v1436
      %v1438 = vpop.f32.mrb[0].mxu0
      %v1439 = vadd.f32 %v1113, %v1438
      %v1440 = vpop.f32.mrb[0].mxu0
      %v1441 = vadd.f32 %v1113, %v1440
      %1442 = vmatprep.mubr.bf16.mxu0 0
      %1443 = vmatmul.mubr.bf16.gmra.mrb[0].mxu0 %v1193
      %v1444 = vpop.f32.mrb[0].mxu0
      %v1445 = vadd.f32 %v1118, %v1444
      %v1446 = vpop.f32.mrb[0].mxu0
      %v1447 = vadd.f32 %v1118, %v1446
      %v1448 = vpop.f32.mrb[0].mxu0
      %v1449 = vadd.f32 %v1123, %v1448
      %v1450 = vpop.f32.mrb[0].mxu0
      %v1451 = vadd.f32 %v1123, %v1450
      %1452 = vmatprep.mubr.bf16.mxu0 0
      %1453 = vmatmul.mubr.bf16.gmra.mrb[0].mxu0 %v1196
      %v1454 = vpop.f32.mrb[0].mxu0
      %v1455 = vadd.f32 %v1128, %v1454
      %v1456 = vpop.f32.mrb[0].mxu0
      %v1457 = vadd.f32 %v1128, %v1456
      %v1458 = vpop.f32.mrb[0].mxu0
      %v1459 = vadd.f32 %v1133, %v1458
      %v1460 = vpop.f32.mrb[0].mxu0
      %v1461 = vadd.f32 %v1133, %v1460
      %1462 = vmatprep.mubr.bf16.mxu0 0
      %1463 = vmatmul.mubr.bf16.gmra.mrb[0].mxu0 %v1199
      %v1464 = vpop.f32.mrb[0].mxu0
      %v1465 = vadd.f32 %v1138, %v1464
      %v1466 = vpop.f32.mrb[0].mxu0
      %v1467 = vadd.f32 %v1138, %v1466
      %v1468 = vpop.f32.mrb[0].mxu0
      %v1469 = vadd.f32 %v1143, %v1468
      %v1470 = vpop.f32.mrb[0].mxu0
      %v1471 = vadd.f32 %v1143, %v1470
      %1472 = vmatprep.mubr.bf16.mxu0 0
      %1473 = vmatmul.mubr.bf16.gmra.mrb[0].mxu0 %v1202
      %v1474 = vpop.f32.mrb[0].mxu0
      %v1475 = vadd.f32 %v1148, %v1474
      %v1476 = vpop.f32.mrb[0].mxu0
      %v1477 = vadd.f32 %v1148, %v1476
      %v1478 = vpop.f32.mrb[0].mxu0
      %v1479 = vadd.f32 %v1153, %v1478
      %v1480 = vpop.f32.mrb[0].mxu0
      %v1481 = vadd.f32 %v1153, %v1480
      %1482 = vdwg.mxu0
      %1483 = vmatprep.subr.bf16.mxu0 %v1058
      %1484 = vmatpush1.bf16.msra.mxu0 %v1057
      %1485 = vmatprep.subr.bf16.mxu0 %v1074
      %1486 = vmatpush1.bf16.msra.mxu0 %v1073
      %1487 = vmatprep.subr.bf16.mxu0 0
      %1488 = vmatpush1.bf16.msra.mxu0 0
      %1489 = vmatprep.subr.bf16.mxu0 0
      %1490 = vmatpush1.bf16.msra.mxu0 0
      %1491 = vmatprep.subr.bf16.mxu0 0
      %1492 = vmatpush1.bf16.msra.mxu0 0
      %1493 = vmatprep.subr.bf16.mxu0 0
      %1494 = vmatpush1.bf16.msra.mxu0 0
      %1495 = vmatprep.subr.bf16.mxu0 0
      %1496 = vmatpush1.bf16.msra.mxu0 0
      %1497 = vmatprep.subr.bf16.mxu0 0
      %1498 = vmatpush1.bf16.msra.mxu0 0
      %1499 = vmatprep.subr.bf16.mxu0 0
      %1500 = vmatpush1.bf16.msra.mxu0 0
      %1501 = vmatprep.subr.bf16.mxu0 0
      %1502 = vmatpush1.bf16.msra.mxu0 0
      %1503 = vmatprep.subr.bf16.mxu0 0
      %1504 = vmatpush1.bf16.msra.mxu0 0
      %1505 = vmatprep.subr.bf16.mxu0 0
      %1506 = vmatpush1.bf16.msra.mxu0 0
      %1507 = vmatprep.subr.bf16.mxu0 0
      %1508 = vmatpush1.bf16.msra.mxu0 0
      %1509 = vmatprep.subr.bf16.mxu0 0
      %1510 = vmatpush1.bf16.msra.mxu0 0
      %1511 = vmatprep.subr.bf16.mxu0 0
      %1512 = vmatpush1.bf16.msra.mxu0 0
      %1513 = vmatprep.subr.bf16.mxu0 0
      %1514 = vmatpush1.bf16.msra.mxu0 0
      %1515 = vmatprep.mubr.bf16.mxu0 0
      %1516 = vmatmul.mubr.bf16.gmra.mrb[0].mxu0 %v1187
      %v1517 = vpop.f32.mrb[0].mxu0
      %v1518 = vadd.f32 %v1098, %v1517
      %v1519 = vpop.f32.mrb[0].mxu0
      %v1520 = vadd.f32 %v1098, %v1519
      %v1521 = vpop.f32.mrb[0].mxu0
      %v1522 = vadd.f32 %v1103, %v1521
      %v1523 = vpop.f32.mrb[0].mxu0
      %v1524 = vadd.f32 %v1103, %v1523
      %1525 = vmatprep.mubr.bf16.mxu0 0
      %1526 = vmatmul.mubr.bf16.gmra.mrb[0].mxu0 %v1190
      %v1527 = vpop.f32.mrb[0].mxu0
      %v1528 = vadd.f32 %v1108, %v1527
      %v1529 = vpop.f32.mrb[0].mxu0
      %v1530 = vadd.f32 %v1108, %v1529
      %v1531 = vpop.f32.mrb[0].mxu0
      %v1532 = vadd.f32 %v1113, %v1531
      %v1533 = vpop.f32.mrb[0].mxu0
      %v1534 = vadd.f32 %v1113, %v1533
      %1535 = vmatprep.mubr.bf16.mxu0 0
      %1536 = vmatmul.mubr.bf16.gmra.mrb[0].mxu0 %v1193
      %v1537 = vpop.f32.mrb[0].mxu0
      %v1538 = vadd.f32 %v1118, %v1537
      %v1539 = vpop.f32.mrb[0].mxu0
      %v1540 = vadd.f32 %v1118, %v1539
      %v1541 = vpop.f32.mrb[0].mxu0
      %v1542 = vadd.f32 %v1123, %v1541
      %v1543 = vpop.f32.mrb[0].mxu0
      %v1544 = vadd.f32 %v1123, %v1543
      %1545 = vmatprep.mubr.bf16.mxu0 0
      %1546 = vmatmul.mubr.bf16.gmra.mrb[0].mxu0 %v1196
      %v1547 = vpop.f32.mrb[0].mxu0
      %v1548 = vadd.f32 %v1128, %v1547
      %v1549 = vpop.f32.mrb[0].mxu0
      %v1550 = vadd.f32 %v1128, %v1549
      %v1551 = vpop.f32.mrb[0].mxu0
      %v1552 = vadd.f32 %v1133, %v1551
      %v1553 = vpop.f32.mrb[0].mxu0
      %v1554 = vadd.f32 %v1133, %v1553
      %1555 = vmatprep.mubr.bf16.mxu0 0
      %1556 = vmatmul.mubr.bf16.gmra.mrb[0].mxu0 %v1199
      %v1557 = vpop.f32.mrb[0].mxu0
      %v1558 = vadd.f32 %v1138, %v1557
      %v1559 = vpop.f32.mrb[0].mxu0
      %v1560 = vadd.f32 %v1138, %v1559
      %v1561 = vpop.f32.mrb[0].mxu0
      %v1562 = vadd.f32 %v1143, %v1561
      %v1563 = vpop.f32.mrb[0].mxu0
      %v1564 = vadd.f32 %v1143, %v1563
      %1565 = vmatprep.mubr.bf16.mxu0 0
      %1566 = vmatmul.mubr.bf16.gmra.mrb[0].mxu0 %v1202
      %v1567 = vpop.f32.mrb[0].mxu0
      %v1568 = vadd.f32 %v1148, %v1567
      %v1569 = vpop.f32.mrb[0].mxu0
      %v1570 = vadd.f32 %v1148, %v1569
      %v1571 = vpop.f32.mrb[0].mxu0
      %v1572 = vadd.f32 %v1153, %v1571
      %v1573 = vpop.f32.mrb[0].mxu0
      %v1574 = vadd.f32 %v1153, %v1573
      %1575 = vdwg.mxu0
      %1576 = vmatprep.subr.bf16.mxu0 %v1060
      %1577 = vmatpush1.bf16.msra.mxu0 %v1059
      %1578 = vmatprep.subr.bf16.mxu0 %v1076
      %1579 = vmatpush1.bf16.msra.mxu0 %v1075
      %1580 = vmatprep.subr.bf16.mxu0 0
      %1581 = vmatpush1.bf16.msra.mxu0 0
      %1582 = vmatprep.subr.bf16.mxu0 0
      %1583 = vmatpush1.bf16.msra.mxu0 0
      %1584 = vmatprep.subr.bf16.mxu0 0
      %1585 = vmatpush1.bf16.msra.mxu0 0
      %1586 = vmatprep.subr.bf16.mxu0 0
      %1587 = vmatpush1.bf16.msra.mxu0 0
      %1588 = vmatprep.subr.bf16.mxu0 0
      %1589 = vmatpush1.bf16.msra.mxu0 0
      %1590 = vmatprep.subr.bf16.mxu0 0
      %1591 = vmatpush1.bf16.msra.mxu0 0
      %1592 = vmatprep.subr.bf16.mxu0 0
      %1593 = vmatpush1.bf16.msra.mxu0 0
      %1594 = vmatprep.subr.bf16.mxu0 0
      %1595 = vmatpush1.bf16.msra.mxu0 0
      %1596 = vmatprep.subr.bf16.mxu0 0
      %1597 = vmatpush1.bf16.msra.mxu0 0
      %1598 = vmatprep.subr.bf16.mxu0 0
      %1599 = vmatpush1.bf16.msra.mxu0 0
      %1600 = vmatprep.subr.bf16.mxu0 0
      %1601 = vmatpush1.bf16.msra.mxu0 0
      %1602 = vmatprep.subr.bf16.mxu0 0
      %1603 = vmatpush1.bf16.msra.mxu0 0
      %1604 = vmatprep.subr.bf16.mxu0 0
      %1605 = vmatpush1.bf16.msra.mxu0 0
      %1606 = vmatprep.subr.bf16.mxu0 0
      %1607 = vmatpush1.bf16.msra.mxu0 0
      %1608 = vmatprep.mubr.bf16.mxu0 0
      %1609 = vmatmul.mubr.bf16.gmra.mrb[0].mxu0 %v1187
      %v1610 = vpop.f32.mrb[0].mxu0
      %v1611 = vadd.f32 %v1098, %v1610
      %v1612 = vpop.f32.mrb[0].mxu0
      %v1613 = vadd.f32 %v1098, %v1612
      %v1614 = vpop.f32.mrb[0].mxu0
      %v1615 = vadd.f32 %v1103, %v1614
      %v1616 = vpop.f32.mrb[0].mxu0
      %v1617 = vadd.f32 %v1103, %v1616
      %1618 = vmatprep.mubr.bf16.mxu0 0
      %1619 = vmatmul.mubr.bf16.gmra.mrb[0].mxu0 %v1190
      %v1620 = vpop.f32.mrb[0].mxu0
      %v1621 = vadd.f32 %v1108, %v1620
      %v1622 = vpop.f32.mrb[0].mxu0
      %v1623 = vadd.f32 %v1108, %v1622
      %v1624 = vpop.f32.mrb[0].mxu0
      %v1625 = vadd.f32 %v1113, %v1624
      %v1626 = vpop.f32.mrb[0].mxu0
      %v1627 = vadd.f32 %v1113, %v1626
      %1628 = vmatprep.mubr.bf16.mxu0 0
      %1629 = vmatmul.mubr.bf16.gmra.mrb[0].mxu0 %v1193
      %v1630 = vpop.f32.mrb[0].mxu0
      %v1631 = vadd.f32 %v1118, %v1630
      %v1632 = vpop.f32.mrb[0].mxu0
      %v1633 = vadd.f32 %v1118, %v1632
      %v1634 = vpop.f32.mrb[0].mxu0
      %v1635 = vadd.f32 %v1123, %v1634
      %v1636 = vpop.f32.mrb[0].mxu0
      %v1637 = vadd.f32 %v1123, %v1636
      %1638 = vmatprep.mubr.bf16.mxu0 0
      %1639 = vmatmul.mubr.bf16.gmra.mrb[0].mxu0 %v1196
      %v1640 = vpop.f32.mrb[0].mxu0
      %v1641 = vadd.f32 %v1128, %v1640
      %v1642 = vpop.f32.mrb[0].mxu0
      %v1643 = vadd.f32 %v1128, %v1642
      %v1644 = vpop.f32.mrb[0].mxu0
      %v1645 = vadd.f32 %v1133, %v1644
      %v1646 = vpop.f32.mrb[0].mxu0
      %v1647 = vadd.f32 %v1133, %v1646
      %1648 = vmatprep.mubr.bf16.mxu0 0
      %1649 = vmatmul.mubr.bf16.gmra.mrb[0].mxu0 %v1199
      %v1650 = vpop.f32.mrb[0].mxu0
      %v1651 = vadd.f32 %v1138, %v1650
      %v1652 = vpop.f32.mrb[0].mxu0
      %v1653 = vadd.f32 %v1138, %v1652
      %v1654 = vpop.f32.mrb[0].mxu0
      %v1655 = vadd.f32 %v1143, %v1654
      %v1656 = vpop.f32.mrb[0].mxu0
      %v1657 = vadd.f32 %v1143, %v1656
      %1658 = vmatprep.mubr.bf16.mxu0 0
      %1659 = vmatmul.mubr.bf16.gmra.mrb[0].mxu0 %v1202
      %v1660 = vpop.f32.mrb[0].mxu0
      %v1661 = vadd.f32 %v1148, %v1660
      %v1662 = vpop.f32.mrb[0].mxu0
      %v1663 = vadd.f32 %v1148, %v1662
      %v1664 = vpop.f32.mrb[0].mxu0
      %v1665 = vadd.f32 %v1153, %v1664
      %v1666 = vpop.f32.mrb[0].mxu0
      %v1667 = vadd.f32 %v1153, %v1666
      %1668 = vdwg.mxu0
      %1669 = vmatprep.subr.bf16.mxu0 %v1062
      %1670 = vmatpush1.bf16.msra.mxu0 %v1061
      %1671 = vmatprep.subr.bf16.mxu0 %v1078
      %1672 = vmatpush1.bf16.msra.mxu0 %v1077
      %1673 = vmatprep.subr.bf16.mxu0 0
      %1674 = vmatpush1.bf16.msra.mxu0 0
      %1675 = vmatprep.subr.bf16.mxu0 0
      %1676 = vmatpush1.bf16.msra.mxu0 0
      %1677 = vmatprep.subr.bf16.mxu0 0
      %1678 = vmatpush1.bf16.msra.mxu0 0
      %1679 = vmatprep.subr.bf16.mxu0 0
      %1680 = vmatpush1.bf16.msra.mxu0 0
      %1681 = vmatprep.subr.bf16.mxu0 0
      %1682 = vmatpush1.bf16.msra.mxu0 0
      %1683 = vmatprep.subr.bf16.mxu0 0
      %1684 = vmatpush1.bf16.msra.mxu0 0
      %1685 = vmatprep.subr.bf16.mxu0 0
      %1686 = vmatpush1.bf16.msra.mxu0 0
      %1687 = vmatprep.subr.bf16.mxu0 0
      %1688 = vmatpush1.bf16.msra.mxu0 0
      %1689 = vmatprep.subr.bf16.mxu0 0
      %1690 = vmatpush1.bf16.msra.mxu0 0
      %1691 = vmatprep.subr.bf16.mxu0 0
      %1692 = vmatpush1.bf16.msra.mxu0 0
      %1693 = vmatprep.subr.bf16.mxu0 0
      %1694 = vmatpush1.bf16.msra.mxu0 0
      %1695 = vmatprep.subr.bf16.mxu0 0
      %1696 = vmatpush1.bf16.msra.mxu0 0
      %1697 = vmatprep.subr.bf16.mxu0 0
      %1698 = vmatpush1.bf16.msra.mxu0 0
      %1699 = vmatprep.subr.bf16.mxu0 0
      %1700 = vmatpush1.bf16.msra.mxu0 0
      %1701 = vmatprep.mubr.bf16.mxu0 0
      %1702 = vmatmul.mubr.bf16.gmra.mrb[0].mxu0 %v1187
      %v1703 = vpop.f32.mrb[0].mxu0
      %v1704 = vadd.f32 %v1098, %v1703
      %v1705 = vpop.f32.mrb[0].mxu0
      %v1706 = vadd.f32 %v1098, %v1705
      %v1707 = vpop.f32.mrb[0].mxu0
      %v1708 = vadd.f32 %v1103, %v1707
      %v1709 = vpop.f32.mrb[0].mxu0
      %v1710 = vadd.f32 %v1103, %v1709
      %1711 = vmatprep.mubr.bf16.mxu0 0
      %1712 = vmatmul.mubr.bf16.gmra.mrb[0].mxu0 %v1190
      %v1713 = vpop.f32.mrb[0].mxu0
      %v1714 = vadd.f32 %v1108, %v1713
      %v1715 = vpop.f32.mrb[0].mxu0
      %v1716 = vadd.f32 %v1108, %v1715
      %v1717 = vpop.f32.mrb[0].mxu0
      %v1718 = vadd.f32 %v1113, %v1717
      %v1719 = vpop.f32.mrb[0].mxu0
      %v1720 = vadd.f32 %v1113, %v1719
      %1721 = vmatprep.mubr.bf16.mxu0 0
      %1722 = vmatmul.mubr.bf16.gmra.mrb[0].mxu0 %v1193
      %v1723 = vpop.f32.mrb[0].mxu0
      %v1724 = vadd.f32 %v1118, %v1723
      %v1725 = vpop.f32.mrb[0].mxu0
      %v1726 = vadd.f32 %v1118, %v1725
      %v1727 = vpop.f32.mrb[0].mxu0
      %v1728 = vadd.f32 %v1123, %v1727
      %v1729 = vpop.f32.mrb[0].mxu0
      %v1730 = vadd.f32 %v1123, %v1729
      %1731 = vmatprep.mubr.bf16.mxu0 0
      %1732 = vmatmul.mubr.bf16.gmra.mrb[0].mxu0 %v1196
      %v1733 = vpop.f32.mrb[0].mxu0
      %v1734 = vadd.f32 %v1128, %v1733
      %v1735 = vpop.f32.mrb[0].mxu0
      %v1736 = vadd.f32 %v1128, %v1735
      %v1737 = vpop.f32.mrb[0].mxu0
      %v1738 = vadd.f32 %v1133, %v1737
      %v1739 = vpop.f32.mrb[0].mxu0
      %v1740 = vadd.f32 %v1133, %v1739
      %1741 = vmatprep.mubr.bf16.mxu0 0
      %1742 = vmatmul.mubr.bf16.gmra.mrb[0].mxu0 %v1199
      %v1743 = vpop.f32.mrb[0].mxu0
      %v1744 = vadd.f32 %v1138, %v1743
      %v1745 = vpop.f32.mrb[0].mxu0
      %v1746 = vadd.f32 %v1138, %v1745
      %v1747 = vpop.f32.mrb[0].mxu0
      %v1748 = vadd.f32 %v1143, %v1747
      %v1749 = vpop.f32.mrb[0].mxu0
      %v1750 = vadd.f32 %v1143, %v1749
      %1751 = vmatprep.mubr.bf16.mxu0 0
      %1752 = vmatmul.mubr.bf16.gmra.mrb[0].mxu0 %v1202
      %v1753 = vpop.f32.mrb[0].mxu0
      %v1754 = vadd.f32 %v1148, %v1753
      %v1755 = vpop.f32.mrb[0].mxu0
      %v1756 = vadd.f32 %v1148, %v1755
      %v1757 = vpop.f32.mrb[0].mxu0
      %v1758 = vadd.f32 %v1153, %v1757
      %v1759 = vpop.f32.mrb[0].mxu0
      %v1760 = vadd.f32 %v1153, %v1759
      %1761 = vdwg.mxu0
      %1762 = vmatprep.subr.bf16.mxu0 %v1064
      %1763 = vmatpush1.bf16.msra.mxu0 %v1063
      %1764 = vmatprep.subr.bf16.mxu0 %v1080
      %1765 = vmatpush1.bf16.msra.mxu0 %v1079
      %1766 = vmatprep.subr.bf16.mxu0 0
      %1767 = vmatpush1.bf16.msra.mxu0 0
      %1768 = vmatprep.subr.bf16.mxu0 0
      %1769 = vmatpush1.bf16.msra.mxu0 0
      %1770 = vmatprep.subr.bf16.mxu0 0
      %1771 = vmatpush1.bf16.msra.mxu0 0
      %1772 = vmatprep.subr.bf16.mxu0 0
      %1773 = vmatpush1.bf16.msra.mxu0 0
      %1774 = vmatprep.subr.bf16.mxu0 0
      %1775 = vmatpush1.bf16.msra.mxu0 0
      %1776 = vmatprep.subr.bf16.mxu0 0
      %1777 = vmatpush1.bf16.msra.mxu0 0
      %1778 = vmatprep.subr.bf16.mxu0 0
      %1779 = vmatpush1.bf16.msra.mxu0 0
      %1780 = vmatprep.subr.bf16.mxu0 0
      %1781 = vmatpush1.bf16.msra.mxu0 0
      %1782 = vmatprep.subr.bf16.mxu0 0
      %1783 = vmatpush1.bf16.msra.mxu0 0
      %1784 = vmatprep.subr.bf16.mxu0 0
      %1785 = vmatpush1.bf16.msra.mxu0 0
      %1786 = vmatprep.subr.bf16.mxu0 0
      %1787 = vmatpush1.bf16.msra.mxu0 0
      %1788 = vmatprep.subr.bf16.mxu0 0
      %1789 = vmatpush1.bf16.msra.mxu0 0
      %1790 = vmatprep.subr.bf16.mxu0 0
      %1791 = vmatpush1.bf16.msra.mxu0 0
      %1792 = vmatprep.subr.bf16.mxu0 0
      %1793 = vmatpush1.bf16.msra.mxu0 0
      %1794 = vmatprep.mubr.bf16.mxu0 0
      %1795 = vmatmul.mubr.bf16.gmra.mrb[0].mxu0 %v1187
      %v1796 = vpop.f32.mrb[0].mxu0
      %v1797 = vadd.f32 %v1098, %v1796
      %v1798 = vpop.f32.mrb[0].mxu0
      %v1799 = vadd.f32 %v1098, %v1798
      %v1800 = vpop.f32.mrb[0].mxu0
      %v1801 = vadd.f32 %v1103, %v1800
      %v1802 = vpop.f32.mrb[0].mxu0
      %v1803 = vadd.f32 %v1103, %v1802
      %1804 = vmatprep.mubr.bf16.mxu0 0
      %1805 = vmatmul.mubr.bf16.gmra.mrb[0].mxu0 %v1190
      %v1806 = vpop.f32.mrb[0].mxu0
      %v1807 = vadd.f32 %v1108, %v1806
      %v1808 = vpop.f32.mrb[0].mxu0
      %v1809 = vadd.f32 %v1108, %v1808
      %v1810 = vpop.f32.mrb[0].mxu0
      %v1811 = vadd.f32 %v1113, %v1810
      %v1812 = vpop.f32.mrb[0].mxu0
      %v1813 = vadd.f32 %v1113, %v1812
      %1814 = vmatprep.mubr.bf16.mxu0 0
      %1815 = vmatmul.mubr.bf16.gmra.mrb[0].mxu0 %v1193
      %v1816 = vpop.f32.mrb[0].mxu0
      %v1817 = vadd.f32 %v1118, %v1816
      %v1818 = vpop.f32.mrb[0].mxu0
      %v1819 = vadd.f32 %v1118, %v1818
      %v1820 = vpop.f32.mrb[0].mxu0
      %v1821 = vadd.f32 %v1123, %v1820
      %v1822 = vpop.f32.mrb[0].mxu0
      %v1823 = vadd.f32 %v1123, %v1822
      %1824 = vmatprep.mubr.bf16.mxu0 0
      %1825 = vmatmul.mubr.bf16.gmra.mrb[0].mxu0 %v1196
      %v1826 = vpop.f32.mrb[0].mxu0
      %v1827 = vadd.f32 %v1128, %v1826
      %v1828 = vpop.f32.mrb[0].mxu0
      %v1829 = vadd.f32 %v1128, %v1828
      %v1830 = vpop.f32.mrb[0].mxu0
      %v1831 = vadd.f32 %v1133, %v1830
      %v1832 = vpop.f32.mrb[0].mxu0
      %v1833 = vadd.f32 %v1133, %v1832
      %1834 = vmatprep.mubr.bf16.mxu0 0
      %1835 = vmatmul.mubr.bf16.gmra.mrb[0].mxu0 %v1199
      %v1836 = vpop.f32.mrb[0].mxu0
      %v1837 = vadd.f32 %v1138, %v1836
      %v1838 = vpop.f32.mrb[0].mxu0
      %v1839 = vadd.f32 %v1138, %v1838
      %v1840 = vpop.f32.mrb[0].mxu0
      %v1841 = vadd.f32 %v1143, %v1840
      %v1842 = vpop.f32.mrb[0].mxu0
      %v1843 = vadd.f32 %v1143, %v1842
      %1844 = vmatprep.mubr.bf16.mxu0 0
      %1845 = vmatmul.mubr.bf16.gmra.mrb[0].mxu0 %v1202
      %v1846 = vpop.f32.mrb[0].mxu0
      %v1847 = vadd.f32 %v1148, %v1846
      %v1848 = vpop.f32.mrb[0].mxu0
      %v1849 = vadd.f32 %v1148, %v1848
      %v1850 = vpop.f32.mrb[0].mxu0
      %v1851 = vadd.f32 %v1153, %v1850
      %v1852 = vpop.f32.mrb[0].mxu0
      %v1853 = vadd.f32 %v1153, %v1852
      %1854 = vdwg.mxu0
      %1855 = vmatprep.subr.bf16.mxu0 %v1066
      %1856 = vmatpush1.bf16.msra.mxu0 %v1065
      %1857 = vmatprep.subr.bf16.mxu0 %v1082
      %1858 = vmatpush1.bf16.msra.mxu0 %v1081
      %1859 = vmatprep.subr.bf16.mxu0 0
      %1860 = vmatpush1.bf16.msra.mxu0 0
      %1861 = vmatprep.subr.bf16.mxu0 0
      %1862 = vmatpush1.bf16.msra.mxu0 0
      %1863 = vmatprep.subr.bf16.mxu0 0
      %1864 = vmatpush1.bf16.msra.mxu0 0
      %1865 = vmatprep.subr.bf16.mxu0 0
      %1866 = vmatpush1.bf16.msra.mxu0 0
      %1867 = vmatprep.subr.bf16.mxu0 0
      %1868 = vmatpush1.bf16.msra.mxu0 0
      %1869 = vmatprep.subr.bf16.mxu0 0
      %1870 = vmatpush1.bf16.msra.mxu0 0
      %1871 = vmatprep.subr.bf16.mxu0 0
      %1872 = vmatpush1.bf16.msra.mxu0 0
      %1873 = vmatprep.subr.bf16.mxu0 0
      %1874 = vmatpush1.bf16.msra.mxu0 0
      %1875 = vmatprep.subr.bf16.mxu0 0
      %1876 = vmatpush1.bf16.msra.mxu0 0
      %1877 = vmatprep.subr.bf16.mxu0 0
      %1878 = vmatpush1.bf16.msra.mxu0 0
      %1879 = vmatprep.subr.bf16.mxu0 0
      %1880 = vmatpush1.bf16.msra.mxu0 0
      %1881 = vmatprep.subr.bf16.mxu0 0
      %1882 = vmatpush1.bf16.msra.mxu0 0
      %1883 = vmatprep.subr.bf16.mxu0 0
      %1884 = vmatpush1.bf16.msra.mxu0 0
      %1885 = vmatprep.subr.bf16.mxu0 0
      %1886 = vmatpush1.bf16.msra.mxu0 0
      %1887 = vmatprep.mubr.bf16.mxu0 0
      %1888 = vmatmul.mubr.bf16.gmra.mrb[0].mxu0 %v1187
      %v1889 = vpop.f32.mrb[0].mxu0
      %v1890 = vadd.f32 %v1098, %v1889
      %v1891 = vpop.f32.mrb[0].mxu0
      %v1892 = vadd.f32 %v1098, %v1891
      %v1893 = vpop.f32.mrb[0].mxu0
      %v1894 = vadd.f32 %v1103, %v1893
      %v1895 = vpop.f32.mrb[0].mxu0
      %v1896 = vadd.f32 %v1103, %v1895
      %1897 = vmatprep.mubr.bf16.mxu0 0
      %1898 = vmatmul.mubr.bf16.gmra.mrb[0].mxu0 %v1190
      %v1899 = vpop.f32.mrb[0].mxu0
      %v1900 = vadd.f32 %v1108, %v1899
      %v1901 = vpop.f32.mrb[0].mxu0
      %v1902 = vadd.f32 %v1108, %v1901
      %v1903 = vpop.f32.mrb[0].mxu0
      %v1904 = vadd.f32 %v1113, %v1903
      %v1905 = vpop.f32.mrb[0].mxu0
      %v1906 = vadd.f32 %v1113, %v1905
      %1907 = vmatprep.mubr.bf16.mxu0 0
      %1908 = vmatmul.mubr.bf16.gmra.mrb[0].mxu0 %v1193
      %v1909 = vpop.f32.mrb[0].mxu0
      %v1910 = vadd.f32 %v1118, %v1909
      %v1911 = vpop.f32.mrb[0].mxu0
      %v1912 = vadd.f32 %v1118, %v1911
      %v1913 = vpop.f32.mrb[0].mxu0
      %v1914 = vadd.f32 %v1123, %v1913
      %v1915 = vpop.f32.mrb[0].mxu0
      %v1916 = vadd.f32 %v1123, %v1915
      %1917 = vmatprep.mubr.bf16.mxu0 0
      %1918 = vmatmul.mubr.bf16.gmra.mrb[0].mxu0 %v1196
      %v1919 = vpop.f32.mrb[0].mxu0
      %v1920 = vadd.f32 %v1128, %v1919
      %v1921 = vpop.f32.mrb[0].mxu0
      %v1922 = vadd.f32 %v1128, %v1921
      %v1923 = vpop.f32.mrb[0].mxu0
      %v1924 = vadd.f32 %v1133, %v1923
      %v1925 = vpop.f32.mrb[0].mxu0
      %v1926 = vadd.f32 %v1133, %v1925
      %1927 = vmatprep.mubr.bf16.mxu0 0
      %1928 = vmatmul.mubr.bf16.gmra.mrb[0].mxu0 %v1199
      %v1929 = vpop.f32.mrb[0].mxu0
      %v1930 = vadd.f32 %v1138, %v1929
      %v1931 = vpop.f32.mrb[0].mxu0
      %v1932 = vadd.f32 %v1138, %v1931
      %v1933 = vpop.f32.mrb[0].mxu0
      %v1934 = vadd.f32 %v1143, %v1933
      %v1935 = vpop.f32.mrb[0].mxu0
      %v1936 = vadd.f32 %v1143, %v1935
      %1937 = vmatprep.mubr.bf16.mxu0 0
      %1938 = vmatmul.mubr.bf16.gmra.mrb[0].mxu0 %v1202
      %v1939 = vpop.f32.mrb[0].mxu0
      %v1940 = vadd.f32 %v1148, %v1939
      %v1941 = vpop.f32.mrb[0].mxu0
      %v1942 = vadd.f32 %v1148, %v1941
      %v1943 = vpop.f32.mrb[0].mxu0
      %v1944 = vadd.f32 %v1153, %v1943
      %v1945 = vpop.f32.mrb[0].mxu0
      %v1946 = vadd.f32 %v1153, %v1945
      %1947 = vdwg.mxu0
      %v1948 = vmul.f32 %v1239, %v1259
      %v1949 = vmul.f32 %v1241, %v1261
      %v1950 = vmul.f32 %v1332, %v1352
      %v1951 = vmul.f32 %v1334, %v1354
      %v1952 = vmul.f32 %v1425, %v1445
      %v1953 = vmul.f32 %v1427, %v1447
      %v1954 = vmul.f32 %v1518, %v1538
      %v1955 = vmul.f32 %v1520, %v1540
      %v1956 = vmul.f32 %v1243, %v1263
      %v1957 = vmul.f32 %v1245, %v1265
      %v1958 = vmul.f32 %v1336, %v1356
      %v1959 = vmul.f32 %v1338, %v1358
      %v1960 = vmul.f32 %v1429, %v1449
      %v1961 = vmul.f32 %v1431, %v1451
      %v1962 = vmul.f32 %v1522, %v1542
      %v1963 = vmul.f32 %v1524, %v1544
      %v1964 = vmul.f32 %v1249, %v1269
      %v1965 = vmul.f32 %v1251, %v1271
      %v1966 = vmul.f32 %v1342, %v1362
      %v1967 = vmul.f32 %v1344, %v1364
      %v1968 = vmul.f32 %v1435, %v1455
      %v1969 = vmul.f32 %v1437, %v1457
      %v1970 = vmul.f32 %v1528, %v1548
      %v1971 = vmul.f32 %v1530, %v1550
      %v1972 = vmul.f32 %v1253, %v1273
      %v1973 = vmul.f32 %v1255, %v1275
      %v1974 = vmul.f32 %v1346, %v1366
      %v1975 = vmul.f32 %v1348, %v1368
      %v1976 = vmul.f32 %v1439, %v1459
      %v1977 = vmul.f32 %v1441, %v1461
      %v1978 = vmul.f32 %v1532, %v1552
      %v1979 = vmul.f32 %v1534, %v1554
      %v1980 = vrot.slane %v1948, 4
      %v1981 = vadd.f32 %v1948, %v1980
      %v1982 = vrot.slane %v1981, 2
      %v1983 = vadd.f32 %v1981, %v1982
      %v1984 = vrot.slane %v1983, 1
      %v1985 = vadd.f32 %v1983, %v1984
      %v1986 = vrot.slane %v1949, 4
      %v1987 = vadd.f32 %v1949, %v1986
      %v1988 = vrot.slane %v1987, 2
      %v1989 = vadd.f32 %v1987, %v1988
      %v1990 = vrot.slane %v1989, 1
      %v1991 = vadd.f32 %v1989, %v1990
      %v1992 = vrot.slane %v1950, 4
      %v1993 = vadd.f32 %v1950, %v1992
      %v1994 = vrot.slane %v1993, 2
      %v1995 = vadd.f32 %v1993, %v1994
      %v1996 = vrot.slane %v1995, 1
      %v1997 = vadd.f32 %v1995, %v1996
      %v1998 = vrot.slane %v1951, 4
      %v1999 = vadd.f32 %v1951, %v1998
      %v2000 = vrot.slane %v1999, 2
      %v2001 = vadd.f32 %v1999, %v2000
      %v2002 = vrot.slane %v2001, 1
      %v2003 = vadd.f32 %v2001, %v2002
      %v2004 = vrot.slane %v1952, 4
      %v2005 = vadd.f32 %v1952, %v2004
      %v2006 = vrot.slane %v2005, 2
      %v2007 = vadd.f32 %v2005, %v2006
      %v2008 = vrot.slane %v2007, 1
      %v2009 = vadd.f32 %v2007, %v2008
      %v2010 = vrot.slane %v1953, 4
      %v2011 = vadd.f32 %v1953, %v2010
      %v2012 = vrot.slane %v2011, 2
      %v2013 = vadd.f32 %v2011, %v2012
      %v2014 = vrot.slane %v2013, 1
      %v2015 = vadd.f32 %v2013, %v2014
      %v2016 = vrot.slane %v1954, 4
      %v2017 = vadd.f32 %v1954, %v2016
      %v2018 = vrot.slane %v2017, 2
      %v2019 = vadd.f32 %v2017, %v2018
      %v2020 = vrot.slane %v2019, 1
      %v2021 = vadd.f32 %v2019, %v2020
      %v2022 = vrot.slane %v1955, 4
      %v2023 = vadd.f32 %v1955, %v2022
      %v2024 = vrot.slane %v2023, 2
      %v2025 = vadd.f32 %v2023, %v2024
      %v2026 = vrot.slane %v2025, 1
      %v2027 = vadd.f32 %v2025, %v2026
      %v2028 = vrot.slane %v1956, 4
      %v2029 = vadd.f32 %v1956, %v2028
      %v2030 = vrot.slane %v2029, 2
      %v2031 = vadd.f32 %v2029, %v2030
      %v2032 = vrot.slane %v2031, 1
      %v2033 = vadd.f32 %v2031, %v2032
      %v2034 = vrot.slane %v1957, 4
      %v2035 = vadd.f32 %v1957, %v2034
      %v2036 = vrot.slane %v2035, 2
      %v2037 = vadd.f32 %v2035, %v2036
      %v2038 = vrot.slane %v2037, 1
      %v2039 = vadd.f32 %v2037, %v2038
      %v2040 = vrot.slane %v1958, 4
      %v2041 = vadd.f32 %v1958, %v2040
      %v2042 = vrot.slane %v2041, 2
      %v2043 = vadd.f32 %v2041, %v2042
      %v2044 = vrot.slane %v2043, 1
      %v2045 = vadd.f32 %v2043, %v2044
      %v2046 = vrot.slane %v1959, 4
      %v2047 = vadd.f32 %v1959, %v2046
      %v2048 = vrot.slane %v2047, 2
      %v2049 = vadd.f32 %v2047, %v2048
      %v2050 = vrot.slane %v2049, 1
      %v2051 = vadd.f32 %v2049, %v2050
      %v2052 = vrot.slane %v1960, 4
      %v2053 = vadd.f32 %v1960, %v2052
      %v2054 = vrot.slane %v2053, 2
      %v2055 = vadd.f32 %v2053, %v2054
      %v2056 = vrot.slane %v2055, 1
      %v2057 = vadd.f32 %v2055, %v2056
      %v2058 = vrot.slane %v1961, 4
      %v2059 = vadd.f32 %v1961, %v2058
      %v2060 = vrot.slane %v2059, 2
      %v2061 = vadd.f32 %v2059, %v2060
      %v2062 = vrot.slane %v2061, 1
      %v2063 = vadd.f32 %v2061, %v2062
      %v2064 = vrot.slane %v1962, 4
      %v2065 = vadd.f32 %v1962, %v2064
      %v2066 = vrot.slane %v2065, 2
      %v2067 = vadd.f32 %v2065, %v2066
      %v2068 = vrot.slane %v2067, 1
      %v2069 = vadd.f32 %v2067, %v2068
      %v2070 = vrot.slane %v1963, 4
      %v2071 = vadd.f32 %v1963, %v2070
      %v2072 = vrot.slane %v2071, 2
      %v2073 = vadd.f32 %v2071, %v2072
      %v2074 = vrot.slane %v2073, 1
      %v2075 = vadd.f32 %v2073, %v2074
      %v2076 = vrot.slane %v1964, 4
      %v2077 = vadd.f32 %v1964, %v2076
      %v2078 = vrot.slane %v2077, 2
      %v2079 = vadd.f32 %v2077, %v2078
      %v2080 = vrot.slane %v2079, 1
      %v2081 = vadd.f32 %v2079, %v2080
      %v2082 = vrot.slane %v1965, 4
      %v2083 = vadd.f32 %v1965, %v2082
      %v2084 = vrot.slane %v2083, 2
      %v2085 = vadd.f32 %v2083, %v2084
      %v2086 = vrot.slane %v2085, 1
      %v2087 = vadd.f32 %v2085, %v2086
      %v2088 = vrot.slane %v1966, 4
      %v2089 = vadd.f32 %v1966, %v2088
      %v2090 = vrot.slane %v2089, 2
      %v2091 = vadd.f32 %v2089, %v2090
      %v2092 = vrot.slane %v2091, 1
      %v2093 = vadd.f32 %v2091, %v2092
      %v2094 = vrot.slane %v1967, 4
      %v2095 = vadd.f32 %v1967, %v2094
      %v2096 = vrot.slane %v2095, 2
      %v2097 = vadd.f32 %v2095, %v2096
      %v2098 = vrot.slane %v2097, 1
      %v2099 = vadd.f32 %v2097, %v2098
      %v2100 = vrot.slane %v1968, 4
      %v2101 = vadd.f32 %v1968, %v2100
      %v2102 = vrot.slane %v2101, 2
      %v2103 = vadd.f32 %v2101, %v2102
      %v2104 = vrot.slane %v2103, 1
      %v2105 = vadd.f32 %v2103, %v2104
      %v2106 = vrot.slane %v1969, 4
      %v2107 = vadd.f32 %v1969, %v2106
      %v2108 = vrot.slane %v2107, 2
      %v2109 = vadd.f32 %v2107, %v2108
      %v2110 = vrot.slane %v2109, 1
      %v2111 = vadd.f32 %v2109, %v2110
      %v2112 = vrot.slane %v1970, 4
      %v2113 = vadd.f32 %v1970, %v2112
      %v2114 = vrot.slane %v2113, 2
      %v2115 = vadd.f32 %v2113, %v2114
      %v2116 = vrot.slane %v2115, 1
      %v2117 = vadd.f32 %v2115, %v2116
      %v2118 = vrot.slane %v1971, 4
      %v2119 = vadd.f32 %v1971, %v2118
      %v2120 = vrot.slane %v2119, 2
      %v2121 = vadd.f32 %v2119, %v2120
      %v2122 = vrot.slane %v2121, 1
      %v2123 = vadd.f32 %v2121, %v2122
      %v2124 = vrot.slane %v1972, 4
      %v2125 = vadd.f32 %v1972, %v2124
      %v2126 = vrot.slane %v2125, 2
      %v2127 = vadd.f32 %v2125, %v2126
      %v2128 = vrot.slane %v2127, 1
      %v2129 = vadd.f32 %v2127, %v2128
      %v2130 = vrot.slane %v1973, 4
      %v2131 = vadd.f32 %v1973, %v2130
      %v2132 = vrot.slane %v2131, 2
      %v2133 = vadd.f32 %v2131, %v2132
      %v2134 = vrot.slane %v2133, 1
      %v2135 = vadd.f32 %v2133, %v2134
      %v2136 = vrot.slane %v1974, 4
      %v2137 = vadd.f32 %v1974, %v2136
      %v2138 = vrot.slane %v2137, 2
      %v2139 = vadd.f32 %v2137, %v2138
      %v2140 = vrot.slane %v2139, 1
      %v2141 = vadd.f32 %v2139, %v2140
      %v2142 = vrot.slane %v1975, 4
      %v2143 = vadd.f32 %v1975, %v2142
      %v2144 = vrot.slane %v2143, 2
      %v2145 = vadd.f32 %v2143, %v2144
      %v2146 = vrot.slane %v2145, 1
      %v2147 = vadd.f32 %v2145, %v2146
      %v2148 = vrot.slane %v1976, 4
      %v2149 = vadd.f32 %v1976, %v2148
      %v2150 = vrot.slane %v2149, 2
      %v2151 = vadd.f32 %v2149, %v2150
      %v2152 = vrot.slane %v2151, 1
      %v2153 = vadd.f32 %v2151, %v2152
      %v2154 = vrot.slane %v1977, 4
      %v2155 = vadd.f32 %v1977, %v2154
      %v2156 = vrot.slane %v2155, 2
      %v2157 = vadd.f32 %v2155, %v2156
      %v2158 = vrot.slane %v2157, 1
      %v2159 = vadd.f32 %v2157, %v2158
      %v2160 = vrot.slane %v1978, 4
      %v2161 = vadd.f32 %v1978, %v2160
      %v2162 = vrot.slane %v2161, 2
      %v2163 = vadd.f32 %v2161, %v2162
      %v2164 = vrot.slane %v2163, 1
      %v2165 = vadd.f32 %v2163, %v2164
      %v2166 = vrot.slane %v1979, 4
      %v2167 = vadd.f32 %v1979, %v2166
      %v2168 = vrot.slane %v2167, 2
      %v2169 = vadd.f32 %v2167, %v2168
      %v2170 = vrot.slane %v2169, 1
      %v2171 = vadd.f32 %v2169, %v2170
      %v2172 = vmul.f32 %v1239, %v1631
      %v2173 = vmul.f32 %v1241, %v1633
      %v2174 = vmul.f32 %v1332, %v1724
      %v2175 = vmul.f32 %v1334, %v1726
      %v2176 = vmul.f32 %v1425, %v1817
      %v2177 = vmul.f32 %v1427, %v1819
      %v2178 = vmul.f32 %v1518, %v1910
      %v2179 = vmul.f32 %v1520, %v1912
      %v2180 = vmul.f32 %v1243, %v1635
      %v2181 = vmul.f32 %v1245, %v1637
      %v2182 = vmul.f32 %v1336, %v1728
      %v2183 = vmul.f32 %v1338, %v1730
      %v2184 = vmul.f32 %v1429, %v1821
      %v2185 = vmul.f32 %v1431, %v1823
      %v2186 = vmul.f32 %v1522, %v1914
      %v2187 = vmul.f32 %v1524, %v1916
      %v2188 = vmul.f32 %v1249, %v1641
      %v2189 = vmul.f32 %v1251, %v1643
      %v2190 = vmul.f32 %v1342, %v1734
      %v2191 = vmul.f32 %v1344, %v1736
      %v2192 = vmul.f32 %v1435, %v1827
      %v2193 = vmul.f32 %v1437, %v1829
      %v2194 = vmul.f32 %v1528, %v1920
      %v2195 = vmul.f32 %v1530, %v1922
      %v2196 = vmul.f32 %v1253, %v1645
      %v2197 = vmul.f32 %v1255, %v1647
      %v2198 = vmul.f32 %v1346, %v1738
      %v2199 = vmul.f32 %v1348, %v1740
      %v2200 = vmul.f32 %v1439, %v1831
      %v2201 = vmul.f32 %v1441, %v1833
      %v2202 = vmul.f32 %v1532, %v1924
      %v2203 = vmul.f32 %v1534, %v1926
      %v2204 = vrot.slane %v2172, 4
      %v2205 = vadd.f32 %v2172, %v2204
      %v2206 = vrot.slane %v2205, 2
      %v2207 = vadd.f32 %v2205, %v2206
      %v2208 = vrot.slane %v2207, 1
      %v2209 = vadd.f32 %v2207, %v2208
      %v2210 = vrot.slane %v2173, 4
      %v2211 = vadd.f32 %v2173, %v2210
      %v2212 = vrot.slane %v2211, 2
      %v2213 = vadd.f32 %v2211, %v2212
      %v2214 = vrot.slane %v2213, 1
      %v2215 = vadd.f32 %v2213, %v2214
      %v2216 = vrot.slane %v2174, 4
      %v2217 = vadd.f32 %v2174, %v2216
      %v2218 = vrot.slane %v2217, 2
      %v2219 = vadd.f32 %v2217, %v2218
      %v2220 = vrot.slane %v2219, 1
      %v2221 = vadd.f32 %v2219, %v2220
      %v2222 = vrot.slane %v2175, 4
      %v2223 = vadd.f32 %v2175, %v2222
      %v2224 = vrot.slane %v2223, 2
      %v2225 = vadd.f32 %v2223, %v2224
      %v2226 = vrot.slane %v2225, 1
      %v2227 = vadd.f32 %v2225, %v2226
      %v2228 = vrot.slane %v2176, 4
      %v2229 = vadd.f32 %v2176, %v2228
      %v2230 = vrot.slane %v2229, 2
      %v2231 = vadd.f32 %v2229, %v2230
      %v2232 = vrot.slane %v2231, 1
      %v2233 = vadd.f32 %v2231, %v2232
      %v2234 = vrot.slane %v2177, 4
      %v2235 = vadd.f32 %v2177, %v2234
      %v2236 = vrot.slane %v2235, 2
      %v2237 = vadd.f32 %v2235, %v2236
      %v2238 = vrot.slane %v2237, 1
      %v2239 = vadd.f32 %v2237, %v2238
      %v2240 = vrot.slane %v2178, 4
      %v2241 = vadd.f32 %v2178, %v2240
      %v2242 = vrot.slane %v2241, 2
      %v2243 = vadd.f32 %v2241, %v2242
      %v2244 = vrot.slane %v2243, 1
      %v2245 = vadd.f32 %v2243, %v2244
      %v2246 = vrot.slane %v2179, 4
      %v2247 = vadd.f32 %v2179, %v2246
      %v2248 = vrot.slane %v2247, 2
      %v2249 = vadd.f32 %v2247, %v2248
      %v2250 = vrot.slane %v2249, 1
      %v2251 = vadd.f32 %v2249, %v2250
      %v2252 = vrot.slane %v2180, 4
      %v2253 = vadd.f32 %v2180, %v2252
      %v2254 = vrot.slane %v2253, 2
      %v2255 = vadd.f32 %v2253, %v2254
      %v2256 = vrot.slane %v2255, 1
      %v2257 = vadd.f32 %v2255, %v2256
      %v2258 = vrot.slane %v2181, 4
      %v2259 = vadd.f32 %v2181, %v2258
      %v2260 = vrot.slane %v2259, 2
      %v2261 = vadd.f32 %v2259, %v2260
      %v2262 = vrot.slane %v2261, 1
      %v2263 = vadd.f32 %v2261, %v2262
      %v2264 = vrot.slane %v2182, 4
      %v2265 = vadd.f32 %v2182, %v2264
      %v2266 = vrot.slane %v2265, 2
      %v2267 = vadd.f32 %v2265, %v2266
      %v2268 = vrot.slane %v2267, 1
      %v2269 = vadd.f32 %v2267, %v2268
      %v2270 = vrot.slane %v2183, 4
      %v2271 = vadd.f32 %v2183, %v2270
      %v2272 = vrot.slane %v2271, 2
      %v2273 = vadd.f32 %v2271, %v2272
      %v2274 = vrot.slane %v2273, 1
      %v2275 = vadd.f32 %v2273, %v2274
      %v2276 = vrot.slane %v2184, 4
      %v2277 = vadd.f32 %v2184, %v2276
      %v2278 = vrot.slane %v2277, 2
      %v2279 = vadd.f32 %v2277, %v2278
      %v2280 = vrot.slane %v2279, 1
      %v2281 = vadd.f32 %v2279, %v2280
      %v2282 = vrot.slane %v2185, 4
      %v2283 = vadd.f32 %v2185, %v2282
      %v2284 = vrot.slane %v2283, 2
      %v2285 = vadd.f32 %v2283, %v2284
      %v2286 = vrot.slane %v2285, 1
      %v2287 = vadd.f32 %v2285, %v2286
      %v2288 = vrot.slane %v2186, 4
      %v2289 = vadd.f32 %v2186, %v2288
      %v2290 = vrot.slane %v2289, 2
      %v2291 = vadd.f32 %v2289, %v2290
      %v2292 = vrot.slane %v2291, 1
      %v2293 = vadd.f32 %v2291, %v2292
      %v2294 = vrot.slane %v2187, 4
      %v2295 = vadd.f32 %v2187, %v2294
      %v2296 = vrot.slane %v2295, 2
      %v2297 = vadd.f32 %v2295, %v2296
      %v2298 = vrot.slane %v2297, 1
      %v2299 = vadd.f32 %v2297, %v2298
      %v2300 = vrot.slane %v2188, 4
      %v2301 = vadd.f32 %v2188, %v2300
      %v2302 = vrot.slane %v2301, 2
      %v2303 = vadd.f32 %v2301, %v2302
      %v2304 = vrot.slane %v2303, 1
      %v2305 = vadd.f32 %v2303, %v2304
      %v2306 = vrot.slane %v2189, 4
      %v2307 = vadd.f32 %v2189, %v2306
      %v2308 = vrot.slane %v2307, 2
      %v2309 = vadd.f32 %v2307, %v2308
      %v2310 = vrot.slane %v2309, 1
      %v2311 = vadd.f32 %v2309, %v2310
      %v2312 = vrot.slane %v2190, 4
      %v2313 = vadd.f32 %v2190, %v2312
      %v2314 = vrot.slane %v2313, 2
      %v2315 = vadd.f32 %v2313, %v2314
      %v2316 = vrot.slane %v2315, 1
      %v2317 = vadd.f32 %v2315, %v2316
      %v2318 = vrot.slane %v2191, 4
      %v2319 = vadd.f32 %v2191, %v2318
      %v2320 = vrot.slane %v2319, 2
      %v2321 = vadd.f32 %v2319, %v2320
      %v2322 = vrot.slane %v2321, 1
      %v2323 = vadd.f32 %v2321, %v2322
      %v2324 = vrot.slane %v2192, 4
      %v2325 = vadd.f32 %v2192, %v2324
      %v2326 = vrot.slane %v2325, 2
      %v2327 = vadd.f32 %v2325, %v2326
      %v2328 = vrot.slane %v2327, 1
      %v2329 = vadd.f32 %v2327, %v2328
      %v2330 = vrot.slane %v2193, 4
      %v2331 = vadd.f32 %v2193, %v2330
      %v2332 = vrot.slane %v2331, 2
      %v2333 = vadd.f32 %v2331, %v2332
      %v2334 = vrot.slane %v2333, 1
      %v2335 = vadd.f32 %v2333, %v2334
      %v2336 = vrot.slane %v2194, 4
      %v2337 = vadd.f32 %v2194, %v2336
      %v2338 = vrot.slane %v2337, 2
      %v2339 = vadd.f32 %v2337, %v2338
      %v2340 = vrot.slane %v2339, 1
      %v2341 = vadd.f32 %v2339, %v2340
      %v2342 = vrot.slane %v2195, 4
      %v2343 = vadd.f32 %v2195, %v2342
      %v2344 = vrot.slane %v2343, 2
      %v2345 = vadd.f32 %v2343, %v2344
      %v2346 = vrot.slane %v2345, 1
      %v2347 = vadd.f32 %v2345, %v2346
      %v2348 = vrot.slane %v2196, 4
      %v2349 = vadd.f32 %v2196, %v2348
      %v2350 = vrot.slane %v2349, 2
      %v2351 = vadd.f32 %v2349, %v2350
      %v2352 = vrot.slane %v2351, 1
      %v2353 = vadd.f32 %v2351, %v2352
      %v2354 = vrot.slane %v2197, 4
      %v2355 = vadd.f32 %v2197, %v2354
      %v2356 = vrot.slane %v2355, 2
      %v2357 = vadd.f32 %v2355, %v2356
      %v2358 = vrot.slane %v2357, 1
      %v2359 = vadd.f32 %v2357, %v2358
      %v2360 = vrot.slane %v2198, 4
      %v2361 = vadd.f32 %v2198, %v2360
      %v2362 = vrot.slane %v2361, 2
      %v2363 = vadd.f32 %v2361, %v2362
      %v2364 = vrot.slane %v2363, 1
      %v2365 = vadd.f32 %v2363, %v2364
      %v2366 = vrot.slane %v2199, 4
      %v2367 = vadd.f32 %v2199, %v2366
      %v2368 = vrot.slane %v2367, 2
      %v2369 = vadd.f32 %v2367, %v2368
      %v2370 = vrot.slane %v2369, 1
      %v2371 = vadd.f32 %v2369, %v2370
      %v2372 = vrot.slane %v2200, 4
      %v2373 = vadd.f32 %v2200, %v2372
      %v2374 = vrot.slane %v2373, 2
      %v2375 = vadd.f32 %v2373, %v2374
      %v2376 = vrot.slane %v2375, 1
      %v2377 = vadd.f32 %v2375, %v2376
      %v2378 = vrot.slane %v2201, 4
      %v2379 = vadd.f32 %v2201, %v2378
      %v2380 = vrot.slane %v2379, 2
      %v2381 = vadd.f32 %v2379, %v2380
      %v2382 = vrot.slane %v2381, 1
      %v2383 = vadd.f32 %v2381, %v2382
      %v2384 = vrot.slane %v2202, 4
      %v2385 = vadd.f32 %v2202, %v2384
      %v2386 = vrot.slane %v2385, 2
      %v2387 = vadd.f32 %v2385, %v2386
      %v2388 = vrot.slane %v2387, 1
      %v2389 = vadd.f32 %v2387, %v2388
      %v2390 = vrot.slane %v2203, 4
      %v2391 = vadd.f32 %v2203, %v2390
      %v2392 = vrot.slane %v2391, 2
      %v2393 = vadd.f32 %v2391, %v2392
      %v2394 = vrot.slane %v2393, 1
      %v2395 = vadd.f32 %v2393, %v2394
      %v2396 = vmax.f32 %v1985, %v2209
      %v2397 = vmax.f32 %v1991, %v2215
      %v2398 = vmax.f32 %v1997, %v2221
      %v2399 = vmax.f32 %v2003, %v2227
      %v2400 = vmax.f32 %v2009, %v2233
      %v2401 = vmax.f32 %v2015, %v2239
      %v2402 = vmax.f32 %v2021, %v2245
      %v2403 = vmax.f32 %v2027, %v2251
      %v2404 = vmax.f32 %v2033, %v2257
      %v2405 = vmax.f32 %v2039, %v2263
      %v2406 = vmax.f32 %v2045, %v2269
      %v2407 = vmax.f32 %v2051, %v2275
      %v2408 = vmax.f32 %v2057, %v2281
      %v2409 = vmax.f32 %v2063, %v2287
      %v2410 = vmax.f32 %v2069, %v2293
      %v2411 = vmax.f32 %v2075, %v2299
      %v2412 = vmax.f32 %v2081, %v2305
      %v2413 = vmax.f32 %v2087, %v2311
      %v2414 = vmax.f32 %v2093, %v2317
      %v2415 = vmax.f32 %v2099, %v2323
      %v2416 = vmax.f32 %v2105, %v2329
      %v2417 = vmax.f32 %v2111, %v2335
      %v2418 = vmax.f32 %v2117, %v2341
      %v2419 = vmax.f32 %v2123, %v2347
      %v2420 = vmax.f32 %v2129, %v2353
      %v2421 = vmax.f32 %v2135, %v2359
      %v2422 = vmax.f32 %v2141, %v2365
      %v2423 = vmax.f32 %v2147, %v2371
      %v2424 = vmax.f32 %v2153, %v2377
      %v2425 = vmax.f32 %v2159, %v2383
      %v2426 = vmax.f32 %v2165, %v2389
      %v2427 = vmax.f32 %v2171, %v2395
      %v2428 = vsub.f32 %v1985, %v2396
      %v2429 = vsub.f32 %v1991, %v2397
      %v2430 = vsub.f32 %v1997, %v2398
      %v2431 = vsub.f32 %v2003, %v2399
      %v2432 = vsub.f32 %v2009, %v2400
      %v2433 = vsub.f32 %v2015, %v2401
      %v2434 = vsub.f32 %v2021, %v2402
      %v2435 = vsub.f32 %v2027, %v2403
      %v2436 = vsub.f32 %v2033, %v2404
      %v2437 = vsub.f32 %v2039, %v2405
      %v2438 = vsub.f32 %v2045, %v2406
      %v2439 = vsub.f32 %v2051, %v2407
      %v2440 = vsub.f32 %v2057, %v2408
      %v2441 = vsub.f32 %v2063, %v2409
      %v2442 = vsub.f32 %v2069, %v2410
      %v2443 = vsub.f32 %v2075, %v2411
      %v2444 = vsub.f32 %v2081, %v2412
      %v2445 = vsub.f32 %v2087, %v2413
      %v2446 = vsub.f32 %v2093, %v2414
      %v2447 = vsub.f32 %v2099, %v2415
      %v2448 = vsub.f32 %v2105, %v2416
      %v2449 = vsub.f32 %v2111, %v2417
      %v2450 = vsub.f32 %v2117, %v2418
      %v2451 = vsub.f32 %v2123, %v2419
      %v2452 = vsub.f32 %v2129, %v2420
      %v2453 = vsub.f32 %v2135, %v2421
      %v2454 = vsub.f32 %v2141, %v2422
      %v2455 = vsub.f32 %v2147, %v2423
      %v2456 = vsub.f32 %v2153, %v2424
      %v2457 = vsub.f32 %v2159, %v2425
      %v2458 = vsub.f32 %v2165, %v2426
      %v2459 = vsub.f32 %v2171, %v2427
      %v2460 = vmul.f32 %v2428, 1.442695
      %v2461 = vpow.pop %v2460
      %v2462 = vmul.f32 %v2429, 1.442695
      %v2463 = vpow.pop %v2462
      %v2464 = vmul.f32 %v2430, 1.442695
      %v2465 = vpow.pop %v2464
      %v2466 = vmul.f32 %v2431, 1.442695
      %v2467 = vpow.pop %v2466
      %v2468 = vmul.f32 %v2432, 1.442695
      %v2469 = vpow.pop %v2468
      %v2470 = vmul.f32 %v2433, 1.442695
      %v2471 = vpow.pop %v2470
      %v2472 = vmul.f32 %v2434, 1.442695
      %v2473 = vpow.pop %v2472
      %v2474 = vmul.f32 %v2435, 1.442695
      %v2475 = vpow.pop %v2474
      %v2476 = vmul.f32 %v2436, 1.442695
      %v2477 = vpow.pop %v2476
      %v2478 = vmul.f32 %v2437, 1.442695
      %v2479 = vpow.pop %v2478
      %v2480 = vmul.f32 %v2438, 1.442695
      %v2481 = vpow.pop %v2480
      %v2482 = vmul.f32 %v2439, 1.442695
      %v2483 = vpow.pop %v2482
      %v2484 = vmul.f32 %v2440, 1.442695
      %v2485 = vpow.pop %v2484
      %v2486 = vmul.f32 %v2441, 1.442695
      %v2487 = vpow.pop %v2486
      %v2488 = vmul.f32 %v2442, 1.442695
      %v2489 = vpow.pop %v2488
      %v2490 = vmul.f32 %v2443, 1.442695
      %v2491 = vpow.pop %v2490
      %v2492 = vmul.f32 %v2444, 1.442695
      %v2493 = vpow.pop %v2492
      %v2494 = vmul.f32 %v2445, 1.442695
      %v2495 = vpow.pop %v2494
      %v2496 = vmul.f32 %v2446, 1.442695
      %v2497 = vpow.pop %v2496
      %v2498 = vmul.f32 %v2447, 1.442695
      %v2499 = vpow.pop %v2498
      %v2500 = vmul.f32 %v2448, 1.442695
      %v2501 = vpow.pop %v2500
      %v2502 = vmul.f32 %v2449, 1.442695
      %v2503 = vpow.pop %v2502
      %v2504 = vmul.f32 %v2450, 1.442695
      %v2505 = vpow.pop %v2504
      %v2506 = vmul.f32 %v2451, 1.442695
      %v2507 = vpow.pop %v2506
      %v2508 = vmul.f32 %v2452, 1.442695
      %v2509 = vpow.pop %v2508
      %v2510 = vmul.f32 %v2453, 1.442695
      %v2511 = vpow.pop %v2510
      %v2512 = vmul.f32 %v2454, 1.442695
      %v2513 = vpow.pop %v2512
      %v2514 = vmul.f32 %v2455, 1.442695
      %v2515 = vpow.pop %v2514
      %v2516 = vmul.f32 %v2456, 1.442695
      %v2517 = vpow.pop %v2516
      %v2518 = vmul.f32 %v2457, 1.442695
      %v2519 = vpow.pop %v2518
      %v2520 = vmul.f32 %v2458, 1.442695
      %v2521 = vpow.pop %v2520
      %v2522 = vmul.f32 %v2459, 1.442695
      %v2523 = vpow.pop %v2522
      %v2524 = vmul.f32 %v2461, %v1279
      %v2525 = vmul.f32 %v2463, %v1281
      %v2526 = vmul.f32 %v2465, %v1372
      %v2527 = vmul.f32 %v2467, %v1374
      %v2528 = vmul.f32 %v2469, %v1465
      %v2529 = vmul.f32 %v2471, %v1467
      %v2530 = vmul.f32 %v2473, %v1558
      %v2531 = vmul.f32 %v2475, %v1560
      %v2532 = vmul.f32 %v2477, %v1283
      %v2533 = vmul.f32 %v2479, %v1285
      %v2534 = vmul.f32 %v2481, %v1376
      %v2535 = vmul.f32 %v2483, %v1378
      %v2536 = vmul.f32 %v2485, %v1469
      %v2537 = vmul.f32 %v2487, %v1471
      %v2538 = vmul.f32 %v2489, %v1562
      %v2539 = vmul.f32 %v2491, %v1564
      %v2540 = vmul.f32 %v2493, %v1289
      %v2541 = vmul.f32 %v2495, %v1291
      %v2542 = vmul.f32 %v2497, %v1382
      %v2543 = vmul.f32 %v2499, %v1384
      %v2544 = vmul.f32 %v2501, %v1475
      %v2545 = vmul.f32 %v2503, %v1477
      %v2546 = vmul.f32 %v2505, %v1568
      %v2547 = vmul.f32 %v2507, %v1570
      %v2548 = vmul.f32 %v2509, %v1293
      %v2549 = vmul.f32 %v2511, %v1295
      %v2550 = vmul.f32 %v2513, %v1386
      %v2551 = vmul.f32 %v2515, %v1388
      %v2552 = vmul.f32 %v2517, %v1479
      %v2553 = vmul.f32 %v2519, %v1481
      %v2554 = vmul.f32 %v2521, %v1572
      %v2555 = vmul.f32 %v2523, %v1574
      %v2556 = vsub.f32 %v2209, %v2396
      %v2557 = vsub.f32 %v2215, %v2397
      %v2558 = vsub.f32 %v2221, %v2398
      %v2559 = vsub.f32 %v2227, %v2399
      %v2560 = vsub.f32 %v2233, %v2400
      %v2561 = vsub.f32 %v2239, %v2401
      %v2562 = vsub.f32 %v2245, %v2402
      %v2563 = vsub.f32 %v2251, %v2403
      %v2564 = vsub.f32 %v2257, %v2404
      %v2565 = vsub.f32 %v2263, %v2405
      %v2566 = vsub.f32 %v2269, %v2406
      %v2567 = vsub.f32 %v2275, %v2407
      %v2568 = vsub.f32 %v2281, %v2408
      %v2569 = vsub.f32 %v2287, %v2409
      %v2570 = vsub.f32 %v2293, %v2410
      %v2571 = vsub.f32 %v2299, %v2411
      %v2572 = vsub.f32 %v2305, %v2412
      %v2573 = vsub.f32 %v2311, %v2413
      %v2574 = vsub.f32 %v2317, %v2414
      %v2575 = vsub.f32 %v2323, %v2415
      %v2576 = vsub.f32 %v2329, %v2416
      %v2577 = vsub.f32 %v2335, %v2417
      %v2578 = vsub.f32 %v2341, %v2418
      %v2579 = vsub.f32 %v2347, %v2419
      %v2580 = vsub.f32 %v2353, %v2420
      %v2581 = vsub.f32 %v2359, %v2421
      %v2582 = vsub.f32 %v2365, %v2422
      %v2583 = vsub.f32 %v2371, %v2423
      %v2584 = vsub.f32 %v2377, %v2424
      %v2585 = vsub.f32 %v2383, %v2425
      %v2586 = vsub.f32 %v2389, %v2426
      %v2587 = vsub.f32 %v2395, %v2427
      %v2588 = vmul.f32 %v2556, 1.442695
      %v2589 = vpow.pop %v2588
      %v2590 = vmul.f32 %v2557, 1.442695
      %v2591 = vpow.pop %v2590
      %v2592 = vmul.f32 %v2558, 1.442695
      %v2593 = vpow.pop %v2592
      %v2594 = vmul.f32 %v2559, 1.442695
      %v2595 = vpow.pop %v2594
      %v2596 = vmul.f32 %v2560, 1.442695
      %v2597 = vpow.pop %v2596
      %v2598 = vmul.f32 %v2561, 1.442695
      %v2599 = vpow.pop %v2598
      %v2600 = vmul.f32 %v2562, 1.442695
      %v2601 = vpow.pop %v2600
      %v2602 = vmul.f32 %v2563, 1.442695
      %v2603 = vpow.pop %v2602
      %v2604 = vmul.f32 %v2564, 1.442695
      %v2605 = vpow.pop %v2604
      %v2606 = vmul.f32 %v2565, 1.442695
      %v2607 = vpow.pop %v2606
      %v2608 = vmul.f32 %v2566, 1.442695
      %v2609 = vpow.pop %v2608
      %v2610 = vmul.f32 %v2567, 1.442695
      %v2611 = vpow.pop %v2610
      %v2612 = vmul.f32 %v2568, 1.442695
      %v2613 = vpow.pop %v2612
      %v2614 = vmul.f32 %v2569, 1.442695
      %v2615 = vpow.pop %v2614
      %v2616 = vmul.f32 %v2570, 1.442695
      %v2617 = vpow.pop %v2616
      %v2618 = vmul.f32 %v2571, 1.442695
      %v2619 = vpow.pop %v2618
      %v2620 = vmul.f32 %v2572, 1.442695
      %v2621 = vpow.pop %v2620
      %v2622 = vmul.f32 %v2573, 1.442695
      %v2623 = vpow.pop %v2622
      %v2624 = vmul.f32 %v2574, 1.442695
      %v2625 = vpow.pop %v2624
      %v2626 = vmul.f32 %v2575, 1.442695
      %v2627 = vpow.pop %v2626
      %v2628 = vmul.f32 %v2576, 1.442695
      %v2629 = vpow.pop %v2628
      %v2630 = vmul.f32 %v2577, 1.442695
      %v2631 = vpow.pop %v2630
      %v2632 = vmul.f32 %v2578, 1.442695
      %v2633 = vpow.pop %v2632
      %v2634 = vmul.f32 %v2579, 1.442695
      %v2635 = vpow.pop %v2634
      %v2636 = vmul.f32 %v2580, 1.442695
      %v2637 = vpow.pop %v2636
      %v2638 = vmul.f32 %v2581, 1.442695
      %v2639 = vpow.pop %v2638
      %v2640 = vmul.f32 %v2582, 1.442695
      %v2641 = vpow.pop %v2640
      %v2642 = vmul.f32 %v2583, 1.442695
      %v2643 = vpow.pop %v2642
      %v2644 = vmul.f32 %v2584, 1.442695
      %v2645 = vpow.pop %v2644
      %v2646 = vmul.f32 %v2585, 1.442695
      %v2647 = vpow.pop %v2646
      %v2648 = vmul.f32 %v2586, 1.442695
      %v2649 = vpow.pop %v2648
      %v2650 = vmul.f32 %v2587, 1.442695
      %v2651 = vpow.pop %v2650
      %v2652 = vadd.f32 %v2461, %v2589
      %v2653 = vadd.f32 %v2463, %v2591
      %v2654 = vadd.f32 %v2465, %v2593
      %v2655 = vadd.f32 %v2467, %v2595
      %v2656 = vadd.f32 %v2469, %v2597
      %v2657 = vadd.f32 %v2471, %v2599
      %v2658 = vadd.f32 %v2473, %v2601
      %v2659 = vadd.f32 %v2475, %v2603
      %v2660 = vadd.f32 %v2477, %v2605
      %v2661 = vadd.f32 %v2479, %v2607
      %v2662 = vadd.f32 %v2481, %v2609
      %v2663 = vadd.f32 %v2483, %v2611
      %v2664 = vadd.f32 %v2485, %v2613
      %v2665 = vadd.f32 %v2487, %v2615
      %v2666 = vadd.f32 %v2489, %v2617
      %v2667 = vadd.f32 %v2491, %v2619
      %v2668 = vadd.f32 %v2493, %v2621
      %v2669 = vadd.f32 %v2495, %v2623
      %v2670 = vadd.f32 %v2497, %v2625
      %v2671 = vadd.f32 %v2499, %v2627
      %v2672 = vadd.f32 %v2501, %v2629
      %v2673 = vadd.f32 %v2503, %v2631
      %v2674 = vadd.f32 %v2505, %v2633
      %v2675 = vadd.f32 %v2507, %v2635
      %v2676 = vadd.f32 %v2509, %v2637
      %v2677 = vadd.f32 %v2511, %v2639
      %v2678 = vadd.f32 %v2513, %v2641
      %v2679 = vadd.f32 %v2515, %v2643
      %v2680 = vadd.f32 %v2517, %v2645
      %v2681 = vadd.f32 %v2519, %v2647
      %v2682 = vadd.f32 %v2521, %v2649
      %v2683 = vadd.f32 %v2523, %v2651
      %v2684 = vmul.f32 %v2589, %v1651
      %v2685 = vmul.f32 %v2591, %v1653
      %v2686 = vmul.f32 %v2593, %v1744
      %v2687 = vmul.f32 %v2595, %v1746
      %v2688 = vmul.f32 %v2597, %v1837
      %v2689 = vmul.f32 %v2599, %v1839
      %v2690 = vmul.f32 %v2601, %v1930
      %v2691 = vmul.f32 %v2603, %v1932
      %v2692 = vmul.f32 %v2605, %v1655
      %v2693 = vmul.f32 %v2607, %v1657
      %v2694 = vmul.f32 %v2609, %v1748
      %v2695 = vmul.f32 %v2611, %v1750
      %v2696 = vmul.f32 %v2613, %v1841
      %v2697 = vmul.f32 %v2615, %v1843
      %v2698 = vmul.f32 %v2617, %v1934
      %v2699 = vmul.f32 %v2619, %v1936
      %v2700 = vmul.f32 %v2621, %v1661
      %v2701 = vmul.f32 %v2623, %v1663
      %v2702 = vmul.f32 %v2625, %v1754
      %v2703 = vmul.f32 %v2627, %v1756
      %v2704 = vmul.f32 %v2629, %v1847
      %v2705 = vmul.f32 %v2631, %v1849
      %v2706 = vmul.f32 %v2633, %v1940
      %v2707 = vmul.f32 %v2635, %v1942
      %v2708 = vmul.f32 %v2637, %v1665
      %v2709 = vmul.f32 %v2639, %v1667
      %v2710 = vmul.f32 %v2641, %v1758
      %v2711 = vmul.f32 %v2643, %v1760
      %v2712 = vmul.f32 %v2645, %v1851
      %v2713 = vmul.f32 %v2647, %v1853
      %v2714 = vmul.f32 %v2649, %v1944
      %v2715 = vmul.f32 %v2651, %v1946
      %v2716 = vadd.f32 %v2524, %v2684
      %v2717 = vadd.f32 %v2525, %v2685
      %v2718 = vadd.f32 %v2526, %v2686
      %v2719 = vadd.f32 %v2527, %v2687
      %v2720 = vadd.f32 %v2528, %v2688
      %v2721 = vadd.f32 %v2529, %v2689
      %v2722 = vadd.f32 %v2530, %v2690
      %v2723 = vadd.f32 %v2531, %v2691
      %v2724 = vadd.f32 %v2532, %v2692
      %v2725 = vadd.f32 %v2533, %v2693
      %v2726 = vadd.f32 %v2534, %v2694
      %v2727 = vadd.f32 %v2535, %v2695
      %v2728 = vadd.f32 %v2536, %v2696
      %v2729 = vadd.f32 %v2537, %v2697
      %v2730 = vadd.f32 %v2538, %v2698
      %v2731 = vadd.f32 %v2539, %v2699
      %v2732 = vadd.f32 %v2540, %v2700
      %v2733 = vadd.f32 %v2541, %v2701
      %v2734 = vadd.f32 %v2542, %v2702
      %v2735 = vadd.f32 %v2543, %v2703
      %v2736 = vadd.f32 %v2544, %v2704
      %v2737 = vadd.f32 %v2545, %v2705
      %v2738 = vadd.f32 %v2546, %v2706
      %v2739 = vadd.f32 %v2547, %v2707
      %v2740 = vadd.f32 %v2548, %v2708
      %v2741 = vadd.f32 %v2549, %v2709
      %v2742 = vadd.f32 %v2550, %v2710
      %v2743 = vadd.f32 %v2551, %v2711
      %v2744 = vadd.f32 %v2552, %v2712
      %v2745 = vadd.f32 %v2553, %v2713
      %v2746 = vadd.f32 %v2554, %v2714
      %v2747 = vadd.f32 %v2555, %v2715
      %v2748 = vrcp.pop %v2652
      %v2749 = vmul.f32 1.0, %v2748
      %v2750 = vrcp.pop %v2653
      %v2751 = vmul.f32 1.0, %v2750
      %v2752 = vrcp.pop %v2654
      %v2753 = vmul.f32 1.0, %v2752
      %v2754 = vrcp.pop %v2655
      %v2755 = vmul.f32 1.0, %v2754
      %v2756 = vrcp.pop %v2656
      %v2757 = vmul.f32 1.0, %v2756
      %v2758 = vrcp.pop %v2657
      %v2759 = vmul.f32 1.0, %v2758
      %v2760 = vrcp.pop %v2658
      %v2761 = vmul.f32 1.0, %v2760
      %v2762 = vrcp.pop %v2659
      %v2763 = vmul.f32 1.0, %v2762
      %v2764 = vrcp.pop %v2660
      %v2765 = vmul.f32 1.0, %v2764
      %v2766 = vrcp.pop %v2661
      %v2767 = vmul.f32 1.0, %v2766
      %v2768 = vrcp.pop %v2662
      %v2769 = vmul.f32 1.0, %v2768
      %v2770 = vrcp.pop %v2663
      %v2771 = vmul.f32 1.0, %v2770
      %v2772 = vrcp.pop %v2664
      %v2773 = vmul.f32 1.0, %v2772
      %v2774 = vrcp.pop %v2665
      %v2775 = vmul.f32 1.0, %v2774
      %v2776 = vrcp.pop %v2666
      %v2777 = vmul.f32 1.0, %v2776
      %v2778 = vrcp.pop %v2667
      %v2779 = vmul.f32 1.0, %v2778
      %v2780 = vrcp.pop %v2668
      %v2781 = vmul.f32 1.0, %v2780
      %v2782 = vrcp.pop %v2669
      %v2783 = vmul.f32 1.0, %v2782
      %v2784 = vrcp.pop %v2670
      %v2785 = vmul.f32 1.0, %v2784
      %v2786 = vrcp.pop %v2671
      %v2787 = vmul.f32 1.0, %v2786
      %v2788 = vrcp.pop %v2672
      %v2789 = vmul.f32 1.0, %v2788
      %v2790 = vrcp.pop %v2673
      %v2791 = vmul.f32 1.0, %v2790
      %v2792 = vrcp.pop %v2674
      %v2793 = vmul.f32 1.0, %v2792
      %v2794 = vrcp.pop %v2675
      %v2795 = vmul.f32 1.0, %v2794
      %v2796 = vrcp.pop %v2676
      %v2797 = vmul.f32 1.0, %v2796
      %v2798 = vrcp.pop %v2677
      %v2799 = vmul.f32 1.0, %v2798
      %v2800 = vrcp.pop %v2678
      %v2801 = vmul.f32 1.0, %v2800
      %v2802 = vrcp.pop %v2679
      %v2803 = vmul.f32 1.0, %v2802
      %v2804 = vrcp.pop %v2680
      %v2805 = vmul.f32 1.0, %v2804
      %v2806 = vrcp.pop %v2681
      %v2807 = vmul.f32 1.0, %v2806
      %v2808 = vrcp.pop %v2682
      %v2809 = vmul.f32 1.0, %v2808
      %v2810 = vrcp.pop %v2683
      %v2811 = vmul.f32 1.0, %v2810
      %v2812 = vmul.f32 %v2716, %v2749
      %v2813 = vmul.f32 %v2717, %v2751
      %v2814 = vmul.f32 %v2718, %v2753
      %v2815 = vmul.f32 %v2719, %v2755
      %v2816 = vmul.f32 %v2720, %v2757
      %v2817 = vmul.f32 %v2721, %v2759
      %v2818 = vmul.f32 %v2722, %v2761
      %v2819 = vmul.f32 %v2723, %v2763
      %v2820 = vmul.f32 %v2724, %v2765
      %v2821 = vmul.f32 %v2725, %v2767
      %v2822 = vmul.f32 %v2726, %v2769
      %v2823 = vmul.f32 %v2727, %v2771
      %v2824 = vmul.f32 %v2728, %v2773
      %v2825 = vmul.f32 %v2729, %v2775
      %v2826 = vmul.f32 %v2730, %v2777
      %v2827 = vmul.f32 %v2731, %v2779
      %v2828 = vmul.f32 %v2732, %v2781
      %v2829 = vmul.f32 %v2733, %v2783
      %v2830 = vmul.f32 %v2734, %v2785
      %v2831 = vmul.f32 %v2735, %v2787
      %v2832 = vmul.f32 %v2736, %v2789
      %v2833 = vmul.f32 %v2737, %v2791
      %v2834 = vmul.f32 %v2738, %v2793
      %v2835 = vmul.f32 %v2739, %v2795
      %v2836 = vmul.f32 %v2740, %v2797
      %v2837 = vmul.f32 %v2741, %v2799
      %v2838 = vmul.f32 %v2742, %v2801
      %v2839 = vmul.f32 %v2743, %v2803
      %v2840 = vmul.f32 %v2744, %v2805
      %v2841 = vmul.f32 %v2745, %v2807
      %v2842 = vmul.f32 %v2746, %v2809
      %v2843 = vmul.f32 %v2747, %v2811
      %v2844 = vpack.c.bf16 %v2820, %v2812
      %v2845 = vpack.c.bf16 %v2821, %v2813
      %v2846 = vpack.c.bf16 %v2822, %v2814
      %v2847 = vpack.c.bf16 %v2823, %v2815
      %v2848 = vpack.c.bf16 %v2824, %v2816
      %v2849 = vpack.c.bf16 %v2825, %v2817
      %v2850 = vpack.c.bf16 %v2826, %v2818
      %v2851 = vpack.c.bf16 %v2827, %v2819
      %v2852 = vpack.c.bf16 %v2836, %v2828
      %v2853 = vpack.c.bf16 %v2837, %v2829
      %v2854 = vpack.c.bf16 %v2838, %v2830
      %v2855 = vpack.c.bf16 %v2839, %v2831
      %v2856 = vpack.c.bf16 %v2840, %v2832
      %v2857 = vpack.c.bf16 %v2841, %v2833
      %v2858 = vpack.c.bf16 %v2842, %v2834
      %v2859 = vpack.c.bf16 %v2843, %v2835
      %2860 = vst [vmem:[#allocation3] sm:$0xff] %v2844
      %2861 = vst [vmem:[#allocation3 + $0x8] sm:$0xff] %v2845
      %2862 = vst [vmem:[#allocation3 + $0x10] sm:$0xff] %v2846
      %2863 = vst [vmem:[#allocation3 + $0x18] sm:$0xff] %v2847
      %2864 = vst [vmem:[#allocation3 + $0x20] sm:$0xff] %v2848
      %2865 = vst [vmem:[#allocation3 + $0x28] sm:$0xff] %v2849
      %2866 = vst [vmem:[#allocation3 + $0x30] sm:$0xff] %v2850
      %2867 = vst [vmem:[#allocation3 + $0x38] sm:$0xff] %v2851
      %2868 = vst [vmem:[#allocation3 + $0x80] sm:$0xff] %v2852
      %2869 = vst [vmem:[#allocation3 + $0x88] sm:$0xff] %v2853
      %2870 = vst [vmem:[#allocation3 + $0x90] sm:$0xff] %v2854
      %2871 = vst [vmem:[#allocation3 + $0x98] sm:$0xff] %v2855
      %2872 = vst [vmem:[#allocation3 + $0xa0] sm:$0xff] %v2856
      %2873 = vst [vmem:[#allocation3 + $0xa8] sm:$0xff] %v2857
      %2874 = vst [vmem:[#allocation3 + $0xb0] sm:$0xff] %v2858
      %2875 = vst [vmem:[#allocation3 + $0xb8] sm:$0xff] %v2859
      %v2876 = vmul.f32 %v1611, %v1259
      %v2877 = vmul.f32 %v1613, %v1261
      %v2878 = vmul.f32 %v1704, %v1352
      %v2879 = vmul.f32 %v1706, %v1354
      %v2880 = vmul.f32 %v1797, %v1445
      %v2881 = vmul.f32 %v1799, %v1447
      %v2882 = vmul.f32 %v1890, %v1538
      %v2883 = vmul.f32 %v1892, %v1540
      %v2884 = vmul.f32 %v1615, %v1263
      %v2885 = vmul.f32 %v1617, %v1265
      %v2886 = vmul.f32 %v1708, %v1356
      %v2887 = vmul.f32 %v1710, %v1358
      %v2888 = vmul.f32 %v1801, %v1449
      %v2889 = vmul.f32 %v1803, %v1451
      %v2890 = vmul.f32 %v1894, %v1542
      %v2891 = vmul.f32 %v1896, %v1544
      %v2892 = vmul.f32 %v1621, %v1269
      %v2893 = vmul.f32 %v1623, %v1271
      %v2894 = vmul.f32 %v1714, %v1362
      %v2895 = vmul.f32 %v1716, %v1364
      %v2896 = vmul.f32 %v1807, %v1455
      %v2897 = vmul.f32 %v1809, %v1457
      %v2898 = vmul.f32 %v1900, %v1548
      %v2899 = vmul.f32 %v1902, %v1550
      %v2900 = vmul.f32 %v1625, %v1273
      %v2901 = vmul.f32 %v1627, %v1275
      %v2902 = vmul.f32 %v1718, %v1366
      %v2903 = vmul.f32 %v1720, %v1368
      %v2904 = vmul.f32 %v1811, %v1459
      %v2905 = vmul.f32 %v1813, %v1461
      %v2906 = vmul.f32 %v1904, %v1552
      %v2907 = vmul.f32 %v1906, %v1554
      %v2908 = vrot.slane %v2876, 4
      %v2909 = vadd.f32 %v2876, %v2908
      %v2910 = vrot.slane %v2909, 2
      %v2911 = vadd.f32 %v2909, %v2910
      %v2912 = vrot.slane %v2911, 1
      %v2913 = vadd.f32 %v2911, %v2912
      %v2914 = vrot.slane %v2877, 4
      %v2915 = vadd.f32 %v2877, %v2914
      %v2916 = vrot.slane %v2915, 2
      %v2917 = vadd.f32 %v2915, %v2916
      %v2918 = vrot.slane %v2917, 1
      %v2919 = vadd.f32 %v2917, %v2918
      %v2920 = vrot.slane %v2878, 4
      %v2921 = vadd.f32 %v2878, %v2920
      %v2922 = vrot.slane %v2921, 2
      %v2923 = vadd.f32 %v2921, %v2922
      %v2924 = vrot.slane %v2923, 1
      %v2925 = vadd.f32 %v2923, %v2924
      %v2926 = vrot.slane %v2879, 4
      %v2927 = vadd.f32 %v2879, %v2926
      %v2928 = vrot.slane %v2927, 2
      %v2929 = vadd.f32 %v2927, %v2928
      %v2930 = vrot.slane %v2929, 1
      %v2931 = vadd.f32 %v2929, %v2930
      %v2932 = vrot.slane %v2880, 4
      %v2933 = vadd.f32 %v2880, %v2932
      %v2934 = vrot.slane %v2933, 2
      %v2935 = vadd.f32 %v2933, %v2934
      %v2936 = vrot.slane %v2935, 1
      %v2937 = vadd.f32 %v2935, %v2936
      %v2938 = vrot.slane %v2881, 4
      %v2939 = vadd.f32 %v2881, %v2938
      %v2940 = vrot.slane %v2939, 2
      %v2941 = vadd.f32 %v2939, %v2940
      %v2942 = vrot.slane %v2941, 1
      %v2943 = vadd.f32 %v2941, %v2942
      %v2944 = vrot.slane %v2882, 4
      %v2945 = vadd.f32 %v2882, %v2944
      %v2946 = vrot.slane %v2945, 2
      %v2947 = vadd.f32 %v2945, %v2946
      %v2948 = vrot.slane %v2947, 1
      %v2949 = vadd.f32 %v2947, %v2948
      %v2950 = vrot.slane %v2883, 4
      %v2951 = vadd.f32 %v2883, %v2950
      %v2952 = vrot.slane %v2951, 2
      %v2953 = vadd.f32 %v2951, %v2952
      %v2954 = vrot.slane %v2953, 1
      %v2955 = vadd.f32 %v2953, %v2954
      %v2956 = vrot.slane %v2884, 4
      %v2957 = vadd.f32 %v2884, %v2956
      %v2958 = vrot.slane %v2957, 2
      %v2959 = vadd.f32 %v2957, %v2958
      %v2960 = vrot.slane %v2959, 1
      %v2961 = vadd.f32 %v2959, %v2960
      %v2962 = vrot.slane %v2885, 4
      %v2963 = vadd.f32 %v2885, %v2962
      %v2964 = vrot.slane %v2963, 2
      %v2965 = vadd.f32 %v2963, %v2964
      %v2966 = vrot.slane %v2965, 1
      %v2967 = vadd.f32 %v2965, %v2966
      %v2968 = vrot.slane %v2886, 4
      %v2969 = vadd.f32 %v2886, %v2968
      %v2970 = vrot.slane %v2969, 2
      %v2971 = vadd.f32 %v2969, %v2970
      %v2972 = vrot.slane %v2971, 1
      %v2973 = vadd.f32 %v2971, %v2972
      %v2974 = vrot.slane %v2887, 4
      %v2975 = vadd.f32 %v2887, %v2974
      %v2976 = vrot.slane %v2975, 2
      %v2977 = vadd.f32 %v2975, %v2976
      %v2978 = vrot.slane %v2977, 1
      %v2979 = vadd.f32 %v2977, %v2978
      %v2980 = vrot.slane %v2888, 4
      %v2981 = vadd.f32 %v2888, %v2980
      %v2982 = vrot.slane %v2981, 2
      %v2983 = vadd.f32 %v2981, %v2982
      %v2984 = vrot.slane %v2983, 1
      %v2985 = vadd.f32 %v2983, %v2984
      %v2986 = vrot.slane %v2889, 4
      %v2987 = vadd.f32 %v2889, %v2986
      %v2988 = vrot.slane %v2987, 2
      %v2989 = vadd.f32 %v2987, %v2988
      %v2990 = vrot.slane %v2989, 1
      %v2991 = vadd.f32 %v2989, %v2990
      %v2992 = vrot.slane %v2890, 4
      %v2993 = vadd.f32 %v2890, %v2992
      %v2994 = vrot.slane %v2993, 2
      %v2995 = vadd.f32 %v2993, %v2994
      %v2996 = vrot.slane %v2995, 1
      %v2997 = vadd.f32 %v2995, %v2996
      %v2998 = vrot.slane %v2891, 4
      %v2999 = vadd.f32 %v2891, %v2998
      %v3000 = vrot.slane %v2999, 2
      %v3001 = vadd.f32 %v2999, %v3000
      %v3002 = vrot.slane %v3001, 1
      %v3003 = vadd.f32 %v3001, %v3002
      %v3004 = vrot.slane %v2892, 4
      %v3005 = vadd.f32 %v2892, %v3004
      %v3006 = vrot.slane %v3005, 2
      %v3007 = vadd.f32 %v3005, %v3006
      %v3008 = vrot.slane %v3007, 1
      %v3009 = vadd.f32 %v3007, %v3008
      %v3010 = vrot.slane %v2893, 4
      %v3011 = vadd.f32 %v2893, %v3010
      %v3012 = vrot.slane %v3011, 2
      %v3013 = vadd.f32 %v3011, %v3012
      %v3014 = vrot.slane %v3013, 1
      %v3015 = vadd.f32 %v3013, %v3014
      %v3016 = vrot.slane %v2894, 4
      %v3017 = vadd.f32 %v2894, %v3016
      %v3018 = vrot.slane %v3017, 2
      %v3019 = vadd.f32 %v3017, %v3018
      %v3020 = vrot.slane %v3019, 1
      %v3021 = vadd.f32 %v3019, %v3020
      %v3022 = vrot.slane %v2895, 4
      %v3023 = vadd.f32 %v2895, %v3022
      %v3024 = vrot.slane %v3023, 2
      %v3025 = vadd.f32 %v3023, %v3024
      %v3026 = vrot.slane %v3025, 1
      %v3027 = vadd.f32 %v3025, %v3026
      %v3028 = vrot.slane %v2896, 4
      %v3029 = vadd.f32 %v2896, %v3028
      %v3030 = vrot.slane %v3029, 2
      %v3031 = vadd.f32 %v3029, %v3030
      %v3032 = vrot.slane %v3031, 1
      %v3033 = vadd.f32 %v3031, %v3032
      %v3034 = vrot.slane %v2897, 4
      %v3035 = vadd.f32 %v2897, %v3034
      %v3036 = vrot.slane %v3035, 2
      %v3037 = vadd.f32 %v3035, %v3036
      %v3038 = vrot.slane %v3037, 1
      %v3039 = vadd.f32 %v3037, %v3038
      %v3040 = vrot.slane %v2898, 4
      %v3041 = vadd.f32 %v2898, %v3040
      %v3042 = vrot.slane %v3041, 2
      %v3043 = vadd.f32 %v3041, %v3042
      %v3044 = vrot.slane %v3043, 1
      %v3045 = vadd.f32 %v3043, %v3044
      %v3046 = vrot.slane %v2899, 4
      %v3047 = vadd.f32 %v2899, %v3046
      %v3048 = vrot.slane %v3047, 2
      %v3049 = vadd.f32 %v3047, %v3048
      %v3050 = vrot.slane %v3049, 1
      %v3051 = vadd.f32 %v3049, %v3050
      %v3052 = vrot.slane %v2900, 4
      %v3053 = vadd.f32 %v2900, %v3052
      %v3054 = vrot.slane %v3053, 2
      %v3055 = vadd.f32 %v3053, %v3054
      %v3056 = vrot.slane %v3055, 1
      %v3057 = vadd.f32 %v3055, %v3056
      %v3058 = vrot.slane %v2901, 4
      %v3059 = vadd.f32 %v2901, %v3058
      %v3060 = vrot.slane %v3059, 2
      %v3061 = vadd.f32 %v3059, %v3060
      %v3062 = vrot.slane %v3061, 1
      %v3063 = vadd.f32 %v3061, %v3062
      %v3064 = vrot.slane %v2902, 4
      %v3065 = vadd.f32 %v2902, %v3064
      %v3066 = vrot.slane %v3065, 2
      %v3067 = vadd.f32 %v3065, %v3066
      %v3068 = vrot.slane %v3067, 1
      %v3069 = vadd.f32 %v3067, %v3068
      %v3070 = vrot.slane %v2903, 4
      %v3071 = vadd.f32 %v2903, %v3070
      %v3072 = vrot.slane %v3071, 2
      %v3073 = vadd.f32 %v3071, %v3072
      %v3074 = vrot.slane %v3073, 1
      %v3075 = vadd.f32 %v3073, %v3074
      %v3076 = vrot.slane %v2904, 4
      %v3077 = vadd.f32 %v2904, %v3076
      %v3078 = vrot.slane %v3077, 2
      %v3079 = vadd.f32 %v3077, %v3078
      %v3080 = vrot.slane %v3079, 1
      %v3081 = vadd.f32 %v3079, %v3080
      %v3082 = vrot.slane %v2905, 4
      %v3083 = vadd.f32 %v2905, %v3082
      %v3084 = vrot.slane %v3083, 2
      %v3085 = vadd.f32 %v3083, %v3084
      %v3086 = vrot.slane %v3085, 1
      %v3087 = vadd.f32 %v3085, %v3086
      %v3088 = vrot.slane %v2906, 4
      %v3089 = vadd.f32 %v2906, %v3088
      %v3090 = vrot.slane %v3089, 2
      %v3091 = vadd.f32 %v3089, %v3090
      %v3092 = vrot.slane %v3091, 1
      %v3093 = vadd.f32 %v3091, %v3092
      %v3094 = vrot.slane %v2907, 4
      %v3095 = vadd.f32 %v2907, %v3094
      %v3096 = vrot.slane %v3095, 2
      %v3097 = vadd.f32 %v3095, %v3096
      %v3098 = vrot.slane %v3097, 1
      %v3099 = vadd.f32 %v3097, %v3098
      %v3100 = vmul.f32 %v1611, %v1631
      %v3101 = vmul.f32 %v1613, %v1633
      %v3102 = vmul.f32 %v1704, %v1724
      %v3103 = vmul.f32 %v1706, %v1726
      %v3104 = vmul.f32 %v1797, %v1817
      %v3105 = vmul.f32 %v1799, %v1819
      %v3106 = vmul.f32 %v1890, %v1910
      %v3107 = vmul.f32 %v1892, %v1912
      %v3108 = vmul.f32 %v1615, %v1635
      %v3109 = vmul.f32 %v1617, %v1637
      %v3110 = vmul.f32 %v1708, %v1728
      %v3111 = vmul.f32 %v1710, %v1730
      %v3112 = vmul.f32 %v1801, %v1821
      %v3113 = vmul.f32 %v1803, %v1823
      %v3114 = vmul.f32 %v1894, %v1914
      %v3115 = vmul.f32 %v1896, %v1916
      %v3116 = vmul.f32 %v1621, %v1641
      %v3117 = vmul.f32 %v1623, %v1643
      %v3118 = vmul.f32 %v1714, %v1734
      %v3119 = vmul.f32 %v1716, %v1736
      %v3120 = vmul.f32 %v1807, %v1827
      %v3121 = vmul.f32 %v1809, %v1829
      %v3122 = vmul.f32 %v1900, %v1920
      %v3123 = vmul.f32 %v1902, %v1922
      %v3124 = vmul.f32 %v1625, %v1645
      %v3125 = vmul.f32 %v1627, %v1647
      %v3126 = vmul.f32 %v1718, %v1738
      %v3127 = vmul.f32 %v1720, %v1740
      %v3128 = vmul.f32 %v1811, %v1831
      %v3129 = vmul.f32 %v1813, %v1833
      %v3130 = vmul.f32 %v1904, %v1924
      %v3131 = vmul.f32 %v1906, %v1926
      %v3132 = vrot.slane %v3100, 4
      %v3133 = vadd.f32 %v3100, %v3132
      %v3134 = vrot.slane %v3133, 2
      %v3135 = vadd.f32 %v3133, %v3134
      %v3136 = vrot.slane %v3135, 1
      %v3137 = vadd.f32 %v3135, %v3136
      %v3138 = vrot.slane %v3101, 4
      %v3139 = vadd.f32 %v3101, %v3138
      %v3140 = vrot.slane %v3139, 2
      %v3141 = vadd.f32 %v3139, %v3140
      %v3142 = vrot.slane %v3141, 1
      %v3143 = vadd.f32 %v3141, %v3142
      %v3144 = vrot.slane %v3102, 4
      %v3145 = vadd.f32 %v3102, %v3144
      %v3146 = vrot.slane %v3145, 2
      %v3147 = vadd.f32 %v3145, %v3146
      %v3148 = vrot.slane %v3147, 1
      %v3149 = vadd.f32 %v3147, %v3148
      %v3150 = vrot.slane %v3103, 4
      %v3151 = vadd.f32 %v3103, %v3150
      %v3152 = vrot.slane %v3151, 2
      %v3153 = vadd.f32 %v3151, %v3152
      %v3154 = vrot.slane %v3153, 1
      %v3155 = vadd.f32 %v3153, %v3154
      %v3156 = vrot.slane %v3104, 4
      %v3157 = vadd.f32 %v3104, %v3156
      %v3158 = vrot.slane %v3157, 2
      %v3159 = vadd.f32 %v3157, %v3158
      %v3160 = vrot.slane %v3159, 1
      %v3161 = vadd.f32 %v3159, %v3160
      %v3162 = vrot.slane %v3105, 4
      %v3163 = vadd.f32 %v3105, %v3162
      %v3164 = vrot.slane %v3163, 2
      %v3165 = vadd.f32 %v3163, %v3164
      %v3166 = vrot.slane %v3165, 1
      %v3167 = vadd.f32 %v3165, %v3166
      %v3168 = vrot.slane %v3106, 4
      %v3169 = vadd.f32 %v3106, %v3168
      %v3170 = vrot.slane %v3169, 2
      %v3171 = vadd.f32 %v3169, %v3170
      %v3172 = vrot.slane %v3171, 1
      %v3173 = vadd.f32 %v3171, %v3172
      %v3174 = vrot.slane %v3107, 4
      %v3175 = vadd.f32 %v3107, %v3174
      %v3176 = vrot.slane %v3175, 2
      %v3177 = vadd.f32 %v3175, %v3176
      %v3178 = vrot.slane %v3177, 1
      %v3179 = vadd.f32 %v3177, %v3178
      %v3180 = vrot.slane %v3108, 4
      %v3181 = vadd.f32 %v3108, %v3180
      %v3182 = vrot.slane %v3181, 2
      %v3183 = vadd.f32 %v3181, %v3182
      %v3184 = vrot.slane %v3183, 1
      %v3185 = vadd.f32 %v3183, %v3184
      %v3186 = vrot.slane %v3109, 4
      %v3187 = vadd.f32 %v3109, %v3186
      %v3188 = vrot.slane %v3187, 2
      %v3189 = vadd.f32 %v3187, %v3188
      %v3190 = vrot.slane %v3189, 1
      %v3191 = vadd.f32 %v3189, %v3190
      %v3192 = vrot.slane %v3110, 4
      %v3193 = vadd.f32 %v3110, %v3192
      %v3194 = vrot.slane %v3193, 2
      %v3195 = vadd.f32 %v3193, %v3194
      %v3196 = vrot.slane %v3195, 1
      %v3197 = vadd.f32 %v3195, %v3196
      %v3198 = vrot.slane %v3111, 4
      %v3199 = vadd.f32 %v3111, %v3198
      %v3200 = vrot.slane %v3199, 2
      %v3201 = vadd.f32 %v3199, %v3200
      %v3202 = vrot.slane %v3201, 1
      %v3203 = vadd.f32 %v3201, %v3202
      %v3204 = vrot.slane %v3112, 4
      %v3205 = vadd.f32 %v3112, %v3204
      %v3206 = vrot.slane %v3205, 2
      %v3207 = vadd.f32 %v3205, %v3206
      %v3208 = vrot.slane %v3207, 1
      %v3209 = vadd.f32 %v3207, %v3208
      %v3210 = vrot.slane %v3113, 4
      %v3211 = vadd.f32 %v3113, %v3210
      %v3212 = vrot.slane %v3211, 2
      %v3213 = vadd.f32 %v3211, %v3212
      %v3214 = vrot.slane %v3213, 1
      %v3215 = vadd.f32 %v3213, %v3214
      %v3216 = vrot.slane %v3114, 4
      %v3217 = vadd.f32 %v3114, %v3216
      %v3218 = vrot.slane %v3217, 2
      %v3219 = vadd.f32 %v3217, %v3218
      %v3220 = vrot.slane %v3219, 1
      %v3221 = vadd.f32 %v3219, %v3220
      %v3222 = vrot.slane %v3115, 4
      %v3223 = vadd.f32 %v3115, %v3222
      %v3224 = vrot.slane %v3223, 2
      %v3225 = vadd.f32 %v3223, %v3224
      %v3226 = vrot.slane %v3225, 1
      %v3227 = vadd.f32 %v3225, %v3226
      %v3228 = vrot.slane %v3116, 4
      %v3229 = vadd.f32 %v3116, %v3228
      %v3230 = vrot.slane %v3229, 2
      %v3231 = vadd.f32 %v3229, %v3230
      %v3232 = vrot.slane %v3231, 1
      %v3233 = vadd.f32 %v3231, %v3232
      %v3234 = vrot.slane %v3117, 4
      %v3235 = vadd.f32 %v3117, %v3234
      %v3236 = vrot.slane %v3235, 2
      %v3237 = vadd.f32 %v3235, %v3236
      %v3238 = vrot.slane %v3237, 1
      %v3239 = vadd.f32 %v3237, %v3238
      %v3240 = vrot.slane %v3118, 4
      %v3241 = vadd.f32 %v3118, %v3240
      %v3242 = vrot.slane %v3241, 2
      %v3243 = vadd.f32 %v3241, %v3242
      %v3244 = vrot.slane %v3243, 1
      %v3245 = vadd.f32 %v3243, %v3244
      %v3246 = vrot.slane %v3119, 4
      %v3247 = vadd.f32 %v3119, %v3246
      %v3248 = vrot.slane %v3247, 2
      %v3249 = vadd.f32 %v3247, %v3248
      %v3250 = vrot.slane %v3249, 1
      %v3251 = vadd.f32 %v3249, %v3250
      %v3252 = vrot.slane %v3120, 4
      %v3253 = vadd.f32 %v3120, %v3252
      %v3254 = vrot.slane %v3253, 2
      %v3255 = vadd.f32 %v3253, %v3254
      %v3256 = vrot.slane %v3255, 1
      %v3257 = vadd.f32 %v3255, %v3256
      %v3258 = vrot.slane %v3121, 4
      %v3259 = vadd.f32 %v3121, %v3258
      %v3260 = vrot.slane %v3259, 2
      %v3261 = vadd.f32 %v3259, %v3260
      %v3262 = vrot.slane %v3261, 1
      %v3263 = vadd.f32 %v3261, %v3262
      %v3264 = vrot.slane %v3122, 4
      %v3265 = vadd.f32 %v3122, %v3264
      %v3266 = vrot.slane %v3265, 2
      %v3267 = vadd.f32 %v3265, %v3266
      %v3268 = vrot.slane %v3267, 1
      %v3269 = vadd.f32 %v3267, %v3268
      %v3270 = vrot.slane %v3123, 4
      %v3271 = vadd.f32 %v3123, %v3270
      %v3272 = vrot.slane %v3271, 2
      %v3273 = vadd.f32 %v3271, %v3272
      %v3274 = vrot.slane %v3273, 1
      %v3275 = vadd.f32 %v3273, %v3274
      %v3276 = vrot.slane %v3124, 4
      %v3277 = vadd.f32 %v3124, %v3276
      %v3278 = vrot.slane %v3277, 2
      %v3279 = vadd.f32 %v3277, %v3278
      %v3280 = vrot.slane %v3279, 1
      %v3281 = vadd.f32 %v3279, %v3280
      %v3282 = vrot.slane %v3125, 4
      %v3283 = vadd.f32 %v3125, %v3282
      %v3284 = vrot.slane %v3283, 2
      %v3285 = vadd.f32 %v3283, %v3284
      %v3286 = vrot.slane %v3285, 1
      %v3287 = vadd.f32 %v3285, %v3286
      %v3288 = vrot.slane %v3126, 4
      %v3289 = vadd.f32 %v3126, %v3288
      %v3290 = vrot.slane %v3289, 2
      %v3291 = vadd.f32 %v3289, %v3290
      %v3292 = vrot.slane %v3291, 1
      %v3293 = vadd.f32 %v3291, %v3292
      %v3294 = vrot.slane %v3127, 4
      %v3295 = vadd.f32 %v3127, %v3294
      %v3296 = vrot.slane %v3295, 2
      %v3297 = vadd.f32 %v3295, %v3296
      %v3298 = vrot.slane %v3297, 1
      %v3299 = vadd.f32 %v3297, %v3298
      %v3300 = vrot.slane %v3128, 4
      %v3301 = vadd.f32 %v3128, %v3300
      %v3302 = vrot.slane %v3301, 2
      %v3303 = vadd.f32 %v3301, %v3302
      %v3304 = vrot.slane %v3303, 1
      %v3305 = vadd.f32 %v3303, %v3304
      %v3306 = vrot.slane %v3129, 4
      %v3307 = vadd.f32 %v3129, %v3306
      %v3308 = vrot.slane %v3307, 2
      %v3309 = vadd.f32 %v3307, %v3308
      %v3310 = vrot.slane %v3309, 1
      %v3311 = vadd.f32 %v3309, %v3310
      %v3312 = vrot.slane %v3130, 4
      %v3313 = vadd.f32 %v3130, %v3312
      %v3314 = vrot.slane %v3313, 2
      %v3315 = vadd.f32 %v3313, %v3314
      %v3316 = vrot.slane %v3315, 1
      %v3317 = vadd.f32 %v3315, %v3316
      %v3318 = vrot.slane %v3131, 4
      %v3319 = vadd.f32 %v3131, %v3318
      %v3320 = vrot.slane %v3319, 2
      %v3321 = vadd.f32 %v3319, %v3320
      %v3322 = vrot.slane %v3321, 1
      %v3323 = vadd.f32 %v3321, %v3322
      %v3324 = vmax.f32 %v2913, %v3137
      %v3325 = vmax.f32 %v2919, %v3143
      %v3326 = vmax.f32 %v2925, %v3149
      %v3327 = vmax.f32 %v2931, %v3155
      %v3328 = vmax.f32 %v2937, %v3161
      %v3329 = vmax.f32 %v2943, %v3167
      %v3330 = vmax.f32 %v2949, %v3173
      %v3331 = vmax.f32 %v2955, %v3179
      %v3332 = vmax.f32 %v2961, %v3185
      %v3333 = vmax.f32 %v2967, %v3191
      %v3334 = vmax.f32 %v2973, %v3197
      %v3335 = vmax.f32 %v2979, %v3203
      %v3336 = vmax.f32 %v2985, %v3209
      %v3337 = vmax.f32 %v2991, %v3215
      %v3338 = vmax.f32 %v2997, %v3221
      %v3339 = vmax.f32 %v3003, %v3227
      %v3340 = vmax.f32 %v3009, %v3233
      %v3341 = vmax.f32 %v3015, %v3239
      %v3342 = vmax.f32 %v3021, %v3245
      %v3343 = vmax.f32 %v3027, %v3251
      %v3344 = vmax.f32 %v3033, %v3257
      %v3345 = vmax.f32 %v3039, %v3263
      %v3346 = vmax.f32 %v3045, %v3269
      %v3347 = vmax.f32 %v3051, %v3275
      %v3348 = vmax.f32 %v3057, %v3281
      %v3349 = vmax.f32 %v3063, %v3287
      %v3350 = vmax.f32 %v3069, %v3293
      %v3351 = vmax.f32 %v3075, %v3299
      %v3352 = vmax.f32 %v3081, %v3305
      %v3353 = vmax.f32 %v3087, %v3311
      %v3354 = vmax.f32 %v3093, %v3317
      %v3355 = vmax.f32 %v3099, %v3323
      %v3356 = vsub.f32 %v2913, %v3324
      %v3357 = vsub.f32 %v2919, %v3325
      %v3358 = vsub.f32 %v2925, %v3326
      %v3359 = vsub.f32 %v2931, %v3327
      %v3360 = vsub.f32 %v2937, %v3328
      %v3361 = vsub.f32 %v2943, %v3329
      %v3362 = vsub.f32 %v2949, %v3330
      %v3363 = vsub.f32 %v2955, %v3331
      %v3364 = vsub.f32 %v2961, %v3332
      %v3365 = vsub.f32 %v2967, %v3333
      %v3366 = vsub.f32 %v2973, %v3334
      %v3367 = vsub.f32 %v2979, %v3335
      %v3368 = vsub.f32 %v2985, %v3336
      %v3369 = vsub.f32 %v2991, %v3337
      %v3370 = vsub.f32 %v2997, %v3338
      %v3371 = vsub.f32 %v3003, %v3339
      %v3372 = vsub.f32 %v3009, %v3340
      %v3373 = vsub.f32 %v3015, %v3341
      %v3374 = vsub.f32 %v3021, %v3342
      %v3375 = vsub.f32 %v3027, %v3343
      %v3376 = vsub.f32 %v3033, %v3344
      %v3377 = vsub.f32 %v3039, %v3345
      %v3378 = vsub.f32 %v3045, %v3346
      %v3379 = vsub.f32 %v3051, %v3347
      %v3380 = vsub.f32 %v3057, %v3348
      %v3381 = vsub.f32 %v3063, %v3349
      %v3382 = vsub.f32 %v3069, %v3350
      %v3383 = vsub.f32 %v3075, %v3351
      %v3384 = vsub.f32 %v3081, %v3352
      %v3385 = vsub.f32 %v3087, %v3353
      %v3386 = vsub.f32 %v3093, %v3354
      %v3387 = vsub.f32 %v3099, %v3355
      %v3388 = vmul.f32 %v3356, 1.442695
      %v3389 = vpow.pop %v3388
      %v3390 = vmul.f32 %v3357, 1.442695
      %v3391 = vpow.pop %v3390
      %v3392 = vmul.f32 %v3358, 1.442695
      %v3393 = vpow.pop %v3392
      %v3394 = vmul.f32 %v3359, 1.442695
      %v3395 = vpow.pop %v3394
      %v3396 = vmul.f32 %v3360, 1.442695
      %v3397 = vpow.pop %v3396
      %v3398 = vmul.f32 %v3361, 1.442695
      %v3399 = vpow.pop %v3398
      %v3400 = vmul.f32 %v3362, 1.442695
      %v3401 = vpow.pop %v3400
      %v3402 = vmul.f32 %v3363, 1.442695
      %v3403 = vpow.pop %v3402
      %v3404 = vmul.f32 %v3364, 1.442695
      %v3405 = vpow.pop %v3404
      %v3406 = vmul.f32 %v3365, 1.442695
      %v3407 = vpow.pop %v3406
      %v3408 = vmul.f32 %v3366, 1.442695
      %v3409 = vpow.pop %v3408
      %v3410 = vmul.f32 %v3367, 1.442695
      %v3411 = vpow.pop %v3410
      %v3412 = vmul.f32 %v3368, 1.442695
      %v3413 = vpow.pop %v3412
      %v3414 = vmul.f32 %v3369, 1.442695
      %v3415 = vpow.pop %v3414
      %v3416 = vmul.f32 %v3370, 1.442695
      %v3417 = vpow.pop %v3416
      %v3418 = vmul.f32 %v3371, 1.442695
      %v3419 = vpow.pop %v3418
      %v3420 = vmul.f32 %v3372, 1.442695
      %v3421 = vpow.pop %v3420
      %v3422 = vmul.f32 %v3373, 1.442695
      %v3423 = vpow.pop %v3422
      %v3424 = vmul.f32 %v3374, 1.442695
      %v3425 = vpow.pop %v3424
      %v3426 = vmul.f32 %v3375, 1.442695
      %v3427 = vpow.pop %v3426
      %v3428 = vmul.f32 %v3376, 1.442695
      %v3429 = vpow.pop %v3428
      %v3430 = vmul.f32 %v3377, 1.442695
      %v3431 = vpow.pop %v3430
      %v3432 = vmul.f32 %v3378, 1.442695
      %v3433 = vpow.pop %v3432
      %v3434 = vmul.f32 %v3379, 1.442695
      %v3435 = vpow.pop %v3434
      %v3436 = vmul.f32 %v3380, 1.442695
      %v3437 = vpow.pop %v3436
      %v3438 = vmul.f32 %v3381, 1.442695
      %v3439 = vpow.pop %v3438
      %v3440 = vmul.f32 %v3382, 1.442695
      %v3441 = vpow.pop %v3440
      %v3442 = vmul.f32 %v3383, 1.442695
      %v3443 = vpow.pop %v3442
      %v3444 = vmul.f32 %v3384, 1.442695
      %v3445 = vpow.pop %v3444
      %v3446 = vmul.f32 %v3385, 1.442695
      %v3447 = vpow.pop %v3446
      %v3448 = vmul.f32 %v3386, 1.442695
      %v3449 = vpow.pop %v3448
      %v3450 = vmul.f32 %v3387, 1.442695
      %v3451 = vpow.pop %v3450
      %v3452 = vmul.f32 %v3389, %v1279
      %v3453 = vmul.f32 %v3391, %v1281
      %v3454 = vmul.f32 %v3393, %v1372
      %v3455 = vmul.f32 %v3395, %v1374
      %v3456 = vmul.f32 %v3397, %v1465
      %v3457 = vmul.f32 %v3399, %v1467
      %v3458 = vmul.f32 %v3401, %v1558
      %v3459 = vmul.f32 %v3403, %v1560
      %v3460 = vmul.f32 %v3405, %v1283
      %v3461 = vmul.f32 %v3407, %v1285
      %v3462 = vmul.f32 %v3409, %v1376
      %v3463 = vmul.f32 %v3411, %v1378
      %v3464 = vmul.f32 %v3413, %v1469
      %v3465 = vmul.f32 %v3415, %v1471
      %v3466 = vmul.f32 %v3417, %v1562
      %v3467 = vmul.f32 %v3419, %v1564
      %v3468 = vmul.f32 %v3421, %v1289
      %v3469 = vmul.f32 %v3423, %v1291
      %v3470 = vmul.f32 %v3425, %v1382
      %v3471 = vmul.f32 %v3427, %v1384
      %v3472 = vmul.f32 %v3429, %v1475
      %v3473 = vmul.f32 %v3431, %v1477
      %v3474 = vmul.f32 %v3433, %v1568
      %v3475 = vmul.f32 %v3435, %v1570
      %v3476 = vmul.f32 %v3437, %v1293
      %v3477 = vmul.f32 %v3439, %v1295
      %v3478 = vmul.f32 %v3441, %v1386
      %v3479 = vmul.f32 %v3443, %v1388
      %v3480 = vmul.f32 %v3445, %v1479
      %v3481 = vmul.f32 %v3447, %v1481
      %v3482 = vmul.f32 %v3449, %v1572
      %v3483 = vmul.f32 %v3451, %v1574
      %v3484 = vsub.f32 %v3137, %v3324
      %v3485 = vsub.f32 %v3143, %v3325
      %v3486 = vsub.f32 %v3149, %v3326
      %v3487 = vsub.f32 %v3155, %v3327
      %v3488 = vsub.f32 %v3161, %v3328
      %v3489 = vsub.f32 %v3167, %v3329
      %v3490 = vsub.f32 %v3173, %v3330
      %v3491 = vsub.f32 %v3179, %v3331
      %v3492 = vsub.f32 %v3185, %v3332
      %v3493 = vsub.f32 %v3191, %v3333
      %v3494 = vsub.f32 %v3197, %v3334
      %v3495 = vsub.f32 %v3203, %v3335
      %v3496 = vsub.f32 %v3209, %v3336
      %v3497 = vsub.f32 %v3215, %v3337
      %v3498 = vsub.f32 %v3221, %v3338
      %v3499 = vsub.f32 %v3227, %v3339
      %v3500 = vsub.f32 %v3233, %v3340
      %v3501 = vsub.f32 %v3239, %v3341
      %v3502 = vsub.f32 %v3245, %v3342
      %v3503 = vsub.f32 %v3251, %v3343
      %v3504 = vsub.f32 %v3257, %v3344
      %v3505 = vsub.f32 %v3263, %v3345
      %v3506 = vsub.f32 %v3269, %v3346
      %v3507 = vsub.f32 %v3275, %v3347
      %v3508 = vsub.f32 %v3281, %v3348
      %v3509 = vsub.f32 %v3287, %v3349
      %v3510 = vsub.f32 %v3293, %v3350
      %v3511 = vsub.f32 %v3299, %v3351
      %v3512 = vsub.f32 %v3305, %v3352
      %v3513 = vsub.f32 %v3311, %v3353
      %v3514 = vsub.f32 %v3317, %v3354
      %v3515 = vsub.f32 %v3323, %v3355
      %v3516 = vmul.f32 %v3484, 1.442695
      %v3517 = vpow.pop %v3516
      %v3518 = vmul.f32 %v3485, 1.442695
      %v3519 = vpow.pop %v3518
      %v3520 = vmul.f32 %v3486, 1.442695
      %v3521 = vpow.pop %v3520
      %v3522 = vmul.f32 %v3487, 1.442695
      %v3523 = vpow.pop %v3522
      %v3524 = vmul.f32 %v3488, 1.442695
      %v3525 = vpow.pop %v3524
      %v3526 = vmul.f32 %v3489, 1.442695
      %v3527 = vpow.pop %v3526
      %v3528 = vmul.f32 %v3490, 1.442695
      %v3529 = vpow.pop %v3528
      %v3530 = vmul.f32 %v3491, 1.442695
      %v3531 = vpow.pop %v3530
      %v3532 = vmul.f32 %v3492, 1.442695
      %v3533 = vpow.pop %v3532
      %v3534 = vmul.f32 %v3493, 1.442695
      %v3535 = vpow.pop %v3534
      %v3536 = vmul.f32 %v3494, 1.442695
      %v3537 = vpow.pop %v3536
      %v3538 = vmul.f32 %v3495, 1.442695
      %v3539 = vpow.pop %v3538
      %v3540 = vmul.f32 %v3496, 1.442695
      %v3541 = vpow.pop %v3540
      %v3542 = vmul.f32 %v3497, 1.442695
      %v3543 = vpow.pop %v3542
      %v3544 = vmul.f32 %v3498, 1.442695
      %v3545 = vpow.pop %v3544
      %v3546 = vmul.f32 %v3499, 1.442695
      %v3547 = vpow.pop %v3546
      %v3548 = vmul.f32 %v3500, 1.442695
      %v3549 = vpow.pop %v3548
      %v3550 = vmul.f32 %v3501, 1.442695
      %v3551 = vpow.pop %v3550
      %v3552 = vmul.f32 %v3502, 1.442695
      %v3553 = vpow.pop %v3552
      %v3554 = vmul.f32 %v3503, 1.442695
      %v3555 = vpow.pop %v3554
      %v3556 = vmul.f32 %v3504, 1.442695
      %v3557 = vpow.pop %v3556
      %v3558 = vmul.f32 %v3505, 1.442695
      %v3559 = vpow.pop %v3558
      %v3560 = vmul.f32 %v3506, 1.442695
      %v3561 = vpow.pop %v3560
      %v3562 = vmul.f32 %v3507, 1.442695
      %v3563 = vpow.pop %v3562
      %v3564 = vmul.f32 %v3508, 1.442695
      %v3565 = vpow.pop %v3564
      %v3566 = vmul.f32 %v3509, 1.442695
      %v3567 = vpow.pop %v3566
      %v3568 = vmul.f32 %v3510, 1.442695
      %v3569 = vpow.pop %v3568
      %v3570 = vmul.f32 %v3511, 1.442695
      %v3571 = vpow.pop %v3570
      %v3572 = vmul.f32 %v3512, 1.442695
      %v3573 = vpow.pop %v3572
      %v3574 = vmul.f32 %v3513, 1.442695
      %v3575 = vpow.pop %v3574
      %v3576 = vmul.f32 %v3514, 1.442695
      %v3577 = vpow.pop %v3576
      %v3578 = vmul.f32 %v3515, 1.442695
      %v3579 = vpow.pop %v3578
      %v3580 = vadd.f32 %v3389, %v3517
      %v3581 = vadd.f32 %v3391, %v3519
      %v3582 = vadd.f32 %v3393, %v3521
      %v3583 = vadd.f32 %v3395, %v3523
      %v3584 = vadd.f32 %v3397, %v3525
      %v3585 = vadd.f32 %v3399, %v3527
      %v3586 = vadd.f32 %v3401, %v3529
      %v3587 = vadd.f32 %v3403, %v3531
      %v3588 = vadd.f32 %v3405, %v3533
      %v3589 = vadd.f32 %v3407, %v3535
      %v3590 = vadd.f32 %v3409, %v3537
      %v3591 = vadd.f32 %v3411, %v3539
      %v3592 = vadd.f32 %v3413, %v3541
      %v3593 = vadd.f32 %v3415, %v3543
      %v3594 = vadd.f32 %v3417, %v3545
      %v3595 = vadd.f32 %v3419, %v3547
      %v3596 = vadd.f32 %v3421, %v3549
      %v3597 = vadd.f32 %v3423, %v3551
      %v3598 = vadd.f32 %v3425, %v3553
      %v3599 = vadd.f32 %v3427, %v3555
      %v3600 = vadd.f32 %v3429, %v3557
      %v3601 = vadd.f32 %v3431, %v3559
      %v3602 = vadd.f32 %v3433, %v3561
      %v3603 = vadd.f32 %v3435, %v3563
      %v3604 = vadd.f32 %v3437, %v3565
      %v3605 = vadd.f32 %v3439, %v3567
      %v3606 = vadd.f32 %v3441, %v3569
      %v3607 = vadd.f32 %v3443, %v3571
      %v3608 = vadd.f32 %v3445, %v3573
      %v3609 = vadd.f32 %v3447, %v3575
      %v3610 = vadd.f32 %v3449, %v3577
      %v3611 = vadd.f32 %v3451, %v3579
      %v3612 = vmul.f32 %v3517, %v1651
      %v3613 = vmul.f32 %v3519, %v1653
      %v3614 = vmul.f32 %v3521, %v1744
      %v3615 = vmul.f32 %v3523, %v1746
      %v3616 = vmul.f32 %v3525, %v1837
      %v3617 = vmul.f32 %v3527, %v1839
      %v3618 = vmul.f32 %v3529, %v1930
      %v3619 = vmul.f32 %v3531, %v1932
      %v3620 = vmul.f32 %v3533, %v1655
      %v3621 = vmul.f32 %v3535, %v1657
      %v3622 = vmul.f32 %v3537, %v1748
      %v3623 = vmul.f32 %v3539, %v1750
      %v3624 = vmul.f32 %v3541, %v1841
      %v3625 = vmul.f32 %v3543, %v1843
      %v3626 = vmul.f32 %v3545, %v1934
      %v3627 = vmul.f32 %v3547, %v1936
      %v3628 = vmul.f32 %v3549, %v1661
      %v3629 = vmul.f32 %v3551, %v1663
      %v3630 = vmul.f32 %v3553, %v1754
      %v3631 = vmul.f32 %v3555, %v1756
      %v3632 = vmul.f32 %v3557, %v1847
      %v3633 = vmul.f32 %v3559, %v1849
      %v3634 = vmul.f32 %v3561, %v1940
      %v3635 = vmul.f32 %v3563, %v1942
      %v3636 = vmul.f32 %v3565, %v1665
      %v3637 = vmul.f32 %v3567, %v1667
      %v3638 = vmul.f32 %v3569, %v1758
      %v3639 = vmul.f32 %v3571, %v1760
      %v3640 = vmul.f32 %v3573, %v1851
      %v3641 = vmul.f32 %v3575, %v1853
      %v3642 = vmul.f32 %v3577, %v1944
      %v3643 = vmul.f32 %v3579, %v1946
      %v3644 = vadd.f32 %v3452, %v3612
      %v3645 = vadd.f32 %v3453, %v3613
      %v3646 = vadd.f32 %v3454, %v3614
      %v3647 = vadd.f32 %v3455, %v3615
      %v3648 = vadd.f32 %v3456, %v3616
      %v3649 = vadd.f32 %v3457, %v3617
      %v3650 = vadd.f32 %v3458, %v3618
      %v3651 = vadd.f32 %v3459, %v3619
      %v3652 = vadd.f32 %v3460, %v3620
      %v3653 = vadd.f32 %v3461, %v3621
      %v3654 = vadd.f32 %v3462, %v3622
      %v3655 = vadd.f32 %v3463, %v3623
      %v3656 = vadd.f32 %v3464, %v3624
      %v3657 = vadd.f32 %v3465, %v3625
      %v3658 = vadd.f32 %v3466, %v3626
      %v3659 = vadd.f32 %v3467, %v3627
      %v3660 = vadd.f32 %v3468, %v3628
      %v3661 = vadd.f32 %v3469, %v3629
      %v3662 = vadd.f32 %v3470, %v3630
      %v3663 = vadd.f32 %v3471, %v3631
      %v3664 = vadd.f32 %v3472, %v3632
      %v3665 = vadd.f32 %v3473, %v3633
      %v3666 = vadd.f32 %v3474, %v3634
      %v3667 = vadd.f32 %v3475, %v3635
      %v3668 = vadd.f32 %v3476, %v3636
      %v3669 = vadd.f32 %v3477, %v3637
      %v3670 = vadd.f32 %v3478, %v3638
      %v3671 = vadd.f32 %v3479, %v3639
      %v3672 = vadd.f32 %v3480, %v3640
      %v3673 = vadd.f32 %v3481, %v3641
      %v3674 = vadd.f32 %v3482, %v3642
      %v3675 = vadd.f32 %v3483, %v3643
      %v3676 = vrcp.pop %v3580
      %v3677 = vmul.f32 1.0, %v3676
      %v3678 = vrcp.pop %v3581
      %v3679 = vmul.f32 1.0, %v3678
      %v3680 = vrcp.pop %v3582
      %v3681 = vmul.f32 1.0, %v3680
      %v3682 = vrcp.pop %v3583
      %v3683 = vmul.f32 1.0, %v3682
      %v3684 = vrcp.pop %v3584
      %v3685 = vmul.f32 1.0, %v3684
      %v3686 = vrcp.pop %v3585
      %v3687 = vmul.f32 1.0, %v3686
      %v3688 = vrcp.pop %v3586
      %v3689 = vmul.f32 1.0, %v3688
      %v3690 = vrcp.pop %v3587
      %v3691 = vmul.f32 1.0, %v3690
      %v3692 = vrcp.pop %v3588
      %v3693 = vmul.f32 1.0, %v3692
      %v3694 = vrcp.pop %v3589
      %v3695 = vmul.f32 1.0, %v3694
      %v3696 = vrcp.pop %v3590
      %v3697 = vmul.f32 1.0, %v3696
      %v3698 = vrcp.pop %v3591
      %v3699 = vmul.f32 1.0, %v3698
      %v3700 = vrcp.pop %v3592
      %v3701 = vmul.f32 1.0, %v3700
      %v3702 = vrcp.pop %v3593
      %v3703 = vmul.f32 1.0, %v3702
      %v3704 = vrcp.pop %v3594
      %v3705 = vmul.f32 1.0, %v3704
      %v3706 = vrcp.pop %v3595
      %v3707 = vmul.f32 1.0, %v3706
      %v3708 = vrcp.pop %v3596
      %v3709 = vmul.f32 1.0, %v3708
      %v3710 = vrcp.pop %v3597
      %v3711 = vmul.f32 1.0, %v3710
      %v3712 = vrcp.pop %v3598
      %v3713 = vmul.f32 1.0, %v3712
      %v3714 = vrcp.pop %v3599
      %v3715 = vmul.f32 1.0, %v3714
      %v3716 = vrcp.pop %v3600
      %v3717 = vmul.f32 1.0, %v3716
      %v3718 = vrcp.pop %v3601
      %v3719 = vmul.f32 1.0, %v3718
      %v3720 = vrcp.pop %v3602
      %v3721 = vmul.f32 1.0, %v3720
      %v3722 = vrcp.pop %v3603
      %v3723 = vmul.f32 1.0, %v3722
      %v3724 = vrcp.pop %v3604
      %v3725 = vmul.f32 1.0, %v3724
      %v3726 = vrcp.pop %v3605
      %v3727 = vmul.f32 1.0, %v3726
      %v3728 = vrcp.pop %v3606
      %v3729 = vmul.f32 1.0, %v3728
      %v3730 = vrcp.pop %v3607
      %v3731 = vmul.f32 1.0, %v3730
      %v3732 = vrcp.pop %v3608
      %v3733 = vmul.f32 1.0, %v3732
      %v3734 = vrcp.pop %v3609
      %v3735 = vmul.f32 1.0, %v3734
      %v3736 = vrcp.pop %v3610
      %v3737 = vmul.f32 1.0, %v3736
      %v3738 = vrcp.pop %v3611
      %v3739 = vmul.f32 1.0, %v3738
      %v3740 = vmul.f32 %v3644, %v3677
      %v3741 = vmul.f32 %v3645, %v3679
      %v3742 = vmul.f32 %v3646, %v3681
      %v3743 = vmul.f32 %v3647, %v3683
      %v3744 = vmul.f32 %v3648, %v3685
      %v3745 = vmul.f32 %v3649, %v3687
      %v3746 = vmul.f32 %v3650, %v3689
      %v3747 = vmul.f32 %v3651, %v3691
      %v3748 = vmul.f32 %v3652, %v3693
      %v3749 = vmul.f32 %v3653, %v3695
      %v3750 = vmul.f32 %v3654, %v3697
      %v3751 = vmul.f32 %v3655, %v3699
      %v3752 = vmul.f32 %v3656, %v3701
      %v3753 = vmul.f32 %v3657, %v3703
      %v3754 = vmul.f32 %v3658, %v3705
      %v3755 = vmul.f32 %v3659, %v3707
      %v3756 = vmul.f32 %v3660, %v3709
      %v3757 = vmul.f32 %v3661, %v3711
      %v3758 = vmul.f32 %v3662, %v3713
      %v3759 = vmul.f32 %v3663, %v3715
      %v3760 = vmul.f32 %v3664, %v3717
      %v3761 = vmul.f32 %v3665, %v3719
      %v3762 = vmul.f32 %v3666, %v3721
      %v3763 = vmul.f32 %v3667, %v3723
      %v3764 = vmul.f32 %v3668, %v3725
      %v3765 = vmul.f32 %v3669, %v3727
      %v3766 = vmul.f32 %v3670, %v3729
      %v3767 = vmul.f32 %v3671, %v3731
      %v3768 = vmul.f32 %v3672, %v3733
      %v3769 = vmul.f32 %v3673, %v3735
      %v3770 = vmul.f32 %v3674, %v3737
      %v3771 = vmul.f32 %v3675, %v3739
      %v3772 = vpack.c.bf16 %v3748, %v3740
      %v3773 = vpack.c.bf16 %v3749, %v3741
      %v3774 = vpack.c.bf16 %v3750, %v3742
      %v3775 = vpack.c.bf16 %v3751, %v3743
      %v3776 = vpack.c.bf16 %v3752, %v3744
      %v3777 = vpack.c.bf16 %v3753, %v3745
      %v3778 = vpack.c.bf16 %v3754, %v3746
      %v3779 = vpack.c.bf16 %v3755, %v3747
      %v3780 = vpack.c.bf16 %v3764, %v3756
      %v3781 = vpack.c.bf16 %v3765, %v3757
      %v3782 = vpack.c.bf16 %v3766, %v3758
      %v3783 = vpack.c.bf16 %v3767, %v3759
      %v3784 = vpack.c.bf16 %v3768, %v3760
      %v3785 = vpack.c.bf16 %v3769, %v3761
      %v3786 = vpack.c.bf16 %v3770, %v3762
      %v3787 = vpack.c.bf16 %v3771, %v3763
      %3788 = vst [vmem:[#allocation3 + $0x40] sm:$0xff] %v3772
      %3789 = vst [vmem:[#allocation3 + $0x48] sm:$0xff] %v3773
      %3790 = vst [vmem:[#allocation3 + $0x50] sm:$0xff] %v3774
      %3791 = vst [vmem:[#allocation3 + $0x58] sm:$0xff] %v3775
      %3792 = vst [vmem:[#allocation3 + $0x60] sm:$0xff] %v3776
      %3793 = vst [vmem:[#allocation3 + $0x68] sm:$0xff] %v3777
      %3794 = vst [vmem:[#allocation3 + $0x70] sm:$0xff] %v3778
      %3795 = vst [vmem:[#allocation3 + $0x78] sm:$0xff] %v3779
      %3796 = vst [vmem:[#allocation3 + $0xc0] sm:$0xff] %v3780
      %3797 = vst [vmem:[#allocation3 + $0xc8] sm:$0xff] %v3781
      %3798 = vst [vmem:[#allocation3 + $0xd0] sm:$0xff] %v3782
      %3799 = vst [vmem:[#allocation3 + $0xd8] sm:$0xff] %v3783
      %3800 = vst [vmem:[#allocation3 + $0xe0] sm:$0xff] %v3784
      %3801 = vst [vmem:[#allocation3 + $0xe8] sm:$0xff] %v3785
      %3802 = vst [vmem:[#allocation3 + $0xf0] sm:$0xff] %v3786
      %3803 = vst [vmem:[#allocation3 + $0xf8] sm:$0xff] %v3787
      %v3804 = vld [vmem:[%s693] sm:$0xf]
      %v3805 = vld [vmem:[%s693 + $0x4] sm:$0xf]
      %v3806 = vld [vmem:[%s693 + $0x8] sm:$0xf]
      %v3807 = vld [vmem:[%s693 + $0xc] sm:$0xf]
      %v3808 = vld [vmem:[#allocation3] sm:$0xff]
      %v3809 = vld [vmem:[#allocation3 + $0x8] sm:$0xff]
      %v3810 = vld [vmem:[#allocation3 + $0x10] sm:$0xff]
      %v3811 = vld [vmem:[#allocation3 + $0x18] sm:$0xff]
      %v3812 = vld [vmem:[#allocation3 + $0x20] sm:$0xff]
      %v3813 = vld [vmem:[#allocation3 + $0x28] sm:$0xff]
      %v3814 = vld [vmem:[#allocation3 + $0x30] sm:$0xff]
      %v3815 = vld [vmem:[#allocation3 + $0x38] sm:$0xff]
      %v3816 = vld [vmem:[#allocation3 + $0x40] sm:$0xff]
      %v3817 = vld [vmem:[#allocation3 + $0x48] sm:$0xff]
      %v3818 = vld [vmem:[#allocation3 + $0x50] sm:$0xff]
      %v3819 = vld [vmem:[#allocation3 + $0x58] sm:$0xff]
      %v3820 = vld [vmem:[#allocation3 + $0x60] sm:$0xff]
      %v3821 = vld [vmem:[#allocation3 + $0x68] sm:$0xff]
      %v3822 = vld [vmem:[#allocation3 + $0x70] sm:$0xff]
      %v3823 = vld [vmem:[#allocation3 + $0x78] sm:$0xff]
      %v3824 = vld [vmem:[#allocation3 + $0x80] sm:$0xff]
      %v3825 = vld [vmem:[#allocation3 + $0x88] sm:$0xff]
      %v3826 = vld [vmem:[#allocation3 + $0x90] sm:$0xff]
      %v3827 = vld [vmem:[#allocation3 + $0x98] sm:$0xff]
      %v3828 = vld [vmem:[#allocation3 + $0xa0] sm:$0xff]
      %v3829 = vld [vmem:[#allocation3 + $0xa8] sm:$0xff]
      %v3830 = vld [vmem:[#allocation3 + $0xb0] sm:$0xff]
      %v3831 = vld [vmem:[#allocation3 + $0xb8] sm:$0xff]
      %v3832 = vld [vmem:[#allocation3 + $0xc0] sm:$0xff]
      %v3833 = vld [vmem:[#allocation3 + $0xc8] sm:$0xff]
      %v3834 = vld [vmem:[#allocation3 + $0xd0] sm:$0xff]
      %v3835 = vld [vmem:[#allocation3 + $0xd8] sm:$0xff]
      %v3836 = vld [vmem:[#allocation3 + $0xe0] sm:$0xff]
      %v3837 = vld [vmem:[#allocation3 + $0xe8] sm:$0xff]
      %v3838 = vld [vmem:[#allocation3 + $0xf0] sm:$0xff]
      %v3839 = vld [vmem:[#allocation3 + $0xf8] sm:$0xff]
      %v3840 = vld [vmem:[%s698] sm:$0xff]
      %v3841 = vld [vmem:[%s698 + $0x8] sm:$0xff]
      %v3842 = vld [vmem:[%s698 + $0x10] sm:$0xff]
      %v3843 = vld [vmem:[%s698 + $0x18] sm:$0xff]
      %3845 = vset.pattern.permute.xlu0 0
      %3846 = vperm.xlu0 %3845, %v3840
      %v3847 = vpop.permute.xlu0 %3846
      %3850 = vset.pattern.permute.xlu0 0
      %3851 = vperm.xlu0 %3850, %v3841
      %v3852 = vpop.permute.xlu0 %3851
      %3855 = vset.pattern.permute.xlu0 0
      %3856 = vperm.xlu0 %3855, %v3842
      %v3857 = vpop.permute.xlu0 %3856
      %3860 = vset.pattern.permute.xlu0 0
      %3861 = vperm.xlu0 %3860, %v3843
      %v3862 = vpop.permute.xlu0 %3861
      %v3868 = vunpack.c.l.b16 %v3804
      %v3869 = vunpack.c.l.b16 %v3805
      %v3870 = vunpack.c.l.b16 %v3806
      %v3871 = vunpack.c.l.b16 %v3807
      %v3872 = vpack.c.b16 %v3869, %v3868
      %v3873 = vpack.c.b16 %v3871, %v3870
      %v3875 = vsel %vm1185, %v3872, 0
      %v3878 = vsel %vm1185, %v3873, 0
      %3880 = vmatprep.subr.bf16.mxu0 %v3809
      %3881 = vmatpush1.bf16.msra.mxu0 %v3808
      %3882 = vmatprep.subr.bf16.mxu0 %v3825
      %3883 = vmatpush1.bf16.msra.mxu0 %v3824
      %3884 = vmatprep.subr.bf16.mxu0 0
      %3885 = vmatpush1.bf16.msra.mxu0 0
      %3886 = vmatprep.subr.bf16.mxu0 0
      %3887 = vmatpush1.bf16.msra.mxu0 0
      %3888 = vmatprep.subr.bf16.mxu0 0
      %3889 = vmatpush1.bf16.msra.mxu0 0
      %3890 = vmatprep.subr.bf16.mxu0 0
      %3891 = vmatpush1.bf16.msra.mxu0 0
      %3892 = vmatprep.subr.bf16.mxu0 0
      %3893 = vmatpush1.bf16.msra.mxu0 0
      %3894 = vmatprep.subr.bf16.mxu0 0
      %3895 = vmatpush1.bf16.msra.mxu0 0
      %3896 = vmatprep.subr.bf16.mxu0 0
      %3897 = vmatpush1.bf16.msra.mxu0 0
      %3898 = vmatprep.subr.bf16.mxu0 0
      %3899 = vmatpush1.bf16.msra.mxu0 0
      %3900 = vmatprep.subr.bf16.mxu0 0
      %3901 = vmatpush1.bf16.msra.mxu0 0
      %3902 = vmatprep.subr.bf16.mxu0 0
      %3903 = vmatpush1.bf16.msra.mxu0 0
      %3904 = vmatprep.subr.bf16.mxu0 0
      %3905 = vmatpush1.bf16.msra.mxu0 0
      %3906 = vmatprep.subr.bf16.mxu0 0
      %3907 = vmatpush1.bf16.msra.mxu0 0
      %3908 = vmatprep.subr.bf16.mxu0 0
      %3909 = vmatpush1.bf16.msra.mxu0 0
      %3910 = vmatprep.subr.bf16.mxu0 0
      %3911 = vmatpush1.bf16.msra.mxu0 0
      %3912 = vmatprep.mubr.bf16.mxu0 0
      %3913 = vmatmul.mubr.bf16.gmra.mrb[0].mxu0 %v3875
      %v3914 = vpop.f32.mrb[0].mxu0
      %v3915 = vadd.f32 %v3847, %v3914
      %v3916 = vpop.f32.mrb[0].mxu0
      %v3917 = vadd.f32 %v3847, %v3916
      %v3918 = vpop.f32.mrb[0].mxu0
      %v3919 = vadd.f32 %v3852, %v3918
      %v3920 = vpop.f32.mrb[0].mxu0
      %v3921 = vadd.f32 %v3852, %v3920
      %3922 = vmatprep.mubr.bf16.mxu0 0
      %3923 = vmatmul.mubr.bf16.gmra.mrb[0].mxu0 %v3878
      %v3924 = vpop.f32.mrb[0].mxu0
      %v3925 = vadd.f32 %v3857, %v3924
      %v3926 = vpop.f32.mrb[0].mxu0
      %v3927 = vadd.f32 %v3857, %v3926
      %v3928 = vpop.f32.mrb[0].mxu0
      %v3929 = vadd.f32 %v3862, %v3928
      %v3930 = vpop.f32.mrb[0].mxu0
      %v3931 = vadd.f32 %v3862, %v3930
      %3932 = vdwg.mxu0
      %3933 = vmatprep.subr.bf16.mxu0 %v3811
      %3934 = vmatpush1.bf16.msra.mxu0 %v3810
      %3935 = vmatprep.subr.bf16.mxu0 %v3827
      %3936 = vmatpush1.bf16.msra.mxu0 %v3826
      %3937 = vmatprep.subr.bf16.mxu0 0
      %3938 = vmatpush1.bf16.msra.mxu0 0
      %3939 = vmatprep.subr.bf16.mxu0 0
      %3940 = vmatpush1.bf16.msra.mxu0 0
      %3941 = vmatprep.subr.bf16.mxu0 0
      %3942 = vmatpush1.bf16.msra.mxu0 0
      %3943 = vmatprep.subr.bf16.mxu0 0
      %3944 = vmatpush1.bf16.msra.mxu0 0
      %3945 = vmatprep.subr.bf16.mxu0 0
      %3946 = vmatpush1.bf16.msra.mxu0 0
      %3947 = vmatprep.subr.bf16.mxu0 0
      %3948 = vmatpush1.bf16.msra.mxu0 0
      %3949 = vmatprep.subr.bf16.mxu0 0
      %3950 = vmatpush1.bf16.msra.mxu0 0
      %3951 = vmatprep.subr.bf16.mxu0 0
      %3952 = vmatpush1.bf16.msra.mxu0 0
      %3953 = vmatprep.subr.bf16.mxu0 0
      %3954 = vmatpush1.bf16.msra.mxu0 0
      %3955 = vmatprep.subr.bf16.mxu0 0
      %3956 = vmatpush1.bf16.msra.mxu0 0
      %3957 = vmatprep.subr.bf16.mxu0 0
      %3958 = vmatpush1.bf16.msra.mxu0 0
      %3959 = vmatprep.subr.bf16.mxu0 0
      %3960 = vmatpush1.bf16.msra.mxu0 0
      %3961 = vmatprep.subr.bf16.mxu0 0
      %3962 = vmatpush1.bf16.msra.mxu0 0
      %3963 = vmatprep.subr.bf16.mxu0 0
      %3964 = vmatpush1.bf16.msra.mxu0 0
      %3965 = vmatprep.mubr.bf16.mxu0 0
      %3966 = vmatmul.mubr.bf16.gmra.mrb[0].mxu0 %v3875
      %v3967 = vpop.f32.mrb[0].mxu0
      %v3968 = vadd.f32 %v3847, %v3967
      %v3969 = vpop.f32.mrb[0].mxu0
      %v3970 = vadd.f32 %v3847, %v3969
      %v3971 = vpop.f32.mrb[0].mxu0
      %v3972 = vadd.f32 %v3852, %v3971
      %v3973 = vpop.f32.mrb[0].mxu0
      %v3974 = vadd.f32 %v3852, %v3973
      %3975 = vmatprep.mubr.bf16.mxu0 0
      %3976 = vmatmul.mubr.bf16.gmra.mrb[0].mxu0 %v3878
      %v3977 = vpop.f32.mrb[0].mxu0
      %v3978 = vadd.f32 %v3857, %v3977
      %v3979 = vpop.f32.mrb[0].mxu0
      %v3980 = vadd.f32 %v3857, %v3979
      %v3981 = vpop.f32.mrb[0].mxu0
      %v3982 = vadd.f32 %v3862, %v3981
      %v3983 = vpop.f32.mrb[0].mxu0
      %v3984 = vadd.f32 %v3862, %v3983
      %3985 = vdwg.mxu0
      %3986 = vmatprep.subr.bf16.mxu0 %v3813
      %3987 = vmatpush1.bf16.msra.mxu0 %v3812
      %3988 = vmatprep.subr.bf16.mxu0 %v3829
      %3989 = vmatpush1.bf16.msra.mxu0 %v3828
      %3990 = vmatprep.subr.bf16.mxu0 0
      %3991 = vmatpush1.bf16.msra.mxu0 0
      %3992 = vmatprep.subr.bf16.mxu0 0
      %3993 = vmatpush1.bf16.msra.mxu0 0
      %3994 = vmatprep.subr.bf16.mxu0 0
      %3995 = vmatpush1.bf16.msra.mxu0 0
      %3996 = vmatprep.subr.bf16.mxu0 0
      %3997 = vmatpush1.bf16.msra.mxu0 0
      %3998 = vmatprep.subr.bf16.mxu0 0
      %3999 = vmatpush1.bf16.msra.mxu0 0
      %4000 = vmatprep.subr.bf16.mxu0 0
      %4001 = vmatpush1.bf16.msra.mxu0 0
      %4002 = vmatprep.subr.bf16.mxu0 0
      %4003 = vmatpush1.bf16.msra.mxu0 0
      %4004 = vmatprep.subr.bf16.mxu0 0
      %4005 = vmatpush1.bf16.msra.mxu0 0
      %4006 = vmatprep.subr.bf16.mxu0 0
      %4007 = vmatpush1.bf16.msra.mxu0 0
      %4008 = vmatprep.subr.bf16.mxu0 0
      %4009 = vmatpush1.bf16.msra.mxu0 0
      %4010 = vmatprep.subr.bf16.mxu0 0
      %4011 = vmatpush1.bf16.msra.mxu0 0
      %4012 = vmatprep.subr.bf16.mxu0 0
      %4013 = vmatpush1.bf16.msra.mxu0 0
      %4014 = vmatprep.subr.bf16.mxu0 0
      %4015 = vmatpush1.bf16.msra.mxu0 0
      %4016 = vmatprep.subr.bf16.mxu0 0
      %4017 = vmatpush1.bf16.msra.mxu0 0
      %4018 = vmatprep.mubr.bf16.mxu0 0
      %4019 = vmatmul.mubr.bf16.gmra.mrb[0].mxu0 %v3875
      %v4020 = vpop.f32.mrb[0].mxu0
      %v4021 = vadd.f32 %v3847, %v4020
      %v4022 = vpop.f32.mrb[0].mxu0
      %v4023 = vadd.f32 %v3847, %v4022
      %v4024 = vpop.f32.mrb[0].mxu0
      %v4025 = vadd.f32 %v3852, %v4024
      %v4026 = vpop.f32.mrb[0].mxu0
      %v4027 = vadd.f32 %v3852, %v4026
      %4028 = vmatprep.mubr.bf16.mxu0 0
      %4029 = vmatmul.mubr.bf16.gmra.mrb[0].mxu0 %v3878
      %v4030 = vpop.f32.mrb[0].mxu0
      %v4031 = vadd.f32 %v3857, %v4030
      %v4032 = vpop.f32.mrb[0].mxu0
      %v4033 = vadd.f32 %v3857, %v4032
      %v4034 = vpop.f32.mrb[0].mxu0
      %v4035 = vadd.f32 %v3862, %v4034
      %v4036 = vpop.f32.mrb[0].mxu0
      %v4037 = vadd.f32 %v3862, %v4036
      %4038 = vdwg.mxu0
      %4039 = vmatprep.subr.bf16.mxu0 %v3815
      %4040 = vmatpush1.bf16.msra.mxu0 %v3814
      %4041 = vmatprep.subr.bf16.mxu0 %v3831
      %4042 = vmatpush1.bf16.msra.mxu0 %v3830
      %4043 = vmatprep.subr.bf16.mxu0 0
      %4044 = vmatpush1.bf16.msra.mxu0 0
      %4045 = vmatprep.subr.bf16.mxu0 0
      %4046 = vmatpush1.bf16.msra.mxu0 0
      %4047 = vmatprep.subr.bf16.mxu0 0
      %4048 = vmatpush1.bf16.msra.mxu0 0
      %4049 = vmatprep.subr.bf16.mxu0 0
      %4050 = vmatpush1.bf16.msra.mxu0 0
      %4051 = vmatprep.subr.bf16.mxu0 0
      %4052 = vmatpush1.bf16.msra.mxu0 0
      %4053 = vmatprep.subr.bf16.mxu0 0
      %4054 = vmatpush1.bf16.msra.mxu0 0
      %4055 = vmatprep.subr.bf16.mxu0 0
      %4056 = vmatpush1.bf16.msra.mxu0 0
      %4057 = vmatprep.subr.bf16.mxu0 0
      %4058 = vmatpush1.bf16.msra.mxu0 0
      %4059 = vmatprep.subr.bf16.mxu0 0
      %4060 = vmatpush1.bf16.msra.mxu0 0
      %4061 = vmatprep.subr.bf16.mxu0 0
      %4062 = vmatpush1.bf16.msra.mxu0 0
      %4063 = vmatprep.subr.bf16.mxu0 0
      %4064 = vmatpush1.bf16.msra.mxu0 0
      %4065 = vmatprep.subr.bf16.mxu0 0
      %4066 = vmatpush1.bf16.msra.mxu0 0
      %4067 = vmatprep.subr.bf16.mxu0 0
      %4068 = vmatpush1.bf16.msra.mxu0 0
      %4069 = vmatprep.subr.bf16.mxu0 0
      %4070 = vmatpush1.bf16.msra.mxu0 0
      %4071 = vmatprep.mubr.bf16.mxu0 0
      %4072 = vmatmul.mubr.bf16.gmra.mrb[0].mxu0 %v3875
      %v4073 = vpop.f32.mrb[0].mxu0
      %v4074 = vadd.f32 %v3847, %v4073
      %v4075 = vpop.f32.mrb[0].mxu0
      %v4076 = vadd.f32 %v3847, %v4075
      %v4077 = vpop.f32.mrb[0].mxu0
      %v4078 = vadd.f32 %v3852, %v4077
      %v4079 = vpop.f32.mrb[0].mxu0
      %v4080 = vadd.f32 %v3852, %v4079
      %4081 = vmatprep.mubr.bf16.mxu0 0
      %4082 = vmatmul.mubr.bf16.gmra.mrb[0].mxu0 %v3878
      %v4083 = vpop.f32.mrb[0].mxu0
      %v4084 = vadd.f32 %v3857, %v4083
      %v4085 = vpop.f32.mrb[0].mxu0
      %v4086 = vadd.f32 %v3857, %v4085
      %v4087 = vpop.f32.mrb[0].mxu0
      %v4088 = vadd.f32 %v3862, %v4087
      %v4089 = vpop.f32.mrb[0].mxu0
      %v4090 = vadd.f32 %v3862, %v4089
      %4091 = vdwg.mxu0
      %4092 = vmatprep.subr.bf16.mxu0 %v3817
      %4093 = vmatpush1.bf16.msra.mxu0 %v3816
      %4094 = vmatprep.subr.bf16.mxu0 %v3833
      %4095 = vmatpush1.bf16.msra.mxu0 %v3832
      %4096 = vmatprep.subr.bf16.mxu0 0
      %4097 = vmatpush1.bf16.msra.mxu0 0
      %4098 = vmatprep.subr.bf16.mxu0 0
      %4099 = vmatpush1.bf16.msra.mxu0 0
      %4100 = vmatprep.subr.bf16.mxu0 0
      %4101 = vmatpush1.bf16.msra.mxu0 0
      %4102 = vmatprep.subr.bf16.mxu0 0
      %4103 = vmatpush1.bf16.msra.mxu0 0
      %4104 = vmatprep.subr.bf16.mxu0 0
      %4105 = vmatpush1.bf16.msra.mxu0 0
      %4106 = vmatprep.subr.bf16.mxu0 0
      %4107 = vmatpush1.bf16.msra.mxu0 0
      %4108 = vmatprep.subr.bf16.mxu0 0
      %4109 = vmatpush1.bf16.msra.mxu0 0
      %4110 = vmatprep.subr.bf16.mxu0 0
      %4111 = vmatpush1.bf16.msra.mxu0 0
      %4112 = vmatprep.subr.bf16.mxu0 0
      %4113 = vmatpush1.bf16.msra.mxu0 0
      %4114 = vmatprep.subr.bf16.mxu0 0
      %4115 = vmatpush1.bf16.msra.mxu0 0
      %4116 = vmatprep.subr.bf16.mxu0 0
      %4117 = vmatpush1.bf16.msra.mxu0 0
      %4118 = vmatprep.subr.bf16.mxu0 0
      %4119 = vmatpush1.bf16.msra.mxu0 0
      %4120 = vmatprep.subr.bf16.mxu0 0
      %4121 = vmatpush1.bf16.msra.mxu0 0
      %4122 = vmatprep.subr.bf16.mxu0 0
      %4123 = vmatpush1.bf16.msra.mxu0 0
      %4124 = vmatprep.mubr.bf16.mxu0 0
      %4125 = vmatmul.mubr.bf16.gmra.mrb[0].mxu0 %v3875
      %v4126 = vpop.f32.mrb[0].mxu0
      %v4127 = vadd.f32 %v3847, %v4126
      %v4128 = vpop.f32.mrb[0].mxu0
      %v4129 = vadd.f32 %v3847, %v4128
      %v4130 = vpop.f32.mrb[0].mxu0
      %v4131 = vadd.f32 %v3852, %v4130
      %v4132 = vpop.f32.mrb[0].mxu0
      %v4133 = vadd.f32 %v3852, %v4132
      %4134 = vmatprep.mubr.bf16.mxu0 0
      %4135 = vmatmul.mubr.bf16.gmra.mrb[0].mxu0 %v3878
      %v4136 = vpop.f32.mrb[0].mxu0
      %v4137 = vadd.f32 %v3857, %v4136
      %v4138 = vpop.f32.mrb[0].mxu0
      %v4139 = vadd.f32 %v3857, %v4138
      %v4140 = vpop.f32.mrb[0].mxu0
      %v4141 = vadd.f32 %v3862, %v4140
      %v4142 = vpop.f32.mrb[0].mxu0
      %v4143 = vadd.f32 %v3862, %v4142
      %4144 = vdwg.mxu0
      %4145 = vmatprep.subr.bf16.mxu0 %v3819
      %4146 = vmatpush1.bf16.msra.mxu0 %v3818
      %4147 = vmatprep.subr.bf16.mxu0 %v3835
      %4148 = vmatpush1.bf16.msra.mxu0 %v3834
      %4149 = vmatprep.subr.bf16.mxu0 0
      %4150 = vmatpush1.bf16.msra.mxu0 0
      %4151 = vmatprep.subr.bf16.mxu0 0
      %4152 = vmatpush1.bf16.msra.mxu0 0
      %4153 = vmatprep.subr.bf16.mxu0 0
      %4154 = vmatpush1.bf16.msra.mxu0 0
      %4155 = vmatprep.subr.bf16.mxu0 0
      %4156 = vmatpush1.bf16.msra.mxu0 0
      %4157 = vmatprep.subr.bf16.mxu0 0
      %4158 = vmatpush1.bf16.msra.mxu0 0
      %4159 = vmatprep.subr.bf16.mxu0 0
      %4160 = vmatpush1.bf16.msra.mxu0 0
      %4161 = vmatprep.subr.bf16.mxu0 0
      %4162 = vmatpush1.bf16.msra.mxu0 0
      %4163 = vmatprep.subr.bf16.mxu0 0
      %4164 = vmatpush1.bf16.msra.mxu0 0
      %4165 = vmatprep.subr.bf16.mxu0 0
      %4166 = vmatpush1.bf16.msra.mxu0 0
      %4167 = vmatprep.subr.bf16.mxu0 0
      %4168 = vmatpush1.bf16.msra.mxu0 0
      %4169 = vmatprep.subr.bf16.mxu0 0
      %4170 = vmatpush1.bf16.msra.mxu0 0
      %4171 = vmatprep.subr.bf16.mxu0 0
      %4172 = vmatpush1.bf16.msra.mxu0 0
      %4173 = vmatprep.subr.bf16.mxu0 0
      %4174 = vmatpush1.bf16.msra.mxu0 0
      %4175 = vmatprep.subr.bf16.mxu0 0
      %4176 = vmatpush1.bf16.msra.mxu0 0
      %4177 = vmatprep.mubr.bf16.mxu0 0
      %4178 = vmatmul.mubr.bf16.gmra.mrb[0].mxu0 %v3875
      %v4179 = vpop.f32.mrb[0].mxu0
      %v4180 = vadd.f32 %v3847, %v4179
      %v4181 = vpop.f32.mrb[0].mxu0
      %v4182 = vadd.f32 %v3847, %v4181
      %v4183 = vpop.f32.mrb[0].mxu0
      %v4184 = vadd.f32 %v3852, %v4183
      %v4185 = vpop.f32.mrb[0].mxu0
      %v4186 = vadd.f32 %v3852, %v4185
      %4187 = vmatprep.mubr.bf16.mxu0 0
      %4188 = vmatmul.mubr.bf16.gmra.mrb[0].mxu0 %v3878
      %v4189 = vpop.f32.mrb[0].mxu0
      %v4190 = vadd.f32 %v3857, %v4189
      %v4191 = vpop.f32.mrb[0].mxu0
      %v4192 = vadd.f32 %v3857, %v4191
      %v4193 = vpop.f32.mrb[0].mxu0
      %v4194 = vadd.f32 %v3862, %v4193
      %v4195 = vpop.f32.mrb[0].mxu0
      %v4196 = vadd.f32 %v3862, %v4195
      %4197 = vdwg.mxu0
      %4198 = vmatprep.subr.bf16.mxu0 %v3821
      %4199 = vmatpush1.bf16.msra.mxu0 %v3820
      %4200 = vmatprep.subr.bf16.mxu0 %v3837
      %4201 = vmatpush1.bf16.msra.mxu0 %v3836
      %4202 = vmatprep.subr.bf16.mxu0 0
      %4203 = vmatpush1.bf16.msra.mxu0 0
      %4204 = vmatprep.subr.bf16.mxu0 0
      %4205 = vmatpush1.bf16.msra.mxu0 0
      %4206 = vmatprep.subr.bf16.mxu0 0
      %4207 = vmatpush1.bf16.msra.mxu0 0
      %4208 = vmatprep.subr.bf16.mxu0 0
      %4209 = vmatpush1.bf16.msra.mxu0 0
      %4210 = vmatprep.subr.bf16.mxu0 0
      %4211 = vmatpush1.bf16.msra.mxu0 0
      %4212 = vmatprep.subr.bf16.mxu0 0
      %4213 = vmatpush1.bf16.msra.mxu0 0
      %4214 = vmatprep.subr.bf16.mxu0 0
      %4215 = vmatpush1.bf16.msra.mxu0 0
      %4216 = vmatprep.subr.bf16.mxu0 0
      %4217 = vmatpush1.bf16.msra.mxu0 0
      %4218 = vmatprep.subr.bf16.mxu0 0
      %4219 = vmatpush1.bf16.msra.mxu0 0
      %4220 = vmatprep.subr.bf16.mxu0 0
      %4221 = vmatpush1.bf16.msra.mxu0 0
      %4222 = vmatprep.subr.bf16.mxu0 0
      %4223 = vmatpush1.bf16.msra.mxu0 0
      %4224 = vmatprep.subr.bf16.mxu0 0
      %4225 = vmatpush1.bf16.msra.mxu0 0
      %4226 = vmatprep.subr.bf16.mxu0 0
      %4227 = vmatpush1.bf16.msra.mxu0 0
      %4228 = vmatprep.subr.bf16.mxu0 0
      %4229 = vmatpush1.bf16.msra.mxu0 0
      %4230 = vmatprep.mubr.bf16.mxu0 0
      %4231 = vmatmul.mubr.bf16.gmra.mrb[0].mxu0 %v3875
      %v4232 = vpop.f32.mrb[0].mxu0
      %v4233 = vadd.f32 %v3847, %v4232
      %v4234 = vpop.f32.mrb[0].mxu0
      %v4235 = vadd.f32 %v3847, %v4234
      %v4236 = vpop.f32.mrb[0].mxu0
      %v4237 = vadd.f32 %v3852, %v4236
      %v4238 = vpop.f32.mrb[0].mxu0
      %v4239 = vadd.f32 %v3852, %v4238
      %4240 = vmatprep.mubr.bf16.mxu0 0
      %4241 = vmatmul.mubr.bf16.gmra.mrb[0].mxu0 %v3878
      %v4242 = vpop.f32.mrb[0].mxu0
      %v4243 = vadd.f32 %v3857, %v4242
      %v4244 = vpop.f32.mrb[0].mxu0
      %v4245 = vadd.f32 %v3857, %v4244
      %v4246 = vpop.f32.mrb[0].mxu0
      %v4247 = vadd.f32 %v3862, %v4246
      %v4248 = vpop.f32.mrb[0].mxu0
      %v4249 = vadd.f32 %v3862, %v4248
      %4250 = vdwg.mxu0
      %4251 = vmatprep.subr.bf16.mxu0 %v3823
      %4252 = vmatpush1.bf16.msra.mxu0 %v3822
      %4253 = vmatprep.subr.bf16.mxu0 %v3839
      %4254 = vmatpush1.bf16.msra.mxu0 %v3838
      %4255 = vmatprep.subr.bf16.mxu0 0
      %4256 = vmatpush1.bf16.msra.mxu0 0
      %4257 = vmatprep.subr.bf16.mxu0 0
      %4258 = vmatpush1.bf16.msra.mxu0 0
      %4259 = vmatprep.subr.bf16.mxu0 0
      %4260 = vmatpush1.bf16.msra.mxu0 0
      %4261 = vmatprep.subr.bf16.mxu0 0
      %4262 = vmatpush1.bf16.msra.mxu0 0
      %4263 = vmatprep.subr.bf16.mxu0 0
      %4264 = vmatpush1.bf16.msra.mxu0 0
      %4265 = vmatprep.subr.bf16.mxu0 0
      %4266 = vmatpush1.bf16.msra.mxu0 0
      %4267 = vmatprep.subr.bf16.mxu0 0
      %4268 = vmatpush1.bf16.msra.mxu0 0
      %4269 = vmatprep.subr.bf16.mxu0 0
      %4270 = vmatpush1.bf16.msra.mxu0 0
      %4271 = vmatprep.subr.bf16.mxu0 0
      %4272 = vmatpush1.bf16.msra.mxu0 0
      %4273 = vmatprep.subr.bf16.mxu0 0
      %4274 = vmatpush1.bf16.msra.mxu0 0
      %4275 = vmatprep.subr.bf16.mxu0 0
      %4276 = vmatpush1.bf16.msra.mxu0 0
      %4277 = vmatprep.subr.bf16.mxu0 0
      %4278 = vmatpush1.bf16.msra.mxu0 0
      %4279 = vmatprep.subr.bf16.mxu0 0
      %4280 = vmatpush1.bf16.msra.mxu0 0
      %4281 = vmatprep.subr.bf16.mxu0 0
      %4282 = vmatpush1.bf16.msra.mxu0 0
      %4283 = vmatprep.mubr.bf16.mxu0 0
      %4284 = vmatmul.mubr.bf16.gmra.mrb[0].mxu0 %v3875
      %v4285 = vpop.f32.mrb[0].mxu0
      %v4286 = vadd.f32 %v3847, %v4285
      %v4287 = vpop.f32.mrb[0].mxu0
      %v4288 = vadd.f32 %v3847, %v4287
      %v4289 = vpop.f32.mrb[0].mxu0
      %v4290 = vadd.f32 %v3852, %v4289
      %v4291 = vpop.f32.mrb[0].mxu0
      %v4292 = vadd.f32 %v3852, %v4291
      %4293 = vmatprep.mubr.bf16.mxu0 0
      %4294 = vmatmul.mubr.bf16.gmra.mrb[0].mxu0 %v3878
      %v4295 = vpop.f32.mrb[0].mxu0
      %v4296 = vadd.f32 %v3857, %v4295
      %v4297 = vpop.f32.mrb[0].mxu0
      %v4298 = vadd.f32 %v3857, %v4297
      %v4299 = vpop.f32.mrb[0].mxu0
      %v4300 = vadd.f32 %v3862, %v4299
      %v4301 = vpop.f32.mrb[0].mxu0
      %v4302 = vadd.f32 %v3862, %v4301
      %4303 = vdwg.mxu0
      %v4304 = vadd.f32 %v975, %v3915
      %v4305 = vadd.f32 %v976, %v3917
      %v4306 = vadd.f32 %v977, %v3968
      %v4307 = vadd.f32 %v978, %v3970
      %v4308 = vadd.f32 %v979, %v4021
      %v4309 = vadd.f32 %v980, %v4023
      %v4310 = vadd.f32 %v981, %v4074
      %v4311 = vadd.f32 %v982, %v4076
      %v4312 = vadd.f32 %v983, %v4127
      %v4313 = vadd.f32 %v984, %v4129
      %v4314 = vadd.f32 %v985, %v4180
      %v4315 = vadd.f32 %v986, %v4182
      %v4316 = vadd.f32 %v987, %v4233
      %v4317 = vadd.f32 %v988, %v4235
      %v4318 = vadd.f32 %v989, %v4286
      %v4319 = vadd.f32 %v990, %v4288
      %v4320 = vadd.f32 %v991, %v3919
      %v4321 = vadd.f32 %v992, %v3921
      %v4322 = vadd.f32 %v993, %v3972
      %v4323 = vadd.f32 %v994, %v3974
      %v4324 = vadd.f32 %v995, %v4025
      %v4325 = vadd.f32 %v996, %v4027
      %v4326 = vadd.f32 %v997, %v4078
      %v4327 = vadd.f32 %v998, %v4080
      %v4328 = vadd.f32 %v999, %v4131
      %v4329 = vadd.f32 %v1000, %v4133
      %v4330 = vadd.f32 %v1001, %v4184
      %v4331 = vadd.f32 %v1002, %v4186
      %v4332 = vadd.f32 %v1003, %v4237
      %v4333 = vadd.f32 %v1004, %v4239
      %v4334 = vadd.f32 %v1005, %v4290
      %v4335 = vadd.f32 %v1006, %v4292
      %v4336 = vadd.f32 %v1007, %v3925
      %v4337 = vadd.f32 %v1008, %v3927
      %v4338 = vadd.f32 %v1009, %v3978
      %v4339 = vadd.f32 %v1010, %v3980
      %v4340 = vadd.f32 %v1011, %v4031
      %v4341 = vadd.f32 %v1012, %v4033
      %v4342 = vadd.f32 %v1013, %v4084
      %v4343 = vadd.f32 %v1014, %v4086
      %v4344 = vadd.f32 %v1015, %v4137
      %v4345 = vadd.f32 %v1016, %v4139
      %v4346 = vadd.f32 %v1017, %v4190
      %v4347 = vadd.f32 %v1018, %v4192
      %v4348 = vadd.f32 %v1019, %v4243
      %v4349 = vadd.f32 %v1020, %v4245
      %v4350 = vadd.f32 %v1021, %v4296
      %v4351 = vadd.f32 %v1022, %v4298
      %v4352 = vadd.f32 %v1023, %v3929
      %v4353 = vadd.f32 %v1024, %v3931
      %v4354 = vadd.f32 %v1025, %v3982
      %v4355 = vadd.f32 %v1026, %v3984
      %v4356 = vadd.f32 %v1027, %v4035
      %v4357 = vadd.f32 %v1028, %v4037
      %v4358 = vadd.f32 %v1029, %v4088
      %v4359 = vadd.f32 %v1030, %v4090
      %v4360 = vadd.f32 %v1031, %v4141
      %v4361 = vadd.f32 %v1032, %v4143
      %v4362 = vadd.f32 %v1033, %v4194
      %v4363 = vadd.f32 %v1034, %v4196
      %v4364 = vadd.f32 %v1035, %v4247
      %v4365 = vadd.f32 %v1036, %v4249
      %v4366 = vadd.f32 %v1037, %v4300
      %v4367 = vadd.f32 %v1038, %v4302
      %v4368 = vadd.f32 %v4304, %v4320
      %v4369 = vadd.f32 %v4368, %v4336
      %v4370 = vadd.f32 %v4369, %v4352
      %v4371 = vrot.slane %v4370, 4
      %v4372 = vadd.f32 %v4370, %v4371
      %v4373 = vrot.slane %v4372, 2
      %v4374 = vadd.f32 %v4372, %v4373
      %v4375 = vrot.slane %v4374, 1
      %v4376 = vadd.f32 %v4374, %v4375
      %v4377 = vadd.f32 %v4305, %v4321
      %v4378 = vadd.f32 %v4377, %v4337
      %v4379 = vadd.f32 %v4378, %v4353
      %v4380 = vrot.slane %v4379, 4
      %v4381 = vadd.f32 %v4379, %v4380
      %v4382 = vrot.slane %v4381, 2
      %v4383 = vadd.f32 %v4381, %v4382
      %v4384 = vrot.slane %v4383, 1
      %v4385 = vadd.f32 %v4383, %v4384
      %v4386 = vadd.f32 %v4306, %v4322
      %v4387 = vadd.f32 %v4386, %v4338
      %v4388 = vadd.f32 %v4387, %v4354
      %v4389 = vrot.slane %v4388, 4
      %v4390 = vadd.f32 %v4388, %v4389
      %v4391 = vrot.slane %v4390, 2
      %v4392 = vadd.f32 %v4390, %v4391
      %v4393 = vrot.slane %v4392, 1
      %v4394 = vadd.f32 %v4392, %v4393
      %v4395 = vadd.f32 %v4307, %v4323
      %v4396 = vadd.f32 %v4395, %v4339
      %v4397 = vadd.f32 %v4396, %v4355
      %v4398 = vrot.slane %v4397, 4
      %v4399 = vadd.f32 %v4397, %v4398
      %v4400 = vrot.slane %v4399, 2
      %v4401 = vadd.f32 %v4399, %v4400
      %v4402 = vrot.slane %v4401, 1
      %v4403 = vadd.f32 %v4401, %v4402
      %v4404 = vadd.f32 %v4308, %v4324
      %v4405 = vadd.f32 %v4404, %v4340
      %v4406 = vadd.f32 %v4405, %v4356
      %v4407 = vrot.slane %v4406, 4
      %v4408 = vadd.f32 %v4406, %v4407
      %v4409 = vrot.slane %v4408, 2
      %v4410 = vadd.f32 %v4408, %v4409
      %v4411 = vrot.slane %v4410, 1
      %v4412 = vadd.f32 %v4410, %v4411
      %v4413 = vadd.f32 %v4309, %v4325
      %v4414 = vadd.f32 %v4413, %v4341
      %v4415 = vadd.f32 %v4414, %v4357
      %v4416 = vrot.slane %v4415, 4
      %v4417 = vadd.f32 %v4415, %v4416
      %v4418 = vrot.slane %v4417, 2
      %v4419 = vadd.f32 %v4417, %v4418
      %v4420 = vrot.slane %v4419, 1
      %v4421 = vadd.f32 %v4419, %v4420
      %v4422 = vadd.f32 %v4310, %v4326
      %v4423 = vadd.f32 %v4422, %v4342
      %v4424 = vadd.f32 %v4423, %v4358
      %v4425 = vrot.slane %v4424, 4
      %v4426 = vadd.f32 %v4424, %v4425
      %v4427 = vrot.slane %v4426, 2
      %v4428 = vadd.f32 %v4426, %v4427
      %v4429 = vrot.slane %v4428, 1
      %v4430 = vadd.f32 %v4428, %v4429
      %v4431 = vadd.f32 %v4311, %v4327
      %v4432 = vadd.f32 %v4431, %v4343
      %v4433 = vadd.f32 %v4432, %v4359
      %v4434 = vrot.slane %v4433, 4
      %v4435 = vadd.f32 %v4433, %v4434
      %v4436 = vrot.slane %v4435, 2
      %v4437 = vadd.f32 %v4435, %v4436
      %v4438 = vrot.slane %v4437, 1
      %v4439 = vadd.f32 %v4437, %v4438
      %v4440 = vadd.f32 %v4312, %v4328
      %v4441 = vadd.f32 %v4440, %v4344
      %v4442 = vadd.f32 %v4441, %v4360
      %v4443 = vrot.slane %v4442, 4
      %v4444 = vadd.f32 %v4442, %v4443
      %v4445 = vrot.slane %v4444, 2
      %v4446 = vadd.f32 %v4444, %v4445
      %v4447 = vrot.slane %v4446, 1
      %v4448 = vadd.f32 %v4446, %v4447
      %v4449 = vadd.f32 %v4313, %v4329
      %v4450 = vadd.f32 %v4449, %v4345
      %v4451 = vadd.f32 %v4450, %v4361
      %v4452 = vrot.slane %v4451, 4
      %v4453 = vadd.f32 %v4451, %v4452
      %v4454 = vrot.slane %v4453, 2
      %v4455 = vadd.f32 %v4453, %v4454
      %v4456 = vrot.slane %v4455, 1
      %v4457 = vadd.f32 %v4455, %v4456
      %v4458 = vadd.f32 %v4314, %v4330
      %v4459 = vadd.f32 %v4458, %v4346
      %v4460 = vadd.f32 %v4459, %v4362
      %v4461 = vrot.slane %v4460, 4
      %v4462 = vadd.f32 %v4460, %v4461
      %v4463 = vrot.slane %v4462, 2
      %v4464 = vadd.f32 %v4462, %v4463
      %v4465 = vrot.slane %v4464, 1
      %v4466 = vadd.f32 %v4464, %v4465
      %v4467 = vadd.f32 %v4315, %v4331
      %v4468 = vadd.f32 %v4467, %v4347
      %v4469 = vadd.f32 %v4468, %v4363
      %v4470 = vrot.slane %v4469, 4
      %v4471 = vadd.f32 %v4469, %v4470
      %v4472 = vrot.slane %v4471, 2
      %v4473 = vadd.f32 %v4471, %v4472
      %v4474 = vrot.slane %v4473, 1
      %v4475 = vadd.f32 %v4473, %v4474
      %v4476 = vadd.f32 %v4316, %v4332
      %v4477 = vadd.f32 %v4476, %v4348
      %v4478 = vadd.f32 %v4477, %v4364
      %v4479 = vrot.slane %v4478, 4
      %v4480 = vadd.f32 %v4478, %v4479
      %v4481 = vrot.slane %v4480, 2
      %v4482 = vadd.f32 %v4480, %v4481
      %v4483 = vrot.slane %v4482, 1
      %v4484 = vadd.f32 %v4482, %v4483
      %v4485 = vadd.f32 %v4317, %v4333
      %v4486 = vadd.f32 %v4485, %v4349
      %v4487 = vadd.f32 %v4486, %v4365
      %v4488 = vrot.slane %v4487, 4
      %v4489 = vadd.f32 %v4487, %v4488
      %v4490 = vrot.slane %v4489, 2
      %v4491 = vadd.f32 %v4489, %v4490
      %v4492 = vrot.slane %v4491, 1
      %v4493 = vadd.f32 %v4491, %v4492
      %v4494 = vadd.f32 %v4318, %v4334
      %v4495 = vadd.f32 %v4494, %v4350
      %v4496 = vadd.f32 %v4495, %v4366
      %v4497 = vrot.slane %v4496, 4
      %v4498 = vadd.f32 %v4496, %v4497
      %v4499 = vrot.slane %v4498, 2
      %v4500 = vadd.f32 %v4498, %v4499
      %v4501 = vrot.slane %v4500, 1
      %v4502 = vadd.f32 %v4500, %v4501
      %v4503 = vadd.f32 %v4319, %v4335
      %v4504 = vadd.f32 %v4503, %v4351
      %v4505 = vadd.f32 %v4504, %v4367
      %v4506 = vrot.slane %v4505, 4
      %v4507 = vadd.f32 %v4505, %v4506
      %v4508 = vrot.slane %v4507, 2
      %v4509 = vadd.f32 %v4507, %v4508
      %v4510 = vrot.slane %v4509, 1
      %v4511 = vadd.f32 %v4509, %v4510
      %v4512 = vrcp.pop 32.0
      %v4513 = vmul.f32 %v4376, %v4512
      %v4514 = vmul.f32 %v4385, %v4512
      %v4515 = vmul.f32 %v4394, %v4512
      %v4516 = vmul.f32 %v4403, %v4512
      %v4517 = vmul.f32 %v4412, %v4512
      %v4518 = vmul.f32 %v4421, %v4512
      %v4519 = vmul.f32 %v4430, %v4512
      %v4520 = vmul.f32 %v4439, %v4512
      %v4521 = vmul.f32 %v4448, %v4512
      %v4522 = vmul.f32 %v4457, %v4512
      %v4523 = vmul.f32 %v4466, %v4512
      %v4524 = vmul.f32 %v4475, %v4512
      %v4525 = vmul.f32 %v4484, %v4512
      %v4526 = vmul.f32 %v4493, %v4512
      %v4527 = vmul.f32 %v4502, %v4512
      %v4528 = vmul.f32 %v4511, %v4512
      %v4529 = vmul.f32 %v4304, %v4304
      %v4530 = vmul.f32 %v4305, %v4305
      %v4531 = vmul.f32 %v4306, %v4306
      %v4532 = vmul.f32 %v4307, %v4307
      %v4533 = vmul.f32 %v4308, %v4308
      %v4534 = vmul.f32 %v4309, %v4309
      %v4535 = vmul.f32 %v4310, %v4310
      %v4536 = vmul.f32 %v4311, %v4311
      %v4537 = vmul.f32 %v4312, %v4312
      %v4538 = vmul.f32 %v4313, %v4313
      %v4539 = vmul.f32 %v4314, %v4314
      %v4540 = vmul.f32 %v4315, %v4315
      %v4541 = vmul.f32 %v4316, %v4316
      %v4542 = vmul.f32 %v4317, %v4317
      %v4543 = vmul.f32 %v4318, %v4318
      %v4544 = vmul.f32 %v4319, %v4319
      %v4545 = vmul.f32 %v4320, %v4320
      %v4546 = vmul.f32 %v4321, %v4321
      %v4547 = vmul.f32 %v4322, %v4322
      %v4548 = vmul.f32 %v4323, %v4323
      %v4549 = vmul.f32 %v4324, %v4324
      %v4550 = vmul.f32 %v4325, %v4325
      %v4551 = vmul.f32 %v4326, %v4326
      %v4552 = vmul.f32 %v4327, %v4327
      %v4553 = vmul.f32 %v4328, %v4328
      %v4554 = vmul.f32 %v4329, %v4329
      %v4555 = vmul.f32 %v4330, %v4330
      %v4556 = vmul.f32 %v4331, %v4331
      %v4557 = vmul.f32 %v4332, %v4332
      %v4558 = vmul.f32 %v4333, %v4333
      %v4559 = vmul.f32 %v4334, %v4334
      %v4560 = vmul.f32 %v4335, %v4335
      %v4561 = vmul.f32 %v4336, %v4336
      %v4562 = vmul.f32 %v4337, %v4337
      %v4563 = vmul.f32 %v4338, %v4338
      %v4564 = vmul.f32 %v4339, %v4339
      %v4565 = vmul.f32 %v4340, %v4340
      %v4566 = vmul.f32 %v4341, %v4341
      %v4567 = vmul.f32 %v4342, %v4342
      %v4568 = vmul.f32 %v4343, %v4343
      %v4569 = vmul.f32 %v4344, %v4344
      %v4570 = vmul.f32 %v4345, %v4345
      %v4571 = vmul.f32 %v4346, %v4346
      %v4572 = vmul.f32 %v4347, %v4347
      %v4573 = vmul.f32 %v4348, %v4348
      %v4574 = vmul.f32 %v4349, %v4349
      %v4575 = vmul.f32 %v4350, %v4350
      %v4576 = vmul.f32 %v4351, %v4351
      %v4577 = vmul.f32 %v4352, %v4352
      %v4578 = vmul.f32 %v4353, %v4353
      %v4579 = vmul.f32 %v4354, %v4354
      %v4580 = vmul.f32 %v4355, %v4355
      %v4581 = vmul.f32 %v4356, %v4356
      %v4582 = vmul.f32 %v4357, %v4357
      %v4583 = vmul.f32 %v4358, %v4358
      %v4584 = vmul.f32 %v4359, %v4359
      %v4585 = vmul.f32 %v4360, %v4360
      %v4586 = vmul.f32 %v4361, %v4361
      %v4587 = vmul.f32 %v4362, %v4362
      %v4588 = vmul.f32 %v4363, %v4363
      %v4589 = vmul.f32 %v4364, %v4364
      %v4590 = vmul.f32 %v4365, %v4365
      %v4591 = vmul.f32 %v4366, %v4366
      %v4592 = vmul.f32 %v4367, %v4367
      %v4593 = vadd.f32 %v4529, %v4545
      %v4594 = vadd.f32 %v4593, %v4561
      %v4595 = vadd.f32 %v4594, %v4577
      %v4596 = vrot.slane %v4595, 4
      %v4597 = vadd.f32 %v4595, %v4596
      %v4598 = vrot.slane %v4597, 2
      %v4599 = vadd.f32 %v4597, %v4598
      %v4600 = vrot.slane %v4599, 1
      %v4601 = vadd.f32 %v4599, %v4600
      %v4602 = vadd.f32 %v4530, %v4546
      %v4603 = vadd.f32 %v4602, %v4562
      %v4604 = vadd.f32 %v4603, %v4578
      %v4605 = vrot.slane %v4604, 4
      %v4606 = vadd.f32 %v4604, %v4605
      %v4607 = vrot.slane %v4606, 2
      %v4608 = vadd.f32 %v4606, %v4607
      %v4609 = vrot.slane %v4608, 1
      %v4610 = vadd.f32 %v4608, %v4609
      %v4611 = vadd.f32 %v4531, %v4547
      %v4612 = vadd.f32 %v4611, %v4563
      %v4613 = vadd.f32 %v4612, %v4579
      %v4614 = vrot.slane %v4613, 4
      %v4615 = vadd.f32 %v4613, %v4614
      %v4616 = vrot.slane %v4615, 2
      %v4617 = vadd.f32 %v4615, %v4616
      %v4618 = vrot.slane %v4617, 1
      %v4619 = vadd.f32 %v4617, %v4618
      %v4620 = vadd.f32 %v4532, %v4548
      %v4621 = vadd.f32 %v4620, %v4564
      %v4622 = vadd.f32 %v4621, %v4580
      %v4623 = vrot.slane %v4622, 4
      %v4624 = vadd.f32 %v4622, %v4623
      %v4625 = vrot.slane %v4624, 2
      %v4626 = vadd.f32 %v4624, %v4625
      %v4627 = vrot.slane %v4626, 1
      %v4628 = vadd.f32 %v4626, %v4627
      %v4629 = vadd.f32 %v4533, %v4549
      %v4630 = vadd.f32 %v4629, %v4565
      %v4631 = vadd.f32 %v4630, %v4581
      %v4632 = vrot.slane %v4631, 4
      %v4633 = vadd.f32 %v4631, %v4632
      %v4634 = vrot.slane %v4633, 2
      %v4635 = vadd.f32 %v4633, %v4634
      %v4636 = vrot.slane %v4635, 1
      %v4637 = vadd.f32 %v4635, %v4636
      %v4638 = vadd.f32 %v4534, %v4550
      %v4639 = vadd.f32 %v4638, %v4566
      %v4640 = vadd.f32 %v4639, %v4582
      %v4641 = vrot.slane %v4640, 4
      %v4642 = vadd.f32 %v4640, %v4641
      %v4643 = vrot.slane %v4642, 2
      %v4644 = vadd.f32 %v4642, %v4643
      %v4645 = vrot.slane %v4644, 1
      %v4646 = vadd.f32 %v4644, %v4645
      %v4647 = vadd.f32 %v4535, %v4551
      %v4648 = vadd.f32 %v4647, %v4567
      %v4649 = vadd.f32 %v4648, %v4583
      %v4650 = vrot.slane %v4649, 4
      %v4651 = vadd.f32 %v4649, %v4650
      %v4652 = vrot.slane %v4651, 2
      %v4653 = vadd.f32 %v4651, %v4652
      %v4654 = vrot.slane %v4653, 1
      %v4655 = vadd.f32 %v4653, %v4654
      %v4656 = vadd.f32 %v4536, %v4552
      %v4657 = vadd.f32 %v4656, %v4568
      %v4658 = vadd.f32 %v4657, %v4584
      %v4659 = vrot.slane %v4658, 4
      %v4660 = vadd.f32 %v4658, %v4659
      %v4661 = vrot.slane %v4660, 2
      %v4662 = vadd.f32 %v4660, %v4661
      %v4663 = vrot.slane %v4662, 1
      %v4664 = vadd.f32 %v4662, %v4663
      %v4665 = vadd.f32 %v4537, %v4553
      %v4666 = vadd.f32 %v4665, %v4569
      %v4667 = vadd.f32 %v4666, %v4585
      %v4668 = vrot.slane %v4667, 4
      %v4669 = vadd.f32 %v4667, %v4668
      %v4670 = vrot.slane %v4669, 2
      %v4671 = vadd.f32 %v4669, %v4670
      %v4672 = vrot.slane %v4671, 1
      %v4673 = vadd.f32 %v4671, %v4672
      %v4674 = vadd.f32 %v4538, %v4554
      %v4675 = vadd.f32 %v4674, %v4570
      %v4676 = vadd.f32 %v4675, %v4586
      %v4677 = vrot.slane %v4676, 4
      %v4678 = vadd.f32 %v4676, %v4677
      %v4679 = vrot.slane %v4678, 2
      %v4680 = vadd.f32 %v4678, %v4679
      %v4681 = vrot.slane %v4680, 1
      %v4682 = vadd.f32 %v4680, %v4681
      %v4683 = vadd.f32 %v4539, %v4555
      %v4684 = vadd.f32 %v4683, %v4571
      %v4685 = vadd.f32 %v4684, %v4587
      %v4686 = vrot.slane %v4685, 4
      %v4687 = vadd.f32 %v4685, %v4686
      %v4688 = vrot.slane %v4687, 2
      %v4689 = vadd.f32 %v4687, %v4688
      %v4690 = vrot.slane %v4689, 1
      %v4691 = vadd.f32 %v4689, %v4690
      %v4692 = vadd.f32 %v4540, %v4556
      %v4693 = vadd.f32 %v4692, %v4572
      %v4694 = vadd.f32 %v4693, %v4588
      %v4695 = vrot.slane %v4694, 4
      %v4696 = vadd.f32 %v4694, %v4695
      %v4697 = vrot.slane %v4696, 2
      %v4698 = vadd.f32 %v4696, %v4697
      %v4699 = vrot.slane %v4698, 1
      %v4700 = vadd.f32 %v4698, %v4699
      %v4701 = vadd.f32 %v4541, %v4557
      %v4702 = vadd.f32 %v4701, %v4573
      %v4703 = vadd.f32 %v4702, %v4589
      %v4704 = vrot.slane %v4703, 4
      %v4705 = vadd.f32 %v4703, %v4704
      %v4706 = vrot.slane %v4705, 2
      %v4707 = vadd.f32 %v4705, %v4706
      %v4708 = vrot.slane %v4707, 1
      %v4709 = vadd.f32 %v4707, %v4708
      %v4710 = vadd.f32 %v4542, %v4558
      %v4711 = vadd.f32 %v4710, %v4574
      %v4712 = vadd.f32 %v4711, %v4590
      %v4713 = vrot.slane %v4712, 4
      %v4714 = vadd.f32 %v4712, %v4713
      %v4715 = vrot.slane %v4714, 2
      %v4716 = vadd.f32 %v4714, %v4715
      %v4717 = vrot.slane %v4716, 1
      %v4718 = vadd.f32 %v4716, %v4717
      %v4719 = vadd.f32 %v4543, %v4559
      %v4720 = vadd.f32 %v4719, %v4575
      %v4721 = vadd.f32 %v4720, %v4591
      %v4722 = vrot.slane %v4721, 4
      %v4723 = vadd.f32 %v4721, %v4722
      %v4724 = vrot.slane %v4723, 2
      %v4725 = vadd.f32 %v4723, %v4724
      %v4726 = vrot.slane %v4725, 1
      %v4727 = vadd.f32 %v4725, %v4726
      %v4728 = vadd.f32 %v4544, %v4560
      %v4729 = vadd.f32 %v4728, %v4576
      %v4730 = vadd.f32 %v4729, %v4592
      %v4731 = vrot.slane %v4730, 4
      %v4732 = vadd.f32 %v4730, %v4731
      %v4733 = vrot.slane %v4732, 2
      %v4734 = vadd.f32 %v4732, %v4733
      %v4735 = vrot.slane %v4734, 1
      %v4736 = vadd.f32 %v4734, %v4735
      %v4737 = vmul.f32 %v4601, %v4512
      %v4738 = vmul.f32 %v4610, %v4512
      %v4739 = vmul.f32 %v4619, %v4512
      %v4740 = vmul.f32 %v4628, %v4512
      %v4741 = vmul.f32 %v4637, %v4512
      %v4742 = vmul.f32 %v4646, %v4512
      %v4743 = vmul.f32 %v4655, %v4512
      %v4744 = vmul.f32 %v4664, %v4512
      %v4745 = vmul.f32 %v4673, %v4512
      %v4746 = vmul.f32 %v4682, %v4512
      %v4747 = vmul.f32 %v4691, %v4512
      %v4748 = vmul.f32 %v4700, %v4512
      %v4749 = vmul.f32 %v4709, %v4512
      %v4750 = vmul.f32 %v4718, %v4512
      %v4751 = vmul.f32 %v4727, %v4512
      %v4752 = vmul.f32 %v4736, %v4512
      %v4753 = vmul.f32 %v4513, %v4513
      %v4754 = vmul.f32 %v4514, %v4514
      %v4755 = vmul.f32 %v4515, %v4515
      %v4756 = vmul.f32 %v4516, %v4516
      %v4757 = vmul.f32 %v4517, %v4517
      %v4758 = vmul.f32 %v4518, %v4518
      %v4759 = vmul.f32 %v4519, %v4519
      %v4760 = vmul.f32 %v4520, %v4520
      %v4761 = vmul.f32 %v4521, %v4521
      %v4762 = vmul.f32 %v4522, %v4522
      %v4763 = vmul.f32 %v4523, %v4523
      %v4764 = vmul.f32 %v4524, %v4524
      %v4765 = vmul.f32 %v4525, %v4525
      %v4766 = vmul.f32 %v4526, %v4526
      %v4767 = vmul.f32 %v4527, %v4527
      %v4768 = vmul.f32 %v4528, %v4528
      %v4769 = vsub.f32 %v4737, %v4753
      %v4770 = vsub.f32 %v4738, %v4754
      %v4771 = vsub.f32 %v4739, %v4755
      %v4772 = vsub.f32 %v4740, %v4756
      %v4773 = vsub.f32 %v4741, %v4757
      %v4774 = vsub.f32 %v4742, %v4758
      %v4775 = vsub.f32 %v4743, %v4759
      %v4776 = vsub.f32 %v4744, %v4760
      %v4777 = vsub.f32 %v4745, %v4761
      %v4778 = vsub.f32 %v4746, %v4762
      %v4779 = vsub.f32 %v4747, %v4763
      %v4780 = vsub.f32 %v4748, %v4764
      %v4781 = vsub.f32 %v4749, %v4765
      %v4782 = vsub.f32 %v4750, %v4766
      %v4783 = vsub.f32 %v4751, %v4767
      %v4784 = vsub.f32 %v4752, %v4768
      %v4785 = vmax.f32 %v4769, 0.0
      %v4786 = vmax.f32 %v4770, 0.0
      %v4787 = vmax.f32 %v4771, 0.0
      %v4788 = vmax.f32 %v4772, 0.0
      %v4789 = vmax.f32 %v4773, 0.0
      %v4790 = vmax.f32 %v4774, 0.0
      %v4791 = vmax.f32 %v4775, 0.0
      %v4792 = vmax.f32 %v4776, 0.0
      %v4793 = vmax.f32 %v4777, 0.0
      %v4794 = vmax.f32 %v4778, 0.0
      %v4795 = vmax.f32 %v4779, 0.0
      %v4796 = vmax.f32 %v4780, 0.0
      %v4797 = vmax.f32 %v4781, 0.0
      %v4798 = vmax.f32 %v4782, 0.0
      %v4799 = vmax.f32 %v4783, 0.0
      %v4800 = vmax.f32 %v4784, 0.0
      %v4801 = vsub.f32 %v4304, %v4513
      %v4802 = vsub.f32 %v4305, %v4514
      %v4803 = vsub.f32 %v4306, %v4515
      %v4804 = vsub.f32 %v4307, %v4516
      %v4805 = vsub.f32 %v4308, %v4517
      %v4806 = vsub.f32 %v4309, %v4518
      %v4807 = vsub.f32 %v4310, %v4519
      %v4808 = vsub.f32 %v4311, %v4520
      %v4809 = vsub.f32 %v4312, %v4521
      %v4810 = vsub.f32 %v4313, %v4522
      %v4811 = vsub.f32 %v4314, %v4523
      %v4812 = vsub.f32 %v4315, %v4524
      %v4813 = vsub.f32 %v4316, %v4525
      %v4814 = vsub.f32 %v4317, %v4526
      %v4815 = vsub.f32 %v4318, %v4527
      %v4816 = vsub.f32 %v4319, %v4528
      %v4817 = vsub.f32 %v4320, %v4513
      %v4818 = vsub.f32 %v4321, %v4514
      %v4819 = vsub.f32 %v4322, %v4515
      %v4820 = vsub.f32 %v4323, %v4516
      %v4821 = vsub.f32 %v4324, %v4517
      %v4822 = vsub.f32 %v4325, %v4518
      %v4823 = vsub.f32 %v4326, %v4519
      %v4824 = vsub.f32 %v4327, %v4520
      %v4825 = vsub.f32 %v4328, %v4521
      %v4826 = vsub.f32 %v4329, %v4522
      %v4827 = vsub.f32 %v4330, %v4523
      %v4828 = vsub.f32 %v4331, %v4524
      %v4829 = vsub.f32 %v4332, %v4525
      %v4830 = vsub.f32 %v4333, %v4526
      %v4831 = vsub.f32 %v4334, %v4527
      %v4832 = vsub.f32 %v4335, %v4528
      %v4833 = vsub.f32 %v4336, %v4513
      %v4834 = vsub.f32 %v4337, %v4514
      %v4835 = vsub.f32 %v4338, %v4515
      %v4836 = vsub.f32 %v4339, %v4516
      %v4837 = vsub.f32 %v4340, %v4517
      %v4838 = vsub.f32 %v4341, %v4518
      %v4839 = vsub.f32 %v4342, %v4519
      %v4840 = vsub.f32 %v4343, %v4520
      %v4841 = vsub.f32 %v4344, %v4521
      %v4842 = vsub.f32 %v4345, %v4522
      %v4843 = vsub.f32 %v4346, %v4523
      %v4844 = vsub.f32 %v4347, %v4524
      %v4845 = vsub.f32 %v4348, %v4525
      %v4846 = vsub.f32 %v4349, %v4526
      %v4847 = vsub.f32 %v4350, %v4527
      %v4848 = vsub.f32 %v4351, %v4528
      %v4849 = vsub.f32 %v4352, %v4513
      %v4850 = vsub.f32 %v4353, %v4514
      %v4851 = vsub.f32 %v4354, %v4515
      %v4852 = vsub.f32 %v4355, %v4516
      %v4853 = vsub.f32 %v4356, %v4517
      %v4854 = vsub.f32 %v4357, %v4518
      %v4855 = vsub.f32 %v4358, %v4519
      %v4856 = vsub.f32 %v4359, %v4520
      %v4857 = vsub.f32 %v4360, %v4521
      %v4858 = vsub.f32 %v4361, %v4522
      %v4859 = vsub.f32 %v4362, %v4523
      %v4860 = vsub.f32 %v4363, %v4524
      %v4861 = vsub.f32 %v4364, %v4525
      %v4862 = vsub.f32 %v4365, %v4526
      %v4863 = vsub.f32 %v4366, %v4527
      %v4864 = vsub.f32 %v4367, %v4528
      %v4865 = vadd.f32 %v4785, 1e-05
      %v4866 = vadd.f32 %v4786, 1e-05
      %v4867 = vadd.f32 %v4787, 1e-05
      %v4868 = vadd.f32 %v4788, 1e-05
      %v4869 = vadd.f32 %v4789, 1e-05
      %v4870 = vadd.f32 %v4790, 1e-05
      %v4871 = vadd.f32 %v4791, 1e-05
      %v4872 = vadd.f32 %v4792, 1e-05
      %v4873 = vadd.f32 %v4793, 1e-05
      %v4874 = vadd.f32 %v4794, 1e-05
      %v4875 = vadd.f32 %v4795, 1e-05
      %v4876 = vadd.f32 %v4796, 1e-05
      %v4877 = vadd.f32 %v4797, 1e-05
      %v4878 = vadd.f32 %v4798, 1e-05
      %v4879 = vadd.f32 %v4799, 1e-05
      %v4880 = vadd.f32 %v4800, 1e-05
      %v4881 = vrsqrt.pop %v4865
      %v4882 = vrsqrt.pop %v4866
      %v4883 = vrsqrt.pop %v4867
      %v4884 = vrsqrt.pop %v4868
      %v4885 = vrsqrt.pop %v4869
      %v4886 = vrsqrt.pop %v4870
      %v4887 = vrsqrt.pop %v4871
      %v4888 = vrsqrt.pop %v4872
      %v4889 = vrsqrt.pop %v4873
      %v4890 = vrsqrt.pop %v4874
      %v4891 = vrsqrt.pop %v4875
      %v4892 = vrsqrt.pop %v4876
      %v4893 = vrsqrt.pop %v4877
      %v4894 = vrsqrt.pop %v4878
      %v4895 = vrsqrt.pop %v4879
      %v4896 = vrsqrt.pop %v4880
      %v4897 = vmul.f32 %v4801, %v4881
      %v4898 = vmul.f32 %v4802, %v4882
      %v4899 = vmul.f32 %v4803, %v4883
      %v4900 = vmul.f32 %v4804, %v4884
      %v4901 = vmul.f32 %v4805, %v4885
      %v4902 = vmul.f32 %v4806, %v4886
      %v4903 = vmul.f32 %v4807, %v4887
      %v4904 = vmul.f32 %v4808, %v4888
      %v4905 = vmul.f32 %v4809, %v4889
      %v4906 = vmul.f32 %v4810, %v4890
      %v4907 = vmul.f32 %v4811, %v4891
      %v4908 = vmul.f32 %v4812, %v4892
      %v4909 = vmul.f32 %v4813, %v4893
      %v4910 = vmul.f32 %v4814, %v4894
      %v4911 = vmul.f32 %v4815, %v4895
      %v4912 = vmul.f32 %v4816, %v4896
      %v4913 = vmul.f32 %v4817, %v4881
      %v4914 = vmul.f32 %v4818, %v4882
      %v4915 = vmul.f32 %v4819, %v4883
      %v4916 = vmul.f32 %v4820, %v4884
      %v4917 = vmul.f32 %v4821, %v4885
      %v4918 = vmul.f32 %v4822, %v4886
      %v4919 = vmul.f32 %v4823, %v4887
      %v4920 = vmul.f32 %v4824, %v4888
      %v4921 = vmul.f32 %v4825, %v4889
      %v4922 = vmul.f32 %v4826, %v4890
      %v4923 = vmul.f32 %v4827, %v4891
      %v4924 = vmul.f32 %v4828, %v4892
      %v4925 = vmul.f32 %v4829, %v4893
      %v4926 = vmul.f32 %v4830, %v4894
      %v4927 = vmul.f32 %v4831, %v4895
      %v4928 = vmul.f32 %v4832, %v4896
      %v4929 = vmul.f32 %v4833, %v4881
      %v4930 = vmul.f32 %v4834, %v4882
      %v4931 = vmul.f32 %v4835, %v4883
      %v4932 = vmul.f32 %v4836, %v4884
      %v4933 = vmul.f32 %v4837, %v4885
      %v4934 = vmul.f32 %v4838, %v4886
      %v4935 = vmul.f32 %v4839, %v4887
      %v4936 = vmul.f32 %v4840, %v4888
      %v4937 = vmul.f32 %v4841, %v4889
      %v4938 = vmul.f32 %v4842, %v4890
      %v4939 = vmul.f32 %v4843, %v4891
      %v4940 = vmul.f32 %v4844, %v4892
      %v4941 = vmul.f32 %v4845, %v4893
      %v4942 = vmul.f32 %v4846, %v4894
      %v4943 = vmul.f32 %v4847, %v4895
      %v4944 = vmul.f32 %v4848, %v4896
      %v4945 = vmul.f32 %v4849, %v4881
      %v4946 = vmul.f32 %v4850, %v4882
      %v4947 = vmul.f32 %v4851, %v4883
      %v4948 = vmul.f32 %v4852, %v4884
      %v4949 = vmul.f32 %v4853, %v4885
      %v4950 = vmul.f32 %v4854, %v4886
      %v4951 = vmul.f32 %v4855, %v4887
      %v4952 = vmul.f32 %v4856, %v4888
      %v4953 = vmul.f32 %v4857, %v4889
      %v4954 = vmul.f32 %v4858, %v4890
      %v4955 = vmul.f32 %v4859, %v4891
      %v4956 = vmul.f32 %v4860, %v4892
      %v4957 = vmul.f32 %v4861, %v4893
      %v4958 = vmul.f32 %v4862, %v4894
      %v4959 = vmul.f32 %v4863, %v4895
      %v4960 = vmul.f32 %v4864, %v4896
      %v4961 = vld [vmem:[%s723] sm:$0xff]
      %v4962 = vld [vmem:[%s723 + $0x8] sm:$0xff]
      %v4963 = vld [vmem:[%s723 + $0x10] sm:$0xff]
      %v4964 = vld [vmem:[%s723 + $0x18] sm:$0xff]
      %4966 = vset.pattern.permute.xlu0 0
      %4967 = vperm.xlu0 %4966, %v4961
      %v4968 = vpop.permute.xlu0 %4967
      %4971 = vset.pattern.permute.xlu0 0
      %4972 = vperm.xlu0 %4971, %v4962
      %v4973 = vpop.permute.xlu0 %4972
      %4976 = vset.pattern.permute.xlu0 0
      %4977 = vperm.xlu0 %4976, %v4963
      %v4978 = vpop.permute.xlu0 %4977
      %4981 = vset.pattern.permute.xlu0 0
      %4982 = vperm.xlu0 %4981, %v4964
      %v4983 = vpop.permute.xlu0 %4982
      %v4985 = vmul.f32 %v4897, %v4968
      %v4986 = vmul.f32 %v4898, %v4968
      %v4987 = vmul.f32 %v4899, %v4968
      %v4988 = vmul.f32 %v4900, %v4968
      %v4989 = vmul.f32 %v4901, %v4968
      %v4990 = vmul.f32 %v4902, %v4968
      %v4991 = vmul.f32 %v4903, %v4968
      %v4992 = vmul.f32 %v4904, %v4968
      %v4993 = vmul.f32 %v4905, %v4968
      %v4994 = vmul.f32 %v4906, %v4968
      %v4995 = vmul.f32 %v4907, %v4968
      %v4996 = vmul.f32 %v4908, %v4968
      %v4997 = vmul.f32 %v4909, %v4968
      %v4998 = vmul.f32 %v4910, %v4968
      %v4999 = vmul.f32 %v4911, %v4968
      %v5000 = vmul.f32 %v4912, %v4968
      %v5001 = vmul.f32 %v4913, %v4973
      %v5002 = vmul.f32 %v4914, %v4973
      %v5003 = vmul.f32 %v4915, %v4973
      %v5004 = vmul.f32 %v4916, %v4973
      %v5005 = vmul.f32 %v4917, %v4973
      %v5006 = vmul.f32 %v4918, %v4973
      %v5007 = vmul.f32 %v4919, %v4973
      %v5008 = vmul.f32 %v4920, %v4973
      %v5009 = vmul.f32 %v4921, %v4973
      %v5010 = vmul.f32 %v4922, %v4973
      %v5011 = vmul.f32 %v4923, %v4973
      %v5012 = vmul.f32 %v4924, %v4973
      %v5013 = vmul.f32 %v4925, %v4973
      %v5014 = vmul.f32 %v4926, %v4973
      %v5015 = vmul.f32 %v4927, %v4973
      %v5016 = vmul.f32 %v4928, %v4973
      %v5017 = vmul.f32 %v4929, %v4978
      %v5018 = vmul.f32 %v4930, %v4978
      %v5019 = vmul.f32 %v4931, %v4978
      %v5020 = vmul.f32 %v4932, %v4978
      %v5021 = vmul.f32 %v4933, %v4978
      %v5022 = vmul.f32 %v4934, %v4978
      %v5023 = vmul.f32 %v4935, %v4978
      %v5024 = vmul.f32 %v4936, %v4978
      %v5025 = vmul.f32 %v4937, %v4978
      %v5026 = vmul.f32 %v4938, %v4978
      %v5027 = vmul.f32 %v4939, %v4978
      %v5028 = vmul.f32 %v4940, %v4978
      %v5029 = vmul.f32 %v4941, %v4978
      %v5030 = vmul.f32 %v4942, %v4978
      %v5031 = vmul.f32 %v4943, %v4978
      %v5032 = vmul.f32 %v4944, %v4978
      %v5033 = vmul.f32 %v4945, %v4983
      %v5034 = vmul.f32 %v4946, %v4983
      %v5035 = vmul.f32 %v4947, %v4983
      %v5036 = vmul.f32 %v4948, %v4983
      %v5037 = vmul.f32 %v4949, %v4983
      %v5038 = vmul.f32 %v4950, %v4983
      %v5039 = vmul.f32 %v4951, %v4983
      %v5040 = vmul.f32 %v4952, %v4983
      %v5041 = vmul.f32 %v4953, %v4983
      %v5042 = vmul.f32 %v4954, %v4983
      %v5043 = vmul.f32 %v4955, %v4983
      %v5044 = vmul.f32 %v4956, %v4983
      %v5045 = vmul.f32 %v4957, %v4983
      %v5046 = vmul.f32 %v4958, %v4983
      %v5047 = vmul.f32 %v4959, %v4983
      %v5048 = vmul.f32 %v4960, %v4983
      %v5049 = vld [vmem:[%s728] sm:$0xff]
      %v5050 = vld [vmem:[%s728 + $0x8] sm:$0xff]
      %v5051 = vld [vmem:[%s728 + $0x10] sm:$0xff]
      %v5052 = vld [vmem:[%s728 + $0x18] sm:$0xff]
      %5054 = vset.pattern.permute.xlu0 0
      %5055 = vperm.xlu0 %5054, %v5049
      %v5056 = vpop.permute.xlu0 %5055
      %5059 = vset.pattern.permute.xlu0 0
      %5060 = vperm.xlu0 %5059, %v5050
      %v5061 = vpop.permute.xlu0 %5060
      %5064 = vset.pattern.permute.xlu0 0
      %5065 = vperm.xlu0 %5064, %v5051
      %v5066 = vpop.permute.xlu0 %5065
      %5069 = vset.pattern.permute.xlu0 0
      %5070 = vperm.xlu0 %5069, %v5052
      %v5071 = vpop.permute.xlu0 %5070
      %v5073 = vadd.f32 %v4985, %v5056
      %v5074 = vadd.f32 %v4986, %v5056
      %v5075 = vadd.f32 %v4987, %v5056
      %v5076 = vadd.f32 %v4988, %v5056
      %v5077 = vadd.f32 %v4989, %v5056
      %v5078 = vadd.f32 %v4990, %v5056
      %v5079 = vadd.f32 %v4991, %v5056
      %v5080 = vadd.f32 %v4992, %v5056
      %v5081 = vadd.f32 %v4993, %v5056
      %v5082 = vadd.f32 %v4994, %v5056
      %v5083 = vadd.f32 %v4995, %v5056
      %v5084 = vadd.f32 %v4996, %v5056
      %v5085 = vadd.f32 %v4997, %v5056
      %v5086 = vadd.f32 %v4998, %v5056
      %v5087 = vadd.f32 %v4999, %v5056
      %v5088 = vadd.f32 %v5000, %v5056
      %v5089 = vadd.f32 %v5001, %v5061
      %v5090 = vadd.f32 %v5002, %v5061
      %v5091 = vadd.f32 %v5003, %v5061
      %v5092 = vadd.f32 %v5004, %v5061
      %v5093 = vadd.f32 %v5005, %v5061
      %v5094 = vadd.f32 %v5006, %v5061
      %v5095 = vadd.f32 %v5007, %v5061
      %v5096 = vadd.f32 %v5008, %v5061
      %v5097 = vadd.f32 %v5009, %v5061
      %v5098 = vadd.f32 %v5010, %v5061
      %v5099 = vadd.f32 %v5011, %v5061
      %v5100 = vadd.f32 %v5012, %v5061
      %v5101 = vadd.f32 %v5013, %v5061
      %v5102 = vadd.f32 %v5014, %v5061
      %v5103 = vadd.f32 %v5015, %v5061
      %v5104 = vadd.f32 %v5016, %v5061
      %v5105 = vadd.f32 %v5017, %v5066
      %v5106 = vadd.f32 %v5018, %v5066
      %v5107 = vadd.f32 %v5019, %v5066
      %v5108 = vadd.f32 %v5020, %v5066
      %v5109 = vadd.f32 %v5021, %v5066
      %v5110 = vadd.f32 %v5022, %v5066
      %v5111 = vadd.f32 %v5023, %v5066
      %v5112 = vadd.f32 %v5024, %v5066
      %v5113 = vadd.f32 %v5025, %v5066
      %v5114 = vadd.f32 %v5026, %v5066
      %v5115 = vadd.f32 %v5027, %v5066
      %v5116 = vadd.f32 %v5028, %v5066
      %v5117 = vadd.f32 %v5029, %v5066
      %v5118 = vadd.f32 %v5030, %v5066
      %v5119 = vadd.f32 %v5031, %v5066
      %v5120 = vadd.f32 %v5032, %v5066
      %v5121 = vadd.f32 %v5033, %v5071
      %v5122 = vadd.f32 %v5034, %v5071
      %v5123 = vadd.f32 %v5035, %v5071
      %v5124 = vadd.f32 %v5036, %v5071
      %v5125 = vadd.f32 %v5037, %v5071
      %v5126 = vadd.f32 %v5038, %v5071
      %v5127 = vadd.f32 %v5039, %v5071
      %v5128 = vadd.f32 %v5040, %v5071
      %v5129 = vadd.f32 %v5041, %v5071
      %v5130 = vadd.f32 %v5042, %v5071
      %v5131 = vadd.f32 %v5043, %v5071
      %v5132 = vadd.f32 %v5044, %v5071
      %v5133 = vadd.f32 %v5045, %v5071
      %v5134 = vadd.f32 %v5046, %v5071
      %v5135 = vadd.f32 %v5047, %v5071
      %v5136 = vadd.f32 %v5048, %v5071
      %v5137 = vld [vmem:[%s703] sm:$0xf]
      %v5138 = vld [vmem:[%s703 + $0x4] sm:$0xf]
      %v5139 = vld [vmem:[%s703 + $0x8] sm:$0xf]
      %v5140 = vld [vmem:[%s703 + $0xc] sm:$0xf]
      %v5141 = vld [vmem:[%s703 + $0x10] sm:$0xf]
      %v5142 = vld [vmem:[%s703 + $0x14] sm:$0xf]
      %v5143 = vld [vmem:[%s703 + $0x18] sm:$0xf]
      %v5144 = vld [vmem:[%s703 + $0x1c] sm:$0xf]
      %v5145 = vpack.c.bf16 %v5089, %v5073
      %v5146 = vpack.c.bf16 %v5090, %v5074
      %v5147 = vpack.c.bf16 %v5091, %v5075
      %v5148 = vpack.c.bf16 %v5092, %v5076
      %v5149 = vpack.c.bf16 %v5093, %v5077
      %v5150 = vpack.c.bf16 %v5094, %v5078
      %v5151 = vpack.c.bf16 %v5095, %v5079
      %v5152 = vpack.c.bf16 %v5096, %v5080
      %v5153 = vpack.c.bf16 %v5097, %v5081
      %v5154 = vpack.c.bf16 %v5098, %v5082
      %v5155 = vpack.c.bf16 %v5099, %v5083
      %v5156 = vpack.c.bf16 %v5100, %v5084
      %v5157 = vpack.c.bf16 %v5101, %v5085
      %v5158 = vpack.c.bf16 %v5102, %v5086
      %v5159 = vpack.c.bf16 %v5103, %v5087
      %v5160 = vpack.c.bf16 %v5104, %v5088
      %v5161 = vpack.c.bf16 %v5121, %v5105
      %v5162 = vpack.c.bf16 %v5122, %v5106
      %v5163 = vpack.c.bf16 %v5123, %v5107
      %v5164 = vpack.c.bf16 %v5124, %v5108
      %v5165 = vpack.c.bf16 %v5125, %v5109
      %v5166 = vpack.c.bf16 %v5126, %v5110
      %v5167 = vpack.c.bf16 %v5127, %v5111
      %v5168 = vpack.c.bf16 %v5128, %v5112
      %v5169 = vpack.c.bf16 %v5129, %v5113
      %v5170 = vpack.c.bf16 %v5130, %v5114
      %v5171 = vpack.c.bf16 %v5131, %v5115
      %v5172 = vpack.c.bf16 %v5132, %v5116
      %v5173 = vpack.c.bf16 %v5133, %v5117
      %v5174 = vpack.c.bf16 %v5134, %v5118
      %v5175 = vpack.c.bf16 %v5135, %v5119
      %v5176 = vpack.c.bf16 %v5136, %v5120
      %v5177 = vld [vmem:[%s708] sm:$0xff]
      %v5178 = vld [vmem:[%s708 + $0x8] sm:$0xff]
      %v5179 = vld [vmem:[%s708 + $0x10] sm:$0xff]
      %v5180 = vld [vmem:[%s708 + $0x18] sm:$0xff]
      %v5181 = vld [vmem:[%s708 + $0x20] sm:$0xff]
      %v5182 = vld [vmem:[%s708 + $0x28] sm:$0xff]
      %v5183 = vld [vmem:[%s708 + $0x30] sm:$0xff]
      %v5184 = vld [vmem:[%s708 + $0x38] sm:$0xff]
      %5186 = vset.pattern.permute.xlu0 0
      %5187 = vperm.xlu0 %5186, %v5177
      %v5188 = vpop.permute.xlu0 %5187
      %5191 = vset.pattern.permute.xlu0 0
      %5192 = vperm.xlu0 %5191, %v5178
      %v5193 = vpop.permute.xlu0 %5192
      %5196 = vset.pattern.permute.xlu0 0
      %5197 = vperm.xlu0 %5196, %v5179
      %v5198 = vpop.permute.xlu0 %5197
      %5201 = vset.pattern.permute.xlu0 0
      %5202 = vperm.xlu0 %5201, %v5180
      %v5203 = vpop.permute.xlu0 %5202
      %5206 = vset.pattern.permute.xlu0 0
      %5207 = vperm.xlu0 %5206, %v5181
      %v5208 = vpop.permute.xlu0 %5207
      %5211 = vset.pattern.permute.xlu0 0
      %5212 = vperm.xlu0 %5211, %v5182
      %v5213 = vpop.permute.xlu0 %5212
      %5216 = vset.pattern.permute.xlu0 0
      %5217 = vperm.xlu0 %5216, %v5183
      %v5218 = vpop.permute.xlu0 %5217
      %5221 = vset.pattern.permute.xlu0 0
      %5222 = vperm.xlu0 %5221, %v5184
      %v5223 = vpop.permute.xlu0 %5222
      %v5233 = vunpack.c.l.b16 %v5137
      %v5234 = vunpack.c.l.b16 %v5138
      %v5235 = vunpack.c.l.b16 %v5139
      %v5236 = vunpack.c.l.b16 %v5140
      %v5237 = vunpack.c.l.b16 %v5141
      %v5238 = vunpack.c.l.b16 %v5142
      %v5239 = vunpack.c.l.b16 %v5143
      %v5240 = vunpack.c.l.b16 %v5144
      %v5241 = vpack.c.b16 %v5234, %v5233
      %v5242 = vpack.c.b16 %v5236, %v5235
      %v5243 = vpack.c.b16 %v5238, %v5237
      %v5244 = vpack.c.b16 %v5240, %v5239
      %v5246 = vsel %vm1185, %v5241, 0
      %v5249 = vsel %vm1185, %v5242, 0
      %v5252 = vsel %vm1185, %v5243, 0
      %v5255 = vsel %vm1185, %v5244, 0
      %5257 = vmatprep.subr.bf16.mxu0 %v5146
      %5258 = vmatpush1.bf16.msra.mxu0 %v5145
      %5259 = vmatprep.subr.bf16.mxu0 %v5162
      %5260 = vmatpush1.bf16.msra.mxu0 %v5161
      %5261 = vmatprep.subr.bf16.mxu0 0
      %5262 = vmatpush1.bf16.msra.mxu0 0
      %5263 = vmatprep.subr.bf16.mxu0 0
      %5264 = vmatpush1.bf16.msra.mxu0 0
      %5265 = vmatprep.subr.bf16.mxu0 0
      %5266 = vmatpush1.bf16.msra.mxu0 0
      %5267 = vmatprep.subr.bf16.mxu0 0
      %5268 = vmatpush1.bf16.msra.mxu0 0
      %5269 = vmatprep.subr.bf16.mxu0 0
      %5270 = vmatpush1.bf16.msra.mxu0 0
      %5271 = vmatprep.subr.bf16.mxu0 0
      %5272 = vmatpush1.bf16.msra.mxu0 0
      %5273 = vmatprep.subr.bf16.mxu0 0
      %5274 = vmatpush1.bf16.msra.mxu0 0
      %5275 = vmatprep.subr.bf16.mxu0 0
      %5276 = vmatpush1.bf16.msra.mxu0 0
      %5277 = vmatprep.subr.bf16.mxu0 0
      %5278 = vmatpush1.bf16.msra.mxu0 0
      %5279 = vmatprep.subr.bf16.mxu0 0
      %5280 = vmatpush1.bf16.msra.mxu0 0
      %5281 = vmatprep.subr.bf16.mxu0 0
      %5282 = vmatpush1.bf16.msra.mxu0 0
      %5283 = vmatprep.subr.bf16.mxu0 0
      %5284 = vmatpush1.bf16.msra.mxu0 0
      %5285 = vmatprep.subr.bf16.mxu0 0
      %5286 = vmatpush1.bf16.msra.mxu0 0
      %5287 = vmatprep.subr.bf16.mxu0 0
      %5288 = vmatpush1.bf16.msra.mxu0 0
      %5289 = vmatprep.mubr.bf16.mxu0 0
      %5290 = vmatmul.mubr.bf16.gmra.mrb[0].mxu0 %v5246
      %v5291 = vpop.f32.mrb[0].mxu0
      %v5292 = vadd.f32 %v5188, %v5291
      %v5293 = vpop.f32.mrb[0].mxu0
      %v5294 = vadd.f32 %v5188, %v5293
      %v5295 = vpop.f32.mrb[0].mxu0
      %v5296 = vadd.f32 %v5193, %v5295
      %v5297 = vpop.f32.mrb[0].mxu0
      %v5298 = vadd.f32 %v5193, %v5297
      %5299 = vmatprep.mubr.bf16.mxu0 0
      %5300 = vmatmul.mubr.bf16.gmra.mrb[0].mxu0 %v5249
      %v5301 = vpop.f32.mrb[0].mxu0
      %v5302 = vadd.f32 %v5198, %v5301
      %v5303 = vpop.f32.mrb[0].mxu0
      %v5304 = vadd.f32 %v5198, %v5303
      %v5305 = vpop.f32.mrb[0].mxu0
      %v5306 = vadd.f32 %v5203, %v5305
      %v5307 = vpop.f32.mrb[0].mxu0
      %v5308 = vadd.f32 %v5203, %v5307
      %5309 = vmatprep.mubr.bf16.mxu0 0
      %5310 = vmatmul.mubr.bf16.gmra.mrb[0].mxu0 %v5252
      %v5311 = vpop.f32.mrb[0].mxu0
      %v5312 = vadd.f32 %v5208, %v5311
      %v5313 = vpop.f32.mrb[0].mxu0
      %v5314 = vadd.f32 %v5208, %v5313
      %v5315 = vpop.f32.mrb[0].mxu0
      %v5316 = vadd.f32 %v5213, %v5315
      %v5317 = vpop.f32.mrb[0].mxu0
      %v5318 = vadd.f32 %v5213, %v5317
      %5319 = vmatprep.mubr.bf16.mxu0 0
      %5320 = vmatmul.mubr.bf16.gmra.mrb[0].mxu0 %v5255
      %v5321 = vpop.f32.mrb[0].mxu0
      %v5322 = vadd.f32 %v5218, %v5321
      %v5323 = vpop.f32.mrb[0].mxu0
      %v5324 = vadd.f32 %v5218, %v5323
      %v5325 = vpop.f32.mrb[0].mxu0
      %v5326 = vadd.f32 %v5223, %v5325
      %v5327 = vpop.f32.mrb[0].mxu0
      %v5328 = vadd.f32 %v5223, %v5327
      %5329 = vdwg.mxu0
      %5330 = vmatprep.subr.bf16.mxu0 %v5148
      %5331 = vmatpush1.bf16.msra.mxu0 %v5147
      %5332 = vmatprep.subr.bf16.mxu0 %v5164
      %5333 = vmatpush1.bf16.msra.mxu0 %v5163
      %5334 = vmatprep.subr.bf16.mxu0 0
      %5335 = vmatpush1.bf16.msra.mxu0 0
      %5336 = vmatprep.subr.bf16.mxu0 0
      %5337 = vmatpush1.bf16.msra.mxu0 0
      %5338 = vmatprep.subr.bf16.mxu0 0
      %5339 = vmatpush1.bf16.msra.mxu0 0
      %5340 = vmatprep.subr.bf16.mxu0 0
      %5341 = vmatpush1.bf16.msra.mxu0 0
      %5342 = vmatprep.subr.bf16.mxu0 0
      %5343 = vmatpush1.bf16.msra.mxu0 0
      %5344 = vmatprep.subr.bf16.mxu0 0
      %5345 = vmatpush1.bf16.msra.mxu0 0
      %5346 = vmatprep.subr.bf16.mxu0 0
      %5347 = vmatpush1.bf16.msra.mxu0 0
      %5348 = vmatprep.subr.bf16.mxu0 0
      %5349 = vmatpush1.bf16.msra.mxu0 0
      %5350 = vmatprep.subr.bf16.mxu0 0
      %5351 = vmatpush1.bf16.msra.mxu0 0
      %5352 = vmatprep.subr.bf16.mxu0 0
      %5353 = vmatpush1.bf16.msra.mxu0 0
      %5354 = vmatprep.subr.bf16.mxu0 0
      %5355 = vmatpush1.bf16.msra.mxu0 0
      %5356 = vmatprep.subr.bf16.mxu0 0
      %5357 = vmatpush1.bf16.msra.mxu0 0
      %5358 = vmatprep.subr.bf16.mxu0 0
      %5359 = vmatpush1.bf16.msra.mxu0 0
      %5360 = vmatprep.subr.bf16.mxu0 0
      %5361 = vmatpush1.bf16.msra.mxu0 0
      %5362 = vmatprep.mubr.bf16.mxu0 0
      %5363 = vmatmul.mubr.bf16.gmra.mrb[0].mxu0 %v5246
      %v5364 = vpop.f32.mrb[0].mxu0
      %v5365 = vadd.f32 %v5188, %v5364
      %v5366 = vpop.f32.mrb[0].mxu0
      %v5367 = vadd.f32 %v5188, %v5366
      %v5368 = vpop.f32.mrb[0].mxu0
      %v5369 = vadd.f32 %v5193, %v5368
      %v5370 = vpop.f32.mrb[0].mxu0
      %v5371 = vadd.f32 %v5193, %v5370
      %5372 = vmatprep.mubr.bf16.mxu0 0
      %5373 = vmatmul.mubr.bf16.gmra.mrb[0].mxu0 %v5249
      %v5374 = vpop.f32.mrb[0].mxu0
      %v5375 = vadd.f32 %v5198, %v5374
      %v5376 = vpop.f32.mrb[0].mxu0
      %v5377 = vadd.f32 %v5198, %v5376
      %v5378 = vpop.f32.mrb[0].mxu0
      %v5379 = vadd.f32 %v5203, %v5378
      %v5380 = vpop.f32.mrb[0].mxu0
      %v5381 = vadd.f32 %v5203, %v5380
      %5382 = vmatprep.mubr.bf16.mxu0 0
      %5383 = vmatmul.mubr.bf16.gmra.mrb[0].mxu0 %v5252
      %v5384 = vpop.f32.mrb[0].mxu0
      %v5385 = vadd.f32 %v5208, %v5384
      %v5386 = vpop.f32.mrb[0].mxu0
      %v5387 = vadd.f32 %v5208, %v5386
      %v5388 = vpop.f32.mrb[0].mxu0
      %v5389 = vadd.f32 %v5213, %v5388
      %v5390 = vpop.f32.mrb[0].mxu0
      %v5391 = vadd.f32 %v5213, %v5390
      %5392 = vmatprep.mubr.bf16.mxu0 0
      %5393 = vmatmul.mubr.bf16.gmra.mrb[0].mxu0 %v5255
      %v5394 = vpop.f32.mrb[0].mxu0
      %v5395 = vadd.f32 %v5218, %v5394
      %v5396 = vpop.f32.mrb[0].mxu0
      %v5397 = vadd.f32 %v5218, %v5396
      %v5398 = vpop.f32.mrb[0].mxu0
      %v5399 = vadd.f32 %v5223, %v5398
      %v5400 = vpop.f32.mrb[0].mxu0
      %v5401 = vadd.f32 %v5223, %v5400
      %5402 = vdwg.mxu0
      %5403 = vmatprep.subr.bf16.mxu0 %v5150
      %5404 = vmatpush1.bf16.msra.mxu0 %v5149
      %5405 = vmatprep.subr.bf16.mxu0 %v5166
      %5406 = vmatpush1.bf16.msra.mxu0 %v5165
      %5407 = vmatprep.subr.bf16.mxu0 0
      %5408 = vmatpush1.bf16.msra.mxu0 0
      %5409 = vmatprep.subr.bf16.mxu0 0
      %5410 = vmatpush1.bf16.msra.mxu0 0
      %5411 = vmatprep.subr.bf16.mxu0 0
      %5412 = vmatpush1.bf16.msra.mxu0 0
      %5413 = vmatprep.subr.bf16.mxu0 0
      %5414 = vmatpush1.bf16.msra.mxu0 0
      %5415 = vmatprep.subr.bf16.mxu0 0
      %5416 = vmatpush1.bf16.msra.mxu0 0
      %5417 = vmatprep.subr.bf16.mxu0 0
      %5418 = vmatpush1.bf16.msra.mxu0 0
      %5419 = vmatprep.subr.bf16.mxu0 0
      %5420 = vmatpush1.bf16.msra.mxu0 0
      %5421 = vmatprep.subr.bf16.mxu0 0
      %5422 = vmatpush1.bf16.msra.mxu0 0
      %5423 = vmatprep.subr.bf16.mxu0 0
      %5424 = vmatpush1.bf16.msra.mxu0 0
      %5425 = vmatprep.subr.bf16.mxu0 0
      %5426 = vmatpush1.bf16.msra.mxu0 0
      %5427 = vmatprep.subr.bf16.mxu0 0
      %5428 = vmatpush1.bf16.msra.mxu0 0
      %5429 = vmatprep.subr.bf16.mxu0 0
      %5430 = vmatpush1.bf16.msra.mxu0 0
      %5431 = vmatprep.subr.bf16.mxu0 0
      %5432 = vmatpush1.bf16.msra.mxu0 0
      %5433 = vmatprep.subr.bf16.mxu0 0
      %5434 = vmatpush1.bf16.msra.mxu0 0
      %5435 = vmatprep.mubr.bf16.mxu0 0
      %5436 = vmatmul.mubr.bf16.gmra.mrb[0].mxu0 %v5246
      %v5437 = vpop.f32.mrb[0].mxu0
      %v5438 = vadd.f32 %v5188, %v5437
      %v5439 = vpop.f32.mrb[0].mxu0
      %v5440 = vadd.f32 %v5188, %v5439
      %v5441 = vpop.f32.mrb[0].mxu0
      %v5442 = vadd.f32 %v5193, %v5441
      %v5443 = vpop.f32.mrb[0].mxu0
      %v5444 = vadd.f32 %v5193, %v5443
      %5445 = vmatprep.mubr.bf16.mxu0 0
      %5446 = vmatmul.mubr.bf16.gmra.mrb[0].mxu0 %v5249
      %v5447 = vpop.f32.mrb[0].mxu0
      %v5448 = vadd.f32 %v5198, %v5447
      %v5449 = vpop.f32.mrb[0].mxu0
      %v5450 = vadd.f32 %v5198, %v5449
      %v5451 = vpop.f32.mrb[0].mxu0
      %v5452 = vadd.f32 %v5203, %v5451
      %v5453 = vpop.f32.mrb[0].mxu0
      %v5454 = vadd.f32 %v5203, %v5453
      %5455 = vmatprep.mubr.bf16.mxu0 0
      %5456 = vmatmul.mubr.bf16.gmra.mrb[0].mxu0 %v5252
      %v5457 = vpop.f32.mrb[0].mxu0
      %v5458 = vadd.f32 %v5208, %v5457
      %v5459 = vpop.f32.mrb[0].mxu0
      %v5460 = vadd.f32 %v5208, %v5459
      %v5461 = vpop.f32.mrb[0].mxu0
      %v5462 = vadd.f32 %v5213, %v5461
      %v5463 = vpop.f32.mrb[0].mxu0
      %v5464 = vadd.f32 %v5213, %v5463
      %5465 = vmatprep.mubr.bf16.mxu0 0
      %5466 = vmatmul.mubr.bf16.gmra.mrb[0].mxu0 %v5255
      %v5467 = vpop.f32.mrb[0].mxu0
      %v5468 = vadd.f32 %v5218, %v5467
      %v5469 = vpop.f32.mrb[0].mxu0
      %v5470 = vadd.f32 %v5218, %v5469
      %v5471 = vpop.f32.mrb[0].mxu0
      %v5472 = vadd.f32 %v5223, %v5471
      %v5473 = vpop.f32.mrb[0].mxu0
      %v5474 = vadd.f32 %v5223, %v5473
      %5475 = vdwg.mxu0
      %5476 = vmatprep.subr.bf16.mxu0 %v5152
      %5477 = vmatpush1.bf16.msra.mxu0 %v5151
      %5478 = vmatprep.subr.bf16.mxu0 %v5168
      %5479 = vmatpush1.bf16.msra.mxu0 %v5167
      %5480 = vmatprep.subr.bf16.mxu0 0
      %5481 = vmatpush1.bf16.msra.mxu0 0
      %5482 = vmatprep.subr.bf16.mxu0 0
      %5483 = vmatpush1.bf16.msra.mxu0 0
      %5484 = vmatprep.subr.bf16.mxu0 0
      %5485 = vmatpush1.bf16.msra.mxu0 0
      %5486 = vmatprep.subr.bf16.mxu0 0
      %5487 = vmatpush1.bf16.msra.mxu0 0
      %5488 = vmatprep.subr.bf16.mxu0 0
      %5489 = vmatpush1.bf16.msra.mxu0 0
      %5490 = vmatprep.subr.bf16.mxu0 0
      %5491 = vmatpush1.bf16.msra.mxu0 0
      %5492 = vmatprep.subr.bf16.mxu0 0
      %5493 = vmatpush1.bf16.msra.mxu0 0
      %5494 = vmatprep.subr.bf16.mxu0 0
      %5495 = vmatpush1.bf16.msra.mxu0 0
      %5496 = vmatprep.subr.bf16.mxu0 0
      %5497 = vmatpush1.bf16.msra.mxu0 0
      %5498 = vmatprep.subr.bf16.mxu0 0
      %5499 = vmatpush1.bf16.msra.mxu0 0
      %5500 = vmatprep.subr.bf16.mxu0 0
      %5501 = vmatpush1.bf16.msra.mxu0 0
      %5502 = vmatprep.subr.bf16.mxu0 0
      %5503 = vmatpush1.bf16.msra.mxu0 0
      %5504 = vmatprep.subr.bf16.mxu0 0
      %5505 = vmatpush1.bf16.msra.mxu0 0
      %5506 = vmatprep.subr.bf16.mxu0 0
      %5507 = vmatpush1.bf16.msra.mxu0 0
      %5508 = vmatprep.mubr.bf16.mxu0 0
      %5509 = vmatmul.mubr.bf16.gmra.mrb[0].mxu0 %v5246
      %v5510 = vpop.f32.mrb[0].mxu0
      %v5511 = vadd.f32 %v5188, %v5510
      %v5512 = vpop.f32.mrb[0].mxu0
      %v5513 = vadd.f32 %v5188, %v5512
      %v5514 = vpop.f32.mrb[0].mxu0
      %v5515 = vadd.f32 %v5193, %v5514
      %v5516 = vpop.f32.mrb[0].mxu0
      %v5517 = vadd.f32 %v5193, %v5516
      %5518 = vmatprep.mubr.bf16.mxu0 0
      %5519 = vmatmul.mubr.bf16.gmra.mrb[0].mxu0 %v5249
      %v5520 = vpop.f32.mrb[0].mxu0
      %v5521 = vadd.f32 %v5198, %v5520
      %v5522 = vpop.f32.mrb[0].mxu0
      %v5523 = vadd.f32 %v5198, %v5522
      %v5524 = vpop.f32.mrb[0].mxu0
      %v5525 = vadd.f32 %v5203, %v5524
      %v5526 = vpop.f32.mrb[0].mxu0
      %v5527 = vadd.f32 %v5203, %v5526
      %5528 = vmatprep.mubr.bf16.mxu0 0
      %5529 = vmatmul.mubr.bf16.gmra.mrb[0].mxu0 %v5252
      %v5530 = vpop.f32.mrb[0].mxu0
      %v5531 = vadd.f32 %v5208, %v5530
      %v5532 = vpop.f32.mrb[0].mxu0
      %v5533 = vadd.f32 %v5208, %v5532
      %v5534 = vpop.f32.mrb[0].mxu0
      %v5535 = vadd.f32 %v5213, %v5534
      %v5536 = vpop.f32.mrb[0].mxu0
      %v5537 = vadd.f32 %v5213, %v5536
      %5538 = vmatprep.mubr.bf16.mxu0 0
      %5539 = vmatmul.mubr.bf16.gmra.mrb[0].mxu0 %v5255
      %v5540 = vpop.f32.mrb[0].mxu0
      %v5541 = vadd.f32 %v5218, %v5540
      %v5542 = vpop.f32.mrb[0].mxu0
      %v5543 = vadd.f32 %v5218, %v5542
      %v5544 = vpop.f32.mrb[0].mxu0
      %v5545 = vadd.f32 %v5223, %v5544
      %v5546 = vpop.f32.mrb[0].mxu0
      %v5547 = vadd.f32 %v5223, %v5546
      %5548 = vdwg.mxu0
      %5549 = vmatprep.subr.bf16.mxu0 %v5154
      %5550 = vmatpush1.bf16.msra.mxu0 %v5153
      %5551 = vmatprep.subr.bf16.mxu0 %v5170
      %5552 = vmatpush1.bf16.msra.mxu0 %v5169
      %5553 = vmatprep.subr.bf16.mxu0 0
      %5554 = vmatpush1.bf16.msra.mxu0 0
      %5555 = vmatprep.subr.bf16.mxu0 0
      %5556 = vmatpush1.bf16.msra.mxu0 0
      %5557 = vmatprep.subr.bf16.mxu0 0
      %5558 = vmatpush1.bf16.msra.mxu0 0
      %5559 = vmatprep.subr.bf16.mxu0 0
      %5560 = vmatpush1.bf16.msra.mxu0 0
      %5561 = vmatprep.subr.bf16.mxu0 0
      %5562 = vmatpush1.bf16.msra.mxu0 0
      %5563 = vmatprep.subr.bf16.mxu0 0
      %5564 = vmatpush1.bf16.msra.mxu0 0
      %5565 = vmatprep.subr.bf16.mxu0 0
      %5566 = vmatpush1.bf16.msra.mxu0 0
      %5567 = vmatprep.subr.bf16.mxu0 0
      %5568 = vmatpush1.bf16.msra.mxu0 0
      %5569 = vmatprep.subr.bf16.mxu0 0
      %5570 = vmatpush1.bf16.msra.mxu0 0
      %5571 = vmatprep.subr.bf16.mxu0 0
      %5572 = vmatpush1.bf16.msra.mxu0 0
      %5573 = vmatprep.subr.bf16.mxu0 0
      %5574 = vmatpush1.bf16.msra.mxu0 0
      %5575 = vmatprep.subr.bf16.mxu0 0
      %5576 = vmatpush1.bf16.msra.mxu0 0
      %5577 = vmatprep.subr.bf16.mxu0 0
      %5578 = vmatpush1.bf16.msra.mxu0 0
      %5579 = vmatprep.subr.bf16.mxu0 0
      %5580 = vmatpush1.bf16.msra.mxu0 0
      %5581 = vmatprep.mubr.bf16.mxu0 0
      %5582 = vmatmul.mubr.bf16.gmra.mrb[0].mxu0 %v5246
      %v5583 = vpop.f32.mrb[0].mxu0
      %v5584 = vadd.f32 %v5188, %v5583
      %v5585 = vpop.f32.mrb[0].mxu0
      %v5586 = vadd.f32 %v5188, %v5585
      %v5587 = vpop.f32.mrb[0].mxu0
      %v5588 = vadd.f32 %v5193, %v5587
      %v5589 = vpop.f32.mrb[0].mxu0
      %v5590 = vadd.f32 %v5193, %v5589
      %5591 = vmatprep.mubr.bf16.mxu0 0
      %5592 = vmatmul.mubr.bf16.gmra.mrb[0].mxu0 %v5249
      %v5593 = vpop.f32.mrb[0].mxu0
      %v5594 = vadd.f32 %v5198, %v5593
      %v5595 = vpop.f32.mrb[0].mxu0
      %v5596 = vadd.f32 %v5198, %v5595
      %v5597 = vpop.f32.mrb[0].mxu0
      %v5598 = vadd.f32 %v5203, %v5597
      %v5599 = vpop.f32.mrb[0].mxu0
      %v5600 = vadd.f32 %v5203, %v5599
      %5601 = vmatprep.mubr.bf16.mxu0 0
      %5602 = vmatmul.mubr.bf16.gmra.mrb[0].mxu0 %v5252
      %v5603 = vpop.f32.mrb[0].mxu0
      %v5604 = vadd.f32 %v5208, %v5603
      %v5605 = vpop.f32.mrb[0].mxu0
      %v5606 = vadd.f32 %v5208, %v5605
      %v5607 = vpop.f32.mrb[0].mxu0
      %v5608 = vadd.f32 %v5213, %v5607
      %v5609 = vpop.f32.mrb[0].mxu0
      %v5610 = vadd.f32 %v5213, %v5609
      %5611 = vmatprep.mubr.bf16.mxu0 0
      %5612 = vmatmul.mubr.bf16.gmra.mrb[0].mxu0 %v5255
      %v5613 = vpop.f32.mrb[0].mxu0
      %v5614 = vadd.f32 %v5218, %v5613
      %v5615 = vpop.f32.mrb[0].mxu0
      %v5616 = vadd.f32 %v5218, %v5615
      %v5617 = vpop.f32.mrb[0].mxu0
      %v5618 = vadd.f32 %v5223, %v5617
      %v5619 = vpop.f32.mrb[0].mxu0
      %v5620 = vadd.f32 %v5223, %v5619
      %5621 = vdwg.mxu0
      %5622 = vmatprep.subr.bf16.mxu0 %v5156
      %5623 = vmatpush1.bf16.msra.mxu0 %v5155
      %5624 = vmatprep.subr.bf16.mxu0 %v5172
      %5625 = vmatpush1.bf16.msra.mxu0 %v5171
      %5626 = vmatprep.subr.bf16.mxu0 0
      %5627 = vmatpush1.bf16.msra.mxu0 0
      %5628 = vmatprep.subr.bf16.mxu0 0
      %5629 = vmatpush1.bf16.msra.mxu0 0
      %5630 = vmatprep.subr.bf16.mxu0 0
      %5631 = vmatpush1.bf16.msra.mxu0 0
      %5632 = vmatprep.subr.bf16.mxu0 0
      %5633 = vmatpush1.bf16.msra.mxu0 0
      %5634 = vmatprep.subr.bf16.mxu0 0
      %5635 = vmatpush1.bf16.msra.mxu0 0
      %5636 = vmatprep.subr.bf16.mxu0 0
      %5637 = vmatpush1.bf16.msra.mxu0 0
      %5638 = vmatprep.subr.bf16.mxu0 0
      %5639 = vmatpush1.bf16.msra.mxu0 0
      %5640 = vmatprep.subr.bf16.mxu0 0
      %5641 = vmatpush1.bf16.msra.mxu0 0
      %5642 = vmatprep.subr.bf16.mxu0 0
      %5643 = vmatpush1.bf16.msra.mxu0 0
      %5644 = vmatprep.subr.bf16.mxu0 0
      %5645 = vmatpush1.bf16.msra.mxu0 0
      %5646 = vmatprep.subr.bf16.mxu0 0
      %5647 = vmatpush1.bf16.msra.mxu0 0
      %5648 = vmatprep.subr.bf16.mxu0 0
      %5649 = vmatpush1.bf16.msra.mxu0 0
      %5650 = vmatprep.subr.bf16.mxu0 0
      %5651 = vmatpush1.bf16.msra.mxu0 0
      %5652 = vmatprep.subr.bf16.mxu0 0
      %5653 = vmatpush1.bf16.msra.mxu0 0
      %5654 = vmatprep.mubr.bf16.mxu0 0
      %5655 = vmatmul.mubr.bf16.gmra.mrb[0].mxu0 %v5246
      %v5656 = vpop.f32.mrb[0].mxu0
      %v5657 = vadd.f32 %v5188, %v5656
      %v5658 = vpop.f32.mrb[0].mxu0
      %v5659 = vadd.f32 %v5188, %v5658
      %v5660 = vpop.f32.mrb[0].mxu0
      %v5661 = vadd.f32 %v5193, %v5660
      %v5662 = vpop.f32.mrb[0].mxu0
      %v5663 = vadd.f32 %v5193, %v5662
      %5664 = vmatprep.mubr.bf16.mxu0 0
      %5665 = vmatmul.mubr.bf16.gmra.mrb[0].mxu0 %v5249
      %v5666 = vpop.f32.mrb[0].mxu0
      %v5667 = vadd.f32 %v5198, %v5666
      %v5668 = vpop.f32.mrb[0].mxu0
      %v5669 = vadd.f32 %v5198, %v5668
      %v5670 = vpop.f32.mrb[0].mxu0
      %v5671 = vadd.f32 %v5203, %v5670
      %v5672 = vpop.f32.mrb[0].mxu0
      %v5673 = vadd.f32 %v5203, %v5672
      %5674 = vmatprep.mubr.bf16.mxu0 0
      %5675 = vmatmul.mubr.bf16.gmra.mrb[0].mxu0 %v5252
      %v5676 = vpop.f32.mrb[0].mxu0
      %v5677 = vadd.f32 %v5208, %v5676
      %v5678 = vpop.f32.mrb[0].mxu0
      %v5679 = vadd.f32 %v5208, %v5678
      %v5680 = vpop.f32.mrb[0].mxu0
      %v5681 = vadd.f32 %v5213, %v5680
      %v5682 = vpop.f32.mrb[0].mxu0
      %v5683 = vadd.f32 %v5213, %v5682
      %5684 = vmatprep.mubr.bf16.mxu0 0
      %5685 = vmatmul.mubr.bf16.gmra.mrb[0].mxu0 %v5255
      %v5686 = vpop.f32.mrb[0].mxu0
      %v5687 = vadd.f32 %v5218, %v5686
      %v5688 = vpop.f32.mrb[0].mxu0
      %v5689 = vadd.f32 %v5218, %v5688
      %v5690 = vpop.f32.mrb[0].mxu0
      %v5691 = vadd.f32 %v5223, %v5690
      %v5692 = vpop.f32.mrb[0].mxu0
      %v5693 = vadd.f32 %v5223, %v5692
      %5694 = vdwg.mxu0
      %5695 = vmatprep.subr.bf16.mxu0 %v5158
      %5696 = vmatpush1.bf16.msra.mxu0 %v5157
      %5697 = vmatprep.subr.bf16.mxu0 %v5174
      %5698 = vmatpush1.bf16.msra.mxu0 %v5173
      %5699 = vmatprep.subr.bf16.mxu0 0
      %5700 = vmatpush1.bf16.msra.mxu0 0
      %5701 = vmatprep.subr.bf16.mxu0 0
      %5702 = vmatpush1.bf16.msra.mxu0 0
      %5703 = vmatprep.subr.bf16.mxu0 0
      %5704 = vmatpush1.bf16.msra.mxu0 0
      %5705 = vmatprep.subr.bf16.mxu0 0
      %5706 = vmatpush1.bf16.msra.mxu0 0
      %5707 = vmatprep.subr.bf16.mxu0 0
      %5708 = vmatpush1.bf16.msra.mxu0 0
      %5709 = vmatprep.subr.bf16.mxu0 0
      %5710 = vmatpush1.bf16.msra.mxu0 0
      %5711 = vmatprep.subr.bf16.mxu0 0
      %5712 = vmatpush1.bf16.msra.mxu0 0
      %5713 = vmatprep.subr.bf16.mxu0 0
      %5714 = vmatpush1.bf16.msra.mxu0 0
      %5715 = vmatprep.subr.bf16.mxu0 0
      %5716 = vmatpush1.bf16.msra.mxu0 0
      %5717 = vmatprep.subr.bf16.mxu0 0
      %5718 = vmatpush1.bf16.msra.mxu0 0
      %5719 = vmatprep.subr.bf16.mxu0 0
      %5720 = vmatpush1.bf16.msra.mxu0 0
      %5721 = vmatprep.subr.bf16.mxu0 0
      %5722 = vmatpush1.bf16.msra.mxu0 0
      %5723 = vmatprep.subr.bf16.mxu0 0
      %5724 = vmatpush1.bf16.msra.mxu0 0
      %5725 = vmatprep.subr.bf16.mxu0 0
      %5726 = vmatpush1.bf16.msra.mxu0 0
      %5727 = vmatprep.mubr.bf16.mxu0 0
      %5728 = vmatmul.mubr.bf16.gmra.mrb[0].mxu0 %v5246
      %v5729 = vpop.f32.mrb[0].mxu0
      %v5730 = vadd.f32 %v5188, %v5729
      %v5731 = vpop.f32.mrb[0].mxu0
      %v5732 = vadd.f32 %v5188, %v5731
      %v5733 = vpop.f32.mrb[0].mxu0
      %v5734 = vadd.f32 %v5193, %v5733
      %v5735 = vpop.f32.mrb[0].mxu0
      %v5736 = vadd.f32 %v5193, %v5735
      %5737 = vmatprep.mubr.bf16.mxu0 0
      %5738 = vmatmul.mubr.bf16.gmra.mrb[0].mxu0 %v5249
      %v5739 = vpop.f32.mrb[0].mxu0
      %v5740 = vadd.f32 %v5198, %v5739
      %v5741 = vpop.f32.mrb[0].mxu0
      %v5742 = vadd.f32 %v5198, %v5741
      %v5743 = vpop.f32.mrb[0].mxu0
      %v5744 = vadd.f32 %v5203, %v5743
      %v5745 = vpop.f32.mrb[0].mxu0
      %v5746 = vadd.f32 %v5203, %v5745
      %5747 = vmatprep.mubr.bf16.mxu0 0
      %5748 = vmatmul.mubr.bf16.gmra.mrb[0].mxu0 %v5252
      %v5749 = vpop.f32.mrb[0].mxu0
      %v5750 = vadd.f32 %v5208, %v5749
      %v5751 = vpop.f32.mrb[0].mxu0
      %v5752 = vadd.f32 %v5208, %v5751
      %v5753 = vpop.f32.mrb[0].mxu0
      %v5754 = vadd.f32 %v5213, %v5753
      %v5755 = vpop.f32.mrb[0].mxu0
      %v5756 = vadd.f32 %v5213, %v5755
      %5757 = vmatprep.mubr.bf16.mxu0 0
      %5758 = vmatmul.mubr.bf16.gmra.mrb[0].mxu0 %v5255
      %v5759 = vpop.f32.mrb[0].mxu0
      %v5760 = vadd.f32 %v5218, %v5759
      %v5761 = vpop.f32.mrb[0].mxu0
      %v5762 = vadd.f32 %v5218, %v5761
      %v5763 = vpop.f32.mrb[0].mxu0
      %v5764 = vadd.f32 %v5223, %v5763
      %v5765 = vpop.f32.mrb[0].mxu0
      %v5766 = vadd.f32 %v5223, %v5765
      %5767 = vdwg.mxu0
      %5768 = vmatprep.subr.bf16.mxu0 %v5160
      %5769 = vmatpush1.bf16.msra.mxu0 %v5159
      %5770 = vmatprep.subr.bf16.mxu0 %v5176
      %5771 = vmatpush1.bf16.msra.mxu0 %v5175
      %5772 = vmatprep.subr.bf16.mxu0 0
      %5773 = vmatpush1.bf16.msra.mxu0 0
      %5774 = vmatprep.subr.bf16.mxu0 0
      %5775 = vmatpush1.bf16.msra.mxu0 0
      %5776 = vmatprep.subr.bf16.mxu0 0
      %5777 = vmatpush1.bf16.msra.mxu0 0
      %5778 = vmatprep.subr.bf16.mxu0 0
      %5779 = vmatpush1.bf16.msra.mxu0 0
      %5780 = vmatprep.subr.bf16.mxu0 0
      %5781 = vmatpush1.bf16.msra.mxu0 0
      %5782 = vmatprep.subr.bf16.mxu0 0
      %5783 = vmatpush1.bf16.msra.mxu0 0
      %5784 = vmatprep.subr.bf16.mxu0 0
      %5785 = vmatpush1.bf16.msra.mxu0 0
      %5786 = vmatprep.subr.bf16.mxu0 0
      %5787 = vmatpush1.bf16.msra.mxu0 0
      %5788 = vmatprep.subr.bf16.mxu0 0
      %5789 = vmatpush1.bf16.msra.mxu0 0
      %5790 = vmatprep.subr.bf16.mxu0 0
      %5791 = vmatpush1.bf16.msra.mxu0 0
      %5792 = vmatprep.subr.bf16.mxu0 0
      %5793 = vmatpush1.bf16.msra.mxu0 0
      %5794 = vmatprep.subr.bf16.mxu0 0
      %5795 = vmatpush1.bf16.msra.mxu0 0
      %5796 = vmatprep.subr.bf16.mxu0 0
      %5797 = vmatpush1.bf16.msra.mxu0 0
      %5798 = vmatprep.subr.bf16.mxu0 0
      %5799 = vmatpush1.bf16.msra.mxu0 0
      %5800 = vmatprep.mubr.bf16.mxu0 0
      %5801 = vmatmul.mubr.bf16.gmra.mrb[0].mxu0 %v5246
      %v5802 = vpop.f32.mrb[0].mxu0
      %v5803 = vadd.f32 %v5188, %v5802
      %v5804 = vpop.f32.mrb[0].mxu0
      %v5805 = vadd.f32 %v5188, %v5804
      %v5806 = vpop.f32.mrb[0].mxu0
      %v5807 = vadd.f32 %v5193, %v5806
      %v5808 = vpop.f32.mrb[0].mxu0
      %v5809 = vadd.f32 %v5193, %v5808
      %5810 = vmatprep.mubr.bf16.mxu0 0
      %5811 = vmatmul.mubr.bf16.gmra.mrb[0].mxu0 %v5249
      %v5812 = vpop.f32.mrb[0].mxu0
      %v5813 = vadd.f32 %v5198, %v5812
      %v5814 = vpop.f32.mrb[0].mxu0
      %v5815 = vadd.f32 %v5198, %v5814
      %v5816 = vpop.f32.mrb[0].mxu0
      %v5817 = vadd.f32 %v5203, %v5816
      %v5818 = vpop.f32.mrb[0].mxu0
      %v5819 = vadd.f32 %v5203, %v5818
      %5820 = vmatprep.mubr.bf16.mxu0 0
      %5821 = vmatmul.mubr.bf16.gmra.mrb[0].mxu0 %v5252
      %v5822 = vpop.f32.mrb[0].mxu0
      %v5823 = vadd.f32 %v5208, %v5822
      %v5824 = vpop.f32.mrb[0].mxu0
      %v5825 = vadd.f32 %v5208, %v5824
      %v5826 = vpop.f32.mrb[0].mxu0
      %v5827 = vadd.f32 %v5213, %v5826
      %v5828 = vpop.f32.mrb[0].mxu0
      %v5829 = vadd.f32 %v5213, %v5828
      %5830 = vmatprep.mubr.bf16.mxu0 0
      %5831 = vmatmul.mubr.bf16.gmra.mrb[0].mxu0 %v5255
      %v5832 = vpop.f32.mrb[0].mxu0
      %v5833 = vadd.f32 %v5218, %v5832
      %v5834 = vpop.f32.mrb[0].mxu0
      %v5835 = vadd.f32 %v5218, %v5834
      %v5836 = vpop.f32.mrb[0].mxu0
      %v5837 = vadd.f32 %v5223, %v5836
      %v5838 = vpop.f32.mrb[0].mxu0
      %v5839 = vadd.f32 %v5223, %v5838
      %5840 = vdwg.mxu0
      %v5841 = vmul.f32 %v5292, 0.5
      %v5842 = vmul.f32 %v5294, 0.5
      %v5843 = vmul.f32 %v5365, 0.5
      %v5844 = vmul.f32 %v5367, 0.5
      %v5845 = vmul.f32 %v5438, 0.5
      %v5846 = vmul.f32 %v5440, 0.5
      %v5847 = vmul.f32 %v5511, 0.5
      %v5848 = vmul.f32 %v5513, 0.5
      %v5849 = vmul.f32 %v5584, 0.5
      %v5850 = vmul.f32 %v5586, 0.5
      %v5851 = vmul.f32 %v5657, 0.5
      %v5852 = vmul.f32 %v5659, 0.5
      %v5853 = vmul.f32 %v5730, 0.5
      %v5854 = vmul.f32 %v5732, 0.5
      %v5855 = vmul.f32 %v5803, 0.5
      %v5856 = vmul.f32 %v5805, 0.5
      %v5857 = vmul.f32 %v5296, 0.5
      %v5858 = vmul.f32 %v5298, 0.5
      %v5859 = vmul.f32 %v5369, 0.5
      %v5860 = vmul.f32 %v5371, 0.5
      %v5861 = vmul.f32 %v5442, 0.5
      %v5862 = vmul.f32 %v5444, 0.5
      %v5863 = vmul.f32 %v5515, 0.5
      %v5864 = vmul.f32 %v5517, 0.5
      %v5865 = vmul.f32 %v5588, 0.5
      %v5866 = vmul.f32 %v5590, 0.5
      %v5867 = vmul.f32 %v5661, 0.5
      %v5868 = vmul.f32 %v5663, 0.5
      %v5869 = vmul.f32 %v5734, 0.5
      %v5870 = vmul.f32 %v5736, 0.5
      %v5871 = vmul.f32 %v5807, 0.5
      %v5872 = vmul.f32 %v5809, 0.5
      %v5873 = vmul.f32 %v5302, 0.5
      %v5874 = vmul.f32 %v5304, 0.5
      %v5875 = vmul.f32 %v5375, 0.5
      %v5876 = vmul.f32 %v5377, 0.5
      %v5877 = vmul.f32 %v5448, 0.5
      %v5878 = vmul.f32 %v5450, 0.5
      %v5879 = vmul.f32 %v5521, 0.5
      %v5880 = vmul.f32 %v5523, 0.5
      %v5881 = vmul.f32 %v5594, 0.5
      %v5882 = vmul.f32 %v5596, 0.5
      %v5883 = vmul.f32 %v5667, 0.5
      %v5884 = vmul.f32 %v5669, 0.5
      %v5885 = vmul.f32 %v5740, 0.5
      %v5886 = vmul.f32 %v5742, 0.5
      %v5887 = vmul.f32 %v5813, 0.5
      %v5888 = vmul.f32 %v5815, 0.5
      %v5889 = vmul.f32 %v5306, 0.5
      %v5890 = vmul.f32 %v5308, 0.5
      %v5891 = vmul.f32 %v5379, 0.5
      %v5892 = vmul.f32 %v5381, 0.5
      %v5893 = vmul.f32 %v5452, 0.5
      %v5894 = vmul.f32 %v5454, 0.5
      %v5895 = vmul.f32 %v5525, 0.5
      %v5896 = vmul.f32 %v5527, 0.5
      %v5897 = vmul.f32 %v5598, 0.5
      %v5898 = vmul.f32 %v5600, 0.5
      %v5899 = vmul.f32 %v5671, 0.5
      %v5900 = vmul.f32 %v5673, 0.5
      %v5901 = vmul.f32 %v5744, 0.5
      %v5902 = vmul.f32 %v5746, 0.5
      %v5903 = vmul.f32 %v5817, 0.5
      %v5904 = vmul.f32 %v5819, 0.5
      %v5905 = vmul.f32 %v5312, 0.5
      %v5906 = vmul.f32 %v5314, 0.5
      %v5907 = vmul.f32 %v5385, 0.5
      %v5908 = vmul.f32 %v5387, 0.5
      %v5909 = vmul.f32 %v5458, 0.5
      %v5910 = vmul.f32 %v5460, 0.5
      %v5911 = vmul.f32 %v5531, 0.5
      %v5912 = vmul.f32 %v5533, 0.5
      %v5913 = vmul.f32 %v5604, 0.5
      %v5914 = vmul.f32 %v5606, 0.5
      %v5915 = vmul.f32 %v5677, 0.5
      %v5916 = vmul.f32 %v5679, 0.5
      %v5917 = vmul.f32 %v5750, 0.5
      %v5918 = vmul.f32 %v5752, 0.5
      %v5919 = vmul.f32 %v5823, 0.5
      %v5920 = vmul.f32 %v5825, 0.5
      %v5921 = vmul.f32 %v5316, 0.5
      %v5922 = vmul.f32 %v5318, 0.5
      %v5923 = vmul.f32 %v5389, 0.5
      %v5924 = vmul.f32 %v5391, 0.5
      %v5925 = vmul.f32 %v5462, 0.5
      %v5926 = vmul.f32 %v5464, 0.5
      %v5927 = vmul.f32 %v5535, 0.5
      %v5928 = vmul.f32 %v5537, 0.5
      %v5929 = vmul.f32 %v5608, 0.5
      %v5930 = vmul.f32 %v5610, 0.5
      %v5931 = vmul.f32 %v5681, 0.5
      %v5932 = vmul.f32 %v5683, 0.5
      %v5933 = vmul.f32 %v5754, 0.5
      %v5934 = vmul.f32 %v5756, 0.5
      %v5935 = vmul.f32 %v5827, 0.5
      %v5936 = vmul.f32 %v5829, 0.5
      %v5937 = vmul.f32 %v5322, 0.5
      %v5938 = vmul.f32 %v5324, 0.5
      %v5939 = vmul.f32 %v5395, 0.5
      %v5940 = vmul.f32 %v5397, 0.5
      %v5941 = vmul.f32 %v5468, 0.5
      %v5942 = vmul.f32 %v5470, 0.5
      %v5943 = vmul.f32 %v5541, 0.5
      %v5944 = vmul.f32 %v5543, 0.5
      %v5945 = vmul.f32 %v5614, 0.5
      %v5946 = vmul.f32 %v5616, 0.5
      %v5947 = vmul.f32 %v5687, 0.5
      %v5948 = vmul.f32 %v5689, 0.5
      %v5949 = vmul.f32 %v5760, 0.5
      %v5950 = vmul.f32 %v5762, 0.5
      %v5951 = vmul.f32 %v5833, 0.5
      %v5952 = vmul.f32 %v5835, 0.5
      %v5953 = vmul.f32 %v5326, 0.5
      %v5954 = vmul.f32 %v5328, 0.5
      %v5955 = vmul.f32 %v5399, 0.5
      %v5956 = vmul.f32 %v5401, 0.5
      %v5957 = vmul.f32 %v5472, 0.5
      %v5958 = vmul.f32 %v5474, 0.5
      %v5959 = vmul.f32 %v5545, 0.5
      %v5960 = vmul.f32 %v5547, 0.5
      %v5961 = vmul.f32 %v5618, 0.5
      %v5962 = vmul.f32 %v5620, 0.5
      %v5963 = vmul.f32 %v5691, 0.5
      %v5964 = vmul.f32 %v5693, 0.5
      %v5965 = vmul.f32 %v5764, 0.5
      %v5966 = vmul.f32 %v5766, 0.5
      %v5967 = vmul.f32 %v5837, 0.5
      %v5968 = vmul.f32 %v5839, 0.5
      %v5969 = vmul.f32 %v5292, 0.70710677
      %v5970 = vmul.f32 %v5294, 0.70710677
      %v5971 = vmul.f32 %v5365, 0.70710677
      %v5972 = vmul.f32 %v5367, 0.70710677
      %v5973 = vmul.f32 %v5438, 0.70710677
      %v5974 = vmul.f32 %v5440, 0.70710677
      %v5975 = vmul.f32 %v5511, 0.70710677
      %v5976 = vmul.f32 %v5513, 0.70710677
      %v5977 = vmul.f32 %v5584, 0.70710677
      %v5978 = vmul.f32 %v5586, 0.70710677
      %v5979 = vmul.f32 %v5657, 0.70710677
      %v5980 = vmul.f32 %v5659, 0.70710677
      %v5981 = vmul.f32 %v5730, 0.70710677
      %v5982 = vmul.f32 %v5732, 0.70710677
      %v5983 = vmul.f32 %v5803, 0.70710677
      %v5984 = vmul.f32 %v5805, 0.70710677
      %v5985 = vmul.f32 %v5296, 0.70710677
      %v5986 = vmul.f32 %v5298, 0.70710677
      %v5987 = vmul.f32 %v5369, 0.70710677
      %v5988 = vmul.f32 %v5371, 0.70710677
      %v5989 = vmul.f32 %v5442, 0.70710677
      %v5990 = vmul.f32 %v5444, 0.70710677
      %v5991 = vmul.f32 %v5515, 0.70710677
      %v5992 = vmul.f32 %v5517, 0.70710677
      %v5993 = vmul.f32 %v5588, 0.70710677
      %v5994 = vmul.f32 %v5590, 0.70710677
      %v5995 = vmul.f32 %v5661, 0.70710677
      %v5996 = vmul.f32 %v5663, 0.70710677
      %v5997 = vmul.f32 %v5734, 0.70710677
      %v5998 = vmul.f32 %v5736, 0.70710677
      %v5999 = vmul.f32 %v5807, 0.70710677
      %v6000 = vmul.f32 %v5809, 0.70710677
      %v6001 = vmul.f32 %v5302, 0.70710677
      %v6002 = vmul.f32 %v5304, 0.70710677
      %v6003 = vmul.f32 %v5375, 0.70710677
      %v6004 = vmul.f32 %v5377, 0.70710677
      %v6005 = vmul.f32 %v5448, 0.70710677
      %v6006 = vmul.f32 %v5450, 0.70710677
      %v6007 = vmul.f32 %v5521, 0.70710677
      %v6008 = vmul.f32 %v5523, 0.70710677
      %v6009 = vmul.f32 %v5594, 0.70710677
      %v6010 = vmul.f32 %v5596, 0.70710677
      %v6011 = vmul.f32 %v5667, 0.70710677
      %v6012 = vmul.f32 %v5669, 0.70710677
      %v6013 = vmul.f32 %v5740, 0.70710677
      %v6014 = vmul.f32 %v5742, 0.70710677
      %v6015 = vmul.f32 %v5813, 0.70710677
      %v6016 = vmul.f32 %v5815, 0.70710677
      %v6017 = vmul.f32 %v5306, 0.70710677
      %v6018 = vmul.f32 %v5308, 0.70710677
      %v6019 = vmul.f32 %v5379, 0.70710677
      %v6020 = vmul.f32 %v5381, 0.70710677
      %v6021 = vmul.f32 %v5452, 0.70710677
      %v6022 = vmul.f32 %v5454, 0.70710677
      %v6023 = vmul.f32 %v5525, 0.70710677
      %v6024 = vmul.f32 %v5527, 0.70710677
      %v6025 = vmul.f32 %v5598, 0.70710677
      %v6026 = vmul.f32 %v5600, 0.70710677
      %v6027 = vmul.f32 %v5671, 0.70710677
      %v6028 = vmul.f32 %v5673, 0.70710677
      %v6029 = vmul.f32 %v5744, 0.70710677
      %v6030 = vmul.f32 %v5746, 0.70710677
      %v6031 = vmul.f32 %v5817, 0.70710677
      %v6032 = vmul.f32 %v5819, 0.70710677
      %v6033 = vmul.f32 %v5312, 0.70710677
      %v6034 = vmul.f32 %v5314, 0.70710677
      %v6035 = vmul.f32 %v5385, 0.70710677
      %v6036 = vmul.f32 %v5387, 0.70710677
      %v6037 = vmul.f32 %v5458, 0.70710677
      %v6038 = vmul.f32 %v5460, 0.70710677
      %v6039 = vmul.f32 %v5531, 0.70710677
      %v6040 = vmul.f32 %v5533, 0.70710677
      %v6041 = vmul.f32 %v5604, 0.70710677
      %v6042 = vmul.f32 %v5606, 0.70710677
      %v6043 = vmul.f32 %v5677, 0.70710677
      %v6044 = vmul.f32 %v5679, 0.70710677
      %v6045 = vmul.f32 %v5750, 0.70710677
      %v6046 = vmul.f32 %v5752, 0.70710677
      %v6047 = vmul.f32 %v5823, 0.70710677
      %v6048 = vmul.f32 %v5825, 0.70710677
      %v6049 = vmul.f32 %v5316, 0.70710677
      %v6050 = vmul.f32 %v5318, 0.70710677
      %v6051 = vmul.f32 %v5389, 0.70710677
      %v6052 = vmul.f32 %v5391, 0.70710677
      %v6053 = vmul.f32 %v5462, 0.70710677
      %v6054 = vmul.f32 %v5464, 0.70710677
      %v6055 = vmul.f32 %v5535, 0.70710677
      %v6056 = vmul.f32 %v5537, 0.70710677
      %v6057 = vmul.f32 %v5608, 0.70710677
      %v6058 = vmul.f32 %v5610, 0.70710677
      %v6059 = vmul.f32 %v5681, 0.70710677
      %v6060 = vmul.f32 %v5683, 0.70710677
      %v6061 = vmul.f32 %v5754, 0.70710677
      %v6062 = vmul.f32 %v5756, 0.70710677
      %v6063 = vmul.f32 %v5827, 0.70710677
      %v6064 = vmul.f32 %v5829, 0.70710677
      %v6065 = vmul.f32 %v5322, 0.70710677
      %v6066 = vmul.f32 %v5324, 0.70710677
      %v6067 = vmul.f32 %v5395, 0.70710677
      %v6068 = vmul.f32 %v5397, 0.70710677
      %v6069 = vmul.f32 %v5468, 0.70710677
      %v6070 = vmul.f32 %v5470, 0.70710677
      %v6071 = vmul.f32 %v5541, 0.70710677
      %v6072 = vmul.f32 %v5543, 0.70710677
      %v6073 = vmul.f32 %v5614, 0.70710677
      %v6074 = vmul.f32 %v5616, 0.70710677
      %v6075 = vmul.f32 %v5687, 0.70710677
      %v6076 = vmul.f32 %v5689, 0.70710677
      %v6077 = vmul.f32 %v5760, 0.70710677
      %v6078 = vmul.f32 %v5762, 0.70710677
      %v6079 = vmul.f32 %v5833, 0.70710677
      %v6080 = vmul.f32 %v5835, 0.70710677
      %v6081 = vmul.f32 %v5326, 0.70710677
      %v6082 = vmul.f32 %v5328, 0.70710677
      %v6083 = vmul.f32 %v5399, 0.70710677
      %v6084 = vmul.f32 %v5401, 0.70710677
      %v6085 = vmul.f32 %v5472, 0.70710677
      %v6086 = vmul.f32 %v5474, 0.70710677
      %v6087 = vmul.f32 %v5545, 0.70710677
      %v6088 = vmul.f32 %v5547, 0.70710677
      %v6089 = vmul.f32 %v5618, 0.70710677
      %v6090 = vmul.f32 %v5620, 0.70710677
      %v6091 = vmul.f32 %v5691, 0.70710677
      %v6092 = vmul.f32 %v5693, 0.70710677
      %v6093 = vmul.f32 %v5764, 0.70710677
      %v6094 = vmul.f32 %v5766, 0.70710677
      %v6095 = vmul.f32 %v5837, 0.70710677
      %v6096 = vmul.f32 %v5839, 0.70710677
      %v6097 = verf.f32.pop %v5969
      %v6098 = verf.f32.pop %v5970
      %v6099 = verf.f32.pop %v5971
      %v6100 = verf.f32.pop %v5972
      %v6101 = verf.f32.pop %v5973
      %v6102 = verf.f32.pop %v5974
      %v6103 = verf.f32.pop %v5975
      %v6104 = verf.f32.pop %v5976
      %v6105 = verf.f32.pop %v5977
      %v6106 = verf.f32.pop %v5978
      %v6107 = verf.f32.pop %v5979
      %v6108 = verf.f32.pop %v5980
      %v6109 = verf.f32.pop %v5981
      %v6110 = verf.f32.pop %v5982
      %v6111 = verf.f32.pop %v5983
      %v6112 = verf.f32.pop %v5984
      %v6113 = verf.f32.pop %v5985
      %v6114 = verf.f32.pop %v5986
      %v6115 = verf.f32.pop %v5987
      %v6116 = verf.f32.pop %v5988
      %v6117 = verf.f32.pop %v5989
      %v6118 = verf.f32.pop %v5990
      %v6119 = verf.f32.pop %v5991
      %v6120 = verf.f32.pop %v5992
      %v6121 = verf.f32.pop %v5993
      %v6122 = verf.f32.pop %v5994
      %v6123 = verf.f32.pop %v5995
      %v6124 = verf.f32.pop %v5996
      %v6125 = verf.f32.pop %v5997
      %v6126 = verf.f32.pop %v5998
      %v6127 = verf.f32.pop %v5999
      %v6128 = verf.f32.pop %v6000
      %v6129 = verf.f32.pop %v6001
      %v6130 = verf.f32.pop %v6002
      %v6131 = verf.f32.pop %v6003
      %v6132 = verf.f32.pop %v6004
      %v6133 = verf.f32.pop %v6005
      %v6134 = verf.f32.pop %v6006
      %v6135 = verf.f32.pop %v6007
      %v6136 = verf.f32.pop %v6008
      %v6137 = verf.f32.pop %v6009
      %v6138 = verf.f32.pop %v6010
      %v6139 = verf.f32.pop %v6011
      %v6140 = verf.f32.pop %v6012
      %v6141 = verf.f32.pop %v6013
      %v6142 = verf.f32.pop %v6014
      %v6143 = verf.f32.pop %v6015
      %v6144 = verf.f32.pop %v6016
      %v6145 = verf.f32.pop %v6017
      %v6146 = verf.f32.pop %v6018
      %v6147 = verf.f32.pop %v6019
      %v6148 = verf.f32.pop %v6020
      %v6149 = verf.f32.pop %v6021
      %v6150 = verf.f32.pop %v6022
      %v6151 = verf.f32.pop %v6023
      %v6152 = verf.f32.pop %v6024
      %v6153 = verf.f32.pop %v6025
      %v6154 = verf.f32.pop %v6026
      %v6155 = verf.f32.pop %v6027
      %v6156 = verf.f32.pop %v6028
      %v6157 = verf.f32.pop %v6029
      %v6158 = verf.f32.pop %v6030
      %v6159 = verf.f32.pop %v6031
      %v6160 = verf.f32.pop %v6032
      %v6161 = verf.f32.pop %v6033
      %v6162 = verf.f32.pop %v6034
      %v6163 = verf.f32.pop %v6035
      %v6164 = verf.f32.pop %v6036
      %v6165 = verf.f32.pop %v6037
      %v6166 = verf.f32.pop %v6038
      %v6167 = verf.f32.pop %v6039
      %v6168 = verf.f32.pop %v6040
      %v6169 = verf.f32.pop %v6041
      %v6170 = verf.f32.pop %v6042
      %v6171 = verf.f32.pop %v6043
      %v6172 = verf.f32.pop %v6044
      %v6173 = verf.f32.pop %v6045
      %v6174 = verf.f32.pop %v6046
      %v6175 = verf.f32.pop %v6047
      %v6176 = verf.f32.pop %v6048
      %v6177 = verf.f32.pop %v6049
      %v6178 = verf.f32.pop %v6050
      %v6179 = verf.f32.pop %v6051
      %v6180 = verf.f32.pop %v6052
      %v6181 = verf.f32.pop %v6053
      %v6182 = verf.f32.pop %v6054
      %v6183 = verf.f32.pop %v6055
      %v6184 = verf.f32.pop %v6056
      %v6185 = verf.f32.pop %v6057
      %v6186 = verf.f32.pop %v6058
      %v6187 = verf.f32.pop %v6059
      %v6188 = verf.f32.pop %v6060
      %v6189 = verf.f32.pop %v6061
      %v6190 = verf.f32.pop %v6062
      %v6191 = verf.f32.pop %v6063
      %v6192 = verf.f32.pop %v6064
      %v6193 = verf.f32.pop %v6065
      %v6194 = verf.f32.pop %v6066
      %v6195 = verf.f32.pop %v6067
      %v6196 = verf.f32.pop %v6068
      %v6197 = verf.f32.pop %v6069
      %v6198 = verf.f32.pop %v6070
      %v6199 = verf.f32.pop %v6071
      %v6200 = verf.f32.pop %v6072
      %v6201 = verf.f32.pop %v6073
      %v6202 = verf.f32.pop %v6074
      %v6203 = verf.f32.pop %v6075
      %v6204 = verf.f32.pop %v6076
      %v6205 = verf.f32.pop %v6077
      %v6206 = verf.f32.pop %v6078
      %v6207 = verf.f32.pop %v6079
      %v6208 = verf.f32.pop %v6080
      %v6209 = verf.f32.pop %v6081
      %v6210 = verf.f32.pop %v6082
      %v6211 = verf.f32.pop %v6083
      %v6212 = verf.f32.pop %v6084
      %v6213 = verf.f32.pop %v6085
      %v6214 = verf.f32.pop %v6086
      %v6215 = verf.f32.pop %v6087
      %v6216 = verf.f32.pop %v6088
      %v6217 = verf.f32.pop %v6089
      %v6218 = verf.f32.pop %v6090
      %v6219 = verf.f32.pop %v6091
      %v6220 = verf.f32.pop %v6092
      %v6221 = verf.f32.pop %v6093
      %v6222 = verf.f32.pop %v6094
      %v6223 = verf.f32.pop %v6095
      %v6224 = verf.f32.pop %v6096
      %v6225 = vadd.f32 %v6097, 1.0
      %v6226 = vadd.f32 %v6098, 1.0
      %v6227 = vadd.f32 %v6099, 1.0
      %v6228 = vadd.f32 %v6100, 1.0
      %v6229 = vadd.f32 %v6101, 1.0
      %v6230 = vadd.f32 %v6102, 1.0
      %v6231 = vadd.f32 %v6103, 1.0
      %v6232 = vadd.f32 %v6104, 1.0
      %v6233 = vadd.f32 %v6105, 1.0
      %v6234 = vadd.f32 %v6106, 1.0
      %v6235 = vadd.f32 %v6107, 1.0
      %v6236 = vadd.f32 %v6108, 1.0
      %v6237 = vadd.f32 %v6109, 1.0
      %v6238 = vadd.f32 %v6110, 1.0
      %v6239 = vadd.f32 %v6111, 1.0
      %v6240 = vadd.f32 %v6112, 1.0
      %v6241 = vadd.f32 %v6113, 1.0
      %v6242 = vadd.f32 %v6114, 1.0
      %v6243 = vadd.f32 %v6115, 1.0
      %v6244 = vadd.f32 %v6116, 1.0
      %v6245 = vadd.f32 %v6117, 1.0
      %v6246 = vadd.f32 %v6118, 1.0
      %v6247 = vadd.f32 %v6119, 1.0
      %v6248 = vadd.f32 %v6120, 1.0
      %v6249 = vadd.f32 %v6121, 1.0
      %v6250 = vadd.f32 %v6122, 1.0
      %v6251 = vadd.f32 %v6123, 1.0
      %v6252 = vadd.f32 %v6124, 1.0
      %v6253 = vadd.f32 %v6125, 1.0
      %v6254 = vadd.f32 %v6126, 1.0
      %v6255 = vadd.f32 %v6127, 1.0
      %v6256 = vadd.f32 %v6128, 1.0
      %v6257 = vadd.f32 %v6129, 1.0
      %v6258 = vadd.f32 %v6130, 1.0
      %v6259 = vadd.f32 %v6131, 1.0
      %v6260 = vadd.f32 %v6132, 1.0
      %v6261 = vadd.f32 %v6133, 1.0
      %v6262 = vadd.f32 %v6134, 1.0
      %v6263 = vadd.f32 %v6135, 1.0
      %v6264 = vadd.f32 %v6136, 1.0
      %v6265 = vadd.f32 %v6137, 1.0
      %v6266 = vadd.f32 %v6138, 1.0
      %v6267 = vadd.f32 %v6139, 1.0
      %v6268 = vadd.f32 %v6140, 1.0
      %v6269 = vadd.f32 %v6141, 1.0
      %v6270 = vadd.f32 %v6142, 1.0
      %v6271 = vadd.f32 %v6143, 1.0
      %v6272 = vadd.f32 %v6144, 1.0
      %v6273 = vadd.f32 %v6145, 1.0
      %v6274 = vadd.f32 %v6146, 1.0
      %v6275 = vadd.f32 %v6147, 1.0
      %v6276 = vadd.f32 %v6148, 1.0
      %v6277 = vadd.f32 %v6149, 1.0
      %v6278 = vadd.f32 %v6150, 1.0
      %v6279 = vadd.f32 %v6151, 1.0
      %v6280 = vadd.f32 %v6152, 1.0
      %v6281 = vadd.f32 %v6153, 1.0
      %v6282 = vadd.f32 %v6154, 1.0
      %v6283 = vadd.f32 %v6155, 1.0
      %v6284 = vadd.f32 %v6156, 1.0
      %v6285 = vadd.f32 %v6157, 1.0
      %v6286 = vadd.f32 %v6158, 1.0
      %v6287 = vadd.f32 %v6159, 1.0
      %v6288 = vadd.f32 %v6160, 1.0
      %v6289 = vadd.f32 %v6161, 1.0
      %v6290 = vadd.f32 %v6162, 1.0
      %v6291 = vadd.f32 %v6163, 1.0
      %v6292 = vadd.f32 %v6164, 1.0
      %v6293 = vadd.f32 %v6165, 1.0
      %v6294 = vadd.f32 %v6166, 1.0
      %v6295 = vadd.f32 %v6167, 1.0
      %v6296 = vadd.f32 %v6168, 1.0
      %v6297 = vadd.f32 %v6169, 1.0
      %v6298 = vadd.f32 %v6170, 1.0
      %v6299 = vadd.f32 %v6171, 1.0
      %v6300 = vadd.f32 %v6172, 1.0
      %v6301 = vadd.f32 %v6173, 1.0
      %v6302 = vadd.f32 %v6174, 1.0
      %v6303 = vadd.f32 %v6175, 1.0
      %v6304 = vadd.f32 %v6176, 1.0
      %v6305 = vadd.f32 %v6177, 1.0
      %v6306 = vadd.f32 %v6178, 1.0
      %v6307 = vadd.f32 %v6179, 1.0
      %v6308 = vadd.f32 %v6180, 1.0
      %v6309 = vadd.f32 %v6181, 1.0
      %v6310 = vadd.f32 %v6182, 1.0
      %v6311 = vadd.f32 %v6183, 1.0
      %v6312 = vadd.f32 %v6184, 1.0
      %v6313 = vadd.f32 %v6185, 1.0
      %v6314 = vadd.f32 %v6186, 1.0
      %v6315 = vadd.f32 %v6187, 1.0
      %v6316 = vadd.f32 %v6188, 1.0
      %v6317 = vadd.f32 %v6189, 1.0
      %v6318 = vadd.f32 %v6190, 1.0
      %v6319 = vadd.f32 %v6191, 1.0
      %v6320 = vadd.f32 %v6192, 1.0
      %v6321 = vadd.f32 %v6193, 1.0
      %v6322 = vadd.f32 %v6194, 1.0
      %v6323 = vadd.f32 %v6195, 1.0
      %v6324 = vadd.f32 %v6196, 1.0
      %v6325 = vadd.f32 %v6197, 1.0
      %v6326 = vadd.f32 %v6198, 1.0
      %v6327 = vadd.f32 %v6199, 1.0
      %v6328 = vadd.f32 %v6200, 1.0
      %v6329 = vadd.f32 %v6201, 1.0
      %v6330 = vadd.f32 %v6202, 1.0
      %v6331 = vadd.f32 %v6203, 1.0
      %v6332 = vadd.f32 %v6204, 1.0
      %v6333 = vadd.f32 %v6205, 1.0
      %v6334 = vadd.f32 %v6206, 1.0
      %v6335 = vadd.f32 %v6207, 1.0
      %v6336 = vadd.f32 %v6208, 1.0
      %v6337 = vadd.f32 %v6209, 1.0
      %v6338 = vadd.f32 %v6210, 1.0
      %v6339 = vadd.f32 %v6211, 1.0
      %v6340 = vadd.f32 %v6212, 1.0
      %v6341 = vadd.f32 %v6213, 1.0
      %v6342 = vadd.f32 %v6214, 1.0
      %v6343 = vadd.f32 %v6215, 1.0
      %v6344 = vadd.f32 %v6216, 1.0
      %v6345 = vadd.f32 %v6217, 1.0
      %v6346 = vadd.f32 %v6218, 1.0
      %v6347 = vadd.f32 %v6219, 1.0
      %v6348 = vadd.f32 %v6220, 1.0
      %v6349 = vadd.f32 %v6221, 1.0
      %v6350 = vadd.f32 %v6222, 1.0
      %v6351 = vadd.f32 %v6223, 1.0
      %v6352 = vadd.f32 %v6224, 1.0
      %v6353 = vmul.f32 %v5841, %v6225
      %v6354 = vmul.f32 %v5842, %v6226
      %v6355 = vmul.f32 %v5843, %v6227
      %v6356 = vmul.f32 %v5844, %v6228
      %v6357 = vmul.f32 %v5845, %v6229
      %v6358 = vmul.f32 %v5846, %v6230
      %v6359 = vmul.f32 %v5847, %v6231
      %v6360 = vmul.f32 %v5848, %v6232
      %v6361 = vmul.f32 %v5849, %v6233
      %v6362 = vmul.f32 %v5850, %v6234
      %v6363 = vmul.f32 %v5851, %v6235
      %v6364 = vmul.f32 %v5852, %v6236
      %v6365 = vmul.f32 %v5853, %v6237
      %v6366 = vmul.f32 %v5854, %v6238
      %v6367 = vmul.f32 %v5855, %v6239
      %v6368 = vmul.f32 %v5856, %v6240
      %v6369 = vmul.f32 %v5857, %v6241
      %v6370 = vmul.f32 %v5858, %v6242
      %v6371 = vmul.f32 %v5859, %v6243
      %v6372 = vmul.f32 %v5860, %v6244
      %v6373 = vmul.f32 %v5861, %v6245
      %v6374 = vmul.f32 %v5862, %v6246
      %v6375 = vmul.f32 %v5863, %v6247
      %v6376 = vmul.f32 %v5864, %v6248
      %v6377 = vmul.f32 %v5865, %v6249
      %v6378 = vmul.f32 %v5866, %v6250
      %v6379 = vmul.f32 %v5867, %v6251
      %v6380 = vmul.f32 %v5868, %v6252
      %v6381 = vmul.f32 %v5869, %v6253
      %v6382 = vmul.f32 %v5870, %v6254
      %v6383 = vmul.f32 %v5871, %v6255
      %v6384 = vmul.f32 %v5872, %v6256
      %v6385 = vmul.f32 %v5873, %v6257
      %v6386 = vmul.f32 %v5874, %v6258
      %v6387 = vmul.f32 %v5875, %v6259
      %v6388 = vmul.f32 %v5876, %v6260
      %v6389 = vmul.f32 %v5877, %v6261
      %v6390 = vmul.f32 %v5878, %v6262
      %v6391 = vmul.f32 %v5879, %v6263
      %v6392 = vmul.f32 %v5880, %v6264
      %v6393 = vmul.f32 %v5881, %v6265
      %v6394 = vmul.f32 %v5882, %v6266
      %v6395 = vmul.f32 %v5883, %v6267
      %v6396 = vmul.f32 %v5884, %v6268
      %v6397 = vmul.f32 %v5885, %v6269
      %v6398 = vmul.f32 %v5886, %v6270
      %v6399 = vmul.f32 %v5887, %v6271
      %v6400 = vmul.f32 %v5888, %v6272
      %v6401 = vmul.f32 %v5889, %v6273
      %v6402 = vmul.f32 %v5890, %v6274
      %v6403 = vmul.f32 %v5891, %v6275
      %v6404 = vmul.f32 %v5892, %v6276
      %v6405 = vmul.f32 %v5893, %v6277
      %v6406 = vmul.f32 %v5894, %v6278
      %v6407 = vmul.f32 %v5895, %v6279
      %v6408 = vmul.f32 %v5896, %v6280
      %v6409 = vmul.f32 %v5897, %v6281
      %v6410 = vmul.f32 %v5898, %v6282
      %v6411 = vmul.f32 %v5899, %v6283
      %v6412 = vmul.f32 %v5900, %v6284
      %v6413 = vmul.f32 %v5901, %v6285
      %v6414 = vmul.f32 %v5902, %v6286
      %v6415 = vmul.f32 %v5903, %v6287
      %v6416 = vmul.f32 %v5904, %v6288
      %v6417 = vmul.f32 %v5905, %v6289
      %v6418 = vmul.f32 %v5906, %v6290
      %v6419 = vmul.f32 %v5907, %v6291
      %v6420 = vmul.f32 %v5908, %v6292
      %v6421 = vmul.f32 %v5909, %v6293
      %v6422 = vmul.f32 %v5910, %v6294
      %v6423 = vmul.f32 %v5911, %v6295
      %v6424 = vmul.f32 %v5912, %v6296
      %v6425 = vmul.f32 %v5913, %v6297
      %v6426 = vmul.f32 %v5914, %v6298
      %v6427 = vmul.f32 %v5915, %v6299
      %v6428 = vmul.f32 %v5916, %v6300
      %v6429 = vmul.f32 %v5917, %v6301
      %v6430 = vmul.f32 %v5918, %v6302
      %v6431 = vmul.f32 %v5919, %v6303
      %v6432 = vmul.f32 %v5920, %v6304
      %v6433 = vmul.f32 %v5921, %v6305
      %v6434 = vmul.f32 %v5922, %v6306
      %v6435 = vmul.f32 %v5923, %v6307
      %v6436 = vmul.f32 %v5924, %v6308
      %v6437 = vmul.f32 %v5925, %v6309
      %v6438 = vmul.f32 %v5926, %v6310
      %v6439 = vmul.f32 %v5927, %v6311
      %v6440 = vmul.f32 %v5928, %v6312
      %v6441 = vmul.f32 %v5929, %v6313
      %v6442 = vmul.f32 %v5930, %v6314
      %v6443 = vmul.f32 %v5931, %v6315
      %v6444 = vmul.f32 %v5932, %v6316
      %v6445 = vmul.f32 %v5933, %v6317
      %v6446 = vmul.f32 %v5934, %v6318
      %v6447 = vmul.f32 %v5935, %v6319
      %v6448 = vmul.f32 %v5936, %v6320
      %v6449 = vmul.f32 %v5937, %v6321
      %v6450 = vmul.f32 %v5938, %v6322
      %v6451 = vmul.f32 %v5939, %v6323
      %v6452 = vmul.f32 %v5940, %v6324
      %v6453 = vmul.f32 %v5941, %v6325
      %v6454 = vmul.f32 %v5942, %v6326
      %v6455 = vmul.f32 %v5943, %v6327
      %v6456 = vmul.f32 %v5944, %v6328
      %v6457 = vmul.f32 %v5945, %v6329
      %v6458 = vmul.f32 %v5946, %v6330
      %v6459 = vmul.f32 %v5947, %v6331
      %v6460 = vmul.f32 %v5948, %v6332
      %v6461 = vmul.f32 %v5949, %v6333
      %v6462 = vmul.f32 %v5950, %v6334
      %v6463 = vmul.f32 %v5951, %v6335
      %v6464 = vmul.f32 %v5952, %v6336
      %v6465 = vmul.f32 %v5953, %v6337
      %v6466 = vmul.f32 %v5954, %v6338
      %v6467 = vmul.f32 %v5955, %v6339
      %v6468 = vmul.f32 %v5956, %v6340
      %v6469 = vmul.f32 %v5957, %v6341
      %v6470 = vmul.f32 %v5958, %v6342
      %v6471 = vmul.f32 %v5959, %v6343
      %v6472 = vmul.f32 %v5960, %v6344
      %v6473 = vmul.f32 %v5961, %v6345
      %v6474 = vmul.f32 %v5962, %v6346
      %v6475 = vmul.f32 %v5963, %v6347
      %v6476 = vmul.f32 %v5964, %v6348
      %v6477 = vmul.f32 %v5965, %v6349
      %v6478 = vmul.f32 %v5966, %v6350
      %v6479 = vmul.f32 %v5967, %v6351
      %v6480 = vmul.f32 %v5968, %v6352
      %v6481 = vld [vmem:[%s713] sm:$0xf]
      %v6482 = vld [vmem:[%s713 + $0x4] sm:$0xf]
      %v6483 = vld [vmem:[%s713 + $0x8] sm:$0xf]
      %v6484 = vld [vmem:[%s713 + $0xc] sm:$0xf]
      %v6485 = vpack.c.bf16 %v6369, %v6353
      %v6486 = vpack.c.bf16 %v6370, %v6354
      %v6487 = vpack.c.bf16 %v6371, %v6355
      %v6488 = vpack.c.bf16 %v6372, %v6356
      %v6489 = vpack.c.bf16 %v6373, %v6357
      %v6490 = vpack.c.bf16 %v6374, %v6358
      %v6491 = vpack.c.bf16 %v6375, %v6359
      %v6492 = vpack.c.bf16 %v6376, %v6360
      %v6493 = vpack.c.bf16 %v6377, %v6361
      %v6494 = vpack.c.bf16 %v6378, %v6362
      %v6495 = vpack.c.bf16 %v6379, %v6363
      %v6496 = vpack.c.bf16 %v6380, %v6364
      %v6497 = vpack.c.bf16 %v6381, %v6365
      %v6498 = vpack.c.bf16 %v6382, %v6366
      %v6499 = vpack.c.bf16 %v6383, %v6367
      %v6500 = vpack.c.bf16 %v6384, %v6368
      %v6501 = vpack.c.bf16 %v6401, %v6385
      %v6502 = vpack.c.bf16 %v6402, %v6386
      %v6503 = vpack.c.bf16 %v6403, %v6387
      %v6504 = vpack.c.bf16 %v6404, %v6388
      %v6505 = vpack.c.bf16 %v6405, %v6389
      %v6506 = vpack.c.bf16 %v6406, %v6390
      %v6507 = vpack.c.bf16 %v6407, %v6391
      %v6508 = vpack.c.bf16 %v6408, %v6392
      %v6509 = vpack.c.bf16 %v6409, %v6393
      %v6510 = vpack.c.bf16 %v6410, %v6394
      %v6511 = vpack.c.bf16 %v6411, %v6395
      %v6512 = vpack.c.bf16 %v6412, %v6396
      %v6513 = vpack.c.bf16 %v6413, %v6397
      %v6514 = vpack.c.bf16 %v6414, %v6398
      %v6515 = vpack.c.bf16 %v6415, %v6399
      %v6516 = vpack.c.bf16 %v6416, %v6400
      %v6517 = vpack.c.bf16 %v6433, %v6417
      %v6518 = vpack.c.bf16 %v6434, %v6418
      %v6519 = vpack.c.bf16 %v6435, %v6419
      %v6520 = vpack.c.bf16 %v6436, %v6420
      %v6521 = vpack.c.bf16 %v6437, %v6421
      %v6522 = vpack.c.bf16 %v6438, %v6422
      %v6523 = vpack.c.bf16 %v6439, %v6423
      %v6524 = vpack.c.bf16 %v6440, %v6424
      %v6525 = vpack.c.bf16 %v6441, %v6425
      %v6526 = vpack.c.bf16 %v6442, %v6426
      %v6527 = vpack.c.bf16 %v6443, %v6427
      %v6528 = vpack.c.bf16 %v6444, %v6428
      %v6529 = vpack.c.bf16 %v6445, %v6429
      %v6530 = vpack.c.bf16 %v6446, %v6430
      %v6531 = vpack.c.bf16 %v6447, %v6431
      %v6532 = vpack.c.bf16 %v6448, %v6432
      %v6533 = vpack.c.bf16 %v6465, %v6449
      %v6534 = vpack.c.bf16 %v6466, %v6450
      %v6535 = vpack.c.bf16 %v6467, %v6451
      %v6536 = vpack.c.bf16 %v6468, %v6452
      %v6537 = vpack.c.bf16 %v6469, %v6453
      %v6538 = vpack.c.bf16 %v6470, %v6454
      %v6539 = vpack.c.bf16 %v6471, %v6455
      %v6540 = vpack.c.bf16 %v6472, %v6456
      %v6541 = vpack.c.bf16 %v6473, %v6457
      %v6542 = vpack.c.bf16 %v6474, %v6458
      %v6543 = vpack.c.bf16 %v6475, %v6459
      %v6544 = vpack.c.bf16 %v6476, %v6460
      %v6545 = vpack.c.bf16 %v6477, %v6461
      %v6546 = vpack.c.bf16 %v6478, %v6462
      %v6547 = vpack.c.bf16 %v6479, %v6463
      %v6548 = vpack.c.bf16 %v6480, %v6464
      %v6549 = vld [vmem:[%s718] sm:$0xff]
      %v6550 = vld [vmem:[%s718 + $0x8] sm:$0xff]
      %v6551 = vld [vmem:[%s718 + $0x10] sm:$0xff]
      %v6552 = vld [vmem:[%s718 + $0x18] sm:$0xff]
      %6554 = vset.pattern.permute.xlu0 0
      %6555 = vperm.xlu0 %6554, %v6549
      %v6556 = vpop.permute.xlu0 %6555
      %6559 = vset.pattern.permute.xlu0 0
      %6560 = vperm.xlu0 %6559, %v6550
      %v6561 = vpop.permute.xlu0 %6560
      %6564 = vset.pattern.permute.xlu0 0
      %6565 = vperm.xlu0 %6564, %v6551
      %v6566 = vpop.permute.xlu0 %6565
      %6569 = vset.pattern.permute.xlu0 0
      %6570 = vperm.xlu0 %6569, %v6552
      %v6571 = vpop.permute.xlu0 %6570
      %v6577 = vunpack.c.l.b16 %v6481
      %v6578 = vunpack.c.l.b16 %v6482
      %v6579 = vunpack.c.l.b16 %v6483
      %v6580 = vunpack.c.l.b16 %v6484
      %v6581 = vpack.c.b16 %v6578, %v6577
      %v6582 = vpack.c.b16 %v6580, %v6579
      %vm6583 = vcmask 523264
      %v6585 = vsel %vm6583, %v6581, 0
      %v6588 = vsel %vm6583, %v6582, 0
      %6590 = vmatprep.subr.bf16.mxu0 %v6486
      %6591 = vmatpush1.bf16.msra.mxu0 %v6485
      %6592 = vmatprep.subr.bf16.mxu0 %v6502
      %6593 = vmatpush1.bf16.msra.mxu0 %v6501
      %6594 = vmatprep.subr.bf16.mxu0 %v6518
      %6595 = vmatpush1.bf16.msra.mxu0 %v6517
      %6596 = vmatprep.subr.bf16.mxu0 %v6534
      %6597 = vmatpush1.bf16.msra.mxu0 %v6533
      %6598 = vmatprep.subr.bf16.mxu0 0
      %6599 = vmatpush1.bf16.msra.mxu0 0
      %6600 = vmatprep.subr.bf16.mxu0 0
      %6601 = vmatpush1.bf16.msra.mxu0 0
      %6602 = vmatprep.subr.bf16.mxu0 0
      %6603 = vmatpush1.bf16.msra.mxu0 0
      %6604 = vmatprep.subr.bf16.mxu0 0
      %6605 = vmatpush1.bf16.msra.mxu0 0
      %6606 = vmatprep.subr.bf16.mxu0 0
      %6607 = vmatpush1.bf16.msra.mxu0 0
      %6608 = vmatprep.subr.bf16.mxu0 0
      %6609 = vmatpush1.bf16.msra.mxu0 0
      %6610 = vmatprep.subr.bf16.mxu0 0
      %6611 = vmatpush1.bf16.msra.mxu0 0
      %6612 = vmatprep.subr.bf16.mxu0 0
      %6613 = vmatpush1.bf16.msra.mxu0 0
      %6614 = vmatprep.subr.bf16.mxu0 0
      %6615 = vmatpush1.bf16.msra.mxu0 0
      %6616 = vmatprep.subr.bf16.mxu0 0
      %6617 = vmatpush1.bf16.msra.mxu0 0
      %6618 = vmatprep.subr.bf16.mxu0 0
      %6619 = vmatpush1.bf16.msra.mxu0 0
      %6620 = vmatprep.subr.bf16.mxu0 0
      %6621 = vmatpush1.bf16.msra.mxu0 0
      %6622 = vmatprep.mubr.bf16.mxu0 0
      %6623 = vmatmul.mubr.bf16.gmra.mrb[0].mxu0 %v6585
      %v6624 = vpop.f32.mrb[0].mxu0
      %v6625 = vadd.f32 %v6556, %v6624
      %v6626 = vpop.f32.mrb[0].mxu0
      %v6627 = vadd.f32 %v6556, %v6626
      %v6628 = vpop.f32.mrb[0].mxu0
      %v6629 = vadd.f32 %v6561, %v6628
      %v6630 = vpop.f32.mrb[0].mxu0
      %v6631 = vadd.f32 %v6561, %v6630
      %6632 = vmatprep.mubr.bf16.mxu0 0
      %6633 = vmatmul.mubr.bf16.gmra.mrb[0].mxu0 %v6588
      %v6634 = vpop.f32.mrb[0].mxu0
      %v6635 = vadd.f32 %v6566, %v6634
      %v6636 = vpop.f32.mrb[0].mxu0
      %v6637 = vadd.f32 %v6566, %v6636
      %v6638 = vpop.f32.mrb[0].mxu0
      %v6639 = vadd.f32 %v6571, %v6638
      %v6640 = vpop.f32.mrb[0].mxu0
      %v6641 = vadd.f32 %v6571, %v6640
      %6642 = vdwg.mxu0
      %6643 = vmatprep.subr.bf16.mxu0 %v6488
      %6644 = vmatpush1.bf16.msra.mxu0 %v6487
      %6645 = vmatprep.subr.bf16.mxu0 %v6504
      %6646 = vmatpush1.bf16.msra.mxu0 %v6503
      %6647 = vmatprep.subr.bf16.mxu0 %v6520
      %6648 = vmatpush1.bf16.msra.mxu0 %v6519
      %6649 = vmatprep.subr.bf16.mxu0 %v6536
      %6650 = vmatpush1.bf16.msra.mxu0 %v6535
      %6651 = vmatprep.subr.bf16.mxu0 0
      %6652 = vmatpush1.bf16.msra.mxu0 0
      %6653 = vmatprep.subr.bf16.mxu0 0
      %6654 = vmatpush1.bf16.msra.mxu0 0
      %6655 = vmatprep.subr.bf16.mxu0 0
      %6656 = vmatpush1.bf16.msra.mxu0 0
      %6657 = vmatprep.subr.bf16.mxu0 0
      %6658 = vmatpush1.bf16.msra.mxu0 0
      %6659 = vmatprep.subr.bf16.mxu0 0
      %6660 = vmatpush1.bf16.msra.mxu0 0
      %6661 = vmatprep.subr.bf16.mxu0 0
      %6662 = vmatpush1.bf16.msra.mxu0 0
      %6663 = vmatprep.subr.bf16.mxu0 0
      %6664 = vmatpush1.bf16.msra.mxu0 0
      %6665 = vmatprep.subr.bf16.mxu0 0
      %6666 = vmatpush1.bf16.msra.mxu0 0
      %6667 = vmatprep.subr.bf16.mxu0 0
      %6668 = vmatpush1.bf16.msra.mxu0 0
      %6669 = vmatprep.subr.bf16.mxu0 0
      %6670 = vmatpush1.bf16.msra.mxu0 0
      %6671 = vmatprep.subr.bf16.mxu0 0
      %6672 = vmatpush1.bf16.msra.mxu0 0
      %6673 = vmatprep.subr.bf16.mxu0 0
      %6674 = vmatpush1.bf16.msra.mxu0 0
      %6675 = vmatprep.mubr.bf16.mxu0 0
      %6676 = vmatmul.mubr.bf16.gmra.mrb[0].mxu0 %v6585
      %v6677 = vpop.f32.mrb[0].mxu0
      %v6678 = vadd.f32 %v6556, %v6677
      %v6679 = vpop.f32.mrb[0].mxu0
      %v6680 = vadd.f32 %v6556, %v6679
      %v6681 = vpop.f32.mrb[0].mxu0
      %v6682 = vadd.f32 %v6561, %v6681
      %v6683 = vpop.f32.mrb[0].mxu0
      %v6684 = vadd.f32 %v6561, %v6683
      %6685 = vmatprep.mubr.bf16.mxu0 0
      %6686 = vmatmul.mubr.bf16.gmra.mrb[0].mxu0 %v6588
      %v6687 = vpop.f32.mrb[0].mxu0
      %v6688 = vadd.f32 %v6566, %v6687
      %v6689 = vpop.f32.mrb[0].mxu0
      %v6690 = vadd.f32 %v6566, %v6689
      %v6691 = vpop.f32.mrb[0].mxu0
      %v6692 = vadd.f32 %v6571, %v6691
      %v6693 = vpop.f32.mrb[0].mxu0
      %v6694 = vadd.f32 %v6571, %v6693
      %6695 = vdwg.mxu0
      %6696 = vmatprep.subr.bf16.mxu0 %v6490
      %6697 = vmatpush1.bf16.msra.mxu0 %v6489
      %6698 = vmatprep.subr.bf16.mxu0 %v6506
      %6699 = vmatpush1.bf16.msra.mxu0 %v6505
      %6700 = vmatprep.subr.bf16.mxu0 %v6522
      %6701 = vmatpush1.bf16.msra.mxu0 %v6521
      %6702 = vmatprep.subr.bf16.mxu0 %v6538
      %6703 = vmatpush1.bf16.msra.mxu0 %v6537
      %6704 = vmatprep.subr.bf16.mxu0 0
      %6705 = vmatpush1.bf16.msra.mxu0 0
      %6706 = vmatprep.subr.bf16.mxu0 0
      %6707 = vmatpush1.bf16.msra.mxu0 0
      %6708 = vmatprep.subr.bf16.mxu0 0
      %6709 = vmatpush1.bf16.msra.mxu0 0
      %6710 = vmatprep.subr.bf16.mxu0 0
      %6711 = vmatpush1.bf16.msra.mxu0 0
      %6712 = vmatprep.subr.bf16.mxu0 0
      %6713 = vmatpush1.bf16.msra.mxu0 0
      %6714 = vmatprep.subr.bf16.mxu0 0
      %6715 = vmatpush1.bf16.msra.mxu0 0
      %6716 = vmatprep.subr.bf16.mxu0 0
      %6717 = vmatpush1.bf16.msra.mxu0 0
      %6718 = vmatprep.subr.bf16.mxu0 0
      %6719 = vmatpush1.bf16.msra.mxu0 0
      %6720 = vmatprep.subr.bf16.mxu0 0
      %6721 = vmatpush1.bf16.msra.mxu0 0
      %6722 = vmatprep.subr.bf16.mxu0 0
      %6723 = vmatpush1.bf16.msra.mxu0 0
      %6724 = vmatprep.subr.bf16.mxu0 0
      %6725 = vmatpush1.bf16.msra.mxu0 0
      %6726 = vmatprep.subr.bf16.mxu0 0
      %6727 = vmatpush1.bf16.msra.mxu0 0
      %6728 = vmatprep.mubr.bf16.mxu0 0
      %6729 = vmatmul.mubr.bf16.gmra.mrb[0].mxu0 %v6585
      %v6730 = vpop.f32.mrb[0].mxu0
      %v6731 = vadd.f32 %v6556, %v6730
      %v6732 = vpop.f32.mrb[0].mxu0
      %v6733 = vadd.f32 %v6556, %v6732
      %v6734 = vpop.f32.mrb[0].mxu0
      %v6735 = vadd.f32 %v6561, %v6734
      %v6736 = vpop.f32.mrb[0].mxu0
      %v6737 = vadd.f32 %v6561, %v6736
      %6738 = vmatprep.mubr.bf16.mxu0 0
      %6739 = vmatmul.mubr.bf16.gmra.mrb[0].mxu0 %v6588
      %v6740 = vpop.f32.mrb[0].mxu0
      %v6741 = vadd.f32 %v6566, %v6740
      %v6742 = vpop.f32.mrb[0].mxu0
      %v6743 = vadd.f32 %v6566, %v6742
      %v6744 = vpop.f32.mrb[0].mxu0
      %v6745 = vadd.f32 %v6571, %v6744
      %v6746 = vpop.f32.mrb[0].mxu0
      %v6747 = vadd.f32 %v6571, %v6746
      %6748 = vdwg.mxu0
      %6749 = vmatprep.subr.bf16.mxu0 %v6492
      %6750 = vmatpush1.bf16.msra.mxu0 %v6491
      %6751 = vmatprep.subr.bf16.mxu0 %v6508
      %6752 = vmatpush1.bf16.msra.mxu0 %v6507
      %6753 = vmatprep.subr.bf16.mxu0 %v6524
      %6754 = vmatpush1.bf16.msra.mxu0 %v6523
      %6755 = vmatprep.subr.bf16.mxu0 %v6540
      %6756 = vmatpush1.bf16.msra.mxu0 %v6539
      %6757 = vmatprep.subr.bf16.mxu0 0
      %6758 = vmatpush1.bf16.msra.mxu0 0
      %6759 = vmatprep.subr.bf16.mxu0 0
      %6760 = vmatpush1.bf16.msra.mxu0 0
      %6761 = vmatprep.subr.bf16.mxu0 0
      %6762 = vmatpush1.bf16.msra.mxu0 0
      %6763 = vmatprep.subr.bf16.mxu0 0
      %6764 = vmatpush1.bf16.msra.mxu0 0
      %6765 = vmatprep.subr.bf16.mxu0 0
      %6766 = vmatpush1.bf16.msra.mxu0 0
      %6767 = vmatprep.subr.bf16.mxu0 0
      %6768 = vmatpush1.bf16.msra.mxu0 0
      %6769 = vmatprep.subr.bf16.mxu0 0
      %6770 = vmatpush1.bf16.msra.mxu0 0
      %6771 = vmatprep.subr.bf16.mxu0 0
      %6772 = vmatpush1.bf16.msra.mxu0 0
      %6773 = vmatprep.subr.bf16.mxu0 0
      %6774 = vmatpush1.bf16.msra.mxu0 0
      %6775 = vmatprep.subr.bf16.mxu0 0
      %6776 = vmatpush1.bf16.msra.mxu0 0
      %6777 = vmatprep.subr.bf16.mxu0 0
      %6778 = vmatpush1.bf16.msra.mxu0 0
      %6779 = vmatprep.subr.bf16.mxu0 0
      %6780 = vmatpush1.bf16.msra.mxu0 0
      %6781 = vmatprep.mubr.bf16.mxu0 0
      %6782 = vmatmul.mubr.bf16.gmra.mrb[0].mxu0 %v6585
      %v6783 = vpop.f32.mrb[0].mxu0
      %v6784 = vadd.f32 %v6556, %v6783
      %v6785 = vpop.f32.mrb[0].mxu0
      %v6786 = vadd.f32 %v6556, %v6785
      %v6787 = vpop.f32.mrb[0].mxu0
      %v6788 = vadd.f32 %v6561, %v6787
      %v6789 = vpop.f32.mrb[0].mxu0
      %v6790 = vadd.f32 %v6561, %v6789
      %6791 = vmatprep.mubr.bf16.mxu0 0
      %6792 = vmatmul.mubr.bf16.gmra.mrb[0].mxu0 %v6588
      %v6793 = vpop.f32.mrb[0].mxu0
      %v6794 = vadd.f32 %v6566, %v6793
      %v6795 = vpop.f32.mrb[0].mxu0
      %v6796 = vadd.f32 %v6566, %v6795
      %v6797 = vpop.f32.mrb[0].mxu0
      %v6798 = vadd.f32 %v6571, %v6797
      %v6799 = vpop.f32.mrb[0].mxu0
      %v6800 = vadd.f32 %v6571, %v6799
      %6801 = vdwg.mxu0
      %6802 = vmatprep.subr.bf16.mxu0 %v6494
      %6803 = vmatpush1.bf16.msra.mxu0 %v6493
      %6804 = vmatprep.subr.bf16.mxu0 %v6510
      %6805 = vmatpush1.bf16.msra.mxu0 %v6509
      %6806 = vmatprep.subr.bf16.mxu0 %v6526
      %6807 = vmatpush1.bf16.msra.mxu0 %v6525
      %6808 = vmatprep.subr.bf16.mxu0 %v6542
      %6809 = vmatpush1.bf16.msra.mxu0 %v6541
      %6810 = vmatprep.subr.bf16.mxu0 0
      %6811 = vmatpush1.bf16.msra.mxu0 0
      %6812 = vmatprep.subr.bf16.mxu0 0
      %6813 = vmatpush1.bf16.msra.mxu0 0
      %6814 = vmatprep.subr.bf16.mxu0 0
      %6815 = vmatpush1.bf16.msra.mxu0 0
      %6816 = vmatprep.subr.bf16.mxu0 0
      %6817 = vmatpush1.bf16.msra.mxu0 0
      %6818 = vmatprep.subr.bf16.mxu0 0
      %6819 = vmatpush1.bf16.msra.mxu0 0
      %6820 = vmatprep.subr.bf16.mxu0 0
      %6821 = vmatpush1.bf16.msra.mxu0 0
      %6822 = vmatprep.subr.bf16.mxu0 0
      %6823 = vmatpush1.bf16.msra.mxu0 0
      %6824 = vmatprep.subr.bf16.mxu0 0
      %6825 = vmatpush1.bf16.msra.mxu0 0
      %6826 = vmatprep.subr.bf16.mxu0 0
      %6827 = vmatpush1.bf16.msra.mxu0 0
      %6828 = vmatprep.subr.bf16.mxu0 0
      %6829 = vmatpush1.bf16.msra.mxu0 0
      %6830 = vmatprep.subr.bf16.mxu0 0
      %6831 = vmatpush1.bf16.msra.mxu0 0
      %6832 = vmatprep.subr.bf16.mxu0 0
      %6833 = vmatpush1.bf16.msra.mxu0 0
      %6834 = vmatprep.mubr.bf16.mxu0 0
      %6835 = vmatmul.mubr.bf16.gmra.mrb[0].mxu0 %v6585
      %v6836 = vpop.f32.mrb[0].mxu0
      %v6837 = vadd.f32 %v6556, %v6836
      %v6838 = vpop.f32.mrb[0].mxu0
      %v6839 = vadd.f32 %v6556, %v6838
      %v6840 = vpop.f32.mrb[0].mxu0
      %v6841 = vadd.f32 %v6561, %v6840
      %v6842 = vpop.f32.mrb[0].mxu0
      %v6843 = vadd.f32 %v6561, %v6842
      %6844 = vmatprep.mubr.bf16.mxu0 0
      %6845 = vmatmul.mubr.bf16.gmra.mrb[0].mxu0 %v6588
      %v6846 = vpop.f32.mrb[0].mxu0
      %v6847 = vadd.f32 %v6566, %v6846
      %v6848 = vpop.f32.mrb[0].mxu0
      %v6849 = vadd.f32 %v6566, %v6848
      %v6850 = vpop.f32.mrb[0].mxu0
      %v6851 = vadd.f32 %v6571, %v6850
      %v6852 = vpop.f32.mrb[0].mxu0
      %v6853 = vadd.f32 %v6571, %v6852
      %6854 = vdwg.mxu0
      %6855 = vmatprep.subr.bf16.mxu0 %v6496
      %6856 = vmatpush1.bf16.msra.mxu0 %v6495
      %6857 = vmatprep.subr.bf16.mxu0 %v6512
      %6858 = vmatpush1.bf16.msra.mxu0 %v6511
      %6859 = vmatprep.subr.bf16.mxu0 %v6528
      %6860 = vmatpush1.bf16.msra.mxu0 %v6527
      %6861 = vmatprep.subr.bf16.mxu0 %v6544
      %6862 = vmatpush1.bf16.msra.mxu0 %v6543
      %6863 = vmatprep.subr.bf16.mxu0 0
      %6864 = vmatpush1.bf16.msra.mxu0 0
      %6865 = vmatprep.subr.bf16.mxu0 0
      %6866 = vmatpush1.bf16.msra.mxu0 0
      %6867 = vmatprep.subr.bf16.mxu0 0
      %6868 = vmatpush1.bf16.msra.mxu0 0
      %6869 = vmatprep.subr.bf16.mxu0 0
      %6870 = vmatpush1.bf16.msra.mxu0 0
      %6871 = vmatprep.subr.bf16.mxu0 0
      %6872 = vmatpush1.bf16.msra.mxu0 0
      %6873 = vmatprep.subr.bf16.mxu0 0
      %6874 = vmatpush1.bf16.msra.mxu0 0
      %6875 = vmatprep.subr.bf16.mxu0 0
      %6876 = vmatpush1.bf16.msra.mxu0 0
      %6877 = vmatprep.subr.bf16.mxu0 0
      %6878 = vmatpush1.bf16.msra.mxu0 0
      %6879 = vmatprep.subr.bf16.mxu0 0
      %6880 = vmatpush1.bf16.msra.mxu0 0
      %6881 = vmatprep.subr.bf16.mxu0 0
      %6882 = vmatpush1.bf16.msra.mxu0 0
      %6883 = vmatprep.subr.bf16.mxu0 0
      %6884 = vmatpush1.bf16.msra.mxu0 0
      %6885 = vmatprep.subr.bf16.mxu0 0
      %6886 = vmatpush1.bf16.msra.mxu0 0
      %6887 = vmatprep.mubr.bf16.mxu0 0
      %6888 = vmatmul.mubr.bf16.gmra.mrb[0].mxu0 %v6585
      %v6889 = vpop.f32.mrb[0].mxu0
      %v6890 = vadd.f32 %v6556, %v6889
      %v6891 = vpop.f32.mrb[0].mxu0
      %v6892 = vadd.f32 %v6556, %v6891
      %v6893 = vpop.f32.mrb[0].mxu0
      %v6894 = vadd.f32 %v6561, %v6893
      %v6895 = vpop.f32.mrb[0].mxu0
      %v6896 = vadd.f32 %v6561, %v6895
      %6897 = vmatprep.mubr.bf16.mxu0 0
      %6898 = vmatmul.mubr.bf16.gmra.mrb[0].mxu0 %v6588
      %v6899 = vpop.f32.mrb[0].mxu0
      %v6900 = vadd.f32 %v6566, %v6899
      %v6901 = vpop.f32.mrb[0].mxu0
      %v6902 = vadd.f32 %v6566, %v6901
      %v6903 = vpop.f32.mrb[0].mxu0
      %v6904 = vadd.f32 %v6571, %v6903
      %v6905 = vpop.f32.mrb[0].mxu0
      %v6906 = vadd.f32 %v6571, %v6905
      %6907 = vdwg.mxu0
      %6908 = vmatprep.subr.bf16.mxu0 %v6498
      %6909 = vmatpush1.bf16.msra.mxu0 %v6497
      %6910 = vmatprep.subr.bf16.mxu0 %v6514
      %6911 = vmatpush1.bf16.msra.mxu0 %v6513
      %6912 = vmatprep.subr.bf16.mxu0 %v6530
      %6913 = vmatpush1.bf16.msra.mxu0 %v6529
      %6914 = vmatprep.subr.bf16.mxu0 %v6546
      %6915 = vmatpush1.bf16.msra.mxu0 %v6545
      %6916 = vmatprep.subr.bf16.mxu0 0
      %6917 = vmatpush1.bf16.msra.mxu0 0
      %6918 = vmatprep.subr.bf16.mxu0 0
      %6919 = vmatpush1.bf16.msra.mxu0 0
      %6920 = vmatprep.subr.bf16.mxu0 0
      %6921 = vmatpush1.bf16.msra.mxu0 0
      %6922 = vmatprep.subr.bf16.mxu0 0
      %6923 = vmatpush1.bf16.msra.mxu0 0
      %6924 = vmatprep.subr.bf16.mxu0 0
      %6925 = vmatpush1.bf16.msra.mxu0 0
      %6926 = vmatprep.subr.bf16.mxu0 0
      %6927 = vmatpush1.bf16.msra.mxu0 0
      %6928 = vmatprep.subr.bf16.mxu0 0
      %6929 = vmatpush1.bf16.msra.mxu0 0
      %6930 = vmatprep.subr.bf16.mxu0 0
      %6931 = vmatpush1.bf16.msra.mxu0 0
      %6932 = vmatprep.subr.bf16.mxu0 0
      %6933 = vmatpush1.bf16.msra.mxu0 0
      %6934 = vmatprep.subr.bf16.mxu0 0
      %6935 = vmatpush1.bf16.msra.mxu0 0
      %6936 = vmatprep.subr.bf16.mxu0 0
      %6937 = vmatpush1.bf16.msra.mxu0 0
      %6938 = vmatprep.subr.bf16.mxu0 0
      %6939 = vmatpush1.bf16.msra.mxu0 0
      %6940 = vmatprep.mubr.bf16.mxu0 0
      %6941 = vmatmul.mubr.bf16.gmra.mrb[0].mxu0 %v6585
      %v6942 = vpop.f32.mrb[0].mxu0
      %v6943 = vadd.f32 %v6556, %v6942
      %v6944 = vpop.f32.mrb[0].mxu0
      %v6945 = vadd.f32 %v6556, %v6944
      %v6946 = vpop.f32.mrb[0].mxu0
      %v6947 = vadd.f32 %v6561, %v6946
      %v6948 = vpop.f32.mrb[0].mxu0
      %v6949 = vadd.f32 %v6561, %v6948
      %6950 = vmatprep.mubr.bf16.mxu0 0
      %6951 = vmatmul.mubr.bf16.gmra.mrb[0].mxu0 %v6588
      %v6952 = vpop.f32.mrb[0].mxu0
      %v6953 = vadd.f32 %v6566, %v6952
      %v6954 = vpop.f32.mrb[0].mxu0
      %v6955 = vadd.f32 %v6566, %v6954
      %v6956 = vpop.f32.mrb[0].mxu0
      %v6957 = vadd.f32 %v6571, %v6956
      %v6958 = vpop.f32.mrb[0].mxu0
      %v6959 = vadd.f32 %v6571, %v6958
      %6960 = vdwg.mxu0
      %6961 = vmatprep.subr.bf16.mxu0 %v6500
      %6962 = vmatpush1.bf16.msra.mxu0 %v6499
      %6963 = vmatprep.subr.bf16.mxu0 %v6516
      %6964 = vmatpush1.bf16.msra.mxu0 %v6515
      %6965 = vmatprep.subr.bf16.mxu0 %v6532
      %6966 = vmatpush1.bf16.msra.mxu0 %v6531
      %6967 = vmatprep.subr.bf16.mxu0 %v6548
      %6968 = vmatpush1.bf16.msra.mxu0 %v6547
      %6969 = vmatprep.subr.bf16.mxu0 0
      %6970 = vmatpush1.bf16.msra.mxu0 0
      %6971 = vmatprep.subr.bf16.mxu0 0
      %6972 = vmatpush1.bf16.msra.mxu0 0
      %6973 = vmatprep.subr.bf16.mxu0 0
      %6974 = vmatpush1.bf16.msra.mxu0 0
      %6975 = vmatprep.subr.bf16.mxu0 0
      %6976 = vmatpush1.bf16.msra.mxu0 0
      %6977 = vmatprep.subr.bf16.mxu0 0
      %6978 = vmatpush1.bf16.msra.mxu0 0
      %6979 = vmatprep.subr.bf16.mxu0 0
      %6980 = vmatpush1.bf16.msra.mxu0 0
      %6981 = vmatprep.subr.bf16.mxu0 0
      %6982 = vmatpush1.bf16.msra.mxu0 0
      %6983 = vmatprep.subr.bf16.mxu0 0
      %6984 = vmatpush1.bf16.msra.mxu0 0
      %6985 = vmatprep.subr.bf16.mxu0 0
      %6986 = vmatpush1.bf16.msra.mxu0 0
      %6987 = vmatprep.subr.bf16.mxu0 0
      %6988 = vmatpush1.bf16.msra.mxu0 0
      %6989 = vmatprep.subr.bf16.mxu0 0
      %6990 = vmatpush1.bf16.msra.mxu0 0
      %6991 = vmatprep.subr.bf16.mxu0 0
      %6992 = vmatpush1.bf16.msra.mxu0 0
      %6993 = vmatprep.mubr.bf16.mxu0 0
      %6994 = vmatmul.mubr.bf16.gmra.mrb[0].mxu0 %v6585
      %v6995 = vpop.f32.mrb[0].mxu0
      %v6996 = vadd.f32 %v6556, %v6995
      %v6997 = vpop.f32.mrb[0].mxu0
      %v6998 = vadd.f32 %v6556, %v6997
      %v6999 = vpop.f32.mrb[0].mxu0
      %v7000 = vadd.f32 %v6561, %v6999
      %v7001 = vpop.f32.mrb[0].mxu0
      %v7002 = vadd.f32 %v6561, %v7001
      %7003 = vmatprep.mubr.bf16.mxu0 0
      %7004 = vmatmul.mubr.bf16.gmra.mrb[0].mxu0 %v6588
      %v7005 = vpop.f32.mrb[0].mxu0
      %v7006 = vadd.f32 %v6566, %v7005
      %v7007 = vpop.f32.mrb[0].mxu0
      %v7008 = vadd.f32 %v6566, %v7007
      %v7009 = vpop.f32.mrb[0].mxu0
      %v7010 = vadd.f32 %v6571, %v7009
      %v7011 = vpop.f32.mrb[0].mxu0
      %v7012 = vadd.f32 %v6571, %v7011
      %7013 = vdwg.mxu0
      %v7014 = vadd.f32 %v5073, %v6625
      %v7015 = vadd.f32 %v5074, %v6627
      %v7016 = vadd.f32 %v5075, %v6678
      %v7017 = vadd.f32 %v5076, %v6680
      %v7018 = vadd.f32 %v5077, %v6731
      %v7019 = vadd.f32 %v5078, %v6733
      %v7020 = vadd.f32 %v5079, %v6784
      %v7021 = vadd.f32 %v5080, %v6786
      %v7022 = vadd.f32 %v5081, %v6837
      %v7023 = vadd.f32 %v5082, %v6839
      %v7024 = vadd.f32 %v5083, %v6890
      %v7025 = vadd.f32 %v5084, %v6892
      %v7026 = vadd.f32 %v5085, %v6943
      %v7027 = vadd.f32 %v5086, %v6945
      %v7028 = vadd.f32 %v5087, %v6996
      %v7029 = vadd.f32 %v5088, %v6998
      %v7030 = vadd.f32 %v5089, %v6629
      %v7031 = vadd.f32 %v5090, %v6631
      %v7032 = vadd.f32 %v5091, %v6682
      %v7033 = vadd.f32 %v5092, %v6684
      %v7034 = vadd.f32 %v5093, %v6735
      %v7035 = vadd.f32 %v5094, %v6737
      %v7036 = vadd.f32 %v5095, %v6788
      %v7037 = vadd.f32 %v5096, %v6790
      %v7038 = vadd.f32 %v5097, %v6841
      %v7039 = vadd.f32 %v5098, %v6843
      %v7040 = vadd.f32 %v5099, %v6894
      %v7041 = vadd.f32 %v5100, %v6896
      %v7042 = vadd.f32 %v5101, %v6947
      %v7043 = vadd.f32 %v5102, %v6949
      %v7044 = vadd.f32 %v5103, %v7000
      %v7045 = vadd.f32 %v5104, %v7002
      %v7046 = vadd.f32 %v5105, %v6635
      %v7047 = vadd.f32 %v5106, %v6637
      %v7048 = vadd.f32 %v5107, %v6688
      %v7049 = vadd.f32 %v5108, %v6690
      %v7050 = vadd.f32 %v5109, %v6741
      %v7051 = vadd.f32 %v5110, %v6743
      %v7052 = vadd.f32 %v5111, %v6794
      %v7053 = vadd.f32 %v5112, %v6796
      %v7054 = vadd.f32 %v5113, %v6847
      %v7055 = vadd.f32 %v5114, %v6849
      %v7056 = vadd.f32 %v5115, %v6900
      %v7057 = vadd.f32 %v5116, %v6902
      %v7058 = vadd.f32 %v5117, %v6953
      %v7059 = vadd.f32 %v5118, %v6955
      %v7060 = vadd.f32 %v5119, %v7006
      %v7061 = vadd.f32 %v5120, %v7008
      %v7062 = vadd.f32 %v5121, %v6639
      %v7063 = vadd.f32 %v5122, %v6641
      %v7064 = vadd.f32 %v5123, %v6692
      %v7065 = vadd.f32 %v5124, %v6694
      %v7066 = vadd.f32 %v5125, %v6745
      %v7067 = vadd.f32 %v5126, %v6747
      %v7068 = vadd.f32 %v5127, %v6798
      %v7069 = vadd.f32 %v5128, %v6800
      %v7070 = vadd.f32 %v5129, %v6851
      %v7071 = vadd.f32 %v5130, %v6853
      %v7072 = vadd.f32 %v5131, %v6904
      %v7073 = vadd.f32 %v5132, %v6906
      %v7074 = vadd.f32 %v5133, %v6957
      %v7075 = vadd.f32 %v5134, %v6959
      %v7076 = vadd.f32 %v5135, %v7010
      %v7077 = vadd.f32 %v5136, %v7012
      %v7078 = vadd.f32 %v7014, %v7030
      %v7079 = vadd.f32 %v7078, %v7046
      %v7080 = vadd.f32 %v7079, %v7062
      %v7081 = vrot.slane %v7080, 4
      %v7082 = vadd.f32 %v7080, %v7081
      %v7083 = vrot.slane %v7082, 2
      %v7084 = vadd.f32 %v7082, %v7083
      %v7085 = vrot.slane %v7084, 1
      %v7086 = vadd.f32 %v7084, %v7085
      %v7087 = vadd.f32 %v7015, %v7031
      %v7088 = vadd.f32 %v7087, %v7047
      %v7089 = vadd.f32 %v7088, %v7063
      %v7090 = vrot.slane %v7089, 4
      %v7091 = vadd.f32 %v7089, %v7090
      %v7092 = vrot.slane %v7091, 2
      %v7093 = vadd.f32 %v7091, %v7092
      %v7094 = vrot.slane %v7093, 1
      %v7095 = vadd.f32 %v7093, %v7094
      %v7096 = vadd.f32 %v7016, %v7032
      %v7097 = vadd.f32 %v7096, %v7048
      %v7098 = vadd.f32 %v7097, %v7064
      %v7099 = vrot.slane %v7098, 4
      %v7100 = vadd.f32 %v7098, %v7099
      %v7101 = vrot.slane %v7100, 2
      %v7102 = vadd.f32 %v7100, %v7101
      %v7103 = vrot.slane %v7102, 1
      %v7104 = vadd.f32 %v7102, %v7103
      %v7105 = vadd.f32 %v7017, %v7033
      %v7106 = vadd.f32 %v7105, %v7049
      %v7107 = vadd.f32 %v7106, %v7065
      %v7108 = vrot.slane %v7107, 4
      %v7109 = vadd.f32 %v7107, %v7108
      %v7110 = vrot.slane %v7109, 2
      %v7111 = vadd.f32 %v7109, %v7110
      %v7112 = vrot.slane %v7111, 1
      %v7113 = vadd.f32 %v7111, %v7112
      %v7114 = vadd.f32 %v7018, %v7034
      %v7115 = vadd.f32 %v7114, %v7050
      %v7116 = vadd.f32 %v7115, %v7066
      %v7117 = vrot.slane %v7116, 4
      %v7118 = vadd.f32 %v7116, %v7117
      %v7119 = vrot.slane %v7118, 2
      %v7120 = vadd.f32 %v7118, %v7119
      %v7121 = vrot.slane %v7120, 1
      %v7122 = vadd.f32 %v7120, %v7121
      %v7123 = vadd.f32 %v7019, %v7035
      %v7124 = vadd.f32 %v7123, %v7051
      %v7125 = vadd.f32 %v7124, %v7067
      %v7126 = vrot.slane %v7125, 4
      %v7127 = vadd.f32 %v7125, %v7126
      %v7128 = vrot.slane %v7127, 2
      %v7129 = vadd.f32 %v7127, %v7128
      %v7130 = vrot.slane %v7129, 1
      %v7131 = vadd.f32 %v7129, %v7130
      %v7132 = vadd.f32 %v7020, %v7036
      %v7133 = vadd.f32 %v7132, %v7052
      %v7134 = vadd.f32 %v7133, %v7068
      %v7135 = vrot.slane %v7134, 4
      %v7136 = vadd.f32 %v7134, %v7135
      %v7137 = vrot.slane %v7136, 2
      %v7138 = vadd.f32 %v7136, %v7137
      %v7139 = vrot.slane %v7138, 1
      %v7140 = vadd.f32 %v7138, %v7139
      %v7141 = vadd.f32 %v7021, %v7037
      %v7142 = vadd.f32 %v7141, %v7053
      %v7143 = vadd.f32 %v7142, %v7069
      %v7144 = vrot.slane %v7143, 4
      %v7145 = vadd.f32 %v7143, %v7144
      %v7146 = vrot.slane %v7145, 2
      %v7147 = vadd.f32 %v7145, %v7146
      %v7148 = vrot.slane %v7147, 1
      %v7149 = vadd.f32 %v7147, %v7148
      %v7150 = vadd.f32 %v7022, %v7038
      %v7151 = vadd.f32 %v7150, %v7054
      %v7152 = vadd.f32 %v7151, %v7070
      %v7153 = vrot.slane %v7152, 4
      %v7154 = vadd.f32 %v7152, %v7153
      %v7155 = vrot.slane %v7154, 2
      %v7156 = vadd.f32 %v7154, %v7155
      %v7157 = vrot.slane %v7156, 1
      %v7158 = vadd.f32 %v7156, %v7157
      %v7159 = vadd.f32 %v7023, %v7039
      %v7160 = vadd.f32 %v7159, %v7055
      %v7161 = vadd.f32 %v7160, %v7071
      %v7162 = vrot.slane %v7161, 4
      %v7163 = vadd.f32 %v7161, %v7162
      %v7164 = vrot.slane %v7163, 2
      %v7165 = vadd.f32 %v7163, %v7164
      %v7166 = vrot.slane %v7165, 1
      %v7167 = vadd.f32 %v7165, %v7166
      %v7168 = vadd.f32 %v7024, %v7040
      %v7169 = vadd.f32 %v7168, %v7056
      %v7170 = vadd.f32 %v7169, %v7072
      %v7171 = vrot.slane %v7170, 4
      %v7172 = vadd.f32 %v7170, %v7171
      %v7173 = vrot.slane %v7172, 2
      %v7174 = vadd.f32 %v7172, %v7173
      %v7175 = vrot.slane %v7174, 1
      %v7176 = vadd.f32 %v7174, %v7175
      %v7177 = vadd.f32 %v7025, %v7041
      %v7178 = vadd.f32 %v7177, %v7057
      %v7179 = vadd.f32 %v7178, %v7073
      %v7180 = vrot.slane %v7179, 4
      %v7181 = vadd.f32 %v7179, %v7180
      %v7182 = vrot.slane %v7181, 2
      %v7183 = vadd.f32 %v7181, %v7182
      %v7184 = vrot.slane %v7183, 1
      %v7185 = vadd.f32 %v7183, %v7184
      %v7186 = vadd.f32 %v7026, %v7042
      %v7187 = vadd.f32 %v7186, %v7058
      %v7188 = vadd.f32 %v7187, %v7074
      %v7189 = vrot.slane %v7188, 4
      %v7190 = vadd.f32 %v7188, %v7189
      %v7191 = vrot.slane %v7190, 2
      %v7192 = vadd.f32 %v7190, %v7191
      %v7193 = vrot.slane %v7192, 1
      %v7194 = vadd.f32 %v7192, %v7193
      %v7195 = vadd.f32 %v7027, %v7043
      %v7196 = vadd.f32 %v7195, %v7059
      %v7197 = vadd.f32 %v7196, %v7075
      %v7198 = vrot.slane %v7197, 4
      %v7199 = vadd.f32 %v7197, %v7198
      %v7200 = vrot.slane %v7199, 2
      %v7201 = vadd.f32 %v7199, %v7200
      %v7202 = vrot.slane %v7201, 1
      %v7203 = vadd.f32 %v7201, %v7202
      %v7204 = vadd.f32 %v7028, %v7044
      %v7205 = vadd.f32 %v7204, %v7060
      %v7206 = vadd.f32 %v7205, %v7076
      %v7207 = vrot.slane %v7206, 4
      %v7208 = vadd.f32 %v7206, %v7207
      %v7209 = vrot.slane %v7208, 2
      %v7210 = vadd.f32 %v7208, %v7209
      %v7211 = vrot.slane %v7210, 1
      %v7212 = vadd.f32 %v7210, %v7211
      %v7213 = vadd.f32 %v7029, %v7045
      %v7214 = vadd.f32 %v7213, %v7061
      %v7215 = vadd.f32 %v7214, %v7077
      %v7216 = vrot.slane %v7215, 4
      %v7217 = vadd.f32 %v7215, %v7216
      %v7218 = vrot.slane %v7217, 2
      %v7219 = vadd.f32 %v7217, %v7218
      %v7220 = vrot.slane %v7219, 1
      %v7221 = vadd.f32 %v7219, %v7220
      %v7222 = vmul.f32 %v7086, %v4512
      %v7223 = vmul.f32 %v7095, %v4512
      %v7224 = vmul.f32 %v7104, %v4512
      %v7225 = vmul.f32 %v7113, %v4512
      %v7226 = vmul.f32 %v7122, %v4512
      %v7227 = vmul.f32 %v7131, %v4512
      %v7228 = vmul.f32 %v7140, %v4512
      %v7229 = vmul.f32 %v7149, %v4512
      %v7230 = vmul.f32 %v7158, %v4512
      %v7231 = vmul.f32 %v7167, %v4512
      %v7232 = vmul.f32 %v7176, %v4512
      %v7233 = vmul.f32 %v7185, %v4512
      %v7234 = vmul.f32 %v7194, %v4512
      %v7235 = vmul.f32 %v7203, %v4512
      %v7236 = vmul.f32 %v7212, %v4512
      %v7237 = vmul.f32 %v7221, %v4512
      %v7238 = vmul.f32 %v7014, %v7014
      %v7239 = vmul.f32 %v7015, %v7015
      %v7240 = vmul.f32 %v7016, %v7016
      %v7241 = vmul.f32 %v7017, %v7017
      %v7242 = vmul.f32 %v7018, %v7018
      %v7243 = vmul.f32 %v7019, %v7019
      %v7244 = vmul.f32 %v7020, %v7020
      %v7245 = vmul.f32 %v7021, %v7021
      %v7246 = vmul.f32 %v7022, %v7022
      %v7247 = vmul.f32 %v7023, %v7023
      %v7248 = vmul.f32 %v7024, %v7024
      %v7249 = vmul.f32 %v7025, %v7025
      %v7250 = vmul.f32 %v7026, %v7026
      %v7251 = vmul.f32 %v7027, %v7027
      %v7252 = vmul.f32 %v7028, %v7028
      %v7253 = vmul.f32 %v7029, %v7029
      %v7254 = vmul.f32 %v7030, %v7030
      %v7255 = vmul.f32 %v7031, %v7031
      %v7256 = vmul.f32 %v7032, %v7032
      %v7257 = vmul.f32 %v7033, %v7033
      %v7258 = vmul.f32 %v7034, %v7034
      %v7259 = vmul.f32 %v7035, %v7035
      %v7260 = vmul.f32 %v7036, %v7036
      %v7261 = vmul.f32 %v7037, %v7037
      %v7262 = vmul.f32 %v7038, %v7038
      %v7263 = vmul.f32 %v7039, %v7039
      %v7264 = vmul.f32 %v7040, %v7040
      %v7265 = vmul.f32 %v7041, %v7041
      %v7266 = vmul.f32 %v7042, %v7042
      %v7267 = vmul.f32 %v7043, %v7043
      %v7268 = vmul.f32 %v7044, %v7044
      %v7269 = vmul.f32 %v7045, %v7045
      %v7270 = vmul.f32 %v7046, %v7046
      %v7271 = vmul.f32 %v7047, %v7047
      %v7272 = vmul.f32 %v7048, %v7048
      %v7273 = vmul.f32 %v7049, %v7049
      %v7274 = vmul.f32 %v7050, %v7050
      %v7275 = vmul.f32 %v7051, %v7051
      %v7276 = vmul.f32 %v7052, %v7052
      %v7277 = vmul.f32 %v7053, %v7053
      %v7278 = vmul.f32 %v7054, %v7054
      %v7279 = vmul.f32 %v7055, %v7055
      %v7280 = vmul.f32 %v7056, %v7056
      %v7281 = vmul.f32 %v7057, %v7057
      %v7282 = vmul.f32 %v7058, %v7058
      %v7283 = vmul.f32 %v7059, %v7059
      %v7284 = vmul.f32 %v7060, %v7060
      %v7285 = vmul.f32 %v7061, %v7061
      %v7286 = vmul.f32 %v7062, %v7062
      %v7287 = vmul.f32 %v7063, %v7063
      %v7288 = vmul.f32 %v7064, %v7064
      %v7289 = vmul.f32 %v7065, %v7065
      %v7290 = vmul.f32 %v7066, %v7066
      %v7291 = vmul.f32 %v7067, %v7067
      %v7292 = vmul.f32 %v7068, %v7068
      %v7293 = vmul.f32 %v7069, %v7069
      %v7294 = vmul.f32 %v7070, %v7070
      %v7295 = vmul.f32 %v7071, %v7071
      %v7296 = vmul.f32 %v7072, %v7072
      %v7297 = vmul.f32 %v7073, %v7073
      %v7298 = vmul.f32 %v7074, %v7074
      %v7299 = vmul.f32 %v7075, %v7075
      %v7300 = vmul.f32 %v7076, %v7076
      %v7301 = vmul.f32 %v7077, %v7077
      %v7302 = vadd.f32 %v7238, %v7254
      %v7303 = vadd.f32 %v7302, %v7270
      %v7304 = vadd.f32 %v7303, %v7286
      %v7305 = vrot.slane %v7304, 4
      %v7306 = vadd.f32 %v7304, %v7305
      %v7307 = vrot.slane %v7306, 2
      %v7308 = vadd.f32 %v7306, %v7307
      %v7309 = vrot.slane %v7308, 1
      %v7310 = vadd.f32 %v7308, %v7309
      %v7311 = vadd.f32 %v7239, %v7255
      %v7312 = vadd.f32 %v7311, %v7271
      %v7313 = vadd.f32 %v7312, %v7287
      %v7314 = vrot.slane %v7313, 4
      %v7315 = vadd.f32 %v7313, %v7314
      %v7316 = vrot.slane %v7315, 2
      %v7317 = vadd.f32 %v7315, %v7316
      %v7318 = vrot.slane %v7317, 1
      %v7319 = vadd.f32 %v7317, %v7318
      %v7320 = vadd.f32 %v7240, %v7256
      %v7321 = vadd.f32 %v7320, %v7272
      %v7322 = vadd.f32 %v7321, %v7288
      %v7323 = vrot.slane %v7322, 4
      %v7324 = vadd.f32 %v7322, %v7323
      %v7325 = vrot.slane %v7324, 2
      %v7326 = vadd.f32 %v7324, %v7325
      %v7327 = vrot.slane %v7326, 1
      %v7328 = vadd.f32 %v7326, %v7327
      %v7329 = vadd.f32 %v7241, %v7257
      %v7330 = vadd.f32 %v7329, %v7273
      %v7331 = vadd.f32 %v7330, %v7289
      %v7332 = vrot.slane %v7331, 4
      %v7333 = vadd.f32 %v7331, %v7332
      %v7334 = vrot.slane %v7333, 2
      %v7335 = vadd.f32 %v7333, %v7334
      %v7336 = vrot.slane %v7335, 1
      %v7337 = vadd.f32 %v7335, %v7336
      %v7338 = vadd.f32 %v7242, %v7258
      %v7339 = vadd.f32 %v7338, %v7274
      %v7340 = vadd.f32 %v7339, %v7290
      %v7341 = vrot.slane %v7340, 4
      %v7342 = vadd.f32 %v7340, %v7341
      %v7343 = vrot.slane %v7342, 2
      %v7344 = vadd.f32 %v7342, %v7343
      %v7345 = vrot.slane %v7344, 1
      %v7346 = vadd.f32 %v7344, %v7345
      %v7347 = vadd.f32 %v7243, %v7259
      %v7348 = vadd.f32 %v7347, %v7275
      %v7349 = vadd.f32 %v7348, %v7291
      %v7350 = vrot.slane %v7349, 4
      %v7351 = vadd.f32 %v7349, %v7350
      %v7352 = vrot.slane %v7351, 2
      %v7353 = vadd.f32 %v7351, %v7352
      %v7354 = vrot.slane %v7353, 1
      %v7355 = vadd.f32 %v7353, %v7354
      %v7356 = vadd.f32 %v7244, %v7260
      %v7357 = vadd.f32 %v7356, %v7276
      %v7358 = vadd.f32 %v7357, %v7292
      %v7359 = vrot.slane %v7358, 4
      %v7360 = vadd.f32 %v7358, %v7359
      %v7361 = vrot.slane %v7360, 2
      %v7362 = vadd.f32 %v7360, %v7361
      %v7363 = vrot.slane %v7362, 1
      %v7364 = vadd.f32 %v7362, %v7363
      %v7365 = vadd.f32 %v7245, %v7261
      %v7366 = vadd.f32 %v7365, %v7277
      %v7367 = vadd.f32 %v7366, %v7293
      %v7368 = vrot.slane %v7367, 4
      %v7369 = vadd.f32 %v7367, %v7368
      %v7370 = vrot.slane %v7369, 2
      %v7371 = vadd.f32 %v7369, %v7370
      %v7372 = vrot.slane %v7371, 1
      %v7373 = vadd.f32 %v7371, %v7372
      %v7374 = vadd.f32 %v7246, %v7262
      %v7375 = vadd.f32 %v7374, %v7278
      %v7376 = vadd.f32 %v7375, %v7294
      %v7377 = vrot.slane %v7376, 4
      %v7378 = vadd.f32 %v7376, %v7377
      %v7379 = vrot.slane %v7378, 2
      %v7380 = vadd.f32 %v7378, %v7379
      %v7381 = vrot.slane %v7380, 1
      %v7382 = vadd.f32 %v7380, %v7381
      %v7383 = vadd.f32 %v7247, %v7263
      %v7384 = vadd.f32 %v7383, %v7279
      %v7385 = vadd.f32 %v7384, %v7295
      %v7386 = vrot.slane %v7385, 4
      %v7387 = vadd.f32 %v7385, %v7386
      %v7388 = vrot.slane %v7387, 2
      %v7389 = vadd.f32 %v7387, %v7388
      %v7390 = vrot.slane %v7389, 1
      %v7391 = vadd.f32 %v7389, %v7390
      %v7392 = vadd.f32 %v7248, %v7264
      %v7393 = vadd.f32 %v7392, %v7280
      %v7394 = vadd.f32 %v7393, %v7296
      %v7395 = vrot.slane %v7394, 4
      %v7396 = vadd.f32 %v7394, %v7395
      %v7397 = vrot.slane %v7396, 2
      %v7398 = vadd.f32 %v7396, %v7397
      %v7399 = vrot.slane %v7398, 1
      %v7400 = vadd.f32 %v7398, %v7399
      %v7401 = vadd.f32 %v7249, %v7265
      %v7402 = vadd.f32 %v7401, %v7281
      %v7403 = vadd.f32 %v7402, %v7297
      %v7404 = vrot.slane %v7403, 4
      %v7405 = vadd.f32 %v7403, %v7404
      %v7406 = vrot.slane %v7405, 2
      %v7407 = vadd.f32 %v7405, %v7406
      %v7408 = vrot.slane %v7407, 1
      %v7409 = vadd.f32 %v7407, %v7408
      %v7410 = vadd.f32 %v7250, %v7266
      %v7411 = vadd.f32 %v7410, %v7282
      %v7412 = vadd.f32 %v7411, %v7298
      %v7413 = vrot.slane %v7412, 4
      %v7414 = vadd.f32 %v7412, %v7413
      %v7415 = vrot.slane %v7414, 2
      %v7416 = vadd.f32 %v7414, %v7415
      %v7417 = vrot.slane %v7416, 1
      %v7418 = vadd.f32 %v7416, %v7417
      %v7419 = vadd.f32 %v7251, %v7267
      %v7420 = vadd.f32 %v7419, %v7283
      %v7421 = vadd.f32 %v7420, %v7299
      %v7422 = vrot.slane %v7421, 4
      %v7423 = vadd.f32 %v7421, %v7422
      %v7424 = vrot.slane %v7423, 2
      %v7425 = vadd.f32 %v7423, %v7424
      %v7426 = vrot.slane %v7425, 1
      %v7427 = vadd.f32 %v7425, %v7426
      %v7428 = vadd.f32 %v7252, %v7268
      %v7429 = vadd.f32 %v7428, %v7284
      %v7430 = vadd.f32 %v7429, %v7300
      %v7431 = vrot.slane %v7430, 4
      %v7432 = vadd.f32 %v7430, %v7431
      %v7433 = vrot.slane %v7432, 2
      %v7434 = vadd.f32 %v7432, %v7433
      %v7435 = vrot.slane %v7434, 1
      %v7436 = vadd.f32 %v7434, %v7435
      %v7437 = vadd.f32 %v7253, %v7269
      %v7438 = vadd.f32 %v7437, %v7285
      %v7439 = vadd.f32 %v7438, %v7301
      %v7440 = vrot.slane %v7439, 4
      %v7441 = vadd.f32 %v7439, %v7440
      %v7442 = vrot.slane %v7441, 2
      %v7443 = vadd.f32 %v7441, %v7442
      %v7444 = vrot.slane %v7443, 1
      %v7445 = vadd.f32 %v7443, %v7444
      %v7446 = vmul.f32 %v7310, %v4512
      %v7447 = vmul.f32 %v7319, %v4512
      %v7448 = vmul.f32 %v7328, %v4512
      %v7449 = vmul.f32 %v7337, %v4512
      %v7450 = vmul.f32 %v7346, %v4512
      %v7451 = vmul.f32 %v7355, %v4512
      %v7452 = vmul.f32 %v7364, %v4512
      %v7453 = vmul.f32 %v7373, %v4512
      %v7454 = vmul.f32 %v7382, %v4512
      %v7455 = vmul.f32 %v7391, %v4512
      %v7456 = vmul.f32 %v7400, %v4512
      %v7457 = vmul.f32 %v7409, %v4512
      %v7458 = vmul.f32 %v7418, %v4512
      %v7459 = vmul.f32 %v7427, %v4512
      %v7460 = vmul.f32 %v7436, %v4512
      %v7461 = vmul.f32 %v7445, %v4512
      %v7462 = vmul.f32 %v7222, %v7222
      %v7463 = vmul.f32 %v7223, %v7223
      %v7464 = vmul.f32 %v7224, %v7224
      %v7465 = vmul.f32 %v7225, %v7225
      %v7466 = vmul.f32 %v7226, %v7226
      %v7467 = vmul.f32 %v7227, %v7227
      %v7468 = vmul.f32 %v7228, %v7228
      %v7469 = vmul.f32 %v7229, %v7229
      %v7470 = vmul.f32 %v7230, %v7230
      %v7471 = vmul.f32 %v7231, %v7231
      %v7472 = vmul.f32 %v7232, %v7232
      %v7473 = vmul.f32 %v7233, %v7233
      %v7474 = vmul.f32 %v7234, %v7234
      %v7475 = vmul.f32 %v7235, %v7235
      %v7476 = vmul.f32 %v7236, %v7236
      %v7477 = vmul.f32 %v7237, %v7237
      %v7478 = vsub.f32 %v7446, %v7462
      %v7479 = vsub.f32 %v7447, %v7463
      %v7480 = vsub.f32 %v7448, %v7464
      %v7481 = vsub.f32 %v7449, %v7465
      %v7482 = vsub.f32 %v7450, %v7466
      %v7483 = vsub.f32 %v7451, %v7467
      %v7484 = vsub.f32 %v7452, %v7468
      %v7485 = vsub.f32 %v7453, %v7469
      %v7486 = vsub.f32 %v7454, %v7470
      %v7487 = vsub.f32 %v7455, %v7471
      %v7488 = vsub.f32 %v7456, %v7472
      %v7489 = vsub.f32 %v7457, %v7473
      %v7490 = vsub.f32 %v7458, %v7474
      %v7491 = vsub.f32 %v7459, %v7475
      %v7492 = vsub.f32 %v7460, %v7476
      %v7493 = vsub.f32 %v7461, %v7477
      %v7494 = vmax.f32 %v7478, 0.0
      %v7495 = vmax.f32 %v7479, 0.0
      %v7496 = vmax.f32 %v7480, 0.0
      %v7497 = vmax.f32 %v7481, 0.0
      %v7498 = vmax.f32 %v7482, 0.0
      %v7499 = vmax.f32 %v7483, 0.0
      %v7500 = vmax.f32 %v7484, 0.0
      %v7501 = vmax.f32 %v7485, 0.0
      %v7502 = vmax.f32 %v7486, 0.0
      %v7503 = vmax.f32 %v7487, 0.0
      %v7504 = vmax.f32 %v7488, 0.0
      %v7505 = vmax.f32 %v7489, 0.0
      %v7506 = vmax.f32 %v7490, 0.0
      %v7507 = vmax.f32 %v7491, 0.0
      %v7508 = vmax.f32 %v7492, 0.0
      %v7509 = vmax.f32 %v7493, 0.0
      %v7510 = vsub.f32 %v7014, %v7222
      %v7511 = vsub.f32 %v7015, %v7223
      %v7512 = vsub.f32 %v7016, %v7224
      %v7513 = vsub.f32 %v7017, %v7225
      %v7514 = vsub.f32 %v7018, %v7226
      %v7515 = vsub.f32 %v7019, %v7227
      %v7516 = vsub.f32 %v7020, %v7228
      %v7517 = vsub.f32 %v7021, %v7229
      %v7518 = vsub.f32 %v7022, %v7230
      %v7519 = vsub.f32 %v7023, %v7231
      %v7520 = vsub.f32 %v7024, %v7232
      %v7521 = vsub.f32 %v7025, %v7233
      %v7522 = vsub.f32 %v7026, %v7234
      %v7523 = vsub.f32 %v7027, %v7235
      %v7524 = vsub.f32 %v7028, %v7236
      %v7525 = vsub.f32 %v7029, %v7237
      %v7526 = vsub.f32 %v7030, %v7222
      %v7527 = vsub.f32 %v7031, %v7223
      %v7528 = vsub.f32 %v7032, %v7224
      %v7529 = vsub.f32 %v7033, %v7225
      %v7530 = vsub.f32 %v7034, %v7226
      %v7531 = vsub.f32 %v7035, %v7227
      %v7532 = vsub.f32 %v7036, %v7228
      %v7533 = vsub.f32 %v7037, %v7229
      %v7534 = vsub.f32 %v7038, %v7230
      %v7535 = vsub.f32 %v7039, %v7231
      %v7536 = vsub.f32 %v7040, %v7232
      %v7537 = vsub.f32 %v7041, %v7233
      %v7538 = vsub.f32 %v7042, %v7234
      %v7539 = vsub.f32 %v7043, %v7235
      %v7540 = vsub.f32 %v7044, %v7236
      %v7541 = vsub.f32 %v7045, %v7237
      %v7542 = vsub.f32 %v7046, %v7222
      %v7543 = vsub.f32 %v7047, %v7223
      %v7544 = vsub.f32 %v7048, %v7224
      %v7545 = vsub.f32 %v7049, %v7225
      %v7546 = vsub.f32 %v7050, %v7226
      %v7547 = vsub.f32 %v7051, %v7227
      %v7548 = vsub.f32 %v7052, %v7228
      %v7549 = vsub.f32 %v7053, %v7229
      %v7550 = vsub.f32 %v7054, %v7230
      %v7551 = vsub.f32 %v7055, %v7231
      %v7552 = vsub.f32 %v7056, %v7232
      %v7553 = vsub.f32 %v7057, %v7233
      %v7554 = vsub.f32 %v7058, %v7234
      %v7555 = vsub.f32 %v7059, %v7235
      %v7556 = vsub.f32 %v7060, %v7236
      %v7557 = vsub.f32 %v7061, %v7237
      %v7558 = vsub.f32 %v7062, %v7222
      %v7559 = vsub.f32 %v7063, %v7223
      %v7560 = vsub.f32 %v7064, %v7224
      %v7561 = vsub.f32 %v7065, %v7225
      %v7562 = vsub.f32 %v7066, %v7226
      %v7563 = vsub.f32 %v7067, %v7227
      %v7564 = vsub.f32 %v7068, %v7228
      %v7565 = vsub.f32 %v7069, %v7229
      %v7566 = vsub.f32 %v7070, %v7230
      %v7567 = vsub.f32 %v7071, %v7231
      %v7568 = vsub.f32 %v7072, %v7232
      %v7569 = vsub.f32 %v7073, %v7233
      %v7570 = vsub.f32 %v7074, %v7234
      %v7571 = vsub.f32 %v7075, %v7235
      %v7572 = vsub.f32 %v7076, %v7236
      %v7573 = vsub.f32 %v7077, %v7237
      %v7574 = vadd.f32 %v7494, 1e-05
      %v7575 = vadd.f32 %v7495, 1e-05
      %v7576 = vadd.f32 %v7496, 1e-05
      %v7577 = vadd.f32 %v7497, 1e-05
      %v7578 = vadd.f32 %v7498, 1e-05
      %v7579 = vadd.f32 %v7499, 1e-05
      %v7580 = vadd.f32 %v7500, 1e-05
      %v7581 = vadd.f32 %v7501, 1e-05
      %v7582 = vadd.f32 %v7502, 1e-05
      %v7583 = vadd.f32 %v7503, 1e-05
      %v7584 = vadd.f32 %v7504, 1e-05
      %v7585 = vadd.f32 %v7505, 1e-05
      %v7586 = vadd.f32 %v7506, 1e-05
      %v7587 = vadd.f32 %v7507, 1e-05
      %v7588 = vadd.f32 %v7508, 1e-05
      %v7589 = vadd.f32 %v7509, 1e-05
      %v7590 = vrsqrt.pop %v7574
      %v7591 = vrsqrt.pop %v7575
      %v7592 = vrsqrt.pop %v7576
      %v7593 = vrsqrt.pop %v7577
      %v7594 = vrsqrt.pop %v7578
      %v7595 = vrsqrt.pop %v7579
      %v7596 = vrsqrt.pop %v7580
      %v7597 = vrsqrt.pop %v7581
      %v7598 = vrsqrt.pop %v7582
      %v7599 = vrsqrt.pop %v7583
      %v7600 = vrsqrt.pop %v7584
      %v7601 = vrsqrt.pop %v7585
      %v7602 = vrsqrt.pop %v7586
      %v7603 = vrsqrt.pop %v7587
      %v7604 = vrsqrt.pop %v7588
      %v7605 = vrsqrt.pop %v7589
      %v7606 = vmul.f32 %v7510, %v7590
      %v7607 = vmul.f32 %v7511, %v7591
      %v7608 = vmul.f32 %v7512, %v7592
      %v7609 = vmul.f32 %v7513, %v7593
      %v7610 = vmul.f32 %v7514, %v7594
      %v7611 = vmul.f32 %v7515, %v7595
      %v7612 = vmul.f32 %v7516, %v7596
      %v7613 = vmul.f32 %v7517, %v7597
      %v7614 = vmul.f32 %v7518, %v7598
      %v7615 = vmul.f32 %v7519, %v7599
      %v7616 = vmul.f32 %v7520, %v7600
      %v7617 = vmul.f32 %v7521, %v7601
      %v7618 = vmul.f32 %v7522, %v7602
      %v7619 = vmul.f32 %v7523, %v7603
      %v7620 = vmul.f32 %v7524, %v7604
      %v7621 = vmul.f32 %v7525, %v7605
      %v7622 = vmul.f32 %v7526, %v7590
      %v7623 = vmul.f32 %v7527, %v7591
      %v7624 = vmul.f32 %v7528, %v7592
      %v7625 = vmul.f32 %v7529, %v7593
      %v7626 = vmul.f32 %v7530, %v7594
      %v7627 = vmul.f32 %v7531, %v7595
      %v7628 = vmul.f32 %v7532, %v7596
      %v7629 = vmul.f32 %v7533, %v7597
      %v7630 = vmul.f32 %v7534, %v7598
      %v7631 = vmul.f32 %v7535, %v7599
      %v7632 = vmul.f32 %v7536, %v7600
      %v7633 = vmul.f32 %v7537, %v7601
      %v7634 = vmul.f32 %v7538, %v7602
      %v7635 = vmul.f32 %v7539, %v7603
      %v7636 = vmul.f32 %v7540, %v7604
      %v7637 = vmul.f32 %v7541, %v7605
      %v7638 = vmul.f32 %v7542, %v7590
      %v7639 = vmul.f32 %v7543, %v7591
      %v7640 = vmul.f32 %v7544, %v7592
      %v7641 = vmul.f32 %v7545, %v7593
      %v7642 = vmul.f32 %v7546, %v7594
      %v7643 = vmul.f32 %v7547, %v7595
      %v7644 = vmul.f32 %v7548, %v7596
      %v7645 = vmul.f32 %v7549, %v7597
      %v7646 = vmul.f32 %v7550, %v7598
      %v7647 = vmul.f32 %v7551, %v7599
      %v7648 = vmul.f32 %v7552, %v7600
      %v7649 = vmul.f32 %v7553, %v7601
      %v7650 = vmul.f32 %v7554, %v7602
      %v7651 = vmul.f32 %v7555, %v7603
      %v7652 = vmul.f32 %v7556, %v7604
      %v7653 = vmul.f32 %v7557, %v7605
      %v7654 = vmul.f32 %v7558, %v7590
      %v7655 = vmul.f32 %v7559, %v7591
      %v7656 = vmul.f32 %v7560, %v7592
      %v7657 = vmul.f32 %v7561, %v7593
      %v7658 = vmul.f32 %v7562, %v7594
      %v7659 = vmul.f32 %v7563, %v7595
      %v7660 = vmul.f32 %v7564, %v7596
      %v7661 = vmul.f32 %v7565, %v7597
      %v7662 = vmul.f32 %v7566, %v7598
      %v7663 = vmul.f32 %v7567, %v7599
      %v7664 = vmul.f32 %v7568, %v7600
      %v7665 = vmul.f32 %v7569, %v7601
      %v7666 = vmul.f32 %v7570, %v7602
      %v7667 = vmul.f32 %v7571, %v7603
      %v7668 = vmul.f32 %v7572, %v7604
      %v7669 = vmul.f32 %v7573, %v7605
      %v7670 = vld [vmem:[%s733] sm:$0xff]
      %v7671 = vld [vmem:[%s733 + $0x8] sm:$0xff]
      %v7672 = vld [vmem:[%s733 + $0x10] sm:$0xff]
      %v7673 = vld [vmem:[%s733 + $0x18] sm:$0xff]
      %7675 = vset.pattern.permute.xlu0 0
      %7676 = vperm.xlu0 %7675, %v7670
      %v7677 = vpop.permute.xlu0 %7676
      %7680 = vset.pattern.permute.xlu0 0
      %7681 = vperm.xlu0 %7680, %v7671
      %v7682 = vpop.permute.xlu0 %7681
      %7685 = vset.pattern.permute.xlu0 0
      %7686 = vperm.xlu0 %7685, %v7672
      %v7687 = vpop.permute.xlu0 %7686
      %7690 = vset.pattern.permute.xlu0 0
      %7691 = vperm.xlu0 %7690, %v7673
      %v7692 = vpop.permute.xlu0 %7691
      %v7694 = vmul.f32 %v7606, %v7677
      %v7695 = vmul.f32 %v7607, %v7677
      %v7696 = vmul.f32 %v7608, %v7677
      %v7697 = vmul.f32 %v7609, %v7677
      %v7698 = vmul.f32 %v7610, %v7677
      %v7699 = vmul.f32 %v7611, %v7677
      %v7700 = vmul.f32 %v7612, %v7677
      %v7701 = vmul.f32 %v7613, %v7677
      %v7702 = vmul.f32 %v7614, %v7677
      %v7703 = vmul.f32 %v7615, %v7677
      %v7704 = vmul.f32 %v7616, %v7677
      %v7705 = vmul.f32 %v7617, %v7677
      %v7706 = vmul.f32 %v7618, %v7677
      %v7707 = vmul.f32 %v7619, %v7677
      %v7708 = vmul.f32 %v7620, %v7677
      %v7709 = vmul.f32 %v7621, %v7677
      %v7710 = vmul.f32 %v7622, %v7682
      %v7711 = vmul.f32 %v7623, %v7682
      %v7712 = vmul.f32 %v7624, %v7682
      %v7713 = vmul.f32 %v7625, %v7682
      %v7714 = vmul.f32 %v7626, %v7682
      %v7715 = vmul.f32 %v7627, %v7682
      %v7716 = vmul.f32 %v7628, %v7682
      %v7717 = vmul.f32 %v7629, %v7682
      %v7718 = vmul.f32 %v7630, %v7682
      %v7719 = vmul.f32 %v7631, %v7682
      %v7720 = vmul.f32 %v7632, %v7682
      %v7721 = vmul.f32 %v7633, %v7682
      %v7722 = vmul.f32 %v7634, %v7682
      %v7723 = vmul.f32 %v7635, %v7682
      %v7724 = vmul.f32 %v7636, %v7682
      %v7725 = vmul.f32 %v7637, %v7682
      %v7726 = vmul.f32 %v7638, %v7687
      %v7727 = vmul.f32 %v7639, %v7687
      %v7728 = vmul.f32 %v7640, %v7687
      %v7729 = vmul.f32 %v7641, %v7687
      %v7730 = vmul.f32 %v7642, %v7687
      %v7731 = vmul.f32 %v7643, %v7687
      %v7732 = vmul.f32 %v7644, %v7687
      %v7733 = vmul.f32 %v7645, %v7687
      %v7734 = vmul.f32 %v7646, %v7687
      %v7735 = vmul.f32 %v7647, %v7687
      %v7736 = vmul.f32 %v7648, %v7687
      %v7737 = vmul.f32 %v7649, %v7687
      %v7738 = vmul.f32 %v7650, %v7687
      %v7739 = vmul.f32 %v7651, %v7687
      %v7740 = vmul.f32 %v7652, %v7687
      %v7741 = vmul.f32 %v7653, %v7687
      %v7742 = vmul.f32 %v7654, %v7692
      %v7743 = vmul.f32 %v7655, %v7692
      %v7744 = vmul.f32 %v7656, %v7692
      %v7745 = vmul.f32 %v7657, %v7692
      %v7746 = vmul.f32 %v7658, %v7692
      %v7747 = vmul.f32 %v7659, %v7692
      %v7748 = vmul.f32 %v7660, %v7692
      %v7749 = vmul.f32 %v7661, %v7692
      %v7750 = vmul.f32 %v7662, %v7692
      %v7751 = vmul.f32 %v7663, %v7692
      %v7752 = vmul.f32 %v7664, %v7692
      %v7753 = vmul.f32 %v7665, %v7692
      %v7754 = vmul.f32 %v7666, %v7692
      %v7755 = vmul.f32 %v7667, %v7692
      %v7756 = vmul.f32 %v7668, %v7692
      %v7757 = vmul.f32 %v7669, %v7692
      %v7758 = vld [vmem:[%s738] sm:$0xff]
      %v7759 = vld [vmem:[%s738 + $0x8] sm:$0xff]
      %v7760 = vld [vmem:[%s738 + $0x10] sm:$0xff]
      %v7761 = vld [vmem:[%s738 + $0x18] sm:$0xff]
      %7763 = vset.pattern.permute.xlu0 0
      %7764 = vperm.xlu0 %7763, %v7758
      %v7765 = vpop.permute.xlu0 %7764
      %7768 = vset.pattern.permute.xlu0 0
      %7769 = vperm.xlu0 %7768, %v7759
      %v7770 = vpop.permute.xlu0 %7769
      %7773 = vset.pattern.permute.xlu0 0
      %7774 = vperm.xlu0 %7773, %v7760
      %v7775 = vpop.permute.xlu0 %7774
      %7778 = vset.pattern.permute.xlu0 0
      %7779 = vperm.xlu0 %7778, %v7761
      %v7780 = vpop.permute.xlu0 %7779
      %v7782 = vadd.f32 %v7694, %v7765
      %v7783 = vadd.f32 %v7695, %v7765
      %v7784 = vadd.f32 %v7696, %v7765
      %v7785 = vadd.f32 %v7697, %v7765
      %v7786 = vadd.f32 %v7698, %v7765
      %v7787 = vadd.f32 %v7699, %v7765
      %v7788 = vadd.f32 %v7700, %v7765
      %v7789 = vadd.f32 %v7701, %v7765
      %v7790 = vadd.f32 %v7702, %v7765
      %v7791 = vadd.f32 %v7703, %v7765
      %v7792 = vadd.f32 %v7704, %v7765
      %v7793 = vadd.f32 %v7705, %v7765
      %v7794 = vadd.f32 %v7706, %v7765
      %v7795 = vadd.f32 %v7707, %v7765
      %v7796 = vadd.f32 %v7708, %v7765
      %v7797 = vadd.f32 %v7709, %v7765
      %v7798 = vadd.f32 %v7710, %v7770
      %v7799 = vadd.f32 %v7711, %v7770
      %v7800 = vadd.f32 %v7712, %v7770
      %v7801 = vadd.f32 %v7713, %v7770
      %v7802 = vadd.f32 %v7714, %v7770
      %v7803 = vadd.f32 %v7715, %v7770
      %v7804 = vadd.f32 %v7716, %v7770
      %v7805 = vadd.f32 %v7717, %v7770
      %v7806 = vadd.f32 %v7718, %v7770
      %v7807 = vadd.f32 %v7719, %v7770
      %v7808 = vadd.f32 %v7720, %v7770
      %v7809 = vadd.f32 %v7721, %v7770
      %v7810 = vadd.f32 %v7722, %v7770
      %v7811 = vadd.f32 %v7723, %v7770
      %v7812 = vadd.f32 %v7724, %v7770
      %v7813 = vadd.f32 %v7725, %v7770
      %v7814 = vadd.f32 %v7726, %v7775
      %v7815 = vadd.f32 %v7727, %v7775
      %v7816 = vadd.f32 %v7728, %v7775
      %v7817 = vadd.f32 %v7729, %v7775
      %v7818 = vadd.f32 %v7730, %v7775
      %v7819 = vadd.f32 %v7731, %v7775
      %v7820 = vadd.f32 %v7732, %v7775
      %v7821 = vadd.f32 %v7733, %v7775
      %v7822 = vadd.f32 %v7734, %v7775
      %v7823 = vadd.f32 %v7735, %v7775
      %v7824 = vadd.f32 %v7736, %v7775
      %v7825 = vadd.f32 %v7737, %v7775
      %v7826 = vadd.f32 %v7738, %v7775
      %v7827 = vadd.f32 %v7739, %v7775
      %v7828 = vadd.f32 %v7740, %v7775
      %v7829 = vadd.f32 %v7741, %v7775
      %v7830 = vadd.f32 %v7742, %v7780
      %v7831 = vadd.f32 %v7743, %v7780
      %v7832 = vadd.f32 %v7744, %v7780
      %v7833 = vadd.f32 %v7745, %v7780
      %v7834 = vadd.f32 %v7746, %v7780
      %v7835 = vadd.f32 %v7747, %v7780
      %v7836 = vadd.f32 %v7748, %v7780
      %v7837 = vadd.f32 %v7749, %v7780
      %v7838 = vadd.f32 %v7750, %v7780
      %v7839 = vadd.f32 %v7751, %v7780
      %v7840 = vadd.f32 %v7752, %v7780
      %v7841 = vadd.f32 %v7753, %v7780
      %v7842 = vadd.f32 %v7754, %v7780
      %v7843 = vadd.f32 %v7755, %v7780
      %v7844 = vadd.f32 %v7756, %v7780
      %v7845 = vadd.f32 %v7757, %v7780
      %7846 = vst [vmem:[#allocation2] sm:$0xff] %v7782
      %7847 = vst [vmem:[#allocation2 + $0x8] sm:$0xff] %v7783
      %7848 = vst [vmem:[#allocation2 + $0x10] sm:$0xff] %v7784
      %7849 = vst [vmem:[#allocation2 + $0x18] sm:$0xff] %v7785
      %7850 = vst [vmem:[#allocation2 + $0x20] sm:$0xff] %v7786
      %7851 = vst [vmem:[#allocation2 + $0x28] sm:$0xff] %v7787
      %7852 = vst [vmem:[#allocation2 + $0x30] sm:$0xff] %v7788
      %7853 = vst [vmem:[#allocation2 + $0x38] sm:$0xff] %v7789
      %7854 = vst [vmem:[#allocation2 + $0x40] sm:$0xff] %v7790
      %7855 = vst [vmem:[#allocation2 + $0x48] sm:$0xff] %v7791
      %7856 = vst [vmem:[#allocation2 + $0x50] sm:$0xff] %v7792
      %7857 = vst [vmem:[#allocation2 + $0x58] sm:$0xff] %v7793
      %7858 = vst [vmem:[#allocation2 + $0x60] sm:$0xff] %v7794
      %7859 = vst [vmem:[#allocation2 + $0x68] sm:$0xff] %v7795
      %7860 = vst [vmem:[#allocation2 + $0x70] sm:$0xff] %v7796
      %7861 = vst [vmem:[#allocation2 + $0x78] sm:$0xff] %v7797
      %7862 = vst [vmem:[#allocation2 + $0x80] sm:$0xff] %v7798
      %7863 = vst [vmem:[#allocation2 + $0x88] sm:$0xff] %v7799
      %7864 = vst [vmem:[#allocation2 + $0x90] sm:$0xff] %v7800
      %7865 = vst [vmem:[#allocation2 + $0x98] sm:$0xff] %v7801
      %7866 = vst [vmem:[#allocation2 + $0xa0] sm:$0xff] %v7802
      %7867 = vst [vmem:[#allocation2 + $0xa8] sm:$0xff] %v7803
      %7868 = vst [vmem:[#allocation2 + $0xb0] sm:$0xff] %v7804
      %7869 = vst [vmem:[#allocation2 + $0xb8] sm:$0xff] %v7805
      %7870 = vst [vmem:[#allocation2 + $0xc0] sm:$0xff] %v7806
      %7871 = vst [vmem:[#allocation2 + $0xc8] sm:$0xff] %v7807
      %7872 = vst [vmem:[#allocation2 + $0xd0] sm:$0xff] %v7808
      %7873 = vst [vmem:[#allocation2 + $0xd8] sm:$0xff] %v7809
      %7874 = vst [vmem:[#allocation2 + $0xe0] sm:$0xff] %v7810
      %7875 = vst [vmem:[#allocation2 + $0xe8] sm:$0xff] %v7811
      %7876 = vst [vmem:[#allocation2 + $0xf0] sm:$0xff] %v7812
      %7877 = vst [vmem:[#allocation2 + $0xf8] sm:$0xff] %v7813
      %7878 = vst [vmem:[#allocation2 + $0x100] sm:$0xff] %v7814
      %7879 = vst [vmem:[#allocation2 + $0x108] sm:$0xff] %v7815
      %7880 = vst [vmem:[#allocation2 + $0x110] sm:$0xff] %v7816
      %7881 = vst [vmem:[#allocation2 + $0x118] sm:$0xff] %v7817
      %7882 = vst [vmem:[#allocation2 + $0x120] sm:$0xff] %v7818
      %7883 = vst [vmem:[#allocation2 + $0x128] sm:$0xff] %v7819
      %7884 = vst [vmem:[#allocation2 + $0x130] sm:$0xff] %v7820
      %7885 = vst [vmem:[#allocation2 + $0x138] sm:$0xff] %v7821
      %7886 = vst [vmem:[#allocation2 + $0x140] sm:$0xff] %v7822
      %7887 = vst [vmem:[#allocation2 + $0x148] sm:$0xff] %v7823
      %7888 = vst [vmem:[#allocation2 + $0x150] sm:$0xff] %v7824
      %7889 = vst [vmem:[#allocation2 + $0x158] sm:$0xff] %v7825
      %7890 = vst [vmem:[#allocation2 + $0x160] sm:$0xff] %v7826
      %7891 = vst [vmem:[#allocation2 + $0x168] sm:$0xff] %v7827
      %7892 = vst [vmem:[#allocation2 + $0x170] sm:$0xff] %v7828
      %7893 = vst [vmem:[#allocation2 + $0x178] sm:$0xff] %v7829
      %7894 = vst [vmem:[#allocation2 + $0x180] sm:$0xff] %v7830
      %7895 = vst [vmem:[#allocation2 + $0x188] sm:$0xff] %v7831
      %7896 = vst [vmem:[#allocation2 + $0x190] sm:$0xff] %v7832
      %7897 = vst [vmem:[#allocation2 + $0x198] sm:$0xff] %v7833
      %7898 = vst [vmem:[#allocation2 + $0x1a0] sm:$0xff] %v7834
      %7899 = vst [vmem:[#allocation2 + $0x1a8] sm:$0xff] %v7835
      %7900 = vst [vmem:[#allocation2 + $0x1b0] sm:$0xff] %v7836
      %7901 = vst [vmem:[#allocation2 + $0x1b8] sm:$0xff] %v7837
      %7902 = vst [vmem:[#allocation2 + $0x1c0] sm:$0xff] %v7838
      %7903 = vst [vmem:[#allocation2 + $0x1c8] sm:$0xff] %v7839
      %7904 = vst [vmem:[#allocation2 + $0x1d0] sm:$0xff] %v7840
      %7905 = vst [vmem:[#allocation2 + $0x1d8] sm:$0xff] %v7841
      %7906 = vst [vmem:[#allocation2 + $0x1e0] sm:$0xff] %v7842
      %7907 = vst [vmem:[#allocation2 + $0x1e8] sm:$0xff] %v7843
      %7908 = vst [vmem:[#allocation2 + $0x1f0] sm:$0xff] %v7844
      %7909 = vst [vmem:[#allocation2 + $0x1f8] sm:$0xff] %v7845
      %p7910 = scmp.eq.s32.totalorder %s30, 1
      // Predicated region
      $region81: #{transformer_bottleneck_forward.1} parent=75 // pred_check
        %p7911 = pneg %p7910
      $region82: #{transformer_bottleneck_forward.1} parent=75 // pred_check_branch
        %7913 = sbr.rel (%p7911) target = $region84
      $region83: #{transformer_bottleneck_forward.1} parent=75 // pred_region
        %7914 = vst [vmem:[%s743] sm:$0xff] %v7782
        %7915 = vst [vmem:[%s743 + $0x8] sm:$0xff] %v7783
        %7916 = vst [vmem:[%s743 + $0x10] sm:$0xff] %v7784
        %7917 = vst [vmem:[%s743 + $0x18] sm:$0xff] %v7785
        %7918 = vst [vmem:[%s743 + $0x20] sm:$0xff] %v7786
        %7919 = vst [vmem:[%s743 + $0x28] sm:$0xff] %v7787
        %7920 = vst [vmem:[%s743 + $0x30] sm:$0xff] %v7788
        %7921 = vst [vmem:[%s743 + $0x38] sm:$0xff] %v7789
        %7922 = vst [vmem:[%s743 + $0x40] sm:$0xff] %v7798
        %7923 = vst [vmem:[%s743 + $0x48] sm:$0xff] %v7799
        %7924 = vst [vmem:[%s743 + $0x50] sm:$0xff] %v7800
        %7925 = vst [vmem:[%s743 + $0x58] sm:$0xff] %v7801
        %7926 = vst [vmem:[%s743 + $0x60] sm:$0xff] %v7802
        %7927 = vst [vmem:[%s743 + $0x68] sm:$0xff] %v7803
        %7928 = vst [vmem:[%s743 + $0x70] sm:$0xff] %v7804
        %7929 = vst [vmem:[%s743 + $0x78] sm:$0xff] %v7805
        %7930 = vst [vmem:[%s743 + $0x80] sm:$0xff] %v7814
        %7931 = vst [vmem:[%s743 + $0x88] sm:$0xff] %v7815
        %7932 = vst [vmem:[%s743 + $0x90] sm:$0xff] %v7816
        %7933 = vst [vmem:[%s743 + $0x98] sm:$0xff] %v7817
        %7934 = vst [vmem:[%s743 + $0xa0] sm:$0xff] %v7818
        %7935 = vst [vmem:[%s743 + $0xa8] sm:$0xff] %v7819
        %7936 = vst [vmem:[%s743 + $0xb0] sm:$0xff] %v7820
        %7937 = vst [vmem:[%s743 + $0xb8] sm:$0xff] %v7821
        %7938 = vst [vmem:[%s743 + $0xc0] sm:$0xff] %v7830
        %7939 = vst [vmem:[%s743 + $0xc8] sm:$0xff] %v7831
        %7940 = vst [vmem:[%s743 + $0xd0] sm:$0xff] %v7832
        %7941 = vst [vmem:[%s743 + $0xd8] sm:$0xff] %v7833
        %7942 = vst [vmem:[%s743 + $0xe0] sm:$0xff] %v7834
        %7943 = vst [vmem:[%s743 + $0xe8] sm:$0xff] %v7835
        %7944 = vst [vmem:[%s743 + $0xf0] sm:$0xff] %v7836
        %7945 = vst [vmem:[%s743 + $0xf8] sm:$0xff] %v7837
        %s7946 = scalar_lea.vmem %s743, 256
        %7947 = vst [vmem:[%s7946] sm:$0xff] %v7790
        %7948 = vst [vmem:[%s7946 + $0x8] sm:$0xff] %v7791
        %7949 = vst [vmem:[%s7946 + $0x10] sm:$0xff] %v7792
        %7950 = vst [vmem:[%s7946 + $0x18] sm:$0xff] %v7793
        %7951 = vst [vmem:[%s7946 + $0x20] sm:$0xff] %v7794
        %7952 = vst [vmem:[%s7946 + $0x28] sm:$0xff] %v7795
        %7953 = vst [vmem:[%s7946 + $0x30] sm:$0xff] %v7796
        %7954 = vst [vmem:[%s7946 + $0x38] sm:$0xff] %v7797
        %7955 = vst [vmem:[%s7946 + $0x40] sm:$0xff] %v7806
        %7956 = vst [vmem:[%s7946 + $0x48] sm:$0xff] %v7807
        %7957 = vst [vmem:[%s7946 + $0x50] sm:$0xff] %v7808
        %7958 = vst [vmem:[%s7946 + $0x58] sm:$0xff] %v7809
        %7959 = vst [vmem:[%s7946 + $0x60] sm:$0xff] %v7810
        %7960 = vst [vmem:[%s7946 + $0x68] sm:$0xff] %v7811
        %7961 = vst [vmem:[%s7946 + $0x70] sm:$0xff] %v7812
        %7962 = vst [vmem:[%s7946 + $0x78] sm:$0xff] %v7813
        %7963 = vst [vmem:[%s7946 + $0x80] sm:$0xff] %v7822
        %7964 = vst [vmem:[%s7946 + $0x88] sm:$0xff] %v7823
        %7965 = vst [vmem:[%s7946 + $0x90] sm:$0xff] %v7824
        %7966 = vst [vmem:[%s7946 + $0x98] sm:$0xff] %v7825
        %7967 = vst [vmem:[%s7946 + $0xa0] sm:$0xff] %v7826
        %7968 = vst [vmem:[%s7946 + $0xa8] sm:$0xff] %v7827
        %7969 = vst [vmem:[%s7946 + $0xb0] sm:$0xff] %v7828
        %7970 = vst [vmem:[%s7946 + $0xb8] sm:$0xff] %v7829
        %7971 = vst [vmem:[%s7946 + $0xc0] sm:$0xff] %v7838
        %7972 = vst [vmem:[%s7946 + $0xc8] sm:$0xff] %v7839
        %7973 = vst [vmem:[%s7946 + $0xd0] sm:$0xff] %v7840
        %7974 = vst [vmem:[%s7946 + $0xd8] sm:$0xff] %v7841
        %7975 = vst [vmem:[%s7946 + $0xe0] sm:$0xff] %v7842
        %7976 = vst [vmem:[%s7946 + $0xe8] sm:$0xff] %v7843
        %7977 = vst [vmem:[%s7946 + $0xf0] sm:$0xff] %v7844
        %7978 = vst [vmem:[%s7946 + $0xf8] sm:$0xff] %v7845
      $region84: #{transformer_bottleneck_forward.1} parent=75 // pred_fallthru
        _
      %s7979 = smul.u32 8, %s29
      %p7980 = scmp.lt.s32.totalorder %s7979, 7
      %s7981 = scalar_select %p7980, %s7979, 7
      %s7982 = smul.addr %s7981, 8
      %s7983 = scalar_lea.vmem %s14, %s7982
      // Predicated region
      $region85: #{transformer_bottleneck_forward.1} parent=75 // pred_check
        %p7984 = pneg %p419
      $region86: #{transformer_bottleneck_forward.1} parent=75 // pred_check_branch
        %7986 = sbr.rel (%p7984) target = $region88
      $region87: #{transformer_bottleneck_forward.1} parent=75 // pred_region
        %s7987 = smul.u32 8, %s29
      $region88: #{transformer_bottleneck_forward.1} parent=75 // pred_fallthru
        _
      // Predicated region
      $region89: #{transformer_bottleneck_forward.1} parent=75 // pred_check
        %p7988 = pneg %p419
      $region90: #{transformer_bottleneck_forward.1} parent=75 // pred_check_branch
        %7990 = sbr.rel (%p7988) target = $region92
      $region91: #{transformer_bottleneck_forward.1} parent=75 // pred_region
        %s7991 = smul.u32 8, %s29
        %p7992 = scmp.lt.s32.totalorder %s7991, 7
        %s7993 = scalar_select %p7992, %s7991, 7
        %s7994 = smul.addr %s7993, 8
        %s7995 = scalar_lea.vmem %s14, %s7994
      $region92: #{transformer_bottleneck_forward.1} parent=75 // pred_fallthru
        _
    $region76: #{transformer_bottleneck_forward.1} parent=5 // pred_fallthru
      _
    %p7996 = scmp.le.s32.totalorder 2, %s20
    // Predicated region
    $region93: #{transformer_bottleneck_forward.1} parent=5 // pred_check
      %p7997 = pneg %p7996
    $region94: #{transformer_bottleneck_forward.1} parent=5 // pred_check_branch
      %7999 = sbr.rel (%p7997) target = $region96
    $region95: #{transformer_bottleneck_forward.1} parent=5 // pred_region
      %s8000 = ssub.s32 %s20, 2
    $region96: #{transformer_bottleneck_forward.1} parent=5 // pred_fallthru
      _
  $region6: #{transformer_bottleneck_forward.1} parent=0 // loop_footer
    %s24 = sadd.s32 1, %s20
  $region7: #{transformer_bottleneck_forward.1} parent=0 // loop_footer_branch
    %19 = sbr.rel target = $region3
  $region8: #{transformer_bottleneck_forward.1} parent=0 // loop_exit
    _

</llo_original>
